<compile_context>
chip_gen: v5e
topology: v5e:2x2
jax: 0.10.0
libtpu: 0.0.40
codegen_flags: <defaults>
</compile_context>

<pallas_src>
import numpy as np
import jax
import jax.numpy as jnp
from jax.experimental import pallas as pl
from jax.experimental.pallas import tpu as pltpu

# ---------------- model hyper-parameters (small test configuration) ----------
D_MODEL_I = 51          # D_model_s  (source / encoder feature dim)
D_MODEL_O = 19          # D_model_f  (frame / decoder feature dim)
D_FRAME   = 19
D_INNER   = 64          # 2048 in the original; shrunk for the small test
N_HEAD    = 2           # 8 in the original
D_K = D_V = 8           # 64 in the original
VIDEOMAXLEN = 4
BATCH     = 2
SRC_LEN   = 8
TRG_LEN   = VIDEOMAXLEN + 1
N_POSITION = max(VIDEOMAXLEN + 5, SRC_LEN + 5)
LN_EPS    = 1e-6

_SCALE = 1.0 / float(np.sqrt(D_K))
_NT_DIMS = (((1,), (1,)), ((), ()))     # A @ B.T via dot_general (no transpose)


# =============================== in-kernel helpers ============================

def _layernorm(x, g, b):
    mu = jnp.mean(x, axis=-1, keepdims=True)
    var = jnp.mean((x - mu) ** 2, axis=-1, keepdims=True)
    return (x - mu) * jax.lax.rsqrt(var + LN_EPS) * g + b


def _softmax_rows(scores):
    mx = jnp.max(scores, axis=-1, keepdims=True)
    e = jnp.exp(scores - mx)
    return e / jnp.sum(e, axis=-1, keepdims=True)


def _group_softmax(v, m):
    # softmax restricted to lanes where m is True (out-of-group lanes underflow to 0)
    neg = jnp.where(m, v, -1e30)
    mx = jnp.max(neg, axis=-1, keepdims=True)
    e = jnp.exp(neg - mx)
    return e / jnp.sum(e, axis=-1, keepdims=True)


# =============================== fused Pallas kernel ==========================

def _transformer_kernel(
        # ---- encoder inputs ----
        x_enc_ref, src_pad_ref, mbias_ref,
        ewq_ref, ewk_ref, ewv_ref, ewo_ref,
        eln1g_ref, eln1b_ref,
        ew1_ref, eb1_ref, ew2_ref, eb2_ref,
        eln2g_ref, eln2b_ref,
        # ---- decoder inputs ----
        pe_dec_ref, res0_ref,
        wself_ref, slng_ref, slnb_ref,
        cq_ref, ck_ref, wvo_ref,
        clng_ref, clnb_ref,
        dw1_ref, db1_ref, dw2_ref, db2_ref,
        flng_ref, flnb_ref,
        prj_ref,
        # ---- outputs ----
        trg_out_ref, xattn_ref, enc_attn_ref):
    """Whole Transformer forward (encoder + autoregressive decoder) in one kernel."""
    B = mbias_ref.shape[0]
    Ls = mbias_ref.shape[2]
    H = N_HEAD
    Dk = D_K
    T = pe_dec_ref.shape[0]
    Df = trg_out_ref.shape[2]
    Dd = wself_ref.shape[0]                     # 2 * Df

    # ---- hoisted, loop-invariant constants (computed once, reused everywhere) ----
    lane16 = jax.lax.broadcasted_iota(jnp.int32, (1, H * Dk), 1)
    head_masks = [(lane16 >= h * Dk) & (lane16 < (h + 1) * Dk) for h in range(H)]
    col = jax.lax.broadcasted_iota(jnp.int32, (1, Dd), 1)
    g0 = col < 9
    g1 = (col >= 9) & (col < 18)
    g2 = (col >= 18) & (col < Df)

    # ============================== Encoder ==============================
    x_all = x_enc_ref[...]                                              # (B*Ls, De)
    # Q/K/V projections batched over both batch elements (one dot each).
    q_all = jnp.dot(x_all, ewq_ref[...], preferred_element_type=jnp.float32)
    k_all = jnp.dot(x_all, ewk_ref[...], preferred_element_type=jnp.float32)
    v_all = jnp.dot(x_all, ewv_ref[...], preferred_element_type=jnp.float32)

    mha_rows = []
    for b in range(B):                                                  # static (B=2)
        lo, hi = b * Ls, (b + 1) * Ls
        xb = x_all[lo:hi, :]
        qb = q_all[lo:hi, :]
        kb = k_all[lo:hi, :]
        vb = v_all[lo:hi, :]
        bias = mbias_ref[b]                                             # (1, Ls) additive
        ctx_cat = None                                                  # (Ls, H*Dv)
        for h in range(H):
            # lane-masked q: contraction over all H*Dk lanes picks out head h only
            qm = jnp.where(head_masks[h], qb, 0.0)
            scores = jax.lax.dot_general(
                qm, kb, _NT_DIMS, preferred_element_type=jnp.float32) * _SCALE + bias
            attn = _softmax_rows(scores)                                # (Ls, Ls)
            enc_attn_ref[b, h] = attn
            vm = jnp.where(head_masks[h], vb, 0.0)
            term = jnp.dot(attn, vm, preferred_element_type=jnp.float32)
            ctx_cat = term if ctx_cat is None else ctx_cat + term
        proj = jnp.dot(ctx_cat, ewo_ref[...], preferred_element_type=jnp.float32)
        mha_rows.append(_layernorm(proj + xb, eln1g_ref[...], eln1b_ref[...]))

    # FFN batched over both batch elements.
    xm = jnp.concatenate(mha_rows, axis=0)                              # (B*Ls, De)
    h1 = jnp.maximum(
        jnp.dot(xm, ew1_ref[...], preferred_element_type=jnp.float32) + eb1_ref[...], 0.0)
    ff = jnp.dot(h1, ew2_ref[...], preferred_element_type=jnp.float32) + eb2_ref[...]
    z = _layernorm(ff + xm, eln2g_ref[...], eln2b_ref[...])
    # Encoder epilogue: enc_output = z + concat(src_seq, zeros) (prepadded on host).
    enc_out = z + src_pad_ref[...]            # stays on-chip, never written to HBM

    # ============================== Decoder ==============================
    pe_dec = pe_dec_ref[...]                  # (T, Dd): [0 | pe_o[idx]]
    wself = wself_ref[...]
    cq = cq_ref[...]
    prj = prj_ref[...]

    for b in range(B):                                                  # static (B=2)
        lo, hi = b * Ls, (b + 1) * Ls
        enc_b = enc_out[lo:hi, :]                                       # (Ls, De)
        bias = mbias_ref[b]                                             # (1, Ls)

        # Step-invariant cross-attention tensors, hoisted out of the serial loop:
        #   K per head (lane-masked) and the folded V.Wo product per head.
        k_all_b = jnp.dot(enc_b, ck_ref[...], preferred_element_type=jnp.float32)
        k_cr = [jnp.where(head_masks[h], k_all_b, 0.0) for h in range(H)]
        vo_cr = [jnp.dot(enc_b, wvo_ref[h], preferred_element_type=jnp.float32)
                 for h in range(H)]                                     # (Ls, Dd)

        # `res` carried in registers as a 38-lane vector: [trg_seq[b,0] | zeros].
        res38 = res0_ref[b]                                             # (1, Dd)
        trg_out_ref[b, pl.ds(0, 1), :] = res38[:, :Df]                  # seed row 0

        for idx in range(T):                                            # serial, static
            d = res38 + pe_dec[idx:idx + 1, :]                          # concat-free (1,Dd)

            # single-token self-attention (softmax == 1) folded to one matmul
            x = _layernorm(
                jnp.dot(d, wself, preferred_element_type=jnp.float32) + d,
                slng_ref[...], slnb_ref[...])

            # cross attention over the encoder output
            q_all_d = jnp.dot(x, cq, preferred_element_type=jnp.float32)  # (1, H*Dk)
            proj = None
            for h in range(H):
                scores = jax.lax.dot_general(
                    q_all_d, k_cr[h], _NT_DIMS,
                    preferred_element_type=jnp.float32) * _SCALE + bias
                attn = _softmax_rows(scores)                            # (1, Ls)
                xattn_ref[b, h, pl.ds(idx, 1), :] = attn
                term = jnp.dot(attn, vo_cr[h], preferred_element_type=jnp.float32)
                proj = term if proj is None else proj + term
            x = _layernorm(proj + x, clng_ref[...], clnb_ref[...])

            # position-wise FFN
            hh = jnp.maximum(
                jnp.dot(x, dw1_ref[...], preferred_element_type=jnp.float32) + db1_ref[...],
                0.0)
            y = jnp.dot(hh, dw2_ref[...], preferred_element_type=jnp.float32) + db2_ref[...]
            x = _layernorm(y + x, flng_ref[...], flnb_ref[...])

            # trg_word_prj (zero-padded to Dd lanes) + residual, then the gates
            o = jnp.dot(x, prj, preferred_element_type=jnp.float32) + res38
            dec2 = (jnp.where(g0, _group_softmax(o, g0), 0.0)
                    + jnp.where(g1, _group_softmax(o, g1), 0.0)
                    + jnp.where(g2, 1.0 / (1.0 + jnp.exp(-o)), 0.0))
            trg_out_ref[b, pl.ds(idx + 1, 1), :] = dec2[:, :Df]
            res38 = dec2                                                # register carry


# =============================== Pallas wrapper ===============================

def _fullspec(shape):
    zeros = (0,) * len(shape)
    return pl.BlockSpec(tuple(shape), lambda i: zeros)


def transformer_fused(params, x_enc, src_pad, mask_bias, res0):
    p = params
    B = mask_bias.shape[0]
    Ls = mask_bias.shape[2]
    ins = (x_enc, src_pad, mask_bias,
           p['enc_wq'], p['enc_wk'], p['enc_wv'], p['enc_wo'],
           p['enc_ln1_g'], p['enc_ln1_b'],
           p['enc_w1'], p['enc_b1'], p['enc_w2'], p['enc_b2'],
           p['enc_ln2_g'], p['enc_ln2_b'],
           PE_DEC_PAD, res0,
           p['dec_w_self'], p['dec_self_ln_g'], p['dec_self_ln_b'],
           p['dec_cq'], p['dec_ck'], p['dec_wvo'],
           p['dec_cross_ln_g'], p['dec_cross_ln_b'],
           p['dec_w1'], p['dec_b1'], p['dec_w2'], p['dec_b2'],
           p['dec_ffn_ln_g'], p['dec_ffn_ln_b'],
           p['trg_prj_pad'])
    out_shape = (jax.ShapeDtypeStruct((B, TRG_LEN, D_MODEL_O), jnp.float32),
                 jax.ShapeDtypeStruct((B, N_HEAD, VIDEOMAXLEN, Ls), jnp.float32),
                 jax.ShapeDtypeStruct((B, N_HEAD, Ls, Ls), jnp.float32))
    return pl.pallas_call(
        _transformer_kernel,
        out_shape=out_shape,
        grid=(1,),
        in_specs=[_fullspec(x.shape) for x in ins],
        out_specs=tuple(_fullspec(s.shape) for s in out_shape),
        compiler_params=pltpu.CompilerParams(dimension_semantics=("arbitrary",)),
    )(*ins)


# ============================ parameters & pos tables =========================

def _xavier(key, shape):
    limit = float(np.sqrt(6.0 / (shape[0] + shape[1])))
    return jax.random.uniform(key, shape, jnp.float32, -limit, limit)


def make_params(key):
    ks = jax.random.split(key, 15)
    d_enc = 2 * D_MODEL_I          # positional-encoding concat doubles the dim
    d_dec = 2 * D_MODEL_O

    enc_wq = _xavier(ks[0], (d_enc, N_HEAD * D_K))
    enc_wk = _xavier(ks[1], (d_enc, N_HEAD * D_K))
    enc_wv = _xavier(ks[2], (d_enc, N_HEAD * D_V))
    enc_wo = _xavier(ks[3], (N_HEAD * D_V, d_enc))
    enc_w1 = _xavier(ks[4], (d_enc, D_INNER))
    enc_w2 = _xavier(ks[5], (D_INNER, d_enc))

    # decoder self-attention (Wq/Wk do not affect the single-token forward)
    dec_s_wv = _xavier(ks[6], (d_dec, N_HEAD * D_V))
    dec_s_wo = _xavier(ks[7], (N_HEAD * D_V, d_dec))
    # decoder cross-attention
    dec_c_wq = _xavier(ks[8], (d_dec, N_HEAD * D_K))
    dec_c_wk = _xavier(ks[9], (d_enc, N_HEAD * D_K))
    dec_c_wv = _xavier(ks[10], (d_enc, N_HEAD * D_V))
    dec_c_wo = _xavier(ks[11], (N_HEAD * D_V, d_dec))
    dec_w1 = _xavier(ks[12], (d_dec, D_INNER))
    dec_w2 = _xavier(ks[13], (D_INNER, d_dec))
    trg_prj = _xavier(ks[14], (d_dec, D_FRAME))   # nn.Linear(2*d_model_o, d_frame, bias=False)

    # ---- kernel-ready folded layouts (host-side, once; mathematically exact) ----
    # single-token self-attention: softmax == 1  =>  out = x @ (Wv @ Wo)
    w_self = dec_s_wv @ dec_s_wo                                         # (d_dec, d_dec)
    # cross attention: fold V with the output projection per head
    wvo = jnp.stack(
        [dec_c_wv[:, h * D_V:(h + 1) * D_V] @ dec_c_wo[h * D_V:(h + 1) * D_V, :]
         for h in range(N_HEAD)], axis=0)                                # (H, d_enc, d_dec)
    # trg_word_prj zero-padded to d_dec lanes (keeps the gate math in one register)
    prj_pad = jnp.concatenate(
        [trg_prj, jnp.zeros((d_dec, d_dec - D_FRAME), jnp.float32)], axis=1)

    ones = lambda d: jnp.ones((1, d), jnp.float32)
    zeros = lambda d: jnp.zeros((1, d), jnp.float32)
    return {
        'enc_wq': enc_wq, 'enc_wk': enc_wk, 'enc_wv': enc_wv, 'enc_wo': enc_wo,
        'enc_ln1_g': ones(d_enc), 'enc_ln1_b': zeros(d_enc),
        'enc_w1': enc_w1, 'enc_b1': zeros(D_INNER),
        'enc_w2': enc_w2, 'enc_b2': zeros(d_enc),
        'enc_ln2_g': ones(d_enc), 'enc_ln2_b': zeros(d_enc),
        'dec_w_self': w_self,
        'dec_self_ln_g': ones(d_dec), 'dec_self_ln_b': zeros(d_dec),
        'dec_cq': dec_c_wq, 'dec_ck': dec_c_wk, 'dec_wvo': wvo,
        'dec_cross_ln_g': ones(d_dec), 'dec_cross_ln_b': zeros(d_dec),
        'dec_w1': dec_w1, 'dec_b1': zeros(D_INNER),
        'dec_w2': dec_w2, 'dec_b2': zeros(d_dec),
        'dec_ffn_ln_g': ones(d_dec), 'dec_ffn_ln_b': zeros(d_dec),
        'trg_prj_pad': prj_pad,
    }


def sinusoid_table(n_position, d_hid):
    pos = np.arange(n_position)[:, None].astype(np.float64)
    j = np.arange(d_hid)[None, :]
    angle = pos / np.power(10000.0, 2.0 * (j // 2) / d_hid)
    tab = np.where(j % 2 == 0, np.sin(angle), np.cos(angle))
    return jnp.asarray(tab, jnp.float32)


POS_TAB_I = sinusoid_table(N_POSITION, D_MODEL_I)   # PositionalEncoding table
POS_TAB_O = sinusoid_table(N_POSITION, D_MODEL_O)   # IndexPositionalEncoding table
# pe rows pre-padded to [0_{Df} | pe_o[idx]] so the decoder never concatenates.
PE_DEC_PAD = jnp.concatenate(
    [jnp.zeros((VIDEOMAXLEN, D_MODEL_O), jnp.float32),
     POS_TAB_O[:VIDEOMAXLEN, :D_MODEL_O]], axis=-1)


# ================================= forward ====================================

@jax.jit
def transformer_forward(params, src_seq, trg_seq, labellen, framelen):
    del framelen  # unused by the reference forward
    B, Ls, Di = src_seq.shape
    De = 2 * Di

    # get_pad_mask -> additive bias (0 where valid, -1e9 where padded)
    valid = jnp.arange(Ls)[None, :] < labellen[:, None]
    mask_bias = jnp.where(valid, 0.0, -1e9).astype(jnp.float32)[:, None, :]

    # All concatenations done here (once, on slabs) instead of inside the kernel.
    pe_i = POS_TAB_I[:Ls, :Di]
    x_enc = jnp.concatenate(
        [src_seq, jnp.broadcast_to(pe_i[None], (B, Ls, Di))], axis=-1).reshape(B * Ls, De)
    src_pad = jnp.concatenate(
        [src_seq, jnp.zeros_like(src_seq)], axis=-1).reshape(B * Ls, De)
    res0 = jnp.concatenate(
        [trg_seq[:, 0:1, :], jnp.zeros((B, 1, D_MODEL_O), jnp.float32)], axis=-1)

    trg_out, dec_enc_attn_list, enc_slf_attn = transformer_fused(
        params, x_enc, src_pad, mask_bias, res0)

    # decoder self-attention is over a single token -> weights are identically 1.0
    dec_slf_attn_list = jnp.ones((B, N_HEAD, VIDEOMAXLEN, 1), jnp.float32)

    return trg_out, dec_enc_attn_list, enc_slf_attn, dec_slf_attn_list


# =================================== main =====================================

if __name__ == "__main__":
    key = jax.random.PRNGKey(0)
    kp, k1, k2 = jax.random.split(key, 3)
    params = make_params(kp)
    src_seq = jax.random.normal(k1, (BATCH, SRC_LEN, D_MODEL_I), jnp.float32)
    trg_seq = jax.random.normal(k2, (BATCH, TRG_LEN, D_MODEL_O), jnp.float32)
    labellen = jnp.array([5, 8], jnp.int32)
    framelen = jnp.array([VIDEOMAXLEN, VIDEOMAXLEN], jnp.int32)

    outs = transformer_forward(params, src_seq, trg_seq, labellen, framelen)
    jax.block_until_ready(outs)

    dec_output, attn_array, enc_slf_attn_list, dec_slf_attn_list = outs
    assert dec_output.shape == (BATCH, TRG_LEN, D_MODEL_O)
    assert attn_array.shape == (BATCH, N_HEAD, VIDEOMAXLEN, SRC_LEN)
    assert enc_slf_attn_list.shape == (BATCH, N_HEAD, SRC_LEN, SRC_LEN)
    assert dec_slf_attn_list.shape == (BATCH, N_HEAD, VIDEOMAXLEN, 1)
    assert bool(jnp.all(jnp.isfinite(dec_output)))
    assert bool(jnp.all(jnp.isfinite(attn_array)))
    assert bool(jnp.all(jnp.isfinite(enc_slf_attn_list)))
    print("KERNEL_OK")
</pallas_src>

<mosaic_0001>
module attributes {stable_mosaic.version = 11 : i64} {
  func.func @_transformer_kernel(%arg0: i32, %arg1: memref<16x102xf32, #tpu.memory_space<vmem>>, %arg2: memref<16x102xf32, #tpu.memory_space<vmem>>, %arg3: memref<2x1x8xf32, #tpu.memory_space<vmem>>, %arg4: memref<102x16xf32, #tpu.memory_space<vmem>>, %arg5: memref<102x16xf32, #tpu.memory_space<vmem>>, %arg6: memref<102x16xf32, #tpu.memory_space<vmem>>, %arg7: memref<16x102xf32, #tpu.memory_space<vmem>>, %arg8: memref<1x102xf32, #tpu.memory_space<vmem>>, %arg9: memref<1x102xf32, #tpu.memory_space<vmem>>, %arg10: memref<102x64xf32, #tpu.memory_space<vmem>>, %arg11: memref<1x64xf32, #tpu.memory_space<vmem>>, %arg12: memref<64x102xf32, #tpu.memory_space<vmem>>, %arg13: memref<1x102xf32, #tpu.memory_space<vmem>>, %arg14: memref<1x102xf32, #tpu.memory_space<vmem>>, %arg15: memref<1x102xf32, #tpu.memory_space<vmem>>, %arg16: memref<4x38xf32, #tpu.memory_space<vmem>>, %arg17: memref<2x1x38xf32, #tpu.memory_space<vmem>>, %arg18: memref<38x38xf32, #tpu.memory_space<vmem>>, %arg19: memref<1x38xf32, #tpu.memory_space<vmem>>, %arg20: memref<1x38xf32, #tpu.memory_space<vmem>>, %arg21: memref<38x16xf32, #tpu.memory_space<vmem>>, %arg22: memref<102x16xf32, #tpu.memory_space<vmem>>, %arg23: memref<2x102x38xf32, #tpu.memory_space<vmem>>, %arg24: memref<1x38xf32, #tpu.memory_space<vmem>>, %arg25: memref<1x38xf32, #tpu.memory_space<vmem>>, %arg26: memref<38x64xf32, #tpu.memory_space<vmem>>, %arg27: memref<1x64xf32, #tpu.memory_space<vmem>>, %arg28: memref<64x38xf32, #tpu.memory_space<vmem>>, %arg29: memref<1x38xf32, #tpu.memory_space<vmem>>, %arg30: memref<1x38xf32, #tpu.memory_space<vmem>>, %arg31: memref<1x38xf32, #tpu.memory_space<vmem>>, %arg32: memref<38x38xf32, #tpu.memory_space<vmem>>, %arg33: memref<2x5x19xf32, #tpu.memory_space<vmem>>, %arg34: memref<2x2x4x8xf32, #tpu.memory_space<vmem>>, %arg35: memref<2x2x8x8xf32, #tpu.memory_space<vmem>>) attributes {dimension_semantics = [#tpu.dimension_semantics<arbitrary>], iteration_bounds = array<i64: 1>, scalar_prefetch = 0 : i64, scratch_operands = 0 : i64, tpu.core_type = #tpu.core_type<tc>, window_params = [{pipeline_mode = #tpu.pipeline_mode<synchronous>, transform_indices = @transform_0, window_bounds = array<i64: 16, 102>}, {pipeline_mode = #tpu.pipeline_mode<synchronous>, transform_indices = @transform_1, window_bounds = array<i64: 16, 102>}, {pipeline_mode = #tpu.pipeline_mode<synchronous>, transform_indices = @transform_2, window_bounds = array<i64: 2, 1, 8>}, {pipeline_mode = #tpu.pipeline_mode<synchronous>, transform_indices = @transform_3, window_bounds = array<i64: 102, 16>}, {pipeline_mode = #tpu.pipeline_mode<synchronous>, transform_indices = @transform_4, window_bounds = array<i64: 102, 16>}, {pipeline_mode = #tpu.pipeline_mode<synchronous>, transform_indices = @transform_5, window_bounds = array<i64: 102, 16>}, {pipeline_mode = #tpu.pipeline_mode<synchronous>, transform_indices = @transform_6, window_bounds = array<i64: 16, 102>}, {pipeline_mode = #tpu.pipeline_mode<synchronous>, transform_indices = @transform_7, window_bounds = array<i64: 1, 102>}, {pipeline_mode = #tpu.pipeline_mode<synchronous>, transform_indices = @transform_8, window_bounds = array<i64: 1, 102>}, {pipeline_mode = #tpu.pipeline_mode<synchronous>, transform_indices = @transform_9, window_bounds = array<i64: 102, 64>}, {pipeline_mode = #tpu.pipeline_mode<synchronous>, transform_indices = @transform_10, window_bounds = array<i64: 1, 64>}, {pipeline_mode = #tpu.pipeline_mode<synchronous>, transform_indices = @transform_11, window_bounds = array<i64: 64, 102>}, {pipeline_mode = #tpu.pipeline_mode<synchronous>, transform_indices = @transform_12, window_bounds = array<i64: 1, 102>}, {pipeline_mode = #tpu.pipeline_mode<synchronous>, transform_indices = @transform_13, window_bounds = array<i64: 1, 102>}, {pipeline_mode = #tpu.pipeline_mode<synchronous>, transform_indices = @transform_14, window_bounds = array<i64: 1, 102>}, {pipeline_mode = #tpu.pipeline_mode<synchronous>, transform_indices = @transform_15, window_bounds = array<i64: 4, 38>}, {pipeline_mode = #tpu.pipeline_mode<synchronous>, transform_indices = @transform_16, window_bounds = array<i64: 2, 1, 38>}, {pipeline_mode = #tpu.pipeline_mode<synchronous>, transform_indices = @transform_17, window_bounds = array<i64: 38, 38>}, {pipeline_mode = #tpu.pipeline_mode<synchronous>, transform_indices = @transform_18, window_bounds = array<i64: 1, 38>}, {pipeline_mode = #tpu.pipeline_mode<synchronous>, transform_indices = @transform_19, window_bounds = array<i64: 1, 38>}, {pipeline_mode = #tpu.pipeline_mode<synchronous>, transform_indices = @transform_20, window_bounds = array<i64: 38, 16>}, {pipeline_mode = #tpu.pipeline_mode<synchronous>, transform_indices = @transform_21, window_bounds = array<i64: 102, 16>}, {pipeline_mode = #tpu.pipeline_mode<synchronous>, transform_indices = @transform_22, window_bounds = array<i64: 2, 102, 38>}, {pipeline_mode = #tpu.pipeline_mode<synchronous>, transform_indices = @transform_23, window_bounds = array<i64: 1, 38>}, {pipeline_mode = #tpu.pipeline_mode<synchronous>, transform_indices = @transform_24, window_bounds = array<i64: 1, 38>}, {pipeline_mode = #tpu.pipeline_mode<synchronous>, transform_indices = @transform_25, window_bounds = array<i64: 38, 64>}, {pipeline_mode = #tpu.pipeline_mode<synchronous>, transform_indices = @transform_26, window_bounds = array<i64: 1, 64>}, {pipeline_mode = #tpu.pipeline_mode<synchronous>, transform_indices = @transform_27, window_bounds = array<i64: 64, 38>}, {pipeline_mode = #tpu.pipeline_mode<synchronous>, transform_indices = @transform_28, window_bounds = array<i64: 1, 38>}, {pipeline_mode = #tpu.pipeline_mode<synchronous>, transform_indices = @transform_29, window_bounds = array<i64: 1, 38>}, {pipeline_mode = #tpu.pipeline_mode<synchronous>, transform_indices = @transform_30, window_bounds = array<i64: 1, 38>}, {pipeline_mode = #tpu.pipeline_mode<synchronous>, transform_indices = @transform_31, window_bounds = array<i64: 38, 38>}, {pipeline_mode = #tpu.pipeline_mode<synchronous>, transform_indices = @transform_32, window_bounds = array<i64: 2, 5, 19>}, {pipeline_mode = #tpu.pipeline_mode<synchronous>, transform_indices = @transform_33, window_bounds = array<i64: 2, 2, 4, 8>}, {pipeline_mode = #tpu.pipeline_mode<synchronous>, transform_indices = @transform_34, window_bounds = array<i64: 2, 2, 8, 8>}]} {
    %0 = tpu.iota {dimensions = array<i32: 1>} : vector<1x16xi32>
    %c0_i32 = arith.constant 0 : i32
    %1 = vector.broadcast %c0_i32 : i32 to vector<1x16xi32>
    %2 = arith.cmpi sge, %0, %1 : vector<1x16xi32>
    %c8_i32 = arith.constant 8 : i32
    %3 = vector.broadcast %c8_i32 : i32 to vector<1x16xi32>
    %4 = arith.cmpi slt, %0, %3 : vector<1x16xi32>
    %5 = arith.andi %2, %4 : vector<1x16xi1>
    %c8_i32_0 = arith.constant 8 : i32
    %6 = vector.broadcast %c8_i32_0 : i32 to vector<1x16xi32>
    %7 = arith.cmpi sge, %0, %6 : vector<1x16xi32>
    %c16_i32 = arith.constant 16 : i32
    %8 = vector.broadcast %c16_i32 : i32 to vector<1x16xi32>
    %9 = arith.cmpi slt, %0, %8 : vector<1x16xi32>
    %10 = arith.andi %7, %9 : vector<1x16xi1>
    %11 = tpu.iota {dimensions = array<i32: 1>} : vector<1x38xi32>
    %c9_i32 = arith.constant 9 : i32
    %12 = vector.broadcast %c9_i32 : i32 to vector<1x38xi32>
    %13 = arith.cmpi slt, %11, %12 : vector<1x38xi32>
    %c9_i32_1 = arith.constant 9 : i32
    %14 = vector.broadcast %c9_i32_1 : i32 to vector<1x38xi32>
    %15 = arith.cmpi sge, %11, %14 : vector<1x38xi32>
    %c18_i32 = arith.constant 18 : i32
    %16 = vector.broadcast %c18_i32 : i32 to vector<1x38xi32>
    %17 = arith.cmpi slt, %11, %16 : vector<1x38xi32>
    %18 = arith.andi %15, %17 : vector<1x38xi1>
    %c18_i32_2 = arith.constant 18 : i32
    %19 = vector.broadcast %c18_i32_2 : i32 to vector<1x38xi32>
    %20 = arith.cmpi sge, %11, %19 : vector<1x38xi32>
    %c19_i32 = arith.constant 19 : i32
    %21 = vector.broadcast %c19_i32 : i32 to vector<1x38xi32>
    %22 = arith.cmpi slt, %11, %21 : vector<1x38xi32>
    %23 = arith.andi %20, %22 : vector<1x38xi1>
    %c0 = arith.constant 0 : index
    %c0_3 = arith.constant 0 : index
    %24 = vector.load %arg1[%c0, %c0_3] : memref<16x102xf32, #tpu.memory_space<vmem>>, vector<16x102xf32>
    %c0_4 = arith.constant 0 : index
    %c0_5 = arith.constant 0 : index
    %25 = vector.load %arg4[%c0_4, %c0_5] : memref<102x16xf32, #tpu.memory_space<vmem>>, vector<102x16xf32>
    %cst = arith.constant dense<0.000000e+00> : vector<16x16xf32>
    %26 = tpu.matmul %24, %25, %cst {dimension_numbers = #tpu.dot_dimension_numbers<[1], [0], [0], [1], [0, 0, 1, 1], [], []>} : vector<16x102xf32>, vector<102x16xf32>, vector<16x16xf32> -> vector<16x16xf32>
    %c0_6 = arith.constant 0 : index
    %c0_7 = arith.constant 0 : index
    %27 = vector.load %arg5[%c0_6, %c0_7] : memref<102x16xf32, #tpu.memory_space<vmem>>, vector<102x16xf32>
    %cst_8 = arith.constant dense<0.000000e+00> : vector<16x16xf32>
    %28 = tpu.matmul %24, %27, %cst_8 {dimension_numbers = #tpu.dot_dimension_numbers<[1], [0], [0], [1], [0, 0, 1, 1], [], []>} : vector<16x102xf32>, vector<102x16xf32>, vector<16x16xf32> -> vector<16x16xf32>
    %c0_9 = arith.constant 0 : index
    %c0_10 = arith.constant 0 : index
    %29 = vector.load %arg6[%c0_9, %c0_10] : memref<102x16xf32, #tpu.memory_space<vmem>>, vector<102x16xf32>
    %cst_11 = arith.constant dense<0.000000e+00> : vector<16x16xf32>
    %30 = tpu.matmul %24, %29, %cst_11 {dimension_numbers = #tpu.dot_dimension_numbers<[1], [0], [0], [1], [0, 0, 1, 1], [], []>} : vector<16x102xf32>, vector<102x16xf32>, vector<16x16xf32> -> vector<16x16xf32>
    %31 = vector.extract_strided_slice %24 {offsets = [0, 0], sizes = [8, 102], strides = [1, 1]} : vector<16x102xf32> to vector<8x102xf32>
    %32 = vector.extract_strided_slice %26 {offsets = [0, 0], sizes = [8, 16], strides = [1, 1]} : vector<16x16xf32> to vector<8x16xf32>
    %33 = vector.extract_strided_slice %28 {offsets = [0, 0], sizes = [8, 16], strides = [1, 1]} : vector<16x16xf32> to vector<8x16xf32>
    %34 = vector.extract_strided_slice %30 {offsets = [0, 0], sizes = [8, 16], strides = [1, 1]} : vector<16x16xf32> to vector<8x16xf32>
    %c0_12 = arith.constant 0 : index
    %c0_13 = arith.constant 0 : index
    %c0_14 = arith.constant 0 : index
    %35 = vector.load %arg3[%c0_12, %c0_13, %c0_14] : memref<2x1x8xf32, #tpu.memory_space<vmem>>, vector<1x1x8xf32>
    %36 = vector.shape_cast %35 : vector<1x1x8xf32> to vector<1x8xf32>
    %cst_15 = arith.constant 0.000000e+00 : f32
    %37 = vector.shape_cast %5 : vector<1x16xi1> to vector<1x16xi1>
    %38 = vector.broadcast %37 : vector<1x16xi1> to vector<8x16xi1>
    %39 = vector.broadcast %cst_15 : f32 to vector<8x16xf32>
    %40 = arith.select %38, %32, %39 : vector<8x16xi1>, vector<8x16xf32>
    %cst_16 = arith.constant dense<0.000000e+00> : vector<8x8xf32>
    %41 = tpu.matmul %40, %33, %cst_16 {dimension_numbers = #tpu.dot_dimension_numbers<[1], [1], [0], [0], [0, 0, 1, 0], [], []>} : vector<8x16xf32>, vector<8x16xf32>, vector<8x8xf32> -> vector<8x8xf32>
    %cst_17 = arith.constant 0.353553385 : f32
    %42 = vector.broadcast %cst_17 : f32 to vector<8x8xf32>
    %43 = arith.mulf %41, %42 : vector<8x8xf32>
    %44 = vector.broadcast %36 : vector<1x8xf32> to vector<8x8xf32>
    %45 = arith.addf %43, %44 : vector<8x8xf32>
    %cst_18 = arith.constant dense<0xFF800000> : vector<8xf32>
    %46 = vector.multi_reduction <maximumf>, %45, %cst_18 [1] : vector<8x8xf32> to vector<8xf32>
    %47 = vector.shape_cast %46 : vector<8xf32> to vector<8x1xf32>
    %48 = vector.broadcast %47 : vector<8x1xf32> to vector<8x8xf32>
    %49 = arith.subf %45, %48 : vector<8x8xf32>
    %50 = math.exp %49 : vector<8x8xf32>
    %cst_19 = arith.constant dense<0.000000e+00> : vector<8xf32>
    %51 = vector.multi_reduction <add>, %50, %cst_19 [1] : vector<8x8xf32> to vector<8xf32>
    %52 = vector.shape_cast %51 : vector<8xf32> to vector<8x1xf32>
    %53 = vector.broadcast %52 : vector<8x1xf32> to vector<8x8xf32>
    %54 = arith.divf %50, %53 : vector<8x8xf32>
    %c0_20 = arith.constant 0 : index
    %c0_21 = arith.constant 0 : index
    %c0_22 = arith.constant 0 : index
    %c0_23 = arith.constant 0 : index
    %55 = vector.load %arg35[%c0_20, %c0_21, %c0_22, %c0_23] : memref<2x2x8x8xf32, #tpu.memory_space<vmem>>, vector<1x1x8x8xf32>
    %56 = vector.shape_cast %55 : vector<1x1x8x8xf32> to vector<8x8xf32>
    %57 = vector.shape_cast %54 : vector<8x8xf32> to vector<1x1x8x8xf32>
    tpu.vector_store %arg35[%c0_20, %c0_21, %c0_22, %c0_23], %57 {strides = array<i32>} : memref<2x2x8x8xf32, #tpu.memory_space<vmem>>, vector<1x1x8x8xf32>,
    %cst_24 = arith.constant 0.000000e+00 : f32
    %58 = vector.shape_cast %5 : vector<1x16xi1> to vector<1x16xi1>
    %59 = vector.broadcast %58 : vector<1x16xi1> to vector<8x16xi1>
    %60 = vector.broadcast %cst_24 : f32 to vector<8x16xf32>
    %61 = arith.select %59, %34, %60 : vector<8x16xi1>, vector<8x16xf32>
    %cst_25 = arith.constant dense<0.000000e+00> : vector<8x16xf32>
    %62 = tpu.matmul %54, %61, %cst_25 {dimension_numbers = #tpu.dot_dimension_numbers<[1], [0], [0], [1], [0, 0, 1, 1], [], []>} : vector<8x8xf32>, vector<8x16xf32>, vector<8x16xf32> -> vector<8x16xf32>
    %cst_26 = arith.constant 0.000000e+00 : f32
    %63 = vector.shape_cast %10 : vector<1x16xi1> to vector<1x16xi1>
    %64 = vector.broadcast %63 : vector<1x16xi1> to vector<8x16xi1>
    %65 = vector.broadcast %cst_26 : f32 to vector<8x16xf32>
    %66 = arith.select %64, %32, %65 : vector<8x16xi1>, vector<8x16xf32>
    %cst_27 = arith.constant dense<0.000000e+00> : vector<8x8xf32>
    %67 = tpu.matmul %66, %33, %cst_27 {dimension_numbers = #tpu.dot_dimension_numbers<[1], [1], [0], [0], [0, 0, 1, 0], [], []>} : vector<8x16xf32>, vector<8x16xf32>, vector<8x8xf32> -> vector<8x8xf32>
    %cst_28 = arith.constant 0.353553385 : f32
    %68 = vector.broadcast %cst_28 : f32 to vector<8x8xf32>
    %69 = arith.mulf %67, %68 : vector<8x8xf32>
    %70 = vector.broadcast %36 : vector<1x8xf32> to vector<8x8xf32>
    %71 = arith.addf %69, %70 : vector<8x8xf32>
    %cst_29 = arith.constant dense<0xFF800000> : vector<8xf32>
    %72 = vector.multi_reduction <maximumf>, %71, %cst_29 [1] : vector<8x8xf32> to vector<8xf32>
    %73 = vector.shape_cast %72 : vector<8xf32> to vector<8x1xf32>
    %74 = vector.broadcast %73 : vector<8x1xf32> to vector<8x8xf32>
    %75 = arith.subf %71, %74 : vector<8x8xf32>
    %76 = math.exp %75 : vector<8x8xf32>
    %cst_30 = arith.constant dense<0.000000e+00> : vector<8xf32>
    %77 = vector.multi_reduction <add>, %76, %cst_30 [1] : vector<8x8xf32> to vector<8xf32>
    %78 = vector.shape_cast %77 : vector<8xf32> to vector<8x1xf32>
    %79 = vector.broadcast %78 : vector<8x1xf32> to vector<8x8xf32>
    %80 = arith.divf %76, %79 : vector<8x8xf32>
    %c0_31 = arith.constant 0 : index
    %c1 = arith.constant 1 : index
    %c0_32 = arith.constant 0 : index
    %c0_33 = arith.constant 0 : index
    %81 = vector.load %arg35[%c0_31, %c1, %c0_32, %c0_33] : memref<2x2x8x8xf32, #tpu.memory_space<vmem>>, vector<1x1x8x8xf32>
    %82 = vector.shape_cast %81 : vector<1x1x8x8xf32> to vector<8x8xf32>
    %83 = vector.shape_cast %80 : vector<8x8xf32> to vector<1x1x8x8xf32>
    tpu.vector_store %arg35[%c0_31, %c1, %c0_32, %c0_33], %83 {strides = array<i32>} : memref<2x2x8x8xf32, #tpu.memory_space<vmem>>, vector<1x1x8x8xf32>,
    %cst_34 = arith.constant 0.000000e+00 : f32
    %84 = vector.shape_cast %10 : vector<1x16xi1> to vector<1x16xi1>
    %85 = vector.broadcast %84 : vector<1x16xi1> to vector<8x16xi1>
    %86 = vector.broadcast %cst_34 : f32 to vector<8x16xf32>
    %87 = arith.select %85, %34, %86 : vector<8x16xi1>, vector<8x16xf32>
    %cst_35 = arith.constant dense<0.000000e+00> : vector<8x16xf32>
    %88 = tpu.matmul %80, %87, %cst_35 {dimension_numbers = #tpu.dot_dimension_numbers<[1], [0], [0], [1], [0, 0, 1, 1], [], []>} : vector<8x8xf32>, vector<8x16xf32>, vector<8x16xf32> -> vector<8x16xf32>
    %89 = arith.addf %62, %88 : vector<8x16xf32>
    %c0_36 = arith.constant 0 : index
    %c0_37 = arith.constant 0 : index
    %90 = vector.load %arg7[%c0_36, %c0_37] : memref<16x102xf32, #tpu.memory_space<vmem>>, vector<16x102xf32>
    %cst_38 = arith.constant dense<0.000000e+00> : vector<8x102xf32>
    %91 = tpu.matmul %89, %90, %cst_38 {dimension_numbers = #tpu.dot_dimension_numbers<[1], [0], [0], [1], [0, 0, 1, 1], [], []>} : vector<8x16xf32>, vector<16x102xf32>, vector<8x102xf32> -> vector<8x102xf32>
    %92 = arith.addf %91, %31 : vector<8x102xf32>
    %c0_39 = arith.constant 0 : index
    %c0_40 = arith.constant 0 : index
    %93 = vector.load %arg8[%c0_39, %c0_40] : memref<1x102xf32, #tpu.memory_space<vmem>>, vector<1x102xf32>
    %c0_41 = arith.constant 0 : index
    %c0_42 = arith.constant 0 : index
    %94 = vector.load %arg9[%c0_41, %c0_42] : memref<1x102xf32, #tpu.memory_space<vmem>>, vector<1x102xf32>
    %cst_43 = arith.constant dense<0.000000e+00> : vector<8xf32>
    %95 = vector.multi_reduction <add>, %92, %cst_43 [1] : vector<8x102xf32> to vector<8xf32>
    %96 = vector.shape_cast %95 : vector<8xf32> to vector<8x1xf32>
    %cst_44 = arith.constant 1.020000e+02 : f32
    %97 = vector.broadcast %cst_44 : f32 to vector<8x1xf32>
    %98 = arith.divf %96, %97 : vector<8x1xf32>
    %99 = vector.broadcast %98 : vector<8x1xf32> to vector<8x102xf32>
    %100 = arith.subf %92, %99 : vector<8x102xf32>
    %101 = arith.mulf %100, %100 : vector<8x102xf32>
    %cst_45 = arith.constant dense<0.000000e+00> : vector<8xf32>
    %102 = vector.multi_reduction <add>, %101, %cst_45 [1] : vector<8x102xf32> to vector<8xf32>
    %103 = vector.shape_cast %102 : vector<8xf32> to vector<8x1xf32>
    %cst_46 = arith.constant 1.020000e+02 : f32
    %104 = vector.broadcast %cst_46 : f32 to vector<8x1xf32>
    %105 = arith.divf %103, %104 : vector<8x1xf32>
    %106 = vector.broadcast %98 : vector<8x1xf32> to vector<8x102xf32>
    %107 = arith.subf %92, %106 : vector<8x102xf32>
    %cst_47 = arith.constant 9.99999997E-7 : f32
    %108 = vector.broadcast %cst_47 : f32 to vector<8x1xf32>
    %109 = arith.addf %105, %108 : vector<8x1xf32>
    %110 = math.rsqrt %109 : vector<8x1xf32>
    %111 = vector.broadcast %110 : vector<8x1xf32> to vector<8x102xf32>
    %112 = arith.mulf %107, %111 : vector<8x102xf32>
    %113 = vector.broadcast %93 : vector<1x102xf32> to vector<8x102xf32>
    %114 = arith.mulf %112, %113 : vector<8x102xf32>
    %115 = vector.broadcast %94 : vector<1x102xf32> to vector<8x102xf32>
    %116 = arith.addf %114, %115 : vector<8x102xf32>
    %117 = vector.extract_strided_slice %24 {offsets = [8, 0], sizes = [8, 102], strides = [1, 1]} : vector<16x102xf32> to vector<8x102xf32>
    %118 = vector.extract_strided_slice %26 {offsets = [8, 0], sizes = [8, 16], strides = [1, 1]} : vector<16x16xf32> to vector<8x16xf32>
    %119 = vector.extract_strided_slice %28 {offsets = [8, 0], sizes = [8, 16], strides = [1, 1]} : vector<16x16xf32> to vector<8x16xf32>
    %120 = vector.extract_strided_slice %30 {offsets = [8, 0], sizes = [8, 16], strides = [1, 1]} : vector<16x16xf32> to vector<8x16xf32>
    %c1_48 = arith.constant 1 : index
    %c0_49 = arith.constant 0 : index
    %c0_50 = arith.constant 0 : index
    %121 = vector.load %arg3[%c1_48, %c0_49, %c0_50] : memref<2x1x8xf32, #tpu.memory_space<vmem>>, vector<1x1x8xf32>
    %122 = vector.shape_cast %121 : vector<1x1x8xf32> to vector<1x8xf32>
    %cst_51 = arith.constant 0.000000e+00 : f32
    %123 = vector.shape_cast %5 : vector<1x16xi1> to vector<1x16xi1>
    %124 = vector.broadcast %123 : vector<1x16xi1> to vector<8x16xi1>
    %125 = vector.broadcast %cst_51 : f32 to vector<8x16xf32>
    %126 = arith.select %124, %118, %125 : vector<8x16xi1>, vector<8x16xf32>
    %cst_52 = arith.constant dense<0.000000e+00> : vector<8x8xf32>
    %127 = tpu.matmul %126, %119, %cst_52 {dimension_numbers = #tpu.dot_dimension_numbers<[1], [1], [0], [0], [0, 0, 1, 0], [], []>} : vector<8x16xf32>, vector<8x16xf32>, vector<8x8xf32> -> vector<8x8xf32>
    %cst_53 = arith.constant 0.353553385 : f32
    %128 = vector.broadcast %cst_53 : f32 to vector<8x8xf32>
    %129 = arith.mulf %127, %128 : vector<8x8xf32>
    %130 = vector.broadcast %122 : vector<1x8xf32> to vector<8x8xf32>
    %131 = arith.addf %129, %130 : vector<8x8xf32>
    %cst_54 = arith.constant dense<0xFF800000> : vector<8xf32>
    %132 = vector.multi_reduction <maximumf>, %131, %cst_54 [1] : vector<8x8xf32> to vector<8xf32>
    %133 = vector.shape_cast %132 : vector<8xf32> to vector<8x1xf32>
    %134 = vector.broadcast %133 : vector<8x1xf32> to vector<8x8xf32>
    %135 = arith.subf %131, %134 : vector<8x8xf32>
    %136 = math.exp %135 : vector<8x8xf32>
    %cst_55 = arith.constant dense<0.000000e+00> : vector<8xf32>
    %137 = vector.multi_reduction <add>, %136, %cst_55 [1] : vector<8x8xf32> to vector<8xf32>
    %138 = vector.shape_cast %137 : vector<8xf32> to vector<8x1xf32>
    %139 = vector.broadcast %138 : vector<8x1xf32> to vector<8x8xf32>
    %140 = arith.divf %136, %139 : vector<8x8xf32>
    %c1_56 = arith.constant 1 : index
    %c0_57 = arith.constant 0 : index
    %c0_58 = arith.constant 0 : index
    %c0_59 = arith.constant 0 : index
    %141 = vector.load %arg35[%c1_56, %c0_57, %c0_58, %c0_59] : memref<2x2x8x8xf32, #tpu.memory_space<vmem>>, vector<1x1x8x8xf32>
    %142 = vector.shape_cast %141 : vector<1x1x8x8xf32> to vector<8x8xf32>
    %143 = vector.shape_cast %140 : vector<8x8xf32> to vector<1x1x8x8xf32>
    tpu.vector_store %arg35[%c1_56, %c0_57, %c0_58, %c0_59], %143 {strides = array<i32>} : memref<2x2x8x8xf32, #tpu.memory_space<vmem>>, vector<1x1x8x8xf32>,
    %cst_60 = arith.constant 0.000000e+00 : f32
    %144 = vector.shape_cast %5 : vector<1x16xi1> to vector<1x16xi1>
    %145 = vector.broadcast %144 : vector<1x16xi1> to vector<8x16xi1>
    %146 = vector.broadcast %cst_60 : f32 to vector<8x16xf32>
    %147 = arith.select %145, %120, %146 : vector<8x16xi1>, vector<8x16xf32>
    %cst_61 = arith.constant dense<0.000000e+00> : vector<8x16xf32>
    %148 = tpu.matmul %140, %147, %cst_61 {dimension_numbers = #tpu.dot_dimension_numbers<[1], [0], [0], [1], [0, 0, 1, 1], [], []>} : vector<8x8xf32>, vector<8x16xf32>, vector<8x16xf32> -> vector<8x16xf32>
    %cst_62 = arith.constant 0.000000e+00 : f32
    %149 = vector.shape_cast %10 : vector<1x16xi1> to vector<1x16xi1>
    %150 = vector.broadcast %149 : vector<1x16xi1> to vector<8x16xi1>
    %151 = vector.broadcast %cst_62 : f32 to vector<8x16xf32>
    %152 = arith.select %150, %118, %151 : vector<8x16xi1>, vector<8x16xf32>
    %cst_63 = arith.constant dense<0.000000e+00> : vector<8x8xf32>
    %153 = tpu.matmul %152, %119, %cst_63 {dimension_numbers = #tpu.dot_dimension_numbers<[1], [1], [0], [0], [0, 0, 1, 0], [], []>} : vector<8x16xf32>, vector<8x16xf32>, vector<8x8xf32> -> vector<8x8xf32>
    %cst_64 = arith.constant 0.353553385 : f32
    %154 = vector.broadcast %cst_64 : f32 to vector<8x8xf32>
    %155 = arith.mulf %153, %154 : vector<8x8xf32>
    %156 = vector.broadcast %122 : vector<1x8xf32> to vector<8x8xf32>
    %157 = arith.addf %155, %156 : vector<8x8xf32>
    %cst_65 = arith.constant dense<0xFF800000> : vector<8xf32>
    %158 = vector.multi_reduction <maximumf>, %157, %cst_65 [1] : vector<8x8xf32> to vector<8xf32>
    %159 = vector.shape_cast %158 : vector<8xf32> to vector<8x1xf32>
    %160 = vector.broadcast %159 : vector<8x1xf32> to vector<8x8xf32>
    %161 = arith.subf %157, %160 : vector<8x8xf32>
    %162 = math.exp %161 : vector<8x8xf32>
    %cst_66 = arith.constant dense<0.000000e+00> : vector<8xf32>
    %163 = vector.multi_reduction <add>, %162, %cst_66 [1] : vector<8x8xf32> to vector<8xf32>
    %164 = vector.shape_cast %163 : vector<8xf32> to vector<8x1xf32>
    %165 = vector.broadcast %164 : vector<8x1xf32> to vector<8x8xf32>
    %166 = arith.divf %162, %165 : vector<8x8xf32>
    %c1_67 = arith.constant 1 : index
    %c1_68 = arith.constant 1 : index
    %c0_69 = arith.constant 0 : index
    %c0_70 = arith.constant 0 : index
    %167 = vector.load %arg35[%c1_67, %c1_68, %c0_69, %c0_70] : memref<2x2x8x8xf32, #tpu.memory_space<vmem>>, vector<1x1x8x8xf32>
    %168 = vector.shape_cast %167 : vector<1x1x8x8xf32> to vector<8x8xf32>
    %169 = vector.shape_cast %166 : vector<8x8xf32> to vector<1x1x8x8xf32>
    tpu.vector_store %arg35[%c1_67, %c1_68, %c0_69, %c0_70], %169 {strides = array<i32>} : memref<2x2x8x8xf32, #tpu.memory_space<vmem>>, vector<1x1x8x8xf32>,
    %cst_71 = arith.constant 0.000000e+00 : f32
    %170 = vector.shape_cast %10 : vector<1x16xi1> to vector<1x16xi1>
    %171 = vector.broadcast %170 : vector<1x16xi1> to vector<8x16xi1>
    %172 = vector.broadcast %cst_71 : f32 to vector<8x16xf32>
    %173 = arith.select %171, %120, %172 : vector<8x16xi1>, vector<8x16xf32>
    %cst_72 = arith.constant dense<0.000000e+00> : vector<8x16xf32>
    %174 = tpu.matmul %166, %173, %cst_72 {dimension_numbers = #tpu.dot_dimension_numbers<[1], [0], [0], [1], [0, 0, 1, 1], [], []>} : vector<8x8xf32>, vector<8x16xf32>, vector<8x16xf32> -> vector<8x16xf32>
    %175 = arith.addf %148, %174 : vector<8x16xf32>
    %c0_73 = arith.constant 0 : index
    %c0_74 = arith.constant 0 : index
    %176 = vector.load %arg7[%c0_73, %c0_74] : memref<16x102xf32, #tpu.memory_space<vmem>>, vector<16x102xf32>
    %cst_75 = arith.constant dense<0.000000e+00> : vector<8x102xf32>
    %177 = tpu.matmul %175, %176, %cst_75 {dimension_numbers = #tpu.dot_dimension_numbers<[1], [0], [0], [1], [0, 0, 1, 1], [], []>} : vector<8x16xf32>, vector<16x102xf32>, vector<8x102xf32> -> vector<8x102xf32>
    %178 = arith.addf %177, %117 : vector<8x102xf32>
    %c0_76 = arith.constant 0 : index
    %c0_77 = arith.constant 0 : index
    %179 = vector.load %arg8[%c0_76, %c0_77] : memref<1x102xf32, #tpu.memory_space<vmem>>, vector<1x102xf32>
    %c0_78 = arith.constant 0 : index
    %c0_79 = arith.constant 0 : index
    %180 = vector.load %arg9[%c0_78, %c0_79] : memref<1x102xf32, #tpu.memory_space<vmem>>, vector<1x102xf32>
    %cst_80 = arith.constant dense<0.000000e+00> : vector<8xf32>
    %181 = vector.multi_reduction <add>, %178, %cst_80 [1] : vector<8x102xf32> to vector<8xf32>
    %182 = vector.shape_cast %181 : vector<8xf32> to vector<8x1xf32>
    %cst_81 = arith.constant 1.020000e+02 : f32
    %183 = vector.broadcast %cst_81 : f32 to vector<8x1xf32>
    %184 = arith.divf %182, %183 : vector<8x1xf32>
    %185 = vector.broadcast %184 : vector<8x1xf32> to vector<8x102xf32>
    %186 = arith.subf %178, %185 : vector<8x102xf32>
    %187 = arith.mulf %186, %186 : vector<8x102xf32>
    %cst_82 = arith.constant dense<0.000000e+00> : vector<8xf32>
    %188 = vector.multi_reduction <add>, %187, %cst_82 [1] : vector<8x102xf32> to vector<8xf32>
    %189 = vector.shape_cast %188 : vector<8xf32> to vector<8x1xf32>
    %cst_83 = arith.constant 1.020000e+02 : f32
    %190 = vector.broadcast %cst_83 : f32 to vector<8x1xf32>
    %191 = arith.divf %189, %190 : vector<8x1xf32>
    %192 = vector.broadcast %184 : vector<8x1xf32> to vector<8x102xf32>
    %193 = arith.subf %178, %192 : vector<8x102xf32>
    %cst_84 = arith.constant 9.99999997E-7 : f32
    %194 = vector.broadcast %cst_84 : f32 to vector<8x1xf32>
    %195 = arith.addf %191, %194 : vector<8x1xf32>
    %196 = math.rsqrt %195 : vector<8x1xf32>
    %197 = vector.broadcast %196 : vector<8x1xf32> to vector<8x102xf32>
    %198 = arith.mulf %193, %197 : vector<8x102xf32>
    %199 = vector.broadcast %179 : vector<1x102xf32> to vector<8x102xf32>
    %200 = arith.mulf %198, %199 : vector<8x102xf32>
    %201 = vector.broadcast %180 : vector<1x102xf32> to vector<8x102xf32>
    %202 = arith.addf %200, %201 : vector<8x102xf32>
    %203 = tpu.concatenate %116, %202 in 0 : vector<8x102xf32>, vector<8x102xf32> -> vector<16x102xf32>
    %c0_85 = arith.constant 0 : index
    %c0_86 = arith.constant 0 : index
    %204 = vector.load %arg10[%c0_85, %c0_86] : memref<102x64xf32, #tpu.memory_space<vmem>>, vector<102x64xf32>
    %cst_87 = arith.constant dense<0.000000e+00> : vector<16x64xf32>
    %205 = tpu.matmul %203, %204, %cst_87 {dimension_numbers = #tpu.dot_dimension_numbers<[1], [0], [0], [1], [0, 0, 1, 1], [], []>} : vector<16x102xf32>, vector<102x64xf32>, vector<16x64xf32> -> vector<16x64xf32>
    %c0_88 = arith.constant 0 : index
    %c0_89 = arith.constant 0 : index
    %206 = vector.load %arg11[%c0_88, %c0_89] : memref<1x64xf32, #tpu.memory_space<vmem>>, vector<1x64xf32>
    %207 = vector.broadcast %206 : vector<1x64xf32> to vector<16x64xf32>
    %208 = arith.addf %205, %207 : vector<16x64xf32>
    %cst_90 = arith.constant 0.000000e+00 : f32
    %209 = vector.broadcast %cst_90 : f32 to vector<16x64xf32>
    %210 = arith.maximumf %208, %209 : vector<16x64xf32>
    %c0_91 = arith.constant 0 : index
    %c0_92 = arith.constant 0 : index
    %211 = vector.load %arg12[%c0_91, %c0_92] : memref<64x102xf32, #tpu.memory_space<vmem>>, vector<64x102xf32>
    %cst_93 = arith.constant dense<0.000000e+00> : vector<16x102xf32>
    %212 = tpu.matmul %210, %211, %cst_93 {dimension_numbers = #tpu.dot_dimension_numbers<[1], [0], [0], [1], [0, 0, 1, 1], [], []>} : vector<16x64xf32>, vector<64x102xf32>, vector<16x102xf32> -> vector<16x102xf32>
    %c0_94 = arith.constant 0 : index
    %c0_95 = arith.constant 0 : index
    %213 = vector.load %arg13[%c0_94, %c0_95] : memref<1x102xf32, #tpu.memory_space<vmem>>, vector<1x102xf32>
    %214 = vector.broadcast %213 : vector<1x102xf32> to vector<16x102xf32>
    %215 = arith.addf %212, %214 : vector<16x102xf32>
    %216 = arith.addf %215, %203 : vector<16x102xf32>
    %c0_96 = arith.constant 0 : index
    %c0_97 = arith.constant 0 : index
    %217 = vector.load %arg14[%c0_96, %c0_97] : memref<1x102xf32, #tpu.memory_space<vmem>>, vector<1x102xf32>
    %c0_98 = arith.constant 0 : index
    %c0_99 = arith.constant 0 : index
    %218 = vector.load %arg15[%c0_98, %c0_99] : memref<1x102xf32, #tpu.memory_space<vmem>>, vector<1x102xf32>
    %cst_100 = arith.constant dense<0.000000e+00> : vector<16xf32>
    %219 = vector.multi_reduction <add>, %216, %cst_100 [1] : vector<16x102xf32> to vector<16xf32>
    %220 = vector.shape_cast %219 : vector<16xf32> to vector<16x1xf32>
    %cst_101 = arith.constant 1.020000e+02 : f32
    %221 = vector.broadcast %cst_101 : f32 to vector<16x1xf32>
    %222 = arith.divf %220, %221 : vector<16x1xf32>
    %223 = vector.broadcast %222 : vector<16x1xf32> to vector<16x102xf32>
    %224 = arith.subf %216, %223 : vector<16x102xf32>
    %225 = arith.mulf %224, %224 : vector<16x102xf32>
    %cst_102 = arith.constant dense<0.000000e+00> : vector<16xf32>
    %226 = vector.multi_reduction <add>, %225, %cst_102 [1] : vector<16x102xf32> to vector<16xf32>
    %227 = vector.shape_cast %226 : vector<16xf32> to vector<16x1xf32>
    %cst_103 = arith.constant 1.020000e+02 : f32
    %228 = vector.broadcast %cst_103 : f32 to vector<16x1xf32>
    %229 = arith.divf %227, %228 : vector<16x1xf32>
    %230 = vector.broadcast %222 : vector<16x1xf32> to vector<16x102xf32>
    %231 = arith.subf %216, %230 : vector<16x102xf32>
    %cst_104 = arith.constant 9.99999997E-7 : f32
    %232 = vector.broadcast %cst_104 : f32 to vector<16x1xf32>
    %233 = arith.addf %229, %232 : vector<16x1xf32>
    %234 = math.rsqrt %233 : vector<16x1xf32>
    %235 = vector.broadcast %234 : vector<16x1xf32> to vector<16x102xf32>
    %236 = arith.mulf %231, %235 : vector<16x102xf32>
    %237 = vector.broadcast %217 : vector<1x102xf32> to vector<16x102xf32>
    %238 = arith.mulf %236, %237 : vector<16x102xf32>
    %239 = vector.broadcast %218 : vector<1x102xf32> to vector<16x102xf32>
    %240 = arith.addf %238, %239 : vector<16x102xf32>
    %c0_105 = arith.constant 0 : index
    %c0_106 = arith.constant 0 : index
    %241 = vector.load %arg2[%c0_105, %c0_106] : memref<16x102xf32, #tpu.memory_space<vmem>>, vector<16x102xf32>
    %242 = arith.addf %240, %241 : vector<16x102xf32>
    %c0_107 = arith.constant 0 : index
    %c0_108 = arith.constant 0 : index
    %243 = vector.load %arg16[%c0_107, %c0_108] : memref<4x38xf32, #tpu.memory_space<vmem>>, vector<4x38xf32>
    %c0_109 = arith.constant 0 : index
    %c0_110 = arith.constant 0 : index
    %244 = vector.load %arg18[%c0_109, %c0_110] : memref<38x38xf32, #tpu.memory_space<vmem>>, vector<38x38xf32>
    %c0_111 = arith.constant 0 : index
    %c0_112 = arith.constant 0 : index
    %245 = vector.load %arg21[%c0_111, %c0_112] : memref<38x16xf32, #tpu.memory_space<vmem>>, vector<38x16xf32>
    %c0_113 = arith.constant 0 : index
    %c0_114 = arith.constant 0 : index
    %246 = vector.load %arg32[%c0_113, %c0_114] : memref<38x38xf32, #tpu.memory_space<vmem>>, vector<38x38xf32>
    %247 = vector.extract_strided_slice %242 {offsets = [0, 0], sizes = [8, 102], strides = [1, 1]} : vector<16x102xf32> to vector<8x102xf32>
    %c0_115 = arith.constant 0 : index
    %c0_116 = arith.constant 0 : index
    %c0_117 = arith.constant 0 : index
    %248 = vector.load %arg3[%c0_115, %c0_116, %c0_117] : memref<2x1x8xf32, #tpu.memory_space<vmem>>, vector<1x1x8xf32>
    %249 = vector.shape_cast %248 : vector<1x1x8xf32> to vector<1x8xf32>
    %c0_118 = arith.constant 0 : index
    %c0_119 = arith.constant 0 : index
    %250 = vector.load %arg22[%c0_118, %c0_119] : memref<102x16xf32, #tpu.memory_space<vmem>>, vector<102x16xf32>
    %cst_120 = arith.constant dense<0.000000e+00> : vector<8x16xf32>
    %251 = tpu.matmul %247, %250, %cst_120 {dimension_numbers = #tpu.dot_dimension_numbers<[1], [0], [0], [1], [0, 0, 1, 1], [], []>} : vector<8x102xf32>, vector<102x16xf32>, vector<8x16xf32> -> vector<8x16xf32>
    %cst_121 = arith.constant 0.000000e+00 : f32
    %252 = vector.shape_cast %5 : vector<1x16xi1> to vector<1x16xi1>
    %253 = vector.broadcast %252 : vector<1x16xi1> to vector<8x16xi1>
    %254 = vector.broadcast %cst_121 : f32 to vector<8x16xf32>
    %255 = arith.select %253, %251, %254 : vector<8x16xi1>, vector<8x16xf32>
    %cst_122 = arith.constant 0.000000e+00 : f32
    %256 = vector.shape_cast %10 : vector<1x16xi1> to vector<1x16xi1>
    %257 = vector.broadcast %256 : vector<1x16xi1> to vector<8x16xi1>
    %258 = vector.broadcast %cst_122 : f32 to vector<8x16xf32>
    %259 = arith.select %257, %251, %258 : vector<8x16xi1>, vector<8x16xf32>
    %c0_123 = arith.constant 0 : index
    %c0_124 = arith.constant 0 : index
    %c0_125 = arith.constant 0 : index
    %260 = vector.load %arg23[%c0_123, %c0_124, %c0_125] : memref<2x102x38xf32, #tpu.memory_space<vmem>>, vector<1x102x38xf32>
    %261 = vector.shape_cast %260 : vector<1x102x38xf32> to vector<102x38xf32>
    %cst_126 = arith.constant dense<0.000000e+00> : vector<8x38xf32>
    %262 = tpu.matmul %247, %261, %cst_126 {dimension_numbers = #tpu.dot_dimension_numbers<[1], [0], [0], [1], [0, 0, 1, 1], [], []>} : vector<8x102xf32>, vector<102x38xf32>, vector<8x38xf32> -> vector<8x38xf32>
    %c1_127 = arith.constant 1 : index
    %c0_128 = arith.constant 0 : index
    %c0_129 = arith.constant 0 : index
    %263 = vector.load %arg23[%c1_127, %c0_128, %c0_129] : memref<2x102x38xf32, #tpu.memory_space<vmem>>, vector<1x102x38xf32>
    %264 = vector.shape_cast %263 : vector<1x102x38xf32> to vector<102x38xf32>
    %cst_130 = arith.constant dense<0.000000e+00> : vector<8x38xf32>
    %265 = tpu.matmul %247, %264, %cst_130 {dimension_numbers = #tpu.dot_dimension_numbers<[1], [0], [0], [1], [0, 0, 1, 1], [], []>} : vector<8x102xf32>, vector<102x38xf32>, vector<8x38xf32> -> vector<8x38xf32>
    %c0_131 = arith.constant 0 : index
    %c0_132 = arith.constant 0 : index
    %c0_133 = arith.constant 0 : index
    %266 = vector.load %arg17[%c0_131, %c0_132, %c0_133] : memref<2x1x38xf32, #tpu.memory_space<vmem>>, vector<1x1x38xf32>
    %267 = vector.shape_cast %266 : vector<1x1x38xf32> to vector<1x38xf32>
    %268 = vector.extract_strided_slice %267 {offsets = [0, 0], sizes = [1, 19], strides = [1, 1]} : vector<1x38xf32> to vector<1x19xf32>
    %c0_134 = arith.constant 0 : index
    %c0_135 = arith.constant 0 : index
    %c0_136 = arith.constant 0 : index
    %269 = vector.load %arg33[%c0_134, %c0_135, %c0_136] : memref<2x5x19xf32, #tpu.memory_space<vmem>>, vector<1x1x19xf32>
    %270 = vector.shape_cast %269 : vector<1x1x19xf32> to vector<1x19xf32>
    %271 = vector.shape_cast %268 : vector<1x19xf32> to vector<1x1x19xf32>
    tpu.vector_store %arg33[%c0_134, %c0_135, %c0_136], %271 {strides = array<i32>} : memref<2x5x19xf32, #tpu.memory_space<vmem>>, vector<1x1x19xf32>,
    %272 = vector.extract_strided_slice %243 {offsets = [0, 0], sizes = [1, 38], strides = [1, 1]} : vector<4x38xf32> to vector<1x38xf32>
    %273 = arith.addf %267, %272 : vector<1x38xf32>
    %cst_137 = arith.constant dense<0.000000e+00> : vector<1x38xf32>
    %274 = tpu.matmul %273, %244, %cst_137 {dimension_numbers = #tpu.dot_dimension_numbers<[1], [0], [0], [1], [0, 0, 1, 1], [], []>} : vector<1x38xf32>, vector<38x38xf32>, vector<1x38xf32> -> vector<1x38xf32>
    %275 = arith.addf %274, %273 : vector<1x38xf32>
    %c0_138 = arith.constant 0 : index
    %c0_139 = arith.constant 0 : index
    %276 = vector.load %arg19[%c0_138, %c0_139] : memref<1x38xf32, #tpu.memory_space<vmem>>, vector<1x38xf32>
    %c0_140 = arith.constant 0 : index
    %c0_141 = arith.constant 0 : index
    %277 = vector.load %arg20[%c0_140, %c0_141] : memref<1x38xf32, #tpu.memory_space<vmem>>, vector<1x38xf32>
    %cst_142 = arith.constant dense<0.000000e+00> : vector<1xf32>
    %278 = vector.multi_reduction <add>, %275, %cst_142 [1] : vector<1x38xf32> to vector<1xf32>
    %279 = vector.shape_cast %278 : vector<1xf32> to vector<1x1xf32>
    %cst_143 = arith.constant 3.800000e+01 : f32
    %280 = vector.broadcast %cst_143 : f32 to vector<1x1xf32>
    %281 = arith.divf %279, %280 : vector<1x1xf32>
    %282 = vector.broadcast %281 : vector<1x1xf32> to vector<1x38xf32>
    %283 = arith.subf %275, %282 : vector<1x38xf32>
    %284 = arith.mulf %283, %283 : vector<1x38xf32>
    %cst_144 = arith.constant dense<0.000000e+00> : vector<1xf32>
    %285 = vector.multi_reduction <add>, %284, %cst_144 [1] : vector<1x38xf32> to vector<1xf32>
    %286 = vector.shape_cast %285 : vector<1xf32> to vector<1x1xf32>
    %cst_145 = arith.constant 3.800000e+01 : f32
    %287 = vector.broadcast %cst_145 : f32 to vector<1x1xf32>
    %288 = arith.divf %286, %287 : vector<1x1xf32>
    %289 = vector.broadcast %281 : vector<1x1xf32> to vector<1x38xf32>
    %290 = arith.subf %275, %289 : vector<1x38xf32>
    %cst_146 = arith.constant 9.99999997E-7 : f32
    %291 = vector.broadcast %cst_146 : f32 to vector<1x1xf32>
    %292 = arith.addf %288, %291 : vector<1x1xf32>
    %293 = math.rsqrt %292 : vector<1x1xf32>
    %294 = vector.broadcast %293 : vector<1x1xf32> to vector<1x38xf32>
    %295 = arith.mulf %290, %294 : vector<1x38xf32>
    %296 = arith.mulf %295, %276 : vector<1x38xf32>
    %297 = arith.addf %296, %277 : vector<1x38xf32>
    %cst_147 = arith.constant dense<0.000000e+00> : vector<1x16xf32>
    %298 = tpu.matmul %297, %245, %cst_147 {dimension_numbers = #tpu.dot_dimension_numbers<[1], [0], [0], [1], [0, 0, 1, 1], [], []>} : vector<1x38xf32>, vector<38x16xf32>, vector<1x16xf32> -> vector<1x16xf32>
    %cst_148 = arith.constant dense<0.000000e+00> : vector<1x8xf32>
    %299 = tpu.matmul %298, %255, %cst_148 {dimension_numbers = #tpu.dot_dimension_numbers<[1], [1], [0], [0], [0, 0, 1, 0], [], []>} : vector<1x16xf32>, vector<8x16xf32>, vector<1x8xf32> -> vector<1x8xf32>
    %cst_149 = arith.constant 0.353553385 : f32
    %300 = vector.broadcast %cst_149 : f32 to vector<1x8xf32>
    %301 = arith.mulf %299, %300 : vector<1x8xf32>
    %302 = arith.addf %301, %249 : vector<1x8xf32>
    %cst_150 = arith.constant dense<0xFF800000> : vector<1xf32>
    %303 = vector.multi_reduction <maximumf>, %302, %cst_150 [1] : vector<1x8xf32> to vector<1xf32>
    %304 = vector.shape_cast %303 : vector<1xf32> to vector<1x1xf32>
    %305 = vector.broadcast %304 : vector<1x1xf32> to vector<1x8xf32>
    %306 = arith.subf %302, %305 : vector<1x8xf32>
    %307 = math.exp %306 : vector<1x8xf32>
    %cst_151 = arith.constant dense<0.000000e+00> : vector<1xf32>
    %308 = vector.multi_reduction <add>, %307, %cst_151 [1] : vector<1x8xf32> to vector<1xf32>
    %309 = vector.shape_cast %308 : vector<1xf32> to vector<1x1xf32>
    %310 = vector.broadcast %309 : vector<1x1xf32> to vector<1x8xf32>
    %311 = arith.divf %307, %310 : vector<1x8xf32>
    %c0_152 = arith.constant 0 : index
    %c0_153 = arith.constant 0 : index
    %c0_154 = arith.constant 0 : index
    %c0_155 = arith.constant 0 : index
    %312 = vector.load %arg34[%c0_152, %c0_153, %c0_154, %c0_155] : memref<2x2x4x8xf32, #tpu.memory_space<vmem>>, vector<1x1x1x8xf32>
    %313 = vector.shape_cast %312 : vector<1x1x1x8xf32> to vector<1x8xf32>
    %314 = vector.shape_cast %311 : vector<1x8xf32> to vector<1x1x1x8xf32>
    tpu.vector_store %arg34[%c0_152, %c0_153, %c0_154, %c0_155], %314 {strides = array<i32>} : memref<2x2x4x8xf32, #tpu.memory_space<vmem>>, vector<1x1x1x8xf32>,
    %cst_156 = arith.constant dense<0.000000e+00> : vector<1x38xf32>
    %315 = tpu.matmul %311, %262, %cst_156 {dimension_numbers = #tpu.dot_dimension_numbers<[1], [0], [0], [1], [0, 0, 1, 1], [], []>} : vector<1x8xf32>, vector<8x38xf32>, vector<1x38xf32> -> vector<1x38xf32>
    %cst_157 = arith.constant dense<0.000000e+00> : vector<1x8xf32>
    %316 = tpu.matmul %298, %259, %cst_157 {dimension_numbers = #tpu.dot_dimension_numbers<[1], [1], [0], [0], [0, 0, 1, 0], [], []>} : vector<1x16xf32>, vector<8x16xf32>, vector<1x8xf32> -> vector<1x8xf32>
    %cst_158 = arith.constant 0.353553385 : f32
    %317 = vector.broadcast %cst_158 : f32 to vector<1x8xf32>
    %318 = arith.mulf %316, %317 : vector<1x8xf32>
    %319 = arith.addf %318, %249 : vector<1x8xf32>
    %cst_159 = arith.constant dense<0xFF800000> : vector<1xf32>
    %320 = vector.multi_reduction <maximumf>, %319, %cst_159 [1] : vector<1x8xf32> to vector<1xf32>
    %321 = vector.shape_cast %320 : vector<1xf32> to vector<1x1xf32>
    %322 = vector.broadcast %321 : vector<1x1xf32> to vector<1x8xf32>
    %323 = arith.subf %319, %322 : vector<1x8xf32>
    %324 = math.exp %323 : vector<1x8xf32>
    %cst_160 = arith.constant dense<0.000000e+00> : vector<1xf32>
    %325 = vector.multi_reduction <add>, %324, %cst_160 [1] : vector<1x8xf32> to vector<1xf32>
    %326 = vector.shape_cast %325 : vector<1xf32> to vector<1x1xf32>
    %327 = vector.broadcast %326 : vector<1x1xf32> to vector<1x8xf32>
    %328 = arith.divf %324, %327 : vector<1x8xf32>
    %c0_161 = arith.constant 0 : index
    %c1_162 = arith.constant 1 : index
    %c0_163 = arith.constant 0 : index
    %c0_164 = arith.constant 0 : index
    %329 = vector.load %arg34[%c0_161, %c1_162, %c0_163, %c0_164] : memref<2x2x4x8xf32, #tpu.memory_space<vmem>>, vector<1x1x1x8xf32>
    %330 = vector.shape_cast %329 : vector<1x1x1x8xf32> to vector<1x8xf32>
    %331 = vector.shape_cast %328 : vector<1x8xf32> to vector<1x1x1x8xf32>
    tpu.vector_store %arg34[%c0_161, %c1_162, %c0_163, %c0_164], %331 {strides = array<i32>} : memref<2x2x4x8xf32, #tpu.memory_space<vmem>>, vector<1x1x1x8xf32>,
    %cst_165 = arith.constant dense<0.000000e+00> : vector<1x38xf32>
    %332 = tpu.matmul %328, %265, %cst_165 {dimension_numbers = #tpu.dot_dimension_numbers<[1], [0], [0], [1], [0, 0, 1, 1], [], []>} : vector<1x8xf32>, vector<8x38xf32>, vector<1x38xf32> -> vector<1x38xf32>
    %333 = arith.addf %315, %332 : vector<1x38xf32>
    %334 = arith.addf %333, %297 : vector<1x38xf32>
    %c0_166 = arith.constant 0 : index
    %c0_167 = arith.constant 0 : index
    %335 = vector.load %arg24[%c0_166, %c0_167] : memref<1x38xf32, #tpu.memory_space<vmem>>, vector<1x38xf32>
    %c0_168 = arith.constant 0 : index
    %c0_169 = arith.constant 0 : index
    %336 = vector.load %arg25[%c0_168, %c0_169] : memref<1x38xf32, #tpu.memory_space<vmem>>, vector<1x38xf32>
    %cst_170 = arith.constant dense<0.000000e+00> : vector<1xf32>
    %337 = vector.multi_reduction <add>, %334, %cst_170 [1] : vector<1x38xf32> to vector<1xf32>
    %338 = vector.shape_cast %337 : vector<1xf32> to vector<1x1xf32>
    %cst_171 = arith.constant 3.800000e+01 : f32
    %339 = vector.broadcast %cst_171 : f32 to vector<1x1xf32>
    %340 = arith.divf %338, %339 : vector<1x1xf32>
    %341 = vector.broadcast %340 : vector<1x1xf32> to vector<1x38xf32>
    %342 = arith.subf %334, %341 : vector<1x38xf32>
    %343 = arith.mulf %342, %342 : vector<1x38xf32>
    %cst_172 = arith.constant dense<0.000000e+00> : vector<1xf32>
    %344 = vector.multi_reduction <add>, %343, %cst_172 [1] : vector<1x38xf32> to vector<1xf32>
    %345 = vector.shape_cast %344 : vector<1xf32> to vector<1x1xf32>
    %cst_173 = arith.constant 3.800000e+01 : f32
    %346 = vector.broadcast %cst_173 : f32 to vector<1x1xf32>
    %347 = arith.divf %345, %346 : vector<1x1xf32>
    %348 = vector.broadcast %340 : vector<1x1xf32> to vector<1x38xf32>
    %349 = arith.subf %334, %348 : vector<1x38xf32>
    %cst_174 = arith.constant 9.99999997E-7 : f32
    %350 = vector.broadcast %cst_174 : f32 to vector<1x1xf32>
    %351 = arith.addf %347, %350 : vector<1x1xf32>
    %352 = math.rsqrt %351 : vector<1x1xf32>
    %353 = vector.broadcast %352 : vector<1x1xf32> to vector<1x38xf32>
    %354 = arith.mulf %349, %353 : vector<1x38xf32>
    %355 = arith.mulf %354, %335 : vector<1x38xf32>
    %356 = arith.addf %355, %336 : vector<1x38xf32>
    %c0_175 = arith.constant 0 : index
    %c0_176 = arith.constant 0 : index
    %357 = vector.load %arg26[%c0_175, %c0_176] : memref<38x64xf32, #tpu.memory_space<vmem>>, vector<38x64xf32>
    %cst_177 = arith.constant dense<0.000000e+00> : vector<1x64xf32>
    %358 = tpu.matmul %356, %357, %cst_177 {dimension_numbers = #tpu.dot_dimension_numbers<[1], [0], [0], [1], [0, 0, 1, 1], [], []>} : vector<1x38xf32>, vector<38x64xf32>, vector<1x64xf32> -> vector<1x64xf32>
    %c0_178 = arith.constant 0 : index
    %c0_179 = arith.constant 0 : index
    %359 = vector.load %arg27[%c0_178, %c0_179] : memref<1x64xf32, #tpu.memory_space<vmem>>, vector<1x64xf32>
    %360 = arith.addf %358, %359 : vector<1x64xf32>
    %cst_180 = arith.constant 0.000000e+00 : f32
    %361 = vector.broadcast %cst_180 : f32 to vector<1x64xf32>
    %362 = arith.maximumf %360, %361 : vector<1x64xf32>
    %c0_181 = arith.constant 0 : index
    %c0_182 = arith.constant 0 : index
    %363 = vector.load %arg28[%c0_181, %c0_182] : memref<64x38xf32, #tpu.memory_space<vmem>>, vector<64x38xf32>
    %cst_183 = arith.constant dense<0.000000e+00> : vector<1x38xf32>
    %364 = tpu.matmul %362, %363, %cst_183 {dimension_numbers = #tpu.dot_dimension_numbers<[1], [0], [0], [1], [0, 0, 1, 1], [], []>} : vector<1x64xf32>, vector<64x38xf32>, vector<1x38xf32> -> vector<1x38xf32>
    %c0_184 = arith.constant 0 : index
    %c0_185 = arith.constant 0 : index
    %365 = vector.load %arg29[%c0_184, %c0_185] : memref<1x38xf32, #tpu.memory_space<vmem>>, vector<1x38xf32>
    %366 = arith.addf %364, %365 : vector<1x38xf32>
    %367 = arith.addf %366, %356 : vector<1x38xf32>
    %c0_186 = arith.constant 0 : index
    %c0_187 = arith.constant 0 : index
    %368 = vector.load %arg30[%c0_186, %c0_187] : memref<1x38xf32, #tpu.memory_space<vmem>>, vector<1x38xf32>
    %c0_188 = arith.constant 0 : index
    %c0_189 = arith.constant 0 : index
    %369 = vector.load %arg31[%c0_188, %c0_189] : memref<1x38xf32, #tpu.memory_space<vmem>>, vector<1x38xf32>
    %cst_190 = arith.constant dense<0.000000e+00> : vector<1xf32>
    %370 = vector.multi_reduction <add>, %367, %cst_190 [1] : vector<1x38xf32> to vector<1xf32>
    %371 = vector.shape_cast %370 : vector<1xf32> to vector<1x1xf32>
    %cst_191 = arith.constant 3.800000e+01 : f32
    %372 = vector.broadcast %cst_191 : f32 to vector<1x1xf32>
    %373 = arith.divf %371, %372 : vector<1x1xf32>
    %374 = vector.broadcast %373 : vector<1x1xf32> to vector<1x38xf32>
    %375 = arith.subf %367, %374 : vector<1x38xf32>
    %376 = arith.mulf %375, %375 : vector<1x38xf32>
    %cst_192 = arith.constant dense<0.000000e+00> : vector<1xf32>
    %377 = vector.multi_reduction <add>, %376, %cst_192 [1] : vector<1x38xf32> to vector<1xf32>
    %378 = vector.shape_cast %377 : vector<1xf32> to vector<1x1xf32>
    %cst_193 = arith.constant 3.800000e+01 : f32
    %379 = vector.broadcast %cst_193 : f32 to vector<1x1xf32>
    %380 = arith.divf %378, %379 : vector<1x1xf32>
    %381 = vector.broadcast %373 : vector<1x1xf32> to vector<1x38xf32>
    %382 = arith.subf %367, %381 : vector<1x38xf32>
    %cst_194 = arith.constant 9.99999997E-7 : f32
    %383 = vector.broadcast %cst_194 : f32 to vector<1x1xf32>
    %384 = arith.addf %380, %383 : vector<1x1xf32>
    %385 = math.rsqrt %384 : vector<1x1xf32>
    %386 = vector.broadcast %385 : vector<1x1xf32> to vector<1x38xf32>
    %387 = arith.mulf %382, %386 : vector<1x38xf32>
    %388 = arith.mulf %387, %368 : vector<1x38xf32>
    %389 = arith.addf %388, %369 : vector<1x38xf32>
    %cst_195 = arith.constant dense<0.000000e+00> : vector<1x38xf32>
    %390 = tpu.matmul %389, %246, %cst_195 {dimension_numbers = #tpu.dot_dimension_numbers<[1], [0], [0], [1], [0, 0, 1, 1], [], []>} : vector<1x38xf32>, vector<38x38xf32>, vector<1x38xf32> -> vector<1x38xf32>
    %391 = arith.addf %390, %267 : vector<1x38xf32>
    %cst_196 = arith.constant -1.000000e+30 : f32
    %392 = vector.broadcast %cst_196 : f32 to vector<1x38xf32>
    %393 = arith.select %13, %391, %392 : vector<1x38xi1>, vector<1x38xf32>
    %cst_197 = arith.constant dense<0xFF800000> : vector<1xf32>
    %394 = vector.multi_reduction <maximumf>, %393, %cst_197 [1] : vector<1x38xf32> to vector<1xf32>
    %395 = vector.shape_cast %394 : vector<1xf32> to vector<1x1xf32>
    %396 = vector.broadcast %395 : vector<1x1xf32> to vector<1x38xf32>
    %397 = arith.subf %393, %396 : vector<1x38xf32>
    %398 = math.exp %397 : vector<1x38xf32>
    %cst_198 = arith.constant dense<0.000000e+00> : vector<1xf32>
    %399 = vector.multi_reduction <add>, %398, %cst_198 [1] : vector<1x38xf32> to vector<1xf32>
    %400 = vector.shape_cast %399 : vector<1xf32> to vector<1x1xf32>
    %401 = vector.broadcast %400 : vector<1x1xf32> to vector<1x38xf32>
    %402 = arith.divf %398, %401 : vector<1x38xf32>
    %cst_199 = arith.constant 0.000000e+00 : f32
    %403 = vector.broadcast %cst_199 : f32 to vector<1x38xf32>
    %404 = arith.select %13, %402, %403 : vector<1x38xi1>, vector<1x38xf32>
    %cst_200 = arith.constant -1.000000e+30 : f32
    %405 = vector.broadcast %cst_200 : f32 to vector<1x38xf32>
    %406 = arith.select %18, %391, %405 : vector<1x38xi1>, vector<1x38xf32>
    %cst_201 = arith.constant dense<0xFF800000> : vector<1xf32>
    %407 = vector.multi_reduction <maximumf>, %406, %cst_201 [1] : vector<1x38xf32> to vector<1xf32>
    %408 = vector.shape_cast %407 : vector<1xf32> to vector<1x1xf32>
    %409 = vector.broadcast %408 : vector<1x1xf32> to vector<1x38xf32>
    %410 = arith.subf %406, %409 : vector<1x38xf32>
    %411 = math.exp %410 : vector<1x38xf32>
    %cst_202 = arith.constant dense<0.000000e+00> : vector<1xf32>
    %412 = vector.multi_reduction <add>, %411, %cst_202 [1] : vector<1x38xf32> to vector<1xf32>
    %413 = vector.shape_cast %412 : vector<1xf32> to vector<1x1xf32>
    %414 = vector.broadcast %413 : vector<1x1xf32> to vector<1x38xf32>
    %415 = arith.divf %411, %414 : vector<1x38xf32>
    %cst_203 = arith.constant 0.000000e+00 : f32
    %416 = vector.broadcast %cst_203 : f32 to vector<1x38xf32>
    %417 = arith.select %18, %415, %416 : vector<1x38xi1>, vector<1x38xf32>
    %418 = arith.addf %404, %417 : vector<1x38xf32>
    %cst_204 = arith.constant 0.000000e+00 : f32
    %419 = vector.broadcast %cst_204 : f32 to vector<1x38xf32>
    %420 = arith.subf %419, %391 : vector<1x38xf32>
    %421 = math.exp %420 : vector<1x38xf32>
    %cst_205 = arith.constant 1.000000e+00 : f32
    %422 = vector.broadcast %cst_205 : f32 to vector<1x38xf32>
    %423 = arith.addf %422, %421 : vector<1x38xf32>
    %cst_206 = arith.constant 1.000000e+00 : f32
    %424 = vector.broadcast %cst_206 : f32 to vector<1x38xf32>
    %425 = arith.divf %424, %423 : vector<1x38xf32>
    %cst_207 = arith.constant 0.000000e+00 : f32
    %426 = vector.broadcast %cst_207 : f32 to vector<1x38xf32>
    %427 = arith.select %23, %425, %426 : vector<1x38xi1>, vector<1x38xf32>
    %428 = arith.addf %418, %427 : vector<1x38xf32>
    %429 = vector.extract_strided_slice %428 {offsets = [0, 0], sizes = [1, 19], strides = [1, 1]} : vector<1x38xf32> to vector<1x19xf32>
    %c0_208 = arith.constant 0 : index
    %c1_209 = arith.constant 1 : index
    %c0_210 = arith.constant 0 : index
    %430 = vector.load %arg33[%c0_208, %c1_209, %c0_210] : memref<2x5x19xf32, #tpu.memory_space<vmem>>, vector<1x1x19xf32>
    %431 = vector.shape_cast %430 : vector<1x1x19xf32> to vector<1x19xf32>
    %432 = vector.shape_cast %429 : vector<1x19xf32> to vector<1x1x19xf32>
    tpu.vector_store %arg33[%c0_208, %c1_209, %c0_210], %432 {strides = array<i32>} : memref<2x5x19xf32, #tpu.memory_space<vmem>>, vector<1x1x19xf32>,
    %433 = vector.extract_strided_slice %243 {offsets = [1, 0], sizes = [1, 38], strides = [1, 1]} : vector<4x38xf32> to vector<1x38xf32>
    %434 = arith.addf %428, %433 : vector<1x38xf32>
    %cst_211 = arith.constant dense<0.000000e+00> : vector<1x38xf32>
    %435 = tpu.matmul %434, %244, %cst_211 {dimension_numbers = #tpu.dot_dimension_numbers<[1], [0], [0], [1], [0, 0, 1, 1], [], []>} : vector<1x38xf32>, vector<38x38xf32>, vector<1x38xf32> -> vector<1x38xf32>
    %436 = arith.addf %435, %434 : vector<1x38xf32>
    %c0_212 = arith.constant 0 : index
    %c0_213 = arith.constant 0 : index
    %437 = vector.load %arg19[%c0_212, %c0_213] : memref<1x38xf32, #tpu.memory_space<vmem>>, vector<1x38xf32>
    %c0_214 = arith.constant 0 : index
    %c0_215 = arith.constant 0 : index
    %438 = vector.load %arg20[%c0_214, %c0_215] : memref<1x38xf32, #tpu.memory_space<vmem>>, vector<1x38xf32>
    %cst_216 = arith.constant dense<0.000000e+00> : vector<1xf32>
    %439 = vector.multi_reduction <add>, %436, %cst_216 [1] : vector<1x38xf32> to vector<1xf32>
    %440 = vector.shape_cast %439 : vector<1xf32> to vector<1x1xf32>
    %cst_217 = arith.constant 3.800000e+01 : f32
    %441 = vector.broadcast %cst_217 : f32 to vector<1x1xf32>
    %442 = arith.divf %440, %441 : vector<1x1xf32>
    %443 = vector.broadcast %442 : vector<1x1xf32> to vector<1x38xf32>
    %444 = arith.subf %436, %443 : vector<1x38xf32>
    %445 = arith.mulf %444, %444 : vector<1x38xf32>
    %cst_218 = arith.constant dense<0.000000e+00> : vector<1xf32>
    %446 = vector.multi_reduction <add>, %445, %cst_218 [1] : vector<1x38xf32> to vector<1xf32>
    %447 = vector.shape_cast %446 : vector<1xf32> to vector<1x1xf32>
    %cst_219 = arith.constant 3.800000e+01 : f32
    %448 = vector.broadcast %cst_219 : f32 to vector<1x1xf32>
    %449 = arith.divf %447, %448 : vector<1x1xf32>
    %450 = vector.broadcast %442 : vector<1x1xf32> to vector<1x38xf32>
    %451 = arith.subf %436, %450 : vector<1x38xf32>
    %cst_220 = arith.constant 9.99999997E-7 : f32
    %452 = vector.broadcast %cst_220 : f32 to vector<1x1xf32>
    %453 = arith.addf %449, %452 : vector<1x1xf32>
    %454 = math.rsqrt %453 : vector<1x1xf32>
    %455 = vector.broadcast %454 : vector<1x1xf32> to vector<1x38xf32>
    %456 = arith.mulf %451, %455 : vector<1x38xf32>
    %457 = arith.mulf %456, %437 : vector<1x38xf32>
    %458 = arith.addf %457, %438 : vector<1x38xf32>
    %cst_221 = arith.constant dense<0.000000e+00> : vector<1x16xf32>
    %459 = tpu.matmul %458, %245, %cst_221 {dimension_numbers = #tpu.dot_dimension_numbers<[1], [0], [0], [1], [0, 0, 1, 1], [], []>} : vector<1x38xf32>, vector<38x16xf32>, vector<1x16xf32> -> vector<1x16xf32>
    %cst_222 = arith.constant dense<0.000000e+00> : vector<1x8xf32>
    %460 = tpu.matmul %459, %255, %cst_222 {dimension_numbers = #tpu.dot_dimension_numbers<[1], [1], [0], [0], [0, 0, 1, 0], [], []>} : vector<1x16xf32>, vector<8x16xf32>, vector<1x8xf32> -> vector<1x8xf32>
    %cst_223 = arith.constant 0.353553385 : f32
    %461 = vector.broadcast %cst_223 : f32 to vector<1x8xf32>
    %462 = arith.mulf %460, %461 : vector<1x8xf32>
    %463 = arith.addf %462, %249 : vector<1x8xf32>
    %cst_224 = arith.constant dense<0xFF800000> : vector<1xf32>
    %464 = vector.multi_reduction <maximumf>, %463, %cst_224 [1] : vector<1x8xf32> to vector<1xf32>
    %465 = vector.shape_cast %464 : vector<1xf32> to vector<1x1xf32>
    %466 = vector.broadcast %465 : vector<1x1xf32> to vector<1x8xf32>
    %467 = arith.subf %463, %466 : vector<1x8xf32>
    %468 = math.exp %467 : vector<1x8xf32>
    %cst_225 = arith.constant dense<0.000000e+00> : vector<1xf32>
    %469 = vector.multi_reduction <add>, %468, %cst_225 [1] : vector<1x8xf32> to vector<1xf32>
    %470 = vector.shape_cast %469 : vector<1xf32> to vector<1x1xf32>
    %471 = vector.broadcast %470 : vector<1x1xf32> to vector<1x8xf32>
    %472 = arith.divf %468, %471 : vector<1x8xf32>
    %c0_226 = arith.constant 0 : index
    %c0_227 = arith.constant 0 : index
    %c1_228 = arith.constant 1 : index
    %c0_229 = arith.constant 0 : index
    %473 = vector.load %arg34[%c0_226, %c0_227, %c1_228, %c0_229] : memref<2x2x4x8xf32, #tpu.memory_space<vmem>>, vector<1x1x1x8xf32>
    %474 = vector.shape_cast %473 : vector<1x1x1x8xf32> to vector<1x8xf32>
    %475 = vector.shape_cast %472 : vector<1x8xf32> to vector<1x1x1x8xf32>
    tpu.vector_store %arg34[%c0_226, %c0_227, %c1_228, %c0_229], %475 {strides = array<i32>} : memref<2x2x4x8xf32, #tpu.memory_space<vmem>>, vector<1x1x1x8xf32>,
    %cst_230 = arith.constant dense<0.000000e+00> : vector<1x38xf32>
    %476 = tpu.matmul %472, %262, %cst_230 {dimension_numbers = #tpu.dot_dimension_numbers<[1], [0], [0], [1], [0, 0, 1, 1], [], []>} : vector<1x8xf32>, vector<8x38xf32>, vector<1x38xf32> -> vector<1x38xf32>
    %cst_231 = arith.constant dense<0.000000e+00> : vector<1x8xf32>
    %477 = tpu.matmul %459, %259, %cst_231 {dimension_numbers = #tpu.dot_dimension_numbers<[1], [1], [0], [0], [0, 0, 1, 0], [], []>} : vector<1x16xf32>, vector<8x16xf32>, vector<1x8xf32> -> vector<1x8xf32>
    %cst_232 = arith.constant 0.353553385 : f32
    %478 = vector.broadcast %cst_232 : f32 to vector<1x8xf32>
    %479 = arith.mulf %477, %478 : vector<1x8xf32>
    %480 = arith.addf %479, %249 : vector<1x8xf32>
    %cst_233 = arith.constant dense<0xFF800000> : vector<1xf32>
    %481 = vector.multi_reduction <maximumf>, %480, %cst_233 [1] : vector<1x8xf32> to vector<1xf32>
    %482 = vector.shape_cast %481 : vector<1xf32> to vector<1x1xf32>
    %483 = vector.broadcast %482 : vector<1x1xf32> to vector<1x8xf32>
    %484 = arith.subf %480, %483 : vector<1x8xf32>
    %485 = math.exp %484 : vector<1x8xf32>
    %cst_234 = arith.constant dense<0.000000e+00> : vector<1xf32>
    %486 = vector.multi_reduction <add>, %485, %cst_234 [1] : vector<1x8xf32> to vector<1xf32>
    %487 = vector.shape_cast %486 : vector<1xf32> to vector<1x1xf32>
    %488 = vector.broadcast %487 : vector<1x1xf32> to vector<1x8xf32>
    %489 = arith.divf %485, %488 : vector<1x8xf32>
    %c0_235 = arith.constant 0 : index
    %c1_236 = arith.constant 1 : index
    %c1_237 = arith.constant 1 : index
    %c0_238 = arith.constant 0 : index
    %490 = vector.load %arg34[%c0_235, %c1_236, %c1_237, %c0_238] : memref<2x2x4x8xf32, #tpu.memory_space<vmem>>, vector<1x1x1x8xf32>
    %491 = vector.shape_cast %490 : vector<1x1x1x8xf32> to vector<1x8xf32>
    %492 = vector.shape_cast %489 : vector<1x8xf32> to vector<1x1x1x8xf32>
    tpu.vector_store %arg34[%c0_235, %c1_236, %c1_237, %c0_238], %492 {strides = array<i32>} : memref<2x2x4x8xf32, #tpu.memory_space<vmem>>, vector<1x1x1x8xf32>,
    %cst_239 = arith.constant dense<0.000000e+00> : vector<1x38xf32>
    %493 = tpu.matmul %489, %265, %cst_239 {dimension_numbers = #tpu.dot_dimension_numbers<[1], [0], [0], [1], [0, 0, 1, 1], [], []>} : vector<1x8xf32>, vector<8x38xf32>, vector<1x38xf32> -> vector<1x38xf32>
    %494 = arith.addf %476, %493 : vector<1x38xf32>
    %495 = arith.addf %494, %458 : vector<1x38xf32>
    %c0_240 = arith.constant 0 : index
    %c0_241 = arith.constant 0 : index
    %496 = vector.load %arg24[%c0_240, %c0_241] : memref<1x38xf32, #tpu.memory_space<vmem>>, vector<1x38xf32>
    %c0_242 = arith.constant 0 : index
    %c0_243 = arith.constant 0 : index
    %497 = vector.load %arg25[%c0_242, %c0_243] : memref<1x38xf32, #tpu.memory_space<vmem>>, vector<1x38xf32>
    %cst_244 = arith.constant dense<0.000000e+00> : vector<1xf32>
    %498 = vector.multi_reduction <add>, %495, %cst_244 [1] : vector<1x38xf32> to vector<1xf32>
    %499 = vector.shape_cast %498 : vector<1xf32> to vector<1x1xf32>
    %cst_245 = arith.constant 3.800000e+01 : f32
    %500 = vector.broadcast %cst_245 : f32 to vector<1x1xf32>
    %501 = arith.divf %499, %500 : vector<1x1xf32>
    %502 = vector.broadcast %501 : vector<1x1xf32> to vector<1x38xf32>
    %503 = arith.subf %495, %502 : vector<1x38xf32>
    %504 = arith.mulf %503, %503 : vector<1x38xf32>
    %cst_246 = arith.constant dense<0.000000e+00> : vector<1xf32>
    %505 = vector.multi_reduction <add>, %504, %cst_246 [1] : vector<1x38xf32> to vector<1xf32>
    %506 = vector.shape_cast %505 : vector<1xf32> to vector<1x1xf32>
    %cst_247 = arith.constant 3.800000e+01 : f32
    %507 = vector.broadcast %cst_247 : f32 to vector<1x1xf32>
    %508 = arith.divf %506, %507 : vector<1x1xf32>
    %509 = vector.broadcast %501 : vector<1x1xf32> to vector<1x38xf32>
    %510 = arith.subf %495, %509 : vector<1x38xf32>
    %cst_248 = arith.constant 9.99999997E-7 : f32
    %511 = vector.broadcast %cst_248 : f32 to vector<1x1xf32>
    %512 = arith.addf %508, %511 : vector<1x1xf32>
    %513 = math.rsqrt %512 : vector<1x1xf32>
    %514 = vector.broadcast %513 : vector<1x1xf32> to vector<1x38xf32>
    %515 = arith.mulf %510, %514 : vector<1x38xf32>
    %516 = arith.mulf %515, %496 : vector<1x38xf32>
    %517 = arith.addf %516, %497 : vector<1x38xf32>
    %c0_249 = arith.constant 0 : index
    %c0_250 = arith.constant 0 : index
    %518 = vector.load %arg26[%c0_249, %c0_250] : memref<38x64xf32, #tpu.memory_space<vmem>>, vector<38x64xf32>
    %cst_251 = arith.constant dense<0.000000e+00> : vector<1x64xf32>
    %519 = tpu.matmul %517, %518, %cst_251 {dimension_numbers = #tpu.dot_dimension_numbers<[1], [0], [0], [1], [0, 0, 1, 1], [], []>} : vector<1x38xf32>, vector<38x64xf32>, vector<1x64xf32> -> vector<1x64xf32>
    %c0_252 = arith.constant 0 : index
    %c0_253 = arith.constant 0 : index
    %520 = vector.load %arg27[%c0_252, %c0_253] : memref<1x64xf32, #tpu.memory_space<vmem>>, vector<1x64xf32>
    %521 = arith.addf %519, %520 : vector<1x64xf32>
    %cst_254 = arith.constant 0.000000e+00 : f32
    %522 = vector.broadcast %cst_254 : f32 to vector<1x64xf32>
    %523 = arith.maximumf %521, %522 : vector<1x64xf32>
    %c0_255 = arith.constant 0 : index
    %c0_256 = arith.constant 0 : index
    %524 = vector.load %arg28[%c0_255, %c0_256] : memref<64x38xf32, #tpu.memory_space<vmem>>, vector<64x38xf32>
    %cst_257 = arith.constant dense<0.000000e+00> : vector<1x38xf32>
    %525 = tpu.matmul %523, %524, %cst_257 {dimension_numbers = #tpu.dot_dimension_numbers<[1], [0], [0], [1], [0, 0, 1, 1], [], []>} : vector<1x64xf32>, vector<64x38xf32>, vector<1x38xf32> -> vector<1x38xf32>
    %c0_258 = arith.constant 0 : index
    %c0_259 = arith.constant 0 : index
    %526 = vector.load %arg29[%c0_258, %c0_259] : memref<1x38xf32, #tpu.memory_space<vmem>>, vector<1x38xf32>
    %527 = arith.addf %525, %526 : vector<1x38xf32>
    %528 = arith.addf %527, %517 : vector<1x38xf32>
    %c0_260 = arith.constant 0 : index
    %c0_261 = arith.constant 0 : index
    %529 = vector.load %arg30[%c0_260, %c0_261] : memref<1x38xf32, #tpu.memory_space<vmem>>, vector<1x38xf32>
    %c0_262 = arith.constant 0 : index
    %c0_263 = arith.constant 0 : index
    %530 = vector.load %arg31[%c0_262, %c0_263] : memref<1x38xf32, #tpu.memory_space<vmem>>, vector<1x38xf32>
    %cst_264 = arith.constant dense<0.000000e+00> : vector<1xf32>
    %531 = vector.multi_reduction <add>, %528, %cst_264 [1] : vector<1x38xf32> to vector<1xf32>
    %532 = vector.shape_cast %531 : vector<1xf32> to vector<1x1xf32>
    %cst_265 = arith.constant 3.800000e+01 : f32
    %533 = vector.broadcast %cst_265 : f32 to vector<1x1xf32>
    %534 = arith.divf %532, %533 : vector<1x1xf32>
    %535 = vector.broadcast %534 : vector<1x1xf32> to vector<1x38xf32>
    %536 = arith.subf %528, %535 : vector<1x38xf32>
    %537 = arith.mulf %536, %536 : vector<1x38xf32>
    %cst_266 = arith.constant dense<0.000000e+00> : vector<1xf32>
    %538 = vector.multi_reduction <add>, %537, %cst_266 [1] : vector<1x38xf32> to vector<1xf32>
    %539 = vector.shape_cast %538 : vector<1xf32> to vector<1x1xf32>
    %cst_267 = arith.constant 3.800000e+01 : f32
    %540 = vector.broadcast %cst_267 : f32 to vector<1x1xf32>
    %541 = arith.divf %539, %540 : vector<1x1xf32>
    %542 = vector.broadcast %534 : vector<1x1xf32> to vector<1x38xf32>
    %543 = arith.subf %528, %542 : vector<1x38xf32>
    %cst_268 = arith.constant 9.99999997E-7 : f32
    %544 = vector.broadcast %cst_268 : f32 to vector<1x1xf32>
    %545 = arith.addf %541, %544 : vector<1x1xf32>
    %546 = math.rsqrt %545 : vector<1x1xf32>
    %547 = vector.broadcast %546 : vector<1x1xf32> to vector<1x38xf32>
    %548 = arith.mulf %543, %547 : vector<1x38xf32>
    %549 = arith.mulf %548, %529 : vector<1x38xf32>
    %550 = arith.addf %549, %530 : vector<1x38xf32>
    %cst_269 = arith.constant dense<0.000000e+00> : vector<1x38xf32>
    %551 = tpu.matmul %550, %246, %cst_269 {dimension_numbers = #tpu.dot_dimension_numbers<[1], [0], [0], [1], [0, 0, 1, 1], [], []>} : vector<1x38xf32>, vector<38x38xf32>, vector<1x38xf32> -> vector<1x38xf32>
    %552 = arith.addf %551, %428 : vector<1x38xf32>
    %cst_270 = arith.constant -1.000000e+30 : f32
    %553 = vector.broadcast %cst_270 : f32 to vector<1x38xf32>
    %554 = arith.select %13, %552, %553 : vector<1x38xi1>, vector<1x38xf32>
    %cst_271 = arith.constant dense<0xFF800000> : vector<1xf32>
    %555 = vector.multi_reduction <maximumf>, %554, %cst_271 [1] : vector<1x38xf32> to vector<1xf32>
    %556 = vector.shape_cast %555 : vector<1xf32> to vector<1x1xf32>
    %557 = vector.broadcast %556 : vector<1x1xf32> to vector<1x38xf32>
    %558 = arith.subf %554, %557 : vector<1x38xf32>
    %559 = math.exp %558 : vector<1x38xf32>
    %cst_272 = arith.constant dense<0.000000e+00> : vector<1xf32>
    %560 = vector.multi_reduction <add>, %559, %cst_272 [1] : vector<1x38xf32> to vector<1xf32>
    %561 = vector.shape_cast %560 : vector<1xf32> to vector<1x1xf32>
    %562 = vector.broadcast %561 : vector<1x1xf32> to vector<1x38xf32>
    %563 = arith.divf %559, %562 : vector<1x38xf32>
    %cst_273 = arith.constant 0.000000e+00 : f32
    %564 = vector.broadcast %cst_273 : f32 to vector<1x38xf32>
    %565 = arith.select %13, %563, %564 : vector<1x38xi1>, vector<1x38xf32>
    %cst_274 = arith.constant -1.000000e+30 : f32
    %566 = vector.broadcast %cst_274 : f32 to vector<1x38xf32>
    %567 = arith.select %18, %552, %566 : vector<1x38xi1>, vector<1x38xf32>
    %cst_275 = arith.constant dense<0xFF800000> : vector<1xf32>
    %568 = vector.multi_reduction <maximumf>, %567, %cst_275 [1] : vector<1x38xf32> to vector<1xf32>
    %569 = vector.shape_cast %568 : vector<1xf32> to vector<1x1xf32>
    %570 = vector.broadcast %569 : vector<1x1xf32> to vector<1x38xf32>
    %571 = arith.subf %567, %570 : vector<1x38xf32>
    %572 = math.exp %571 : vector<1x38xf32>
    %cst_276 = arith.constant dense<0.000000e+00> : vector<1xf32>
    %573 = vector.multi_reduction <add>, %572, %cst_276 [1] : vector<1x38xf32> to vector<1xf32>
    %574 = vector.shape_cast %573 : vector<1xf32> to vector<1x1xf32>
    %575 = vector.broadcast %574 : vector<1x1xf32> to vector<1x38xf32>
    %576 = arith.divf %572, %575 : vector<1x38xf32>
    %cst_277 = arith.constant 0.000000e+00 : f32
    %577 = vector.broadcast %cst_277 : f32 to vector<1x38xf32>
    %578 = arith.select %18, %576, %577 : vector<1x38xi1>, vector<1x38xf32>
    %579 = arith.addf %565, %578 : vector<1x38xf32>
    %cst_278 = arith.constant 0.000000e+00 : f32
    %580 = vector.broadcast %cst_278 : f32 to vector<1x38xf32>
    %581 = arith.subf %580, %552 : vector<1x38xf32>
    %582 = math.exp %581 : vector<1x38xf32>
    %cst_279 = arith.constant 1.000000e+00 : f32
    %583 = vector.broadcast %cst_279 : f32 to vector<1x38xf32>
    %584 = arith.addf %583, %582 : vector<1x38xf32>
    %cst_280 = arith.constant 1.000000e+00 : f32
    %585 = vector.broadcast %cst_280 : f32 to vector<1x38xf32>
    %586 = arith.divf %585, %584 : vector<1x38xf32>
    %cst_281 = arith.constant 0.000000e+00 : f32
    %587 = vector.broadcast %cst_281 : f32 to vector<1x38xf32>
    %588 = arith.select %23, %586, %587 : vector<1x38xi1>, vector<1x38xf32>
    %589 = arith.addf %579, %588 : vector<1x38xf32>
    %590 = vector.extract_strided_slice %589 {offsets = [0, 0], sizes = [1, 19], strides = [1, 1]} : vector<1x38xf32> to vector<1x19xf32>
    %c0_282 = arith.constant 0 : index
    %c2 = arith.constant 2 : index
    %c0_283 = arith.constant 0 : index
    %591 = vector.load %arg33[%c0_282, %c2, %c0_283] : memref<2x5x19xf32, #tpu.memory_space<vmem>>, vector<1x1x19xf32>
    %592 = vector.shape_cast %591 : vector<1x1x19xf32> to vector<1x19xf32>
    %593 = vector.shape_cast %590 : vector<1x19xf32> to vector<1x1x19xf32>
    tpu.vector_store %arg33[%c0_282, %c2, %c0_283], %593 {strides = array<i32>} : memref<2x5x19xf32, #tpu.memory_space<vmem>>, vector<1x1x19xf32>,
    %594 = vector.extract_strided_slice %243 {offsets = [2, 0], sizes = [1, 38], strides = [1, 1]} : vector<4x38xf32> to vector<1x38xf32>
    %595 = arith.addf %589, %594 : vector<1x38xf32>
    %cst_284 = arith.constant dense<0.000000e+00> : vector<1x38xf32>
    %596 = tpu.matmul %595, %244, %cst_284 {dimension_numbers = #tpu.dot_dimension_numbers<[1], [0], [0], [1], [0, 0, 1, 1], [], []>} : vector<1x38xf32>, vector<38x38xf32>, vector<1x38xf32> -> vector<1x38xf32>
    %597 = arith.addf %596, %595 : vector<1x38xf32>
    %c0_285 = arith.constant 0 : index
    %c0_286 = arith.constant 0 : index
    %598 = vector.load %arg19[%c0_285, %c0_286] : memref<1x38xf32, #tpu.memory_space<vmem>>, vector<1x38xf32>
    %c0_287 = arith.constant 0 : index
    %c0_288 = arith.constant 0 : index
    %599 = vector.load %arg20[%c0_287, %c0_288] : memref<1x38xf32, #tpu.memory_space<vmem>>, vector<1x38xf32>
    %cst_289 = arith.constant dense<0.000000e+00> : vector<1xf32>
    %600 = vector.multi_reduction <add>, %597, %cst_289 [1] : vector<1x38xf32> to vector<1xf32>
    %601 = vector.shape_cast %600 : vector<1xf32> to vector<1x1xf32>
    %cst_290 = arith.constant 3.800000e+01 : f32
    %602 = vector.broadcast %cst_290 : f32 to vector<1x1xf32>
    %603 = arith.divf %601, %602 : vector<1x1xf32>
    %604 = vector.broadcast %603 : vector<1x1xf32> to vector<1x38xf32>
    %605 = arith.subf %597, %604 : vector<1x38xf32>
    %606 = arith.mulf %605, %605 : vector<1x38xf32>
    %cst_291 = arith.constant dense<0.000000e+00> : vector<1xf32>
    %607 = vector.multi_reduction <add>, %606, %cst_291 [1] : vector<1x38xf32> to vector<1xf32>
    %608 = vector.shape_cast %607 : vector<1xf32> to vector<1x1xf32>
    %cst_292 = arith.constant 3.800000e+01 : f32
    %609 = vector.broadcast %cst_292 : f32 to vector<1x1xf32>
    %610 = arith.divf %608, %609 : vector<1x1xf32>
    %611 = vector.broadcast %603 : vector<1x1xf32> to vector<1x38xf32>
    %612 = arith.subf %597, %611 : vector<1x38xf32>
    %cst_293 = arith.constant 9.99999997E-7 : f32
    %613 = vector.broadcast %cst_293 : f32 to vector<1x1xf32>
    %614 = arith.addf %610, %613 : vector<1x1xf32>
    %615 = math.rsqrt %614 : vector<1x1xf32>
    %616 = vector.broadcast %615 : vector<1x1xf32> to vector<1x38xf32>
    %617 = arith.mulf %612, %616 : vector<1x38xf32>
    %618 = arith.mulf %617, %598 : vector<1x38xf32>
    %619 = arith.addf %618, %599 : vector<1x38xf32>
    %cst_294 = arith.constant dense<0.000000e+00> : vector<1x16xf32>
    %620 = tpu.matmul %619, %245, %cst_294 {dimension_numbers = #tpu.dot_dimension_numbers<[1], [0], [0], [1], [0, 0, 1, 1], [], []>} : vector<1x38xf32>, vector<38x16xf32>, vector<1x16xf32> -> vector<1x16xf32>
    %cst_295 = arith.constant dense<0.000000e+00> : vector<1x8xf32>
    %621 = tpu.matmul %620, %255, %cst_295 {dimension_numbers = #tpu.dot_dimension_numbers<[1], [1], [0], [0], [0, 0, 1, 0], [], []>} : vector<1x16xf32>, vector<8x16xf32>, vector<1x8xf32> -> vector<1x8xf32>
    %cst_296 = arith.constant 0.353553385 : f32
    %622 = vector.broadcast %cst_296 : f32 to vector<1x8xf32>
    %623 = arith.mulf %621, %622 : vector<1x8xf32>
    %624 = arith.addf %623, %249 : vector<1x8xf32>
    %cst_297 = arith.constant dense<0xFF800000> : vector<1xf32>
    %625 = vector.multi_reduction <maximumf>, %624, %cst_297 [1] : vector<1x8xf32> to vector<1xf32>
    %626 = vector.shape_cast %625 : vector<1xf32> to vector<1x1xf32>
    %627 = vector.broadcast %626 : vector<1x1xf32> to vector<1x8xf32>
    %628 = arith.subf %624, %627 : vector<1x8xf32>
    %629 = math.exp %628 : vector<1x8xf32>
    %cst_298 = arith.constant dense<0.000000e+00> : vector<1xf32>
    %630 = vector.multi_reduction <add>, %629, %cst_298 [1] : vector<1x8xf32> to vector<1xf32>
    %631 = vector.shape_cast %630 : vector<1xf32> to vector<1x1xf32>
    %632 = vector.broadcast %631 : vector<1x1xf32> to vector<1x8xf32>
    %633 = arith.divf %629, %632 : vector<1x8xf32>
    %c0_299 = arith.constant 0 : index
    %c0_300 = arith.constant 0 : index
    %c2_301 = arith.constant 2 : index
    %c0_302 = arith.constant 0 : index
    %634 = vector.load %arg34[%c0_299, %c0_300, %c2_301, %c0_302] : memref<2x2x4x8xf32, #tpu.memory_space<vmem>>, vector<1x1x1x8xf32>
    %635 = vector.shape_cast %634 : vector<1x1x1x8xf32> to vector<1x8xf32>
    %636 = vector.shape_cast %633 : vector<1x8xf32> to vector<1x1x1x8xf32>
    tpu.vector_store %arg34[%c0_299, %c0_300, %c2_301, %c0_302], %636 {strides = array<i32>} : memref<2x2x4x8xf32, #tpu.memory_space<vmem>>, vector<1x1x1x8xf32>,
    %cst_303 = arith.constant dense<0.000000e+00> : vector<1x38xf32>
    %637 = tpu.matmul %633, %262, %cst_303 {dimension_numbers = #tpu.dot_dimension_numbers<[1], [0], [0], [1], [0, 0, 1, 1], [], []>} : vector<1x8xf32>, vector<8x38xf32>, vector<1x38xf32> -> vector<1x38xf32>
    %cst_304 = arith.constant dense<0.000000e+00> : vector<1x8xf32>
    %638 = tpu.matmul %620, %259, %cst_304 {dimension_numbers = #tpu.dot_dimension_numbers<[1], [1], [0], [0], [0, 0, 1, 0], [], []>} : vector<1x16xf32>, vector<8x16xf32>, vector<1x8xf32> -> vector<1x8xf32>
    %cst_305 = arith.constant 0.353553385 : f32
    %639 = vector.broadcast %cst_305 : f32 to vector<1x8xf32>
    %640 = arith.mulf %638, %639 : vector<1x8xf32>
    %641 = arith.addf %640, %249 : vector<1x8xf32>
    %cst_306 = arith.constant dense<0xFF800000> : vector<1xf32>
    %642 = vector.multi_reduction <maximumf>, %641, %cst_306 [1] : vector<1x8xf32> to vector<1xf32>
    %643 = vector.shape_cast %642 : vector<1xf32> to vector<1x1xf32>
    %644 = vector.broadcast %643 : vector<1x1xf32> to vector<1x8xf32>
    %645 = arith.subf %641, %644 : vector<1x8xf32>
    %646 = math.exp %645 : vector<1x8xf32>
    %cst_307 = arith.constant dense<0.000000e+00> : vector<1xf32>
    %647 = vector.multi_reduction <add>, %646, %cst_307 [1] : vector<1x8xf32> to vector<1xf32>
    %648 = vector.shape_cast %647 : vector<1xf32> to vector<1x1xf32>
    %649 = vector.broadcast %648 : vector<1x1xf32> to vector<1x8xf32>
    %650 = arith.divf %646, %649 : vector<1x8xf32>
    %c0_308 = arith.constant 0 : index
    %c1_309 = arith.constant 1 : index
    %c2_310 = arith.constant 2 : index
    %c0_311 = arith.constant 0 : index
    %651 = vector.load %arg34[%c0_308, %c1_309, %c2_310, %c0_311] : memref<2x2x4x8xf32, #tpu.memory_space<vmem>>, vector<1x1x1x8xf32>
    %652 = vector.shape_cast %651 : vector<1x1x1x8xf32> to vector<1x8xf32>
    %653 = vector.shape_cast %650 : vector<1x8xf32> to vector<1x1x1x8xf32>
    tpu.vector_store %arg34[%c0_308, %c1_309, %c2_310, %c0_311], %653 {strides = array<i32>} : memref<2x2x4x8xf32, #tpu.memory_space<vmem>>, vector<1x1x1x8xf32>,
    %cst_312 = arith.constant dense<0.000000e+00> : vector<1x38xf32>
    %654 = tpu.matmul %650, %265, %cst_312 {dimension_numbers = #tpu.dot_dimension_numbers<[1], [0], [0], [1], [0, 0, 1, 1], [], []>} : vector<1x8xf32>, vector<8x38xf32>, vector<1x38xf32> -> vector<1x38xf32>
    %655 = arith.addf %637, %654 : vector<1x38xf32>
    %656 = arith.addf %655, %619 : vector<1x38xf32>
    %c0_313 = arith.constant 0 : index
    %c0_314 = arith.constant 0 : index
    %657 = vector.load %arg24[%c0_313, %c0_314] : memref<1x38xf32, #tpu.memory_space<vmem>>, vector<1x38xf32>
    %c0_315 = arith.constant 0 : index
    %c0_316 = arith.constant 0 : index
    %658 = vector.load %arg25[%c0_315, %c0_316] : memref<1x38xf32, #tpu.memory_space<vmem>>, vector<1x38xf32>
    %cst_317 = arith.constant dense<0.000000e+00> : vector<1xf32>
    %659 = vector.multi_reduction <add>, %656, %cst_317 [1] : vector<1x38xf32> to vector<1xf32>
    %660 = vector.shape_cast %659 : vector<1xf32> to vector<1x1xf32>
    %cst_318 = arith.constant 3.800000e+01 : f32
    %661 = vector.broadcast %cst_318 : f32 to vector<1x1xf32>
    %662 = arith.divf %660, %661 : vector<1x1xf32>
    %663 = vector.broadcast %662 : vector<1x1xf32> to vector<1x38xf32>
    %664 = arith.subf %656, %663 : vector<1x38xf32>
    %665 = arith.mulf %664, %664 : vector<1x38xf32>
    %cst_319 = arith.constant dense<0.000000e+00> : vector<1xf32>
    %666 = vector.multi_reduction <add>, %665, %cst_319 [1] : vector<1x38xf32> to vector<1xf32>
    %667 = vector.shape_cast %666 : vector<1xf32> to vector<1x1xf32>
    %cst_320 = arith.constant 3.800000e+01 : f32
    %668 = vector.broadcast %cst_320 : f32 to vector<1x1xf32>
    %669 = arith.divf %667, %668 : vector<1x1xf32>
    %670 = vector.broadcast %662 : vector<1x1xf32> to vector<1x38xf32>
    %671 = arith.subf %656, %670 : vector<1x38xf32>
    %cst_321 = arith.constant 9.99999997E-7 : f32
    %672 = vector.broadcast %cst_321 : f32 to vector<1x1xf32>
    %673 = arith.addf %669, %672 : vector<1x1xf32>
    %674 = math.rsqrt %673 : vector<1x1xf32>
    %675 = vector.broadcast %674 : vector<1x1xf32> to vector<1x38xf32>
    %676 = arith.mulf %671, %675 : vector<1x38xf32>
    %677 = arith.mulf %676, %657 : vector<1x38xf32>
    %678 = arith.addf %677, %658 : vector<1x38xf32>
    %c0_322 = arith.constant 0 : index
    %c0_323 = arith.constant 0 : index
    %679 = vector.load %arg26[%c0_322, %c0_323] : memref<38x64xf32, #tpu.memory_space<vmem>>, vector<38x64xf32>
    %cst_324 = arith.constant dense<0.000000e+00> : vector<1x64xf32>
    %680 = tpu.matmul %678, %679, %cst_324 {dimension_numbers = #tpu.dot_dimension_numbers<[1], [0], [0], [1], [0, 0, 1, 1], [], []>} : vector<1x38xf32>, vector<38x64xf32>, vector<1x64xf32> -> vector<1x64xf32>
    %c0_325 = arith.constant 0 : index
    %c0_326 = arith.constant 0 : index
    %681 = vector.load %arg27[%c0_325, %c0_326] : memref<1x64xf32, #tpu.memory_space<vmem>>, vector<1x64xf32>
    %682 = arith.addf %680, %681 : vector<1x64xf32>
    %cst_327 = arith.constant 0.000000e+00 : f32
    %683 = vector.broadcast %cst_327 : f32 to vector<1x64xf32>
    %684 = arith.maximumf %682, %683 : vector<1x64xf32>
    %c0_328 = arith.constant 0 : index
    %c0_329 = arith.constant 0 : index
    %685 = vector.load %arg28[%c0_328, %c0_329] : memref<64x38xf32, #tpu.memory_space<vmem>>, vector<64x38xf32>
    %cst_330 = arith.constant dense<0.000000e+00> : vector<1x38xf32>
    %686 = tpu.matmul %684, %685, %cst_330 {dimension_numbers = #tpu.dot_dimension_numbers<[1], [0], [0], [1], [0, 0, 1, 1], [], []>} : vector<1x64xf32>, vector<64x38xf32>, vector<1x38xf32> -> vector<1x38xf32>
    %c0_331 = arith.constant 0 : index
    %c0_332 = arith.constant 0 : index
    %687 = vector.load %arg29[%c0_331, %c0_332] : memref<1x38xf32, #tpu.memory_space<vmem>>, vector<1x38xf32>
    %688 = arith.addf %686, %687 : vector<1x38xf32>
    %689 = arith.addf %688, %678 : vector<1x38xf32>
    %c0_333 = arith.constant 0 : index
    %c0_334 = arith.constant 0 : index
    %690 = vector.load %arg30[%c0_333, %c0_334] : memref<1x38xf32, #tpu.memory_space<vmem>>, vector<1x38xf32>
    %c0_335 = arith.constant 0 : index
    %c0_336 = arith.constant 0 : index
    %691 = vector.load %arg31[%c0_335, %c0_336] : memref<1x38xf32, #tpu.memory_space<vmem>>, vector<1x38xf32>
    %cst_337 = arith.constant dense<0.000000e+00> : vector<1xf32>
    %692 = vector.multi_reduction <add>, %689, %cst_337 [1] : vector<1x38xf32> to vector<1xf32>
    %693 = vector.shape_cast %692 : vector<1xf32> to vector<1x1xf32>
    %cst_338 = arith.constant 3.800000e+01 : f32
    %694 = vector.broadcast %cst_338 : f32 to vector<1x1xf32>
    %695 = arith.divf %693, %694 : vector<1x1xf32>
    %696 = vector.broadcast %695 : vector<1x1xf32> to vector<1x38xf32>
    %697 = arith.subf %689, %696 : vector<1x38xf32>
    %698 = arith.mulf %697, %697 : vector<1x38xf32>
    %cst_339 = arith.constant dense<0.000000e+00> : vector<1xf32>
    %699 = vector.multi_reduction <add>, %698, %cst_339 [1] : vector<1x38xf32> to vector<1xf32>
    %700 = vector.shape_cast %699 : vector<1xf32> to vector<1x1xf32>
    %cst_340 = arith.constant 3.800000e+01 : f32
    %701 = vector.broadcast %cst_340 : f32 to vector<1x1xf32>
    %702 = arith.divf %700, %701 : vector<1x1xf32>
    %703 = vector.broadcast %695 : vector<1x1xf32> to vector<1x38xf32>
    %704 = arith.subf %689, %703 : vector<1x38xf32>
    %cst_341 = arith.constant 9.99999997E-7 : f32
    %705 = vector.broadcast %cst_341 : f32 to vector<1x1xf32>
    %706 = arith.addf %702, %705 : vector<1x1xf32>
    %707 = math.rsqrt %706 : vector<1x1xf32>
    %708 = vector.broadcast %707 : vector<1x1xf32> to vector<1x38xf32>
    %709 = arith.mulf %704, %708 : vector<1x38xf32>
    %710 = arith.mulf %709, %690 : vector<1x38xf32>
    %711 = arith.addf %710, %691 : vector<1x38xf32>
    %cst_342 = arith.constant dense<0.000000e+00> : vector<1x38xf32>
    %712 = tpu.matmul %711, %246, %cst_342 {dimension_numbers = #tpu.dot_dimension_numbers<[1], [0], [0], [1], [0, 0, 1, 1], [], []>} : vector<1x38xf32>, vector<38x38xf32>, vector<1x38xf32> -> vector<1x38xf32>
    %713 = arith.addf %712, %589 : vector<1x38xf32>
    %cst_343 = arith.constant -1.000000e+30 : f32
    %714 = vector.broadcast %cst_343 : f32 to vector<1x38xf32>
    %715 = arith.select %13, %713, %714 : vector<1x38xi1>, vector<1x38xf32>
    %cst_344 = arith.constant dense<0xFF800000> : vector<1xf32>
    %716 = vector.multi_reduction <maximumf>, %715, %cst_344 [1] : vector<1x38xf32> to vector<1xf32>
    %717 = vector.shape_cast %716 : vector<1xf32> to vector<1x1xf32>
    %718 = vector.broadcast %717 : vector<1x1xf32> to vector<1x38xf32>
    %719 = arith.subf %715, %718 : vector<1x38xf32>
    %720 = math.exp %719 : vector<1x38xf32>
    %cst_345 = arith.constant dense<0.000000e+00> : vector<1xf32>
    %721 = vector.multi_reduction <add>, %720, %cst_345 [1] : vector<1x38xf32> to vector<1xf32>
    %722 = vector.shape_cast %721 : vector<1xf32> to vector<1x1xf32>
    %723 = vector.broadcast %722 : vector<1x1xf32> to vector<1x38xf32>
    %724 = arith.divf %720, %723 : vector<1x38xf32>
    %cst_346 = arith.constant 0.000000e+00 : f32
    %725 = vector.broadcast %cst_346 : f32 to vector<1x38xf32>
    %726 = arith.select %13, %724, %725 : vector<1x38xi1>, vector<1x38xf32>
    %cst_347 = arith.constant -1.000000e+30 : f32
    %727 = vector.broadcast %cst_347 : f32 to vector<1x38xf32>
    %728 = arith.select %18, %713, %727 : vector<1x38xi1>, vector<1x38xf32>
    %cst_348 = arith.constant dense<0xFF800000> : vector<1xf32>
    %729 = vector.multi_reduction <maximumf>, %728, %cst_348 [1] : vector<1x38xf32> to vector<1xf32>
    %730 = vector.shape_cast %729 : vector<1xf32> to vector<1x1xf32>
    %731 = vector.broadcast %730 : vector<1x1xf32> to vector<1x38xf32>
    %732 = arith.subf %728, %731 : vector<1x38xf32>
    %733 = math.exp %732 : vector<1x38xf32>
    %cst_349 = arith.constant dense<0.000000e+00> : vector<1xf32>
    %734 = vector.multi_reduction <add>, %733, %cst_349 [1] : vector<1x38xf32> to vector<1xf32>
    %735 = vector.shape_cast %734 : vector<1xf32> to vector<1x1xf32>
    %736 = vector.broadcast %735 : vector<1x1xf32> to vector<1x38xf32>
    %737 = arith.divf %733, %736 : vector<1x38xf32>
    %cst_350 = arith.constant 0.000000e+00 : f32
    %738 = vector.broadcast %cst_350 : f32 to vector<1x38xf32>
    %739 = arith.select %18, %737, %738 : vector<1x38xi1>, vector<1x38xf32>
    %740 = arith.addf %726, %739 : vector<1x38xf32>
    %cst_351 = arith.constant 0.000000e+00 : f32
    %741 = vector.broadcast %cst_351 : f32 to vector<1x38xf32>
    %742 = arith.subf %741, %713 : vector<1x38xf32>
    %743 = math.exp %742 : vector<1x38xf32>
    %cst_352 = arith.constant 1.000000e+00 : f32
    %744 = vector.broadcast %cst_352 : f32 to vector<1x38xf32>
    %745 = arith.addf %744, %743 : vector<1x38xf32>
    %cst_353 = arith.constant 1.000000e+00 : f32
    %746 = vector.broadcast %cst_353 : f32 to vector<1x38xf32>
    %747 = arith.divf %746, %745 : vector<1x38xf32>
    %cst_354 = arith.constant 0.000000e+00 : f32
    %748 = vector.broadcast %cst_354 : f32 to vector<1x38xf32>
    %749 = arith.select %23, %747, %748 : vector<1x38xi1>, vector<1x38xf32>
    %750 = arith.addf %740, %749 : vector<1x38xf32>
    %751 = vector.extract_strided_slice %750 {offsets = [0, 0], sizes = [1, 19], strides = [1, 1]} : vector<1x38xf32> to vector<1x19xf32>
    %c0_355 = arith.constant 0 : index
    %c3 = arith.constant 3 : index
    %c0_356 = arith.constant 0 : index
    %752 = vector.load %arg33[%c0_355, %c3, %c0_356] : memref<2x5x19xf32, #tpu.memory_space<vmem>>, vector<1x1x19xf32>
    %753 = vector.shape_cast %752 : vector<1x1x19xf32> to vector<1x19xf32>
    %754 = vector.shape_cast %751 : vector<1x19xf32> to vector<1x1x19xf32>
    tpu.vector_store %arg33[%c0_355, %c3, %c0_356], %754 {strides = array<i32>} : memref<2x5x19xf32, #tpu.memory_space<vmem>>, vector<1x1x19xf32>,
    %755 = vector.extract_strided_slice %243 {offsets = [3, 0], sizes = [1, 38], strides = [1, 1]} : vector<4x38xf32> to vector<1x38xf32>
    %756 = arith.addf %750, %755 : vector<1x38xf32>
    %cst_357 = arith.constant dense<0.000000e+00> : vector<1x38xf32>
    %757 = tpu.matmul %756, %244, %cst_357 {dimension_numbers = #tpu.dot_dimension_numbers<[1], [0], [0], [1], [0, 0, 1, 1], [], []>} : vector<1x38xf32>, vector<38x38xf32>, vector<1x38xf32> -> vector<1x38xf32>
    %758 = arith.addf %757, %756 : vector<1x38xf32>
    %c0_358 = arith.constant 0 : index
    %c0_359 = arith.constant 0 : index
    %759 = vector.load %arg19[%c0_358, %c0_359] : memref<1x38xf32, #tpu.memory_space<vmem>>, vector<1x38xf32>
    %c0_360 = arith.constant 0 : index
    %c0_361 = arith.constant 0 : index
    %760 = vector.load %arg20[%c0_360, %c0_361] : memref<1x38xf32, #tpu.memory_space<vmem>>, vector<1x38xf32>
    %cst_362 = arith.constant dense<0.000000e+00> : vector<1xf32>
    %761 = vector.multi_reduction <add>, %758, %cst_362 [1] : vector<1x38xf32> to vector<1xf32>
    %762 = vector.shape_cast %761 : vector<1xf32> to vector<1x1xf32>
    %cst_363 = arith.constant 3.800000e+01 : f32
    %763 = vector.broadcast %cst_363 : f32 to vector<1x1xf32>
    %764 = arith.divf %762, %763 : vector<1x1xf32>
    %765 = vector.broadcast %764 : vector<1x1xf32> to vector<1x38xf32>
    %766 = arith.subf %758, %765 : vector<1x38xf32>
    %767 = arith.mulf %766, %766 : vector<1x38xf32>
    %cst_364 = arith.constant dense<0.000000e+00> : vector<1xf32>
    %768 = vector.multi_reduction <add>, %767, %cst_364 [1] : vector<1x38xf32> to vector<1xf32>
    %769 = vector.shape_cast %768 : vector<1xf32> to vector<1x1xf32>
    %cst_365 = arith.constant 3.800000e+01 : f32
    %770 = vector.broadcast %cst_365 : f32 to vector<1x1xf32>
    %771 = arith.divf %769, %770 : vector<1x1xf32>
    %772 = vector.broadcast %764 : vector<1x1xf32> to vector<1x38xf32>
    %773 = arith.subf %758, %772 : vector<1x38xf32>
    %cst_366 = arith.constant 9.99999997E-7 : f32
    %774 = vector.broadcast %cst_366 : f32 to vector<1x1xf32>
    %775 = arith.addf %771, %774 : vector<1x1xf32>
    %776 = math.rsqrt %775 : vector<1x1xf32>
    %777 = vector.broadcast %776 : vector<1x1xf32> to vector<1x38xf32>
    %778 = arith.mulf %773, %777 : vector<1x38xf32>
    %779 = arith.mulf %778, %759 : vector<1x38xf32>
    %780 = arith.addf %779, %760 : vector<1x38xf32>
    %cst_367 = arith.constant dense<0.000000e+00> : vector<1x16xf32>
    %781 = tpu.matmul %780, %245, %cst_367 {dimension_numbers = #tpu.dot_dimension_numbers<[1], [0], [0], [1], [0, 0, 1, 1], [], []>} : vector<1x38xf32>, vector<38x16xf32>, vector<1x16xf32> -> vector<1x16xf32>
    %cst_368 = arith.constant dense<0.000000e+00> : vector<1x8xf32>
    %782 = tpu.matmul %781, %255, %cst_368 {dimension_numbers = #tpu.dot_dimension_numbers<[1], [1], [0], [0], [0, 0, 1, 0], [], []>} : vector<1x16xf32>, vector<8x16xf32>, vector<1x8xf32> -> vector<1x8xf32>
    %cst_369 = arith.constant 0.353553385 : f32
    %783 = vector.broadcast %cst_369 : f32 to vector<1x8xf32>
    %784 = arith.mulf %782, %783 : vector<1x8xf32>
    %785 = arith.addf %784, %249 : vector<1x8xf32>
    %cst_370 = arith.constant dense<0xFF800000> : vector<1xf32>
    %786 = vector.multi_reduction <maximumf>, %785, %cst_370 [1] : vector<1x8xf32> to vector<1xf32>
    %787 = vector.shape_cast %786 : vector<1xf32> to vector<1x1xf32>
    %788 = vector.broadcast %787 : vector<1x1xf32> to vector<1x8xf32>
    %789 = arith.subf %785, %788 : vector<1x8xf32>
    %790 = math.exp %789 : vector<1x8xf32>
    %cst_371 = arith.constant dense<0.000000e+00> : vector<1xf32>
    %791 = vector.multi_reduction <add>, %790, %cst_371 [1] : vector<1x8xf32> to vector<1xf32>
    %792 = vector.shape_cast %791 : vector<1xf32> to vector<1x1xf32>
    %793 = vector.broadcast %792 : vector<1x1xf32> to vector<1x8xf32>
    %794 = arith.divf %790, %793 : vector<1x8xf32>
    %c0_372 = arith.constant 0 : index
    %c0_373 = arith.constant 0 : index
    %c3_374 = arith.constant 3 : index
    %c0_375 = arith.constant 0 : index
    %795 = vector.load %arg34[%c0_372, %c0_373, %c3_374, %c0_375] : memref<2x2x4x8xf32, #tpu.memory_space<vmem>>, vector<1x1x1x8xf32>
    %796 = vector.shape_cast %795 : vector<1x1x1x8xf32> to vector<1x8xf32>
    %797 = vector.shape_cast %794 : vector<1x8xf32> to vector<1x1x1x8xf32>
    tpu.vector_store %arg34[%c0_372, %c0_373, %c3_374, %c0_375], %797 {strides = array<i32>} : memref<2x2x4x8xf32, #tpu.memory_space<vmem>>, vector<1x1x1x8xf32>,
    %cst_376 = arith.constant dense<0.000000e+00> : vector<1x38xf32>
    %798 = tpu.matmul %794, %262, %cst_376 {dimension_numbers = #tpu.dot_dimension_numbers<[1], [0], [0], [1], [0, 0, 1, 1], [], []>} : vector<1x8xf32>, vector<8x38xf32>, vector<1x38xf32> -> vector<1x38xf32>
    %cst_377 = arith.constant dense<0.000000e+00> : vector<1x8xf32>
    %799 = tpu.matmul %781, %259, %cst_377 {dimension_numbers = #tpu.dot_dimension_numbers<[1], [1], [0], [0], [0, 0, 1, 0], [], []>} : vector<1x16xf32>, vector<8x16xf32>, vector<1x8xf32> -> vector<1x8xf32>
    %cst_378 = arith.constant 0.353553385 : f32
    %800 = vector.broadcast %cst_378 : f32 to vector<1x8xf32>
    %801 = arith.mulf %799, %800 : vector<1x8xf32>
    %802 = arith.addf %801, %249 : vector<1x8xf32>
    %cst_379 = arith.constant dense<0xFF800000> : vector<1xf32>
    %803 = vector.multi_reduction <maximumf>, %802, %cst_379 [1] : vector<1x8xf32> to vector<1xf32>
    %804 = vector.shape_cast %803 : vector<1xf32> to vector<1x1xf32>
    %805 = vector.broadcast %804 : vector<1x1xf32> to vector<1x8xf32>
    %806 = arith.subf %802, %805 : vector<1x8xf32>
    %807 = math.exp %806 : vector<1x8xf32>
    %cst_380 = arith.constant dense<0.000000e+00> : vector<1xf32>
    %808 = vector.multi_reduction <add>, %807, %cst_380 [1] : vector<1x8xf32> to vector<1xf32>
    %809 = vector.shape_cast %808 : vector<1xf32> to vector<1x1xf32>
    %810 = vector.broadcast %809 : vector<1x1xf32> to vector<1x8xf32>
    %811 = arith.divf %807, %810 : vector<1x8xf32>
    %c0_381 = arith.constant 0 : index
    %c1_382 = arith.constant 1 : index
    %c3_383 = arith.constant 3 : index
    %c0_384 = arith.constant 0 : index
    %812 = vector.load %arg34[%c0_381, %c1_382, %c3_383, %c0_384] : memref<2x2x4x8xf32, #tpu.memory_space<vmem>>, vector<1x1x1x8xf32>
    %813 = vector.shape_cast %812 : vector<1x1x1x8xf32> to vector<1x8xf32>
    %814 = vector.shape_cast %811 : vector<1x8xf32> to vector<1x1x1x8xf32>
    tpu.vector_store %arg34[%c0_381, %c1_382, %c3_383, %c0_384], %814 {strides = array<i32>} : memref<2x2x4x8xf32, #tpu.memory_space<vmem>>, vector<1x1x1x8xf32>,
    %cst_385 = arith.constant dense<0.000000e+00> : vector<1x38xf32>
    %815 = tpu.matmul %811, %265, %cst_385 {dimension_numbers = #tpu.dot_dimension_numbers<[1], [0], [0], [1], [0, 0, 1, 1], [], []>} : vector<1x8xf32>, vector<8x38xf32>, vector<1x38xf32> -> vector<1x38xf32>
    %816 = arith.addf %798, %815 : vector<1x38xf32>
    %817 = arith.addf %816, %780 : vector<1x38xf32>
    %c0_386 = arith.constant 0 : index
    %c0_387 = arith.constant 0 : index
    %818 = vector.load %arg24[%c0_386, %c0_387] : memref<1x38xf32, #tpu.memory_space<vmem>>, vector<1x38xf32>
    %c0_388 = arith.constant 0 : index
    %c0_389 = arith.constant 0 : index
    %819 = vector.load %arg25[%c0_388, %c0_389] : memref<1x38xf32, #tpu.memory_space<vmem>>, vector<1x38xf32>
    %cst_390 = arith.constant dense<0.000000e+00> : vector<1xf32>
    %820 = vector.multi_reduction <add>, %817, %cst_390 [1] : vector<1x38xf32> to vector<1xf32>
    %821 = vector.shape_cast %820 : vector<1xf32> to vector<1x1xf32>
    %cst_391 = arith.constant 3.800000e+01 : f32
    %822 = vector.broadcast %cst_391 : f32 to vector<1x1xf32>
    %823 = arith.divf %821, %822 : vector<1x1xf32>
    %824 = vector.broadcast %823 : vector<1x1xf32> to vector<1x38xf32>
    %825 = arith.subf %817, %824 : vector<1x38xf32>
    %826 = arith.mulf %825, %825 : vector<1x38xf32>
    %cst_392 = arith.constant dense<0.000000e+00> : vector<1xf32>
    %827 = vector.multi_reduction <add>, %826, %cst_392 [1] : vector<1x38xf32> to vector<1xf32>
    %828 = vector.shape_cast %827 : vector<1xf32> to vector<1x1xf32>
    %cst_393 = arith.constant 3.800000e+01 : f32
    %829 = vector.broadcast %cst_393 : f32 to vector<1x1xf32>
    %830 = arith.divf %828, %829 : vector<1x1xf32>
    %831 = vector.broadcast %823 : vector<1x1xf32> to vector<1x38xf32>
    %832 = arith.subf %817, %831 : vector<1x38xf32>
    %cst_394 = arith.constant 9.99999997E-7 : f32
    %833 = vector.broadcast %cst_394 : f32 to vector<1x1xf32>
    %834 = arith.addf %830, %833 : vector<1x1xf32>
    %835 = math.rsqrt %834 : vector<1x1xf32>
    %836 = vector.broadcast %835 : vector<1x1xf32> to vector<1x38xf32>
    %837 = arith.mulf %832, %836 : vector<1x38xf32>
    %838 = arith.mulf %837, %818 : vector<1x38xf32>
    %839 = arith.addf %838, %819 : vector<1x38xf32>
    %c0_395 = arith.constant 0 : index
    %c0_396 = arith.constant 0 : index
    %840 = vector.load %arg26[%c0_395, %c0_396] : memref<38x64xf32, #tpu.memory_space<vmem>>, vector<38x64xf32>
    %cst_397 = arith.constant dense<0.000000e+00> : vector<1x64xf32>
    %841 = tpu.matmul %839, %840, %cst_397 {dimension_numbers = #tpu.dot_dimension_numbers<[1], [0], [0], [1], [0, 0, 1, 1], [], []>} : vector<1x38xf32>, vector<38x64xf32>, vector<1x64xf32> -> vector<1x64xf32>
    %c0_398 = arith.constant 0 : index
    %c0_399 = arith.constant 0 : index
    %842 = vector.load %arg27[%c0_398, %c0_399] : memref<1x64xf32, #tpu.memory_space<vmem>>, vector<1x64xf32>
    %843 = arith.addf %841, %842 : vector<1x64xf32>
    %cst_400 = arith.constant 0.000000e+00 : f32
    %844 = vector.broadcast %cst_400 : f32 to vector<1x64xf32>
    %845 = arith.maximumf %843, %844 : vector<1x64xf32>
    %c0_401 = arith.constant 0 : index
    %c0_402 = arith.constant 0 : index
    %846 = vector.load %arg28[%c0_401, %c0_402] : memref<64x38xf32, #tpu.memory_space<vmem>>, vector<64x38xf32>
    %cst_403 = arith.constant dense<0.000000e+00> : vector<1x38xf32>
    %847 = tpu.matmul %845, %846, %cst_403 {dimension_numbers = #tpu.dot_dimension_numbers<[1], [0], [0], [1], [0, 0, 1, 1], [], []>} : vector<1x64xf32>, vector<64x38xf32>, vector<1x38xf32> -> vector<1x38xf32>
    %c0_404 = arith.constant 0 : index
    %c0_405 = arith.constant 0 : index
    %848 = vector.load %arg29[%c0_404, %c0_405] : memref<1x38xf32, #tpu.memory_space<vmem>>, vector<1x38xf32>
    %849 = arith.addf %847, %848 : vector<1x38xf32>
    %850 = arith.addf %849, %839 : vector<1x38xf32>
    %c0_406 = arith.constant 0 : index
    %c0_407 = arith.constant 0 : index
    %851 = vector.load %arg30[%c0_406, %c0_407] : memref<1x38xf32, #tpu.memory_space<vmem>>, vector<1x38xf32>
    %c0_408 = arith.constant 0 : index
    %c0_409 = arith.constant 0 : index
    %852 = vector.load %arg31[%c0_408, %c0_409] : memref<1x38xf32, #tpu.memory_space<vmem>>, vector<1x38xf32>
    %cst_410 = arith.constant dense<0.000000e+00> : vector<1xf32>
    %853 = vector.multi_reduction <add>, %850, %cst_410 [1] : vector<1x38xf32> to vector<1xf32>
    %854 = vector.shape_cast %853 : vector<1xf32> to vector<1x1xf32>
    %cst_411 = arith.constant 3.800000e+01 : f32
    %855 = vector.broadcast %cst_411 : f32 to vector<1x1xf32>
    %856 = arith.divf %854, %855 : vector<1x1xf32>
    %857 = vector.broadcast %856 : vector<1x1xf32> to vector<1x38xf32>
    %858 = arith.subf %850, %857 : vector<1x38xf32>
    %859 = arith.mulf %858, %858 : vector<1x38xf32>
    %cst_412 = arith.constant dense<0.000000e+00> : vector<1xf32>
    %860 = vector.multi_reduction <add>, %859, %cst_412 [1] : vector<1x38xf32> to vector<1xf32>
    %861 = vector.shape_cast %860 : vector<1xf32> to vector<1x1xf32>
    %cst_413 = arith.constant 3.800000e+01 : f32
    %862 = vector.broadcast %cst_413 : f32 to vector<1x1xf32>
    %863 = arith.divf %861, %862 : vector<1x1xf32>
    %864 = vector.broadcast %856 : vector<1x1xf32> to vector<1x38xf32>
    %865 = arith.subf %850, %864 : vector<1x38xf32>
    %cst_414 = arith.constant 9.99999997E-7 : f32
    %866 = vector.broadcast %cst_414 : f32 to vector<1x1xf32>
    %867 = arith.addf %863, %866 : vector<1x1xf32>
    %868 = math.rsqrt %867 : vector<1x1xf32>
    %869 = vector.broadcast %868 : vector<1x1xf32> to vector<1x38xf32>
    %870 = arith.mulf %865, %869 : vector<1x38xf32>
    %871 = arith.mulf %870, %851 : vector<1x38xf32>
    %872 = arith.addf %871, %852 : vector<1x38xf32>
    %cst_415 = arith.constant dense<0.000000e+00> : vector<1x38xf32>
    %873 = tpu.matmul %872, %246, %cst_415 {dimension_numbers = #tpu.dot_dimension_numbers<[1], [0], [0], [1], [0, 0, 1, 1], [], []>} : vector<1x38xf32>, vector<38x38xf32>, vector<1x38xf32> -> vector<1x38xf32>
    %874 = arith.addf %873, %750 : vector<1x38xf32>
    %cst_416 = arith.constant -1.000000e+30 : f32
    %875 = vector.broadcast %cst_416 : f32 to vector<1x38xf32>
    %876 = arith.select %13, %874, %875 : vector<1x38xi1>, vector<1x38xf32>
    %cst_417 = arith.constant dense<0xFF800000> : vector<1xf32>
    %877 = vector.multi_reduction <maximumf>, %876, %cst_417 [1] : vector<1x38xf32> to vector<1xf32>
    %878 = vector.shape_cast %877 : vector<1xf32> to vector<1x1xf32>
    %879 = vector.broadcast %878 : vector<1x1xf32> to vector<1x38xf32>
    %880 = arith.subf %876, %879 : vector<1x38xf32>
    %881 = math.exp %880 : vector<1x38xf32>
    %cst_418 = arith.constant dense<0.000000e+00> : vector<1xf32>
    %882 = vector.multi_reduction <add>, %881, %cst_418 [1] : vector<1x38xf32> to vector<1xf32>
    %883 = vector.shape_cast %882 : vector<1xf32> to vector<1x1xf32>
    %884 = vector.broadcast %883 : vector<1x1xf32> to vector<1x38xf32>
    %885 = arith.divf %881, %884 : vector<1x38xf32>
    %cst_419 = arith.constant 0.000000e+00 : f32
    %886 = vector.broadcast %cst_419 : f32 to vector<1x38xf32>
    %887 = arith.select %13, %885, %886 : vector<1x38xi1>, vector<1x38xf32>
    %cst_420 = arith.constant -1.000000e+30 : f32
    %888 = vector.broadcast %cst_420 : f32 to vector<1x38xf32>
    %889 = arith.select %18, %874, %888 : vector<1x38xi1>, vector<1x38xf32>
    %cst_421 = arith.constant dense<0xFF800000> : vector<1xf32>
    %890 = vector.multi_reduction <maximumf>, %889, %cst_421 [1] : vector<1x38xf32> to vector<1xf32>
    %891 = vector.shape_cast %890 : vector<1xf32> to vector<1x1xf32>
    %892 = vector.broadcast %891 : vector<1x1xf32> to vector<1x38xf32>
    %893 = arith.subf %889, %892 : vector<1x38xf32>
    %894 = math.exp %893 : vector<1x38xf32>
    %cst_422 = arith.constant dense<0.000000e+00> : vector<1xf32>
    %895 = vector.multi_reduction <add>, %894, %cst_422 [1] : vector<1x38xf32> to vector<1xf32>
    %896 = vector.shape_cast %895 : vector<1xf32> to vector<1x1xf32>
    %897 = vector.broadcast %896 : vector<1x1xf32> to vector<1x38xf32>
    %898 = arith.divf %894, %897 : vector<1x38xf32>
    %cst_423 = arith.constant 0.000000e+00 : f32
    %899 = vector.broadcast %cst_423 : f32 to vector<1x38xf32>
    %900 = arith.select %18, %898, %899 : vector<1x38xi1>, vector<1x38xf32>
    %901 = arith.addf %887, %900 : vector<1x38xf32>
    %cst_424 = arith.constant 0.000000e+00 : f32
    %902 = vector.broadcast %cst_424 : f32 to vector<1x38xf32>
    %903 = arith.subf %902, %874 : vector<1x38xf32>
    %904 = math.exp %903 : vector<1x38xf32>
    %cst_425 = arith.constant 1.000000e+00 : f32
    %905 = vector.broadcast %cst_425 : f32 to vector<1x38xf32>
    %906 = arith.addf %905, %904 : vector<1x38xf32>
    %cst_426 = arith.constant 1.000000e+00 : f32
    %907 = vector.broadcast %cst_426 : f32 to vector<1x38xf32>
    %908 = arith.divf %907, %906 : vector<1x38xf32>
    %cst_427 = arith.constant 0.000000e+00 : f32
    %909 = vector.broadcast %cst_427 : f32 to vector<1x38xf32>
    %910 = arith.select %23, %908, %909 : vector<1x38xi1>, vector<1x38xf32>
    %911 = arith.addf %901, %910 : vector<1x38xf32>
    %912 = vector.extract_strided_slice %911 {offsets = [0, 0], sizes = [1, 19], strides = [1, 1]} : vector<1x38xf32> to vector<1x19xf32>
    %c0_428 = arith.constant 0 : index
    %c4 = arith.constant 4 : index
    %c0_429 = arith.constant 0 : index
    %913 = vector.load %arg33[%c0_428, %c4, %c0_429] : memref<2x5x19xf32, #tpu.memory_space<vmem>>, vector<1x1x19xf32>
    %914 = vector.shape_cast %913 : vector<1x1x19xf32> to vector<1x19xf32>
    %915 = vector.shape_cast %912 : vector<1x19xf32> to vector<1x1x19xf32>
    tpu.vector_store %arg33[%c0_428, %c4, %c0_429], %915 {strides = array<i32>} : memref<2x5x19xf32, #tpu.memory_space<vmem>>, vector<1x1x19xf32>,
    %916 = vector.extract_strided_slice %242 {offsets = [8, 0], sizes = [8, 102], strides = [1, 1]} : vector<16x102xf32> to vector<8x102xf32>
    %c1_430 = arith.constant 1 : index
    %c0_431 = arith.constant 0 : index
    %c0_432 = arith.constant 0 : index
    %917 = vector.load %arg3[%c1_430, %c0_431, %c0_432] : memref<2x1x8xf32, #tpu.memory_space<vmem>>, vector<1x1x8xf32>
    %918 = vector.shape_cast %917 : vector<1x1x8xf32> to vector<1x8xf32>
    %c0_433 = arith.constant 0 : index
    %c0_434 = arith.constant 0 : index
    %919 = vector.load %arg22[%c0_433, %c0_434] : memref<102x16xf32, #tpu.memory_space<vmem>>, vector<102x16xf32>
    %cst_435 = arith.constant dense<0.000000e+00> : vector<8x16xf32>
    %920 = tpu.matmul %916, %919, %cst_435 {dimension_numbers = #tpu.dot_dimension_numbers<[1], [0], [0], [1], [0, 0, 1, 1], [], []>} : vector<8x102xf32>, vector<102x16xf32>, vector<8x16xf32> -> vector<8x16xf32>
    %cst_436 = arith.constant 0.000000e+00 : f32
    %921 = vector.shape_cast %5 : vector<1x16xi1> to vector<1x16xi1>
    %922 = vector.broadcast %921 : vector<1x16xi1> to vector<8x16xi1>
    %923 = vector.broadcast %cst_436 : f32 to vector<8x16xf32>
    %924 = arith.select %922, %920, %923 : vector<8x16xi1>, vector<8x16xf32>
    %cst_437 = arith.constant 0.000000e+00 : f32
    %925 = vector.shape_cast %10 : vector<1x16xi1> to vector<1x16xi1>
    %926 = vector.broadcast %925 : vector<1x16xi1> to vector<8x16xi1>
    %927 = vector.broadcast %cst_437 : f32 to vector<8x16xf32>
    %928 = arith.select %926, %920, %927 : vector<8x16xi1>, vector<8x16xf32>
    %c0_438 = arith.constant 0 : index
    %c0_439 = arith.constant 0 : index
    %c0_440 = arith.constant 0 : index
    %929 = vector.load %arg23[%c0_438, %c0_439, %c0_440] : memref<2x102x38xf32, #tpu.memory_space<vmem>>, vector<1x102x38xf32>
    %930 = vector.shape_cast %929 : vector<1x102x38xf32> to vector<102x38xf32>
    %cst_441 = arith.constant dense<0.000000e+00> : vector<8x38xf32>
    %931 = tpu.matmul %916, %930, %cst_441 {dimension_numbers = #tpu.dot_dimension_numbers<[1], [0], [0], [1], [0, 0, 1, 1], [], []>} : vector<8x102xf32>, vector<102x38xf32>, vector<8x38xf32> -> vector<8x38xf32>
    %c1_442 = arith.constant 1 : index
    %c0_443 = arith.constant 0 : index
    %c0_444 = arith.constant 0 : index
    %932 = vector.load %arg23[%c1_442, %c0_443, %c0_444] : memref<2x102x38xf32, #tpu.memory_space<vmem>>, vector<1x102x38xf32>
    %933 = vector.shape_cast %932 : vector<1x102x38xf32> to vector<102x38xf32>
    %cst_445 = arith.constant dense<0.000000e+00> : vector<8x38xf32>
    %934 = tpu.matmul %916, %933, %cst_445 {dimension_numbers = #tpu.dot_dimension_numbers<[1], [0], [0], [1], [0, 0, 1, 1], [], []>} : vector<8x102xf32>, vector<102x38xf32>, vector<8x38xf32> -> vector<8x38xf32>
    %c1_446 = arith.constant 1 : index
    %c0_447 = arith.constant 0 : index
    %c0_448 = arith.constant 0 : index
    %935 = vector.load %arg17[%c1_446, %c0_447, %c0_448] : memref<2x1x38xf32, #tpu.memory_space<vmem>>, vector<1x1x38xf32>
    %936 = vector.shape_cast %935 : vector<1x1x38xf32> to vector<1x38xf32>
    %937 = vector.extract_strided_slice %936 {offsets = [0, 0], sizes = [1, 19], strides = [1, 1]} : vector<1x38xf32> to vector<1x19xf32>
    %c1_449 = arith.constant 1 : index
    %c0_450 = arith.constant 0 : index
    %c0_451 = arith.constant 0 : index
    %938 = vector.load %arg33[%c1_449, %c0_450, %c0_451] : memref<2x5x19xf32, #tpu.memory_space<vmem>>, vector<1x1x19xf32>
    %939 = vector.shape_cast %938 : vector<1x1x19xf32> to vector<1x19xf32>
    %940 = vector.shape_cast %937 : vector<1x19xf32> to vector<1x1x19xf32>
    tpu.vector_store %arg33[%c1_449, %c0_450, %c0_451], %940 {strides = array<i32>} : memref<2x5x19xf32, #tpu.memory_space<vmem>>, vector<1x1x19xf32>,
    %941 = vector.extract_strided_slice %243 {offsets = [0, 0], sizes = [1, 38], strides = [1, 1]} : vector<4x38xf32> to vector<1x38xf32>
    %942 = arith.addf %936, %941 : vector<1x38xf32>
    %cst_452 = arith.constant dense<0.000000e+00> : vector<1x38xf32>
    %943 = tpu.matmul %942, %244, %cst_452 {dimension_numbers = #tpu.dot_dimension_numbers<[1], [0], [0], [1], [0, 0, 1, 1], [], []>} : vector<1x38xf32>, vector<38x38xf32>, vector<1x38xf32> -> vector<1x38xf32>
    %944 = arith.addf %943, %942 : vector<1x38xf32>
    %c0_453 = arith.constant 0 : index
    %c0_454 = arith.constant 0 : index
    %945 = vector.load %arg19[%c0_453, %c0_454] : memref<1x38xf32, #tpu.memory_space<vmem>>, vector<1x38xf32>
    %c0_455 = arith.constant 0 : index
    %c0_456 = arith.constant 0 : index
    %946 = vector.load %arg20[%c0_455, %c0_456] : memref<1x38xf32, #tpu.memory_space<vmem>>, vector<1x38xf32>
    %cst_457 = arith.constant dense<0.000000e+00> : vector<1xf32>
    %947 = vector.multi_reduction <add>, %944, %cst_457 [1] : vector<1x38xf32> to vector<1xf32>
    %948 = vector.shape_cast %947 : vector<1xf32> to vector<1x1xf32>
    %cst_458 = arith.constant 3.800000e+01 : f32
    %949 = vector.broadcast %cst_458 : f32 to vector<1x1xf32>
    %950 = arith.divf %948, %949 : vector<1x1xf32>
    %951 = vector.broadcast %950 : vector<1x1xf32> to vector<1x38xf32>
    %952 = arith.subf %944, %951 : vector<1x38xf32>
    %953 = arith.mulf %952, %952 : vector<1x38xf32>
    %cst_459 = arith.constant dense<0.000000e+00> : vector<1xf32>
    %954 = vector.multi_reduction <add>, %953, %cst_459 [1] : vector<1x38xf32> to vector<1xf32>
    %955 = vector.shape_cast %954 : vector<1xf32> to vector<1x1xf32>
    %cst_460 = arith.constant 3.800000e+01 : f32
    %956 = vector.broadcast %cst_460 : f32 to vector<1x1xf32>
    %957 = arith.divf %955, %956 : vector<1x1xf32>
    %958 = vector.broadcast %950 : vector<1x1xf32> to vector<1x38xf32>
    %959 = arith.subf %944, %958 : vector<1x38xf32>
    %cst_461 = arith.constant 9.99999997E-7 : f32
    %960 = vector.broadcast %cst_461 : f32 to vector<1x1xf32>
    %961 = arith.addf %957, %960 : vector<1x1xf32>
    %962 = math.rsqrt %961 : vector<1x1xf32>
    %963 = vector.broadcast %962 : vector<1x1xf32> to vector<1x38xf32>
    %964 = arith.mulf %959, %963 : vector<1x38xf32>
    %965 = arith.mulf %964, %945 : vector<1x38xf32>
    %966 = arith.addf %965, %946 : vector<1x38xf32>
    %cst_462 = arith.constant dense<0.000000e+00> : vector<1x16xf32>
    %967 = tpu.matmul %966, %245, %cst_462 {dimension_numbers = #tpu.dot_dimension_numbers<[1], [0], [0], [1], [0, 0, 1, 1], [], []>} : vector<1x38xf32>, vector<38x16xf32>, vector<1x16xf32> -> vector<1x16xf32>
    %cst_463 = arith.constant dense<0.000000e+00> : vector<1x8xf32>
    %968 = tpu.matmul %967, %924, %cst_463 {dimension_numbers = #tpu.dot_dimension_numbers<[1], [1], [0], [0], [0, 0, 1, 0], [], []>} : vector<1x16xf32>, vector<8x16xf32>, vector<1x8xf32> -> vector<1x8xf32>
    %cst_464 = arith.constant 0.353553385 : f32
    %969 = vector.broadcast %cst_464 : f32 to vector<1x8xf32>
    %970 = arith.mulf %968, %969 : vector<1x8xf32>
    %971 = arith.addf %970, %918 : vector<1x8xf32>
    %cst_465 = arith.constant dense<0xFF800000> : vector<1xf32>
    %972 = vector.multi_reduction <maximumf>, %971, %cst_465 [1] : vector<1x8xf32> to vector<1xf32>
    %973 = vector.shape_cast %972 : vector<1xf32> to vector<1x1xf32>
    %974 = vector.broadcast %973 : vector<1x1xf32> to vector<1x8xf32>
    %975 = arith.subf %971, %974 : vector<1x8xf32>
    %976 = math.exp %975 : vector<1x8xf32>
    %cst_466 = arith.constant dense<0.000000e+00> : vector<1xf32>
    %977 = vector.multi_reduction <add>, %976, %cst_466 [1] : vector<1x8xf32> to vector<1xf32>
    %978 = vector.shape_cast %977 : vector<1xf32> to vector<1x1xf32>
    %979 = vector.broadcast %978 : vector<1x1xf32> to vector<1x8xf32>
    %980 = arith.divf %976, %979 : vector<1x8xf32>
    %c1_467 = arith.constant 1 : index
    %c0_468 = arith.constant 0 : index
    %c0_469 = arith.constant 0 : index
    %c0_470 = arith.constant 0 : index
    %981 = vector.load %arg34[%c1_467, %c0_468, %c0_469, %c0_470] : memref<2x2x4x8xf32, #tpu.memory_space<vmem>>, vector<1x1x1x8xf32>
    %982 = vector.shape_cast %981 : vector<1x1x1x8xf32> to vector<1x8xf32>
    %983 = vector.shape_cast %980 : vector<1x8xf32> to vector<1x1x1x8xf32>
    tpu.vector_store %arg34[%c1_467, %c0_468, %c0_469, %c0_470], %983 {strides = array<i32>} : memref<2x2x4x8xf32, #tpu.memory_space<vmem>>, vector<1x1x1x8xf32>,
    %cst_471 = arith.constant dense<0.000000e+00> : vector<1x38xf32>
    %984 = tpu.matmul %980, %931, %cst_471 {dimension_numbers = #tpu.dot_dimension_numbers<[1], [0], [0], [1], [0, 0, 1, 1], [], []>} : vector<1x8xf32>, vector<8x38xf32>, vector<1x38xf32> -> vector<1x38xf32>
    %cst_472 = arith.constant dense<0.000000e+00> : vector<1x8xf32>
    %985 = tpu.matmul %967, %928, %cst_472 {dimension_numbers = #tpu.dot_dimension_numbers<[1], [1], [0], [0], [0, 0, 1, 0], [], []>} : vector<1x16xf32>, vector<8x16xf32>, vector<1x8xf32> -> vector<1x8xf32>
    %cst_473 = arith.constant 0.353553385 : f32
    %986 = vector.broadcast %cst_473 : f32 to vector<1x8xf32>
    %987 = arith.mulf %985, %986 : vector<1x8xf32>
    %988 = arith.addf %987, %918 : vector<1x8xf32>
    %cst_474 = arith.constant dense<0xFF800000> : vector<1xf32>
    %989 = vector.multi_reduction <maximumf>, %988, %cst_474 [1] : vector<1x8xf32> to vector<1xf32>
    %990 = vector.shape_cast %989 : vector<1xf32> to vector<1x1xf32>
    %991 = vector.broadcast %990 : vector<1x1xf32> to vector<1x8xf32>
    %992 = arith.subf %988, %991 : vector<1x8xf32>
    %993 = math.exp %992 : vector<1x8xf32>
    %cst_475 = arith.constant dense<0.000000e+00> : vector<1xf32>
    %994 = vector.multi_reduction <add>, %993, %cst_475 [1] : vector<1x8xf32> to vector<1xf32>
    %995 = vector.shape_cast %994 : vector<1xf32> to vector<1x1xf32>
    %996 = vector.broadcast %995 : vector<1x1xf32> to vector<1x8xf32>
    %997 = arith.divf %993, %996 : vector<1x8xf32>
    %c1_476 = arith.constant 1 : index
    %c1_477 = arith.constant 1 : index
    %c0_478 = arith.constant 0 : index
    %c0_479 = arith.constant 0 : index
    %998 = vector.load %arg34[%c1_476, %c1_477, %c0_478, %c0_479] : memref<2x2x4x8xf32, #tpu.memory_space<vmem>>, vector<1x1x1x8xf32>
    %999 = vector.shape_cast %998 : vector<1x1x1x8xf32> to vector<1x8xf32>
    %1000 = vector.shape_cast %997 : vector<1x8xf32> to vector<1x1x1x8xf32>
    tpu.vector_store %arg34[%c1_476, %c1_477, %c0_478, %c0_479], %1000 {strides = array<i32>} : memref<2x2x4x8xf32, #tpu.memory_space<vmem>>, vector<1x1x1x8xf32>,
    %cst_480 = arith.constant dense<0.000000e+00> : vector<1x38xf32>
    %1001 = tpu.matmul %997, %934, %cst_480 {dimension_numbers = #tpu.dot_dimension_numbers<[1], [0], [0], [1], [0, 0, 1, 1], [], []>} : vector<1x8xf32>, vector<8x38xf32>, vector<1x38xf32> -> vector<1x38xf32>
    %1002 = arith.addf %984, %1001 : vector<1x38xf32>
    %1003 = arith.addf %1002, %966 : vector<1x38xf32>
    %c0_481 = arith.constant 0 : index
    %c0_482 = arith.constant 0 : index
    %1004 = vector.load %arg24[%c0_481, %c0_482] : memref<1x38xf32, #tpu.memory_space<vmem>>, vector<1x38xf32>
    %c0_483 = arith.constant 0 : index
    %c0_484 = arith.constant 0 : index
    %1005 = vector.load %arg25[%c0_483, %c0_484] : memref<1x38xf32, #tpu.memory_space<vmem>>, vector<1x38xf32>
    %cst_485 = arith.constant dense<0.000000e+00> : vector<1xf32>
    %1006 = vector.multi_reduction <add>, %1003, %cst_485 [1] : vector<1x38xf32> to vector<1xf32>
    %1007 = vector.shape_cast %1006 : vector<1xf32> to vector<1x1xf32>
    %cst_486 = arith.constant 3.800000e+01 : f32
    %1008 = vector.broadcast %cst_486 : f32 to vector<1x1xf32>
    %1009 = arith.divf %1007, %1008 : vector<1x1xf32>
    %1010 = vector.broadcast %1009 : vector<1x1xf32> to vector<1x38xf32>
    %1011 = arith.subf %1003, %1010 : vector<1x38xf32>
    %1012 = arith.mulf %1011, %1011 : vector<1x38xf32>
    %cst_487 = arith.constant dense<0.000000e+00> : vector<1xf32>
    %1013 = vector.multi_reduction <add>, %1012, %cst_487 [1] : vector<1x38xf32> to vector<1xf32>
    %1014 = vector.shape_cast %1013 : vector<1xf32> to vector<1x1xf32>
    %cst_488 = arith.constant 3.800000e+01 : f32
    %1015 = vector.broadcast %cst_488 : f32 to vector<1x1xf32>
    %1016 = arith.divf %1014, %1015 : vector<1x1xf32>
    %1017 = vector.broadcast %1009 : vector<1x1xf32> to vector<1x38xf32>
    %1018 = arith.subf %1003, %1017 : vector<1x38xf32>
    %cst_489 = arith.constant 9.99999997E-7 : f32
    %1019 = vector.broadcast %cst_489 : f32 to vector<1x1xf32>
    %1020 = arith.addf %1016, %1019 : vector<1x1xf32>
    %1021 = math.rsqrt %1020 : vector<1x1xf32>
    %1022 = vector.broadcast %1021 : vector<1x1xf32> to vector<1x38xf32>
    %1023 = arith.mulf %1018, %1022 : vector<1x38xf32>
    %1024 = arith.mulf %1023, %1004 : vector<1x38xf32>
    %1025 = arith.addf %1024, %1005 : vector<1x38xf32>
    %c0_490 = arith.constant 0 : index
    %c0_491 = arith.constant 0 : index
    %1026 = vector.load %arg26[%c0_490, %c0_491] : memref<38x64xf32, #tpu.memory_space<vmem>>, vector<38x64xf32>
    %cst_492 = arith.constant dense<0.000000e+00> : vector<1x64xf32>
    %1027 = tpu.matmul %1025, %1026, %cst_492 {dimension_numbers = #tpu.dot_dimension_numbers<[1], [0], [0], [1], [0, 0, 1, 1], [], []>} : vector<1x38xf32>, vector<38x64xf32>, vector<1x64xf32> -> vector<1x64xf32>
    %c0_493 = arith.constant 0 : index
    %c0_494 = arith.constant 0 : index
    %1028 = vector.load %arg27[%c0_493, %c0_494] : memref<1x64xf32, #tpu.memory_space<vmem>>, vector<1x64xf32>
    %1029 = arith.addf %1027, %1028 : vector<1x64xf32>
    %cst_495 = arith.constant 0.000000e+00 : f32
    %1030 = vector.broadcast %cst_495 : f32 to vector<1x64xf32>
    %1031 = arith.maximumf %1029, %1030 : vector<1x64xf32>
    %c0_496 = arith.constant 0 : index
    %c0_497 = arith.constant 0 : index
    %1032 = vector.load %arg28[%c0_496, %c0_497] : memref<64x38xf32, #tpu.memory_space<vmem>>, vector<64x38xf32>
    %cst_498 = arith.constant dense<0.000000e+00> : vector<1x38xf32>
    %1033 = tpu.matmul %1031, %1032, %cst_498 {dimension_numbers = #tpu.dot_dimension_numbers<[1], [0], [0], [1], [0, 0, 1, 1], [], []>} : vector<1x64xf32>, vector<64x38xf32>, vector<1x38xf32> -> vector<1x38xf32>
    %c0_499 = arith.constant 0 : index
    %c0_500 = arith.constant 0 : index
    %1034 = vector.load %arg29[%c0_499, %c0_500] : memref<1x38xf32, #tpu.memory_space<vmem>>, vector<1x38xf32>
    %1035 = arith.addf %1033, %1034 : vector<1x38xf32>
    %1036 = arith.addf %1035, %1025 : vector<1x38xf32>
    %c0_501 = arith.constant 0 : index
    %c0_502 = arith.constant 0 : index
    %1037 = vector.load %arg30[%c0_501, %c0_502] : memref<1x38xf32, #tpu.memory_space<vmem>>, vector<1x38xf32>
    %c0_503 = arith.constant 0 : index
    %c0_504 = arith.constant 0 : index
    %1038 = vector.load %arg31[%c0_503, %c0_504] : memref<1x38xf32, #tpu.memory_space<vmem>>, vector<1x38xf32>
    %cst_505 = arith.constant dense<0.000000e+00> : vector<1xf32>
    %1039 = vector.multi_reduction <add>, %1036, %cst_505 [1] : vector<1x38xf32> to vector<1xf32>
    %1040 = vector.shape_cast %1039 : vector<1xf32> to vector<1x1xf32>
    %cst_506 = arith.constant 3.800000e+01 : f32
    %1041 = vector.broadcast %cst_506 : f32 to vector<1x1xf32>
    %1042 = arith.divf %1040, %1041 : vector<1x1xf32>
    %1043 = vector.broadcast %1042 : vector<1x1xf32> to vector<1x38xf32>
    %1044 = arith.subf %1036, %1043 : vector<1x38xf32>
    %1045 = arith.mulf %1044, %1044 : vector<1x38xf32>
    %cst_507 = arith.constant dense<0.000000e+00> : vector<1xf32>
    %1046 = vector.multi_reduction <add>, %1045, %cst_507 [1] : vector<1x38xf32> to vector<1xf32>
    %1047 = vector.shape_cast %1046 : vector<1xf32> to vector<1x1xf32>
    %cst_508 = arith.constant 3.800000e+01 : f32
    %1048 = vector.broadcast %cst_508 : f32 to vector<1x1xf32>
    %1049 = arith.divf %1047, %1048 : vector<1x1xf32>
    %1050 = vector.broadcast %1042 : vector<1x1xf32> to vector<1x38xf32>
    %1051 = arith.subf %1036, %1050 : vector<1x38xf32>
    %cst_509 = arith.constant 9.99999997E-7 : f32
    %1052 = vector.broadcast %cst_509 : f32 to vector<1x1xf32>
    %1053 = arith.addf %1049, %1052 : vector<1x1xf32>
    %1054 = math.rsqrt %1053 : vector<1x1xf32>
    %1055 = vector.broadcast %1054 : vector<1x1xf32> to vector<1x38xf32>
    %1056 = arith.mulf %1051, %1055 : vector<1x38xf32>
    %1057 = arith.mulf %1056, %1037 : vector<1x38xf32>
    %1058 = arith.addf %1057, %1038 : vector<1x38xf32>
    %cst_510 = arith.constant dense<0.000000e+00> : vector<1x38xf32>
    %1059 = tpu.matmul %1058, %246, %cst_510 {dimension_numbers = #tpu.dot_dimension_numbers<[1], [0], [0], [1], [0, 0, 1, 1], [], []>} : vector<1x38xf32>, vector<38x38xf32>, vector<1x38xf32> -> vector<1x38xf32>
    %1060 = arith.addf %1059, %936 : vector<1x38xf32>
    %cst_511 = arith.constant -1.000000e+30 : f32
    %1061 = vector.broadcast %cst_511 : f32 to vector<1x38xf32>
    %1062 = arith.select %13, %1060, %1061 : vector<1x38xi1>, vector<1x38xf32>
    %cst_512 = arith.constant dense<0xFF800000> : vector<1xf32>
    %1063 = vector.multi_reduction <maximumf>, %1062, %cst_512 [1] : vector<1x38xf32> to vector<1xf32>
    %1064 = vector.shape_cast %1063 : vector<1xf32> to vector<1x1xf32>
    %1065 = vector.broadcast %1064 : vector<1x1xf32> to vector<1x38xf32>
    %1066 = arith.subf %1062, %1065 : vector<1x38xf32>
    %1067 = math.exp %1066 : vector<1x38xf32>
    %cst_513 = arith.constant dense<0.000000e+00> : vector<1xf32>
    %1068 = vector.multi_reduction <add>, %1067, %cst_513 [1] : vector<1x38xf32> to vector<1xf32>
    %1069 = vector.shape_cast %1068 : vector<1xf32> to vector<1x1xf32>
    %1070 = vector.broadcast %1069 : vector<1x1xf32> to vector<1x38xf32>
    %1071 = arith.divf %1067, %1070 : vector<1x38xf32>
    %cst_514 = arith.constant 0.000000e+00 : f32
    %1072 = vector.broadcast %cst_514 : f32 to vector<1x38xf32>
    %1073 = arith.select %13, %1071, %1072 : vector<1x38xi1>, vector<1x38xf32>
    %cst_515 = arith.constant -1.000000e+30 : f32
    %1074 = vector.broadcast %cst_515 : f32 to vector<1x38xf32>
    %1075 = arith.select %18, %1060, %1074 : vector<1x38xi1>, vector<1x38xf32>
    %cst_516 = arith.constant dense<0xFF800000> : vector<1xf32>
    %1076 = vector.multi_reduction <maximumf>, %1075, %cst_516 [1] : vector<1x38xf32> to vector<1xf32>
    %1077 = vector.shape_cast %1076 : vector<1xf32> to vector<1x1xf32>
    %1078 = vector.broadcast %1077 : vector<1x1xf32> to vector<1x38xf32>
    %1079 = arith.subf %1075, %1078 : vector<1x38xf32>
    %1080 = math.exp %1079 : vector<1x38xf32>
    %cst_517 = arith.constant dense<0.000000e+00> : vector<1xf32>
    %1081 = vector.multi_reduction <add>, %1080, %cst_517 [1] : vector<1x38xf32> to vector<1xf32>
    %1082 = vector.shape_cast %1081 : vector<1xf32> to vector<1x1xf32>
    %1083 = vector.broadcast %1082 : vector<1x1xf32> to vector<1x38xf32>
    %1084 = arith.divf %1080, %1083 : vector<1x38xf32>
    %cst_518 = arith.constant 0.000000e+00 : f32
    %1085 = vector.broadcast %cst_518 : f32 to vector<1x38xf32>
    %1086 = arith.select %18, %1084, %1085 : vector<1x38xi1>, vector<1x38xf32>
    %1087 = arith.addf %1073, %1086 : vector<1x38xf32>
    %cst_519 = arith.constant 0.000000e+00 : f32
    %1088 = vector.broadcast %cst_519 : f32 to vector<1x38xf32>
    %1089 = arith.subf %1088, %1060 : vector<1x38xf32>
    %1090 = math.exp %1089 : vector<1x38xf32>
    %cst_520 = arith.constant 1.000000e+00 : f32
    %1091 = vector.broadcast %cst_520 : f32 to vector<1x38xf32>
    %1092 = arith.addf %1091, %1090 : vector<1x38xf32>
    %cst_521 = arith.constant 1.000000e+00 : f32
    %1093 = vector.broadcast %cst_521 : f32 to vector<1x38xf32>
    %1094 = arith.divf %1093, %1092 : vector<1x38xf32>
    %cst_522 = arith.constant 0.000000e+00 : f32
    %1095 = vector.broadcast %cst_522 : f32 to vector<1x38xf32>
    %1096 = arith.select %23, %1094, %1095 : vector<1x38xi1>, vector<1x38xf32>
    %1097 = arith.addf %1087, %1096 : vector<1x38xf32>
    %1098 = vector.extract_strided_slice %1097 {offsets = [0, 0], sizes = [1, 19], strides = [1, 1]} : vector<1x38xf32> to vector<1x19xf32>
    %c1_523 = arith.constant 1 : index
    %c1_524 = arith.constant 1 : index
    %c0_525 = arith.constant 0 : index
    %1099 = vector.load %arg33[%c1_523, %c1_524, %c0_525] : memref<2x5x19xf32, #tpu.memory_space<vmem>>, vector<1x1x19xf32>
    %1100 = vector.shape_cast %1099 : vector<1x1x19xf32> to vector<1x19xf32>
    %1101 = vector.shape_cast %1098 : vector<1x19xf32> to vector<1x1x19xf32>
    tpu.vector_store %arg33[%c1_523, %c1_524, %c0_525], %1101 {strides = array<i32>} : memref<2x5x19xf32, #tpu.memory_space<vmem>>, vector<1x1x19xf32>,
    %1102 = vector.extract_strided_slice %243 {offsets = [1, 0], sizes = [1, 38], strides = [1, 1]} : vector<4x38xf32> to vector<1x38xf32>
    %1103 = arith.addf %1097, %1102 : vector<1x38xf32>
    %cst_526 = arith.constant dense<0.000000e+00> : vector<1x38xf32>
    %1104 = tpu.matmul %1103, %244, %cst_526 {dimension_numbers = #tpu.dot_dimension_numbers<[1], [0], [0], [1], [0, 0, 1, 1], [], []>} : vector<1x38xf32>, vector<38x38xf32>, vector<1x38xf32> -> vector<1x38xf32>
    %1105 = arith.addf %1104, %1103 : vector<1x38xf32>
    %c0_527 = arith.constant 0 : index
    %c0_528 = arith.constant 0 : index
    %1106 = vector.load %arg19[%c0_527, %c0_528] : memref<1x38xf32, #tpu.memory_space<vmem>>, vector<1x38xf32>
    %c0_529 = arith.constant 0 : index
    %c0_530 = arith.constant 0 : index
    %1107 = vector.load %arg20[%c0_529, %c0_530] : memref<1x38xf32, #tpu.memory_space<vmem>>, vector<1x38xf32>
    %cst_531 = arith.constant dense<0.000000e+00> : vector<1xf32>
    %1108 = vector.multi_reduction <add>, %1105, %cst_531 [1] : vector<1x38xf32> to vector<1xf32>
    %1109 = vector.shape_cast %1108 : vector<1xf32> to vector<1x1xf32>
    %cst_532 = arith.constant 3.800000e+01 : f32
    %1110 = vector.broadcast %cst_532 : f32 to vector<1x1xf32>
    %1111 = arith.divf %1109, %1110 : vector<1x1xf32>
    %1112 = vector.broadcast %1111 : vector<1x1xf32> to vector<1x38xf32>
    %1113 = arith.subf %1105, %1112 : vector<1x38xf32>
    %1114 = arith.mulf %1113, %1113 : vector<1x38xf32>
    %cst_533 = arith.constant dense<0.000000e+00> : vector<1xf32>
    %1115 = vector.multi_reduction <add>, %1114, %cst_533 [1] : vector<1x38xf32> to vector<1xf32>
    %1116 = vector.shape_cast %1115 : vector<1xf32> to vector<1x1xf32>
    %cst_534 = arith.constant 3.800000e+01 : f32
    %1117 = vector.broadcast %cst_534 : f32 to vector<1x1xf32>
    %1118 = arith.divf %1116, %1117 : vector<1x1xf32>
    %1119 = vector.broadcast %1111 : vector<1x1xf32> to vector<1x38xf32>
    %1120 = arith.subf %1105, %1119 : vector<1x38xf32>
    %cst_535 = arith.constant 9.99999997E-7 : f32
    %1121 = vector.broadcast %cst_535 : f32 to vector<1x1xf32>
    %1122 = arith.addf %1118, %1121 : vector<1x1xf32>
    %1123 = math.rsqrt %1122 : vector<1x1xf32>
    %1124 = vector.broadcast %1123 : vector<1x1xf32> to vector<1x38xf32>
    %1125 = arith.mulf %1120, %1124 : vector<1x38xf32>
    %1126 = arith.mulf %1125, %1106 : vector<1x38xf32>
    %1127 = arith.addf %1126, %1107 : vector<1x38xf32>
    %cst_536 = arith.constant dense<0.000000e+00> : vector<1x16xf32>
    %1128 = tpu.matmul %1127, %245, %cst_536 {dimension_numbers = #tpu.dot_dimension_numbers<[1], [0], [0], [1], [0, 0, 1, 1], [], []>} : vector<1x38xf32>, vector<38x16xf32>, vector<1x16xf32> -> vector<1x16xf32>
    %cst_537 = arith.constant dense<0.000000e+00> : vector<1x8xf32>
    %1129 = tpu.matmul %1128, %924, %cst_537 {dimension_numbers = #tpu.dot_dimension_numbers<[1], [1], [0], [0], [0, 0, 1, 0], [], []>} : vector<1x16xf32>, vector<8x16xf32>, vector<1x8xf32> -> vector<1x8xf32>
    %cst_538 = arith.constant 0.353553385 : f32
    %1130 = vector.broadcast %cst_538 : f32 to vector<1x8xf32>
    %1131 = arith.mulf %1129, %1130 : vector<1x8xf32>
    %1132 = arith.addf %1131, %918 : vector<1x8xf32>
    %cst_539 = arith.constant dense<0xFF800000> : vector<1xf32>
    %1133 = vector.multi_reduction <maximumf>, %1132, %cst_539 [1] : vector<1x8xf32> to vector<1xf32>
    %1134 = vector.shape_cast %1133 : vector<1xf32> to vector<1x1xf32>
    %1135 = vector.broadcast %1134 : vector<1x1xf32> to vector<1x8xf32>
    %1136 = arith.subf %1132, %1135 : vector<1x8xf32>
    %1137 = math.exp %1136 : vector<1x8xf32>
    %cst_540 = arith.constant dense<0.000000e+00> : vector<1xf32>
    %1138 = vector.multi_reduction <add>, %1137, %cst_540 [1] : vector<1x8xf32> to vector<1xf32>
    %1139 = vector.shape_cast %1138 : vector<1xf32> to vector<1x1xf32>
    %1140 = vector.broadcast %1139 : vector<1x1xf32> to vector<1x8xf32>
    %1141 = arith.divf %1137, %1140 : vector<1x8xf32>
    %c1_541 = arith.constant 1 : index
    %c0_542 = arith.constant 0 : index
    %c1_543 = arith.constant 1 : index
    %c0_544 = arith.constant 0 : index
    %1142 = vector.load %arg34[%c1_541, %c0_542, %c1_543, %c0_544] : memref<2x2x4x8xf32, #tpu.memory_space<vmem>>, vector<1x1x1x8xf32>
    %1143 = vector.shape_cast %1142 : vector<1x1x1x8xf32> to vector<1x8xf32>
    %1144 = vector.shape_cast %1141 : vector<1x8xf32> to vector<1x1x1x8xf32>
    tpu.vector_store %arg34[%c1_541, %c0_542, %c1_543, %c0_544], %1144 {strides = array<i32>} : memref<2x2x4x8xf32, #tpu.memory_space<vmem>>, vector<1x1x1x8xf32>,
    %cst_545 = arith.constant dense<0.000000e+00> : vector<1x38xf32>
    %1145 = tpu.matmul %1141, %931, %cst_545 {dimension_numbers = #tpu.dot_dimension_numbers<[1], [0], [0], [1], [0, 0, 1, 1], [], []>} : vector<1x8xf32>, vector<8x38xf32>, vector<1x38xf32> -> vector<1x38xf32>
    %cst_546 = arith.constant dense<0.000000e+00> : vector<1x8xf32>
    %1146 = tpu.matmul %1128, %928, %cst_546 {dimension_numbers = #tpu.dot_dimension_numbers<[1], [1], [0], [0], [0, 0, 1, 0], [], []>} : vector<1x16xf32>, vector<8x16xf32>, vector<1x8xf32> -> vector<1x8xf32>
    %cst_547 = arith.constant 0.353553385 : f32
    %1147 = vector.broadcast %cst_547 : f32 to vector<1x8xf32>
    %1148 = arith.mulf %1146, %1147 : vector<1x8xf32>
    %1149 = arith.addf %1148, %918 : vector<1x8xf32>
    %cst_548 = arith.constant dense<0xFF800000> : vector<1xf32>
    %1150 = vector.multi_reduction <maximumf>, %1149, %cst_548 [1] : vector<1x8xf32> to vector<1xf32>
    %1151 = vector.shape_cast %1150 : vector<1xf32> to vector<1x1xf32>
    %1152 = vector.broadcast %1151 : vector<1x1xf32> to vector<1x8xf32>
    %1153 = arith.subf %1149, %1152 : vector<1x8xf32>
    %1154 = math.exp %1153 : vector<1x8xf32>
    %cst_549 = arith.constant dense<0.000000e+00> : vector<1xf32>
    %1155 = vector.multi_reduction <add>, %1154, %cst_549 [1] : vector<1x8xf32> to vector<1xf32>
    %1156 = vector.shape_cast %1155 : vector<1xf32> to vector<1x1xf32>
    %1157 = vector.broadcast %1156 : vector<1x1xf32> to vector<1x8xf32>
    %1158 = arith.divf %1154, %1157 : vector<1x8xf32>
    %c1_550 = arith.constant 1 : index
    %c1_551 = arith.constant 1 : index
    %c1_552 = arith.constant 1 : index
    %c0_553 = arith.constant 0 : index
    %1159 = vector.load %arg34[%c1_550, %c1_551, %c1_552, %c0_553] : memref<2x2x4x8xf32, #tpu.memory_space<vmem>>, vector<1x1x1x8xf32>
    %1160 = vector.shape_cast %1159 : vector<1x1x1x8xf32> to vector<1x8xf32>
    %1161 = vector.shape_cast %1158 : vector<1x8xf32> to vector<1x1x1x8xf32>
    tpu.vector_store %arg34[%c1_550, %c1_551, %c1_552, %c0_553], %1161 {strides = array<i32>} : memref<2x2x4x8xf32, #tpu.memory_space<vmem>>, vector<1x1x1x8xf32>,
    %cst_554 = arith.constant dense<0.000000e+00> : vector<1x38xf32>
    %1162 = tpu.matmul %1158, %934, %cst_554 {dimension_numbers = #tpu.dot_dimension_numbers<[1], [0], [0], [1], [0, 0, 1, 1], [], []>} : vector<1x8xf32>, vector<8x38xf32>, vector<1x38xf32> -> vector<1x38xf32>
    %1163 = arith.addf %1145, %1162 : vector<1x38xf32>
    %1164 = arith.addf %1163, %1127 : vector<1x38xf32>
    %c0_555 = arith.constant 0 : index
    %c0_556 = arith.constant 0 : index
    %1165 = vector.load %arg24[%c0_555, %c0_556] : memref<1x38xf32, #tpu.memory_space<vmem>>, vector<1x38xf32>
    %c0_557 = arith.constant 0 : index
    %c0_558 = arith.constant 0 : index
    %1166 = vector.load %arg25[%c0_557, %c0_558] : memref<1x38xf32, #tpu.memory_space<vmem>>, vector<1x38xf32>
    %cst_559 = arith.constant dense<0.000000e+00> : vector<1xf32>
    %1167 = vector.multi_reduction <add>, %1164, %cst_559 [1] : vector<1x38xf32> to vector<1xf32>
    %1168 = vector.shape_cast %1167 : vector<1xf32> to vector<1x1xf32>
    %cst_560 = arith.constant 3.800000e+01 : f32
    %1169 = vector.broadcast %cst_560 : f32 to vector<1x1xf32>
    %1170 = arith.divf %1168, %1169 : vector<1x1xf32>
    %1171 = vector.broadcast %1170 : vector<1x1xf32> to vector<1x38xf32>
    %1172 = arith.subf %1164, %1171 : vector<1x38xf32>
    %1173 = arith.mulf %1172, %1172 : vector<1x38xf32>
    %cst_561 = arith.constant dense<0.000000e+00> : vector<1xf32>
    %1174 = vector.multi_reduction <add>, %1173, %cst_561 [1] : vector<1x38xf32> to vector<1xf32>
    %1175 = vector.shape_cast %1174 : vector<1xf32> to vector<1x1xf32>
    %cst_562 = arith.constant 3.800000e+01 : f32
    %1176 = vector.broadcast %cst_562 : f32 to vector<1x1xf32>
    %1177 = arith.divf %1175, %1176 : vector<1x1xf32>
    %1178 = vector.broadcast %1170 : vector<1x1xf32> to vector<1x38xf32>
    %1179 = arith.subf %1164, %1178 : vector<1x38xf32>
    %cst_563 = arith.constant 9.99999997E-7 : f32
    %1180 = vector.broadcast %cst_563 : f32 to vector<1x1xf32>
    %1181 = arith.addf %1177, %1180 : vector<1x1xf32>
    %1182 = math.rsqrt %1181 : vector<1x1xf32>
    %1183 = vector.broadcast %1182 : vector<1x1xf32> to vector<1x38xf32>
    %1184 = arith.mulf %1179, %1183 : vector<1x38xf32>
    %1185 = arith.mulf %1184, %1165 : vector<1x38xf32>
    %1186 = arith.addf %1185, %1166 : vector<1x38xf32>
    %c0_564 = arith.constant 0 : index
    %c0_565 = arith.constant 0 : index
    %1187 = vector.load %arg26[%c0_564, %c0_565] : memref<38x64xf32, #tpu.memory_space<vmem>>, vector<38x64xf32>
    %cst_566 = arith.constant dense<0.000000e+00> : vector<1x64xf32>
    %1188 = tpu.matmul %1186, %1187, %cst_566 {dimension_numbers = #tpu.dot_dimension_numbers<[1], [0], [0], [1], [0, 0, 1, 1], [], []>} : vector<1x38xf32>, vector<38x64xf32>, vector<1x64xf32> -> vector<1x64xf32>
    %c0_567 = arith.constant 0 : index
    %c0_568 = arith.constant 0 : index
    %1189 = vector.load %arg27[%c0_567, %c0_568] : memref<1x64xf32, #tpu.memory_space<vmem>>, vector<1x64xf32>
    %1190 = arith.addf %1188, %1189 : vector<1x64xf32>
    %cst_569 = arith.constant 0.000000e+00 : f32
    %1191 = vector.broadcast %cst_569 : f32 to vector<1x64xf32>
    %1192 = arith.maximumf %1190, %1191 : vector<1x64xf32>
    %c0_570 = arith.constant 0 : index
    %c0_571 = arith.constant 0 : index
    %1193 = vector.load %arg28[%c0_570, %c0_571] : memref<64x38xf32, #tpu.memory_space<vmem>>, vector<64x38xf32>
    %cst_572 = arith.constant dense<0.000000e+00> : vector<1x38xf32>
    %1194 = tpu.matmul %1192, %1193, %cst_572 {dimension_numbers = #tpu.dot_dimension_numbers<[1], [0], [0], [1], [0, 0, 1, 1], [], []>} : vector<1x64xf32>, vector<64x38xf32>, vector<1x38xf32> -> vector<1x38xf32>
    %c0_573 = arith.constant 0 : index
    %c0_574 = arith.constant 0 : index
    %1195 = vector.load %arg29[%c0_573, %c0_574] : memref<1x38xf32, #tpu.memory_space<vmem>>, vector<1x38xf32>
    %1196 = arith.addf %1194, %1195 : vector<1x38xf32>
    %1197 = arith.addf %1196, %1186 : vector<1x38xf32>
    %c0_575 = arith.constant 0 : index
    %c0_576 = arith.constant 0 : index
    %1198 = vector.load %arg30[%c0_575, %c0_576] : memref<1x38xf32, #tpu.memory_space<vmem>>, vector<1x38xf32>
    %c0_577 = arith.constant 0 : index
    %c0_578 = arith.constant 0 : index
    %1199 = vector.load %arg31[%c0_577, %c0_578] : memref<1x38xf32, #tpu.memory_space<vmem>>, vector<1x38xf32>
    %cst_579 = arith.constant dense<0.000000e+00> : vector<1xf32>
    %1200 = vector.multi_reduction <add>, %1197, %cst_579 [1] : vector<1x38xf32> to vector<1xf32>
    %1201 = vector.shape_cast %1200 : vector<1xf32> to vector<1x1xf32>
    %cst_580 = arith.constant 3.800000e+01 : f32
    %1202 = vector.broadcast %cst_580 : f32 to vector<1x1xf32>
    %1203 = arith.divf %1201, %1202 : vector<1x1xf32>
    %1204 = vector.broadcast %1203 : vector<1x1xf32> to vector<1x38xf32>
    %1205 = arith.subf %1197, %1204 : vector<1x38xf32>
    %1206 = arith.mulf %1205, %1205 : vector<1x38xf32>
    %cst_581 = arith.constant dense<0.000000e+00> : vector<1xf32>
    %1207 = vector.multi_reduction <add>, %1206, %cst_581 [1] : vector<1x38xf32> to vector<1xf32>
    %1208 = vector.shape_cast %1207 : vector<1xf32> to vector<1x1xf32>
    %cst_582 = arith.constant 3.800000e+01 : f32
    %1209 = vector.broadcast %cst_582 : f32 to vector<1x1xf32>
    %1210 = arith.divf %1208, %1209 : vector<1x1xf32>
    %1211 = vector.broadcast %1203 : vector<1x1xf32> to vector<1x38xf32>
    %1212 = arith.subf %1197, %1211 : vector<1x38xf32>
    %cst_583 = arith.constant 9.99999997E-7 : f32
    %1213 = vector.broadcast %cst_583 : f32 to vector<1x1xf32>
    %1214 = arith.addf %1210, %1213 : vector<1x1xf32>
    %1215 = math.rsqrt %1214 : vector<1x1xf32>
    %1216 = vector.broadcast %1215 : vector<1x1xf32> to vector<1x38xf32>
    %1217 = arith.mulf %1212, %1216 : vector<1x38xf32>
    %1218 = arith.mulf %1217, %1198 : vector<1x38xf32>
    %1219 = arith.addf %1218, %1199 : vector<1x38xf32>
    %cst_584 = arith.constant dense<0.000000e+00> : vector<1x38xf32>
    %1220 = tpu.matmul %1219, %246, %cst_584 {dimension_numbers = #tpu.dot_dimension_numbers<[1], [0], [0], [1], [0, 0, 1, 1], [], []>} : vector<1x38xf32>, vector<38x38xf32>, vector<1x38xf32> -> vector<1x38xf32>
    %1221 = arith.addf %1220, %1097 : vector<1x38xf32>
    %cst_585 = arith.constant -1.000000e+30 : f32
    %1222 = vector.broadcast %cst_585 : f32 to vector<1x38xf32>
    %1223 = arith.select %13, %1221, %1222 : vector<1x38xi1>, vector<1x38xf32>
    %cst_586 = arith.constant dense<0xFF800000> : vector<1xf32>
    %1224 = vector.multi_reduction <maximumf>, %1223, %cst_586 [1] : vector<1x38xf32> to vector<1xf32>
    %1225 = vector.shape_cast %1224 : vector<1xf32> to vector<1x1xf32>
    %1226 = vector.broadcast %1225 : vector<1x1xf32> to vector<1x38xf32>
    %1227 = arith.subf %1223, %1226 : vector<1x38xf32>
    %1228 = math.exp %1227 : vector<1x38xf32>
    %cst_587 = arith.constant dense<0.000000e+00> : vector<1xf32>
    %1229 = vector.multi_reduction <add>, %1228, %cst_587 [1] : vector<1x38xf32> to vector<1xf32>
    %1230 = vector.shape_cast %1229 : vector<1xf32> to vector<1x1xf32>
    %1231 = vector.broadcast %1230 : vector<1x1xf32> to vector<1x38xf32>
    %1232 = arith.divf %1228, %1231 : vector<1x38xf32>
    %cst_588 = arith.constant 0.000000e+00 : f32
    %1233 = vector.broadcast %cst_588 : f32 to vector<1x38xf32>
    %1234 = arith.select %13, %1232, %1233 : vector<1x38xi1>, vector<1x38xf32>
    %cst_589 = arith.constant -1.000000e+30 : f32
    %1235 = vector.broadcast %cst_589 : f32 to vector<1x38xf32>
    %1236 = arith.select %18, %1221, %1235 : vector<1x38xi1>, vector<1x38xf32>
    %cst_590 = arith.constant dense<0xFF800000> : vector<1xf32>
    %1237 = vector.multi_reduction <maximumf>, %1236, %cst_590 [1] : vector<1x38xf32> to vector<1xf32>
    %1238 = vector.shape_cast %1237 : vector<1xf32> to vector<1x1xf32>
    %1239 = vector.broadcast %1238 : vector<1x1xf32> to vector<1x38xf32>
    %1240 = arith.subf %1236, %1239 : vector<1x38xf32>
    %1241 = math.exp %1240 : vector<1x38xf32>
    %cst_591 = arith.constant dense<0.000000e+00> : vector<1xf32>
    %1242 = vector.multi_reduction <add>, %1241, %cst_591 [1] : vector<1x38xf32> to vector<1xf32>
    %1243 = vector.shape_cast %1242 : vector<1xf32> to vector<1x1xf32>
    %1244 = vector.broadcast %1243 : vector<1x1xf32> to vector<1x38xf32>
    %1245 = arith.divf %1241, %1244 : vector<1x38xf32>
    %cst_592 = arith.constant 0.000000e+00 : f32
    %1246 = vector.broadcast %cst_592 : f32 to vector<1x38xf32>
    %1247 = arith.select %18, %1245, %1246 : vector<1x38xi1>, vector<1x38xf32>
    %1248 = arith.addf %1234, %1247 : vector<1x38xf32>
    %cst_593 = arith.constant 0.000000e+00 : f32
    %1249 = vector.broadcast %cst_593 : f32 to vector<1x38xf32>
    %1250 = arith.subf %1249, %1221 : vector<1x38xf32>
    %1251 = math.exp %1250 : vector<1x38xf32>
    %cst_594 = arith.constant 1.000000e+00 : f32
    %1252 = vector.broadcast %cst_594 : f32 to vector<1x38xf32>
    %1253 = arith.addf %1252, %1251 : vector<1x38xf32>
    %cst_595 = arith.constant 1.000000e+00 : f32
    %1254 = vector.broadcast %cst_595 : f32 to vector<1x38xf32>
    %1255 = arith.divf %1254, %1253 : vector<1x38xf32>
    %cst_596 = arith.constant 0.000000e+00 : f32
    %1256 = vector.broadcast %cst_596 : f32 to vector<1x38xf32>
    %1257 = arith.select %23, %1255, %1256 : vector<1x38xi1>, vector<1x38xf32>
    %1258 = arith.addf %1248, %1257 : vector<1x38xf32>
    %1259 = vector.extract_strided_slice %1258 {offsets = [0, 0], sizes = [1, 19], strides = [1, 1]} : vector<1x38xf32> to vector<1x19xf32>
    %c1_597 = arith.constant 1 : index
    %c2_598 = arith.constant 2 : index
    %c0_599 = arith.constant 0 : index
    %1260 = vector.load %arg33[%c1_597, %c2_598, %c0_599] : memref<2x5x19xf32, #tpu.memory_space<vmem>>, vector<1x1x19xf32>
    %1261 = vector.shape_cast %1260 : vector<1x1x19xf32> to vector<1x19xf32>
    %1262 = vector.shape_cast %1259 : vector<1x19xf32> to vector<1x1x19xf32>
    tpu.vector_store %arg33[%c1_597, %c2_598, %c0_599], %1262 {strides = array<i32>} : memref<2x5x19xf32, #tpu.memory_space<vmem>>, vector<1x1x19xf32>,
    %1263 = vector.extract_strided_slice %243 {offsets = [2, 0], sizes = [1, 38], strides = [1, 1]} : vector<4x38xf32> to vector<1x38xf32>
    %1264 = arith.addf %1258, %1263 : vector<1x38xf32>
    %cst_600 = arith.constant dense<0.000000e+00> : vector<1x38xf32>
    %1265 = tpu.matmul %1264, %244, %cst_600 {dimension_numbers = #tpu.dot_dimension_numbers<[1], [0], [0], [1], [0, 0, 1, 1], [], []>} : vector<1x38xf32>, vector<38x38xf32>, vector<1x38xf32> -> vector<1x38xf32>
    %1266 = arith.addf %1265, %1264 : vector<1x38xf32>
    %c0_601 = arith.constant 0 : index
    %c0_602 = arith.constant 0 : index
    %1267 = vector.load %arg19[%c0_601, %c0_602] : memref<1x38xf32, #tpu.memory_space<vmem>>, vector<1x38xf32>
    %c0_603 = arith.constant 0 : index
    %c0_604 = arith.constant 0 : index
    %1268 = vector.load %arg20[%c0_603, %c0_604] : memref<1x38xf32, #tpu.memory_space<vmem>>, vector<1x38xf32>
    %cst_605 = arith.constant dense<0.000000e+00> : vector<1xf32>
    %1269 = vector.multi_reduction <add>, %1266, %cst_605 [1] : vector<1x38xf32> to vector<1xf32>
    %1270 = vector.shape_cast %1269 : vector<1xf32> to vector<1x1xf32>
    %cst_606 = arith.constant 3.800000e+01 : f32
    %1271 = vector.broadcast %cst_606 : f32 to vector<1x1xf32>
    %1272 = arith.divf %1270, %1271 : vector<1x1xf32>
    %1273 = vector.broadcast %1272 : vector<1x1xf32> to vector<1x38xf32>
    %1274 = arith.subf %1266, %1273 : vector<1x38xf32>
    %1275 = arith.mulf %1274, %1274 : vector<1x38xf32>
    %cst_607 = arith.constant dense<0.000000e+00> : vector<1xf32>
    %1276 = vector.multi_reduction <add>, %1275, %cst_607 [1] : vector<1x38xf32> to vector<1xf32>
    %1277 = vector.shape_cast %1276 : vector<1xf32> to vector<1x1xf32>
    %cst_608 = arith.constant 3.800000e+01 : f32
    %1278 = vector.broadcast %cst_608 : f32 to vector<1x1xf32>
    %1279 = arith.divf %1277, %1278 : vector<1x1xf32>
    %1280 = vector.broadcast %1272 : vector<1x1xf32> to vector<1x38xf32>
    %1281 = arith.subf %1266, %1280 : vector<1x38xf32>
    %cst_609 = arith.constant 9.99999997E-7 : f32
    %1282 = vector.broadcast %cst_609 : f32 to vector<1x1xf32>
    %1283 = arith.addf %1279, %1282 : vector<1x1xf32>
    %1284 = math.rsqrt %1283 : vector<1x1xf32>
    %1285 = vector.broadcast %1284 : vector<1x1xf32> to vector<1x38xf32>
    %1286 = arith.mulf %1281, %1285 : vector<1x38xf32>
    %1287 = arith.mulf %1286, %1267 : vector<1x38xf32>
    %1288 = arith.addf %1287, %1268 : vector<1x38xf32>
    %cst_610 = arith.constant dense<0.000000e+00> : vector<1x16xf32>
    %1289 = tpu.matmul %1288, %245, %cst_610 {dimension_numbers = #tpu.dot_dimension_numbers<[1], [0], [0], [1], [0, 0, 1, 1], [], []>} : vector<1x38xf32>, vector<38x16xf32>, vector<1x16xf32> -> vector<1x16xf32>
    %cst_611 = arith.constant dense<0.000000e+00> : vector<1x8xf32>
    %1290 = tpu.matmul %1289, %924, %cst_611 {dimension_numbers = #tpu.dot_dimension_numbers<[1], [1], [0], [0], [0, 0, 1, 0], [], []>} : vector<1x16xf32>, vector<8x16xf32>, vector<1x8xf32> -> vector<1x8xf32>
    %cst_612 = arith.constant 0.353553385 : f32
    %1291 = vector.broadcast %cst_612 : f32 to vector<1x8xf32>
    %1292 = arith.mulf %1290, %1291 : vector<1x8xf32>
    %1293 = arith.addf %1292, %918 : vector<1x8xf32>
    %cst_613 = arith.constant dense<0xFF800000> : vector<1xf32>
    %1294 = vector.multi_reduction <maximumf>, %1293, %cst_613 [1] : vector<1x8xf32> to vector<1xf32>
    %1295 = vector.shape_cast %1294 : vector<1xf32> to vector<1x1xf32>
    %1296 = vector.broadcast %1295 : vector<1x1xf32> to vector<1x8xf32>
    %1297 = arith.subf %1293, %1296 : vector<1x8xf32>
    %1298 = math.exp %1297 : vector<1x8xf32>
    %cst_614 = arith.constant dense<0.000000e+00> : vector<1xf32>
    %1299 = vector.multi_reduction <add>, %1298, %cst_614 [1] : vector<1x8xf32> to vector<1xf32>
    %1300 = vector.shape_cast %1299 : vector<1xf32> to vector<1x1xf32>
    %1301 = vector.broadcast %1300 : vector<1x1xf32> to vector<1x8xf32>
    %1302 = arith.divf %1298, %1301 : vector<1x8xf32>
    %c1_615 = arith.constant 1 : index
    %c0_616 = arith.constant 0 : index
    %c2_617 = arith.constant 2 : index
    %c0_618 = arith.constant 0 : index
    %1303 = vector.load %arg34[%c1_615, %c0_616, %c2_617, %c0_618] : memref<2x2x4x8xf32, #tpu.memory_space<vmem>>, vector<1x1x1x8xf32>
    %1304 = vector.shape_cast %1303 : vector<1x1x1x8xf32> to vector<1x8xf32>
    %1305 = vector.shape_cast %1302 : vector<1x8xf32> to vector<1x1x1x8xf32>
    tpu.vector_store %arg34[%c1_615, %c0_616, %c2_617, %c0_618], %1305 {strides = array<i32>} : memref<2x2x4x8xf32, #tpu.memory_space<vmem>>, vector<1x1x1x8xf32>,
    %cst_619 = arith.constant dense<0.000000e+00> : vector<1x38xf32>
    %1306 = tpu.matmul %1302, %931, %cst_619 {dimension_numbers = #tpu.dot_dimension_numbers<[1], [0], [0], [1], [0, 0, 1, 1], [], []>} : vector<1x8xf32>, vector<8x38xf32>, vector<1x38xf32> -> vector<1x38xf32>
    %cst_620 = arith.constant dense<0.000000e+00> : vector<1x8xf32>
    %1307 = tpu.matmul %1289, %928, %cst_620 {dimension_numbers = #tpu.dot_dimension_numbers<[1], [1], [0], [0], [0, 0, 1, 0], [], []>} : vector<1x16xf32>, vector<8x16xf32>, vector<1x8xf32> -> vector<1x8xf32>
    %cst_621 = arith.constant 0.353553385 : f32
    %1308 = vector.broadcast %cst_621 : f32 to vector<1x8xf32>
    %1309 = arith.mulf %1307, %1308 : vector<1x8xf32>
    %1310 = arith.addf %1309, %918 : vector<1x8xf32>
    %cst_622 = arith.constant dense<0xFF800000> : vector<1xf32>
    %1311 = vector.multi_reduction <maximumf>, %1310, %cst_622 [1] : vector<1x8xf32> to vector<1xf32>
    %1312 = vector.shape_cast %1311 : vector<1xf32> to vector<1x1xf32>
    %1313 = vector.broadcast %1312 : vector<1x1xf32> to vector<1x8xf32>
    %1314 = arith.subf %1310, %1313 : vector<1x8xf32>
    %1315 = math.exp %1314 : vector<1x8xf32>
    %cst_623 = arith.constant dense<0.000000e+00> : vector<1xf32>
    %1316 = vector.multi_reduction <add>, %1315, %cst_623 [1] : vector<1x8xf32> to vector<1xf32>
    %1317 = vector.shape_cast %1316 : vector<1xf32> to vector<1x1xf32>
    %1318 = vector.broadcast %1317 : vector<1x1xf32> to vector<1x8xf32>
    %1319 = arith.divf %1315, %1318 : vector<1x8xf32>
    %c1_624 = arith.constant 1 : index
    %c1_625 = arith.constant 1 : index
    %c2_626 = arith.constant 2 : index
    %c0_627 = arith.constant 0 : index
    %1320 = vector.load %arg34[%c1_624, %c1_625, %c2_626, %c0_627] : memref<2x2x4x8xf32, #tpu.memory_space<vmem>>, vector<1x1x1x8xf32>
    %1321 = vector.shape_cast %1320 : vector<1x1x1x8xf32> to vector<1x8xf32>
    %1322 = vector.shape_cast %1319 : vector<1x8xf32> to vector<1x1x1x8xf32>
    tpu.vector_store %arg34[%c1_624, %c1_625, %c2_626, %c0_627], %1322 {strides = array<i32>} : memref<2x2x4x8xf32, #tpu.memory_space<vmem>>, vector<1x1x1x8xf32>,
    %cst_628 = arith.constant dense<0.000000e+00> : vector<1x38xf32>
    %1323 = tpu.matmul %1319, %934, %cst_628 {dimension_numbers = #tpu.dot_dimension_numbers<[1], [0], [0], [1], [0, 0, 1, 1], [], []>} : vector<1x8xf32>, vector<8x38xf32>, vector<1x38xf32> -> vector<1x38xf32>
    %1324 = arith.addf %1306, %1323 : vector<1x38xf32>
    %1325 = arith.addf %1324, %1288 : vector<1x38xf32>
    %c0_629 = arith.constant 0 : index
    %c0_630 = arith.constant 0 : index
    %1326 = vector.load %arg24[%c0_629, %c0_630] : memref<1x38xf32, #tpu.memory_space<vmem>>, vector<1x38xf32>
    %c0_631 = arith.constant 0 : index
    %c0_632 = arith.constant 0 : index
    %1327 = vector.load %arg25[%c0_631, %c0_632] : memref<1x38xf32, #tpu.memory_space<vmem>>, vector<1x38xf32>
    %cst_633 = arith.constant dense<0.000000e+00> : vector<1xf32>
    %1328 = vector.multi_reduction <add>, %1325, %cst_633 [1] : vector<1x38xf32> to vector<1xf32>
    %1329 = vector.shape_cast %1328 : vector<1xf32> to vector<1x1xf32>
    %cst_634 = arith.constant 3.800000e+01 : f32
    %1330 = vector.broadcast %cst_634 : f32 to vector<1x1xf32>
    %1331 = arith.divf %1329, %1330 : vector<1x1xf32>
    %1332 = vector.broadcast %1331 : vector<1x1xf32> to vector<1x38xf32>
    %1333 = arith.subf %1325, %1332 : vector<1x38xf32>
    %1334 = arith.mulf %1333, %1333 : vector<1x38xf32>
    %cst_635 = arith.constant dense<0.000000e+00> : vector<1xf32>
    %1335 = vector.multi_reduction <add>, %1334, %cst_635 [1] : vector<1x38xf32> to vector<1xf32>
    %1336 = vector.shape_cast %1335 : vector<1xf32> to vector<1x1xf32>
    %cst_636 = arith.constant 3.800000e+01 : f32
    %1337 = vector.broadcast %cst_636 : f32 to vector<1x1xf32>
    %1338 = arith.divf %1336, %1337 : vector<1x1xf32>
    %1339 = vector.broadcast %1331 : vector<1x1xf32> to vector<1x38xf32>
    %1340 = arith.subf %1325, %1339 : vector<1x38xf32>
    %cst_637 = arith.constant 9.99999997E-7 : f32
    %1341 = vector.broadcast %cst_637 : f32 to vector<1x1xf32>
    %1342 = arith.addf %1338, %1341 : vector<1x1xf32>
    %1343 = math.rsqrt %1342 : vector<1x1xf32>
    %1344 = vector.broadcast %1343 : vector<1x1xf32> to vector<1x38xf32>
    %1345 = arith.mulf %1340, %1344 : vector<1x38xf32>
    %1346 = arith.mulf %1345, %1326 : vector<1x38xf32>
    %1347 = arith.addf %1346, %1327 : vector<1x38xf32>
    %c0_638 = arith.constant 0 : index
    %c0_639 = arith.constant 0 : index
    %1348 = vector.load %arg26[%c0_638, %c0_639] : memref<38x64xf32, #tpu.memory_space<vmem>>, vector<38x64xf32>
    %cst_640 = arith.constant dense<0.000000e+00> : vector<1x64xf32>
    %1349 = tpu.matmul %1347, %1348, %cst_640 {dimension_numbers = #tpu.dot_dimension_numbers<[1], [0], [0], [1], [0, 0, 1, 1], [], []>} : vector<1x38xf32>, vector<38x64xf32>, vector<1x64xf32> -> vector<1x64xf32>
    %c0_641 = arith.constant 0 : index
    %c0_642 = arith.constant 0 : index
    %1350 = vector.load %arg27[%c0_641, %c0_642] : memref<1x64xf32, #tpu.memory_space<vmem>>, vector<1x64xf32>
    %1351 = arith.addf %1349, %1350 : vector<1x64xf32>
    %cst_643 = arith.constant 0.000000e+00 : f32
    %1352 = vector.broadcast %cst_643 : f32 to vector<1x64xf32>
    %1353 = arith.maximumf %1351, %1352 : vector<1x64xf32>
    %c0_644 = arith.constant 0 : index
    %c0_645 = arith.constant 0 : index
    %1354 = vector.load %arg28[%c0_644, %c0_645] : memref<64x38xf32, #tpu.memory_space<vmem>>, vector<64x38xf32>
    %cst_646 = arith.constant dense<0.000000e+00> : vector<1x38xf32>
    %1355 = tpu.matmul %1353, %1354, %cst_646 {dimension_numbers = #tpu.dot_dimension_numbers<[1], [0], [0], [1], [0, 0, 1, 1], [], []>} : vector<1x64xf32>, vector<64x38xf32>, vector<1x38xf32> -> vector<1x38xf32>
    %c0_647 = arith.constant 0 : index
    %c0_648 = arith.constant 0 : index
    %1356 = vector.load %arg29[%c0_647, %c0_648] : memref<1x38xf32, #tpu.memory_space<vmem>>, vector<1x38xf32>
    %1357 = arith.addf %1355, %1356 : vector<1x38xf32>
    %1358 = arith.addf %1357, %1347 : vector<1x38xf32>
    %c0_649 = arith.constant 0 : index
    %c0_650 = arith.constant 0 : index
    %1359 = vector.load %arg30[%c0_649, %c0_650] : memref<1x38xf32, #tpu.memory_space<vmem>>, vector<1x38xf32>
    %c0_651 = arith.constant 0 : index
    %c0_652 = arith.constant 0 : index
    %1360 = vector.load %arg31[%c0_651, %c0_652] : memref<1x38xf32, #tpu.memory_space<vmem>>, vector<1x38xf32>
    %cst_653 = arith.constant dense<0.000000e+00> : vector<1xf32>
    %1361 = vector.multi_reduction <add>, %1358, %cst_653 [1] : vector<1x38xf32> to vector<1xf32>
    %1362 = vector.shape_cast %1361 : vector<1xf32> to vector<1x1xf32>
    %cst_654 = arith.constant 3.800000e+01 : f32
    %1363 = vector.broadcast %cst_654 : f32 to vector<1x1xf32>
    %1364 = arith.divf %1362, %1363 : vector<1x1xf32>
    %1365 = vector.broadcast %1364 : vector<1x1xf32> to vector<1x38xf32>
    %1366 = arith.subf %1358, %1365 : vector<1x38xf32>
    %1367 = arith.mulf %1366, %1366 : vector<1x38xf32>
    %cst_655 = arith.constant dense<0.000000e+00> : vector<1xf32>
    %1368 = vector.multi_reduction <add>, %1367, %cst_655 [1] : vector<1x38xf32> to vector<1xf32>
    %1369 = vector.shape_cast %1368 : vector<1xf32> to vector<1x1xf32>
    %cst_656 = arith.constant 3.800000e+01 : f32
    %1370 = vector.broadcast %cst_656 : f32 to vector<1x1xf32>
    %1371 = arith.divf %1369, %1370 : vector<1x1xf32>
    %1372 = vector.broadcast %1364 : vector<1x1xf32> to vector<1x38xf32>
    %1373 = arith.subf %1358, %1372 : vector<1x38xf32>
    %cst_657 = arith.constant 9.99999997E-7 : f32
    %1374 = vector.broadcast %cst_657 : f32 to vector<1x1xf32>
    %1375 = arith.addf %1371, %1374 : vector<1x1xf32>
    %1376 = math.rsqrt %1375 : vector<1x1xf32>
    %1377 = vector.broadcast %1376 : vector<1x1xf32> to vector<1x38xf32>
    %1378 = arith.mulf %1373, %1377 : vector<1x38xf32>
    %1379 = arith.mulf %1378, %1359 : vector<1x38xf32>
    %1380 = arith.addf %1379, %1360 : vector<1x38xf32>
    %cst_658 = arith.constant dense<0.000000e+00> : vector<1x38xf32>
    %1381 = tpu.matmul %1380, %246, %cst_658 {dimension_numbers = #tpu.dot_dimension_numbers<[1], [0], [0], [1], [0, 0, 1, 1], [], []>} : vector<1x38xf32>, vector<38x38xf32>, vector<1x38xf32> -> vector<1x38xf32>
    %1382 = arith.addf %1381, %1258 : vector<1x38xf32>
    %cst_659 = arith.constant -1.000000e+30 : f32
    %1383 = vector.broadcast %cst_659 : f32 to vector<1x38xf32>
    %1384 = arith.select %13, %1382, %1383 : vector<1x38xi1>, vector<1x38xf32>
    %cst_660 = arith.constant dense<0xFF800000> : vector<1xf32>
    %1385 = vector.multi_reduction <maximumf>, %1384, %cst_660 [1] : vector<1x38xf32> to vector<1xf32>
    %1386 = vector.shape_cast %1385 : vector<1xf32> to vector<1x1xf32>
    %1387 = vector.broadcast %1386 : vector<1x1xf32> to vector<1x38xf32>
    %1388 = arith.subf %1384, %1387 : vector<1x38xf32>
    %1389 = math.exp %1388 : vector<1x38xf32>
    %cst_661 = arith.constant dense<0.000000e+00> : vector<1xf32>
    %1390 = vector.multi_reduction <add>, %1389, %cst_661 [1] : vector<1x38xf32> to vector<1xf32>
    %1391 = vector.shape_cast %1390 : vector<1xf32> to vector<1x1xf32>
    %1392 = vector.broadcast %1391 : vector<1x1xf32> to vector<1x38xf32>
    %1393 = arith.divf %1389, %1392 : vector<1x38xf32>
    %cst_662 = arith.constant 0.000000e+00 : f32
    %1394 = vector.broadcast %cst_662 : f32 to vector<1x38xf32>
    %1395 = arith.select %13, %1393, %1394 : vector<1x38xi1>, vector<1x38xf32>
    %cst_663 = arith.constant -1.000000e+30 : f32
    %1396 = vector.broadcast %cst_663 : f32 to vector<1x38xf32>
    %1397 = arith.select %18, %1382, %1396 : vector<1x38xi1>, vector<1x38xf32>
    %cst_664 = arith.constant dense<0xFF800000> : vector<1xf32>
    %1398 = vector.multi_reduction <maximumf>, %1397, %cst_664 [1] : vector<1x38xf32> to vector<1xf32>
    %1399 = vector.shape_cast %1398 : vector<1xf32> to vector<1x1xf32>
    %1400 = vector.broadcast %1399 : vector<1x1xf32> to vector<1x38xf32>
    %1401 = arith.subf %1397, %1400 : vector<1x38xf32>
    %1402 = math.exp %1401 : vector<1x38xf32>
    %cst_665 = arith.constant dense<0.000000e+00> : vector<1xf32>
    %1403 = vector.multi_reduction <add>, %1402, %cst_665 [1] : vector<1x38xf32> to vector<1xf32>
    %1404 = vector.shape_cast %1403 : vector<1xf32> to vector<1x1xf32>
    %1405 = vector.broadcast %1404 : vector<1x1xf32> to vector<1x38xf32>
    %1406 = arith.divf %1402, %1405 : vector<1x38xf32>
    %cst_666 = arith.constant 0.000000e+00 : f32
    %1407 = vector.broadcast %cst_666 : f32 to vector<1x38xf32>
    %1408 = arith.select %18, %1406, %1407 : vector<1x38xi1>, vector<1x38xf32>
    %1409 = arith.addf %1395, %1408 : vector<1x38xf32>
    %cst_667 = arith.constant 0.000000e+00 : f32
    %1410 = vector.broadcast %cst_667 : f32 to vector<1x38xf32>
    %1411 = arith.subf %1410, %1382 : vector<1x38xf32>
    %1412 = math.exp %1411 : vector<1x38xf32>
    %cst_668 = arith.constant 1.000000e+00 : f32
    %1413 = vector.broadcast %cst_668 : f32 to vector<1x38xf32>
    %1414 = arith.addf %1413, %1412 : vector<1x38xf32>
    %cst_669 = arith.constant 1.000000e+00 : f32
    %1415 = vector.broadcast %cst_669 : f32 to vector<1x38xf32>
    %1416 = arith.divf %1415, %1414 : vector<1x38xf32>
    %cst_670 = arith.constant 0.000000e+00 : f32
    %1417 = vector.broadcast %cst_670 : f32 to vector<1x38xf32>
    %1418 = arith.select %23, %1416, %1417 : vector<1x38xi1>, vector<1x38xf32>
    %1419 = arith.addf %1409, %1418 : vector<1x38xf32>
    %1420 = vector.extract_strided_slice %1419 {offsets = [0, 0], sizes = [1, 19], strides = [1, 1]} : vector<1x38xf32> to vector<1x19xf32>
    %c1_671 = arith.constant 1 : index
    %c3_672 = arith.constant 3 : index
    %c0_673 = arith.constant 0 : index
    %1421 = vector.load %arg33[%c1_671, %c3_672, %c0_673] : memref<2x5x19xf32, #tpu.memory_space<vmem>>, vector<1x1x19xf32>
    %1422 = vector.shape_cast %1421 : vector<1x1x19xf32> to vector<1x19xf32>
    %1423 = vector.shape_cast %1420 : vector<1x19xf32> to vector<1x1x19xf32>
    tpu.vector_store %arg33[%c1_671, %c3_672, %c0_673], %1423 {strides = array<i32>} : memref<2x5x19xf32, #tpu.memory_space<vmem>>, vector<1x1x19xf32>,
    %1424 = vector.extract_strided_slice %243 {offsets = [3, 0], sizes = [1, 38], strides = [1, 1]} : vector<4x38xf32> to vector<1x38xf32>
    %1425 = arith.addf %1419, %1424 : vector<1x38xf32>
    %cst_674 = arith.constant dense<0.000000e+00> : vector<1x38xf32>
    %1426 = tpu.matmul %1425, %244, %cst_674 {dimension_numbers = #tpu.dot_dimension_numbers<[1], [0], [0], [1], [0, 0, 1, 1], [], []>} : vector<1x38xf32>, vector<38x38xf32>, vector<1x38xf32> -> vector<1x38xf32>
    %1427 = arith.addf %1426, %1425 : vector<1x38xf32>
    %c0_675 = arith.constant 0 : index
    %c0_676 = arith.constant 0 : index
    %1428 = vector.load %arg19[%c0_675, %c0_676] : memref<1x38xf32, #tpu.memory_space<vmem>>, vector<1x38xf32>
    %c0_677 = arith.constant 0 : index
    %c0_678 = arith.constant 0 : index
    %1429 = vector.load %arg20[%c0_677, %c0_678] : memref<1x38xf32, #tpu.memory_space<vmem>>, vector<1x38xf32>
    %cst_679 = arith.constant dense<0.000000e+00> : vector<1xf32>
    %1430 = vector.multi_reduction <add>, %1427, %cst_679 [1] : vector<1x38xf32> to vector<1xf32>
    %1431 = vector.shape_cast %1430 : vector<1xf32> to vector<1x1xf32>
    %cst_680 = arith.constant 3.800000e+01 : f32
    %1432 = vector.broadcast %cst_680 : f32 to vector<1x1xf32>
    %1433 = arith.divf %1431, %1432 : vector<1x1xf32>
    %1434 = vector.broadcast %1433 : vector<1x1xf32> to vector<1x38xf32>
    %1435 = arith.subf %1427, %1434 : vector<1x38xf32>
    %1436 = arith.mulf %1435, %1435 : vector<1x38xf32>
    %cst_681 = arith.constant dense<0.000000e+00> : vector<1xf32>
    %1437 = vector.multi_reduction <add>, %1436, %cst_681 [1] : vector<1x38xf32> to vector<1xf32>
    %1438 = vector.shape_cast %1437 : vector<1xf32> to vector<1x1xf32>
    %cst_682 = arith.constant 3.800000e+01 : f32
    %1439 = vector.broadcast %cst_682 : f32 to vector<1x1xf32>
    %1440 = arith.divf %1438, %1439 : vector<1x1xf32>
    %1441 = vector.broadcast %1433 : vector<1x1xf32> to vector<1x38xf32>
    %1442 = arith.subf %1427, %1441 : vector<1x38xf32>
    %cst_683 = arith.constant 9.99999997E-7 : f32
    %1443 = vector.broadcast %cst_683 : f32 to vector<1x1xf32>
    %1444 = arith.addf %1440, %1443 : vector<1x1xf32>
    %1445 = math.rsqrt %1444 : vector<1x1xf32>
    %1446 = vector.broadcast %1445 : vector<1x1xf32> to vector<1x38xf32>
    %1447 = arith.mulf %1442, %1446 : vector<1x38xf32>
    %1448 = arith.mulf %1447, %1428 : vector<1x38xf32>
    %1449 = arith.addf %1448, %1429 : vector<1x38xf32>
    %cst_684 = arith.constant dense<0.000000e+00> : vector<1x16xf32>
    %1450 = tpu.matmul %1449, %245, %cst_684 {dimension_numbers = #tpu.dot_dimension_numbers<[1], [0], [0], [1], [0, 0, 1, 1], [], []>} : vector<1x38xf32>, vector<38x16xf32>, vector<1x16xf32> -> vector<1x16xf32>
    %cst_685 = arith.constant dense<0.000000e+00> : vector<1x8xf32>
    %1451 = tpu.matmul %1450, %924, %cst_685 {dimension_numbers = #tpu.dot_dimension_numbers<[1], [1], [0], [0], [0, 0, 1, 0], [], []>} : vector<1x16xf32>, vector<8x16xf32>, vector<1x8xf32> -> vector<1x8xf32>
    %cst_686 = arith.constant 0.353553385 : f32
    %1452 = vector.broadcast %cst_686 : f32 to vector<1x8xf32>
    %1453 = arith.mulf %1451, %1452 : vector<1x8xf32>
    %1454 = arith.addf %1453, %918 : vector<1x8xf32>
    %cst_687 = arith.constant dense<0xFF800000> : vector<1xf32>
    %1455 = vector.multi_reduction <maximumf>, %1454, %cst_687 [1] : vector<1x8xf32> to vector<1xf32>
    %1456 = vector.shape_cast %1455 : vector<1xf32> to vector<1x1xf32>
    %1457 = vector.broadcast %1456 : vector<1x1xf32> to vector<1x8xf32>
    %1458 = arith.subf %1454, %1457 : vector<1x8xf32>
    %1459 = math.exp %1458 : vector<1x8xf32>
    %cst_688 = arith.constant dense<0.000000e+00> : vector<1xf32>
    %1460 = vector.multi_reduction <add>, %1459, %cst_688 [1] : vector<1x8xf32> to vector<1xf32>
    %1461 = vector.shape_cast %1460 : vector<1xf32> to vector<1x1xf32>
    %1462 = vector.broadcast %1461 : vector<1x1xf32> to vector<1x8xf32>
    %1463 = arith.divf %1459, %1462 : vector<1x8xf32>
    %c1_689 = arith.constant 1 : index
    %c0_690 = arith.constant 0 : index
    %c3_691 = arith.constant 3 : index
    %c0_692 = arith.constant 0 : index
    %1464 = vector.load %arg34[%c1_689, %c0_690, %c3_691, %c0_692] : memref<2x2x4x8xf32, #tpu.memory_space<vmem>>, vector<1x1x1x8xf32>
    %1465 = vector.shape_cast %1464 : vector<1x1x1x8xf32> to vector<1x8xf32>
    %1466 = vector.shape_cast %1463 : vector<1x8xf32> to vector<1x1x1x8xf32>
    tpu.vector_store %arg34[%c1_689, %c0_690, %c3_691, %c0_692], %1466 {strides = array<i32>} : memref<2x2x4x8xf32, #tpu.memory_space<vmem>>, vector<1x1x1x8xf32>,
    %cst_693 = arith.constant dense<0.000000e+00> : vector<1x38xf32>
    %1467 = tpu.matmul %1463, %931, %cst_693 {dimension_numbers = #tpu.dot_dimension_numbers<[1], [0], [0], [1], [0, 0, 1, 1], [], []>} : vector<1x8xf32>, vector<8x38xf32>, vector<1x38xf32> -> vector<1x38xf32>
    %cst_694 = arith.constant dense<0.000000e+00> : vector<1x8xf32>
    %1468 = tpu.matmul %1450, %928, %cst_694 {dimension_numbers = #tpu.dot_dimension_numbers<[1], [1], [0], [0], [0, 0, 1, 0], [], []>} : vector<1x16xf32>, vector<8x16xf32>, vector<1x8xf32> -> vector<1x8xf32>
    %cst_695 = arith.constant 0.353553385 : f32
    %1469 = vector.broadcast %cst_695 : f32 to vector<1x8xf32>
    %1470 = arith.mulf %1468, %1469 : vector<1x8xf32>
    %1471 = arith.addf %1470, %918 : vector<1x8xf32>
    %cst_696 = arith.constant dense<0xFF800000> : vector<1xf32>
    %1472 = vector.multi_reduction <maximumf>, %1471, %cst_696 [1] : vector<1x8xf32> to vector<1xf32>
    %1473 = vector.shape_cast %1472 : vector<1xf32> to vector<1x1xf32>
    %1474 = vector.broadcast %1473 : vector<1x1xf32> to vector<1x8xf32>
    %1475 = arith.subf %1471, %1474 : vector<1x8xf32>
    %1476 = math.exp %1475 : vector<1x8xf32>
    %cst_697 = arith.constant dense<0.000000e+00> : vector<1xf32>
    %1477 = vector.multi_reduction <add>, %1476, %cst_697 [1] : vector<1x8xf32> to vector<1xf32>
    %1478 = vector.shape_cast %1477 : vector<1xf32> to vector<1x1xf32>
    %1479 = vector.broadcast %1478 : vector<1x1xf32> to vector<1x8xf32>
    %1480 = arith.divf %1476, %1479 : vector<1x8xf32>
    %c1_698 = arith.constant 1 : index
    %c1_699 = arith.constant 1 : index
    %c3_700 = arith.constant 3 : index
    %c0_701 = arith.constant 0 : index
    %1481 = vector.load %arg34[%c1_698, %c1_699, %c3_700, %c0_701] : memref<2x2x4x8xf32, #tpu.memory_space<vmem>>, vector<1x1x1x8xf32>
    %1482 = vector.shape_cast %1481 : vector<1x1x1x8xf32> to vector<1x8xf32>
    %1483 = vector.shape_cast %1480 : vector<1x8xf32> to vector<1x1x1x8xf32>
    tpu.vector_store %arg34[%c1_698, %c1_699, %c3_700, %c0_701], %1483 {strides = array<i32>} : memref<2x2x4x8xf32, #tpu.memory_space<vmem>>, vector<1x1x1x8xf32>,
    %cst_702 = arith.constant dense<0.000000e+00> : vector<1x38xf32>
    %1484 = tpu.matmul %1480, %934, %cst_702 {dimension_numbers = #tpu.dot_dimension_numbers<[1], [0], [0], [1], [0, 0, 1, 1], [], []>} : vector<1x8xf32>, vector<8x38xf32>, vector<1x38xf32> -> vector<1x38xf32>
    %1485 = arith.addf %1467, %1484 : vector<1x38xf32>
    %1486 = arith.addf %1485, %1449 : vector<1x38xf32>
    %c0_703 = arith.constant 0 : index
    %c0_704 = arith.constant 0 : index
    %1487 = vector.load %arg24[%c0_703, %c0_704] : memref<1x38xf32, #tpu.memory_space<vmem>>, vector<1x38xf32>
    %c0_705 = arith.constant 0 : index
    %c0_706 = arith.constant 0 : index
    %1488 = vector.load %arg25[%c0_705, %c0_706] : memref<1x38xf32, #tpu.memory_space<vmem>>, vector<1x38xf32>
    %cst_707 = arith.constant dense<0.000000e+00> : vector<1xf32>
    %1489 = vector.multi_reduction <add>, %1486, %cst_707 [1] : vector<1x38xf32> to vector<1xf32>
    %1490 = vector.shape_cast %1489 : vector<1xf32> to vector<1x1xf32>
    %cst_708 = arith.constant 3.800000e+01 : f32
    %1491 = vector.broadcast %cst_708 : f32 to vector<1x1xf32>
    %1492 = arith.divf %1490, %1491 : vector<1x1xf32>
    %1493 = vector.broadcast %1492 : vector<1x1xf32> to vector<1x38xf32>
    %1494 = arith.subf %1486, %1493 : vector<1x38xf32>
    %1495 = arith.mulf %1494, %1494 : vector<1x38xf32>
    %cst_709 = arith.constant dense<0.000000e+00> : vector<1xf32>
    %1496 = vector.multi_reduction <add>, %1495, %cst_709 [1] : vector<1x38xf32> to vector<1xf32>
    %1497 = vector.shape_cast %1496 : vector<1xf32> to vector<1x1xf32>
    %cst_710 = arith.constant 3.800000e+01 : f32
    %1498 = vector.broadcast %cst_710 : f32 to vector<1x1xf32>
    %1499 = arith.divf %1497, %1498 : vector<1x1xf32>
    %1500 = vector.broadcast %1492 : vector<1x1xf32> to vector<1x38xf32>
    %1501 = arith.subf %1486, %1500 : vector<1x38xf32>
    %cst_711 = arith.constant 9.99999997E-7 : f32
    %1502 = vector.broadcast %cst_711 : f32 to vector<1x1xf32>
    %1503 = arith.addf %1499, %1502 : vector<1x1xf32>
    %1504 = math.rsqrt %1503 : vector<1x1xf32>
    %1505 = vector.broadcast %1504 : vector<1x1xf32> to vector<1x38xf32>
    %1506 = arith.mulf %1501, %1505 : vector<1x38xf32>
    %1507 = arith.mulf %1506, %1487 : vector<1x38xf32>
    %1508 = arith.addf %1507, %1488 : vector<1x38xf32>
    %c0_712 = arith.constant 0 : index
    %c0_713 = arith.constant 0 : index
    %1509 = vector.load %arg26[%c0_712, %c0_713] : memref<38x64xf32, #tpu.memory_space<vmem>>, vector<38x64xf32>
    %cst_714 = arith.constant dense<0.000000e+00> : vector<1x64xf32>
    %1510 = tpu.matmul %1508, %1509, %cst_714 {dimension_numbers = #tpu.dot_dimension_numbers<[1], [0], [0], [1], [0, 0, 1, 1], [], []>} : vector<1x38xf32>, vector<38x64xf32>, vector<1x64xf32> -> vector<1x64xf32>
    %c0_715 = arith.constant 0 : index
    %c0_716 = arith.constant 0 : index
    %1511 = vector.load %arg27[%c0_715, %c0_716] : memref<1x64xf32, #tpu.memory_space<vmem>>, vector<1x64xf32>
    %1512 = arith.addf %1510, %1511 : vector<1x64xf32>
    %cst_717 = arith.constant 0.000000e+00 : f32
    %1513 = vector.broadcast %cst_717 : f32 to vector<1x64xf32>
    %1514 = arith.maximumf %1512, %1513 : vector<1x64xf32>
    %c0_718 = arith.constant 0 : index
    %c0_719 = arith.constant 0 : index
    %1515 = vector.load %arg28[%c0_718, %c0_719] : memref<64x38xf32, #tpu.memory_space<vmem>>, vector<64x38xf32>
    %cst_720 = arith.constant dense<0.000000e+00> : vector<1x38xf32>
    %1516 = tpu.matmul %1514, %1515, %cst_720 {dimension_numbers = #tpu.dot_dimension_numbers<[1], [0], [0], [1], [0, 0, 1, 1], [], []>} : vector<1x64xf32>, vector<64x38xf32>, vector<1x38xf32> -> vector<1x38xf32>
    %c0_721 = arith.constant 0 : index
    %c0_722 = arith.constant 0 : index
    %1517 = vector.load %arg29[%c0_721, %c0_722] : memref<1x38xf32, #tpu.memory_space<vmem>>, vector<1x38xf32>
    %1518 = arith.addf %1516, %1517 : vector<1x38xf32>
    %1519 = arith.addf %1518, %1508 : vector<1x38xf32>
    %c0_723 = arith.constant 0 : index
    %c0_724 = arith.constant 0 : index
    %1520 = vector.load %arg30[%c0_723, %c0_724] : memref<1x38xf32, #tpu.memory_space<vmem>>, vector<1x38xf32>
    %c0_725 = arith.constant 0 : index
    %c0_726 = arith.constant 0 : index
    %1521 = vector.load %arg31[%c0_725, %c0_726] : memref<1x38xf32, #tpu.memory_space<vmem>>, vector<1x38xf32>
    %cst_727 = arith.constant dense<0.000000e+00> : vector<1xf32>
    %1522 = vector.multi_reduction <add>, %1519, %cst_727 [1] : vector<1x38xf32> to vector<1xf32>
    %1523 = vector.shape_cast %1522 : vector<1xf32> to vector<1x1xf32>
    %cst_728 = arith.constant 3.800000e+01 : f32
    %1524 = vector.broadcast %cst_728 : f32 to vector<1x1xf32>
    %1525 = arith.divf %1523, %1524 : vector<1x1xf32>
    %1526 = vector.broadcast %1525 : vector<1x1xf32> to vector<1x38xf32>
    %1527 = arith.subf %1519, %1526 : vector<1x38xf32>
    %1528 = arith.mulf %1527, %1527 : vector<1x38xf32>
    %cst_729 = arith.constant dense<0.000000e+00> : vector<1xf32>
    %1529 = vector.multi_reduction <add>, %1528, %cst_729 [1] : vector<1x38xf32> to vector<1xf32>
    %1530 = vector.shape_cast %1529 : vector<1xf32> to vector<1x1xf32>
    %cst_730 = arith.constant 3.800000e+01 : f32
    %1531 = vector.broadcast %cst_730 : f32 to vector<1x1xf32>
    %1532 = arith.divf %1530, %1531 : vector<1x1xf32>
    %1533 = vector.broadcast %1525 : vector<1x1xf32> to vector<1x38xf32>
    %1534 = arith.subf %1519, %1533 : vector<1x38xf32>
    %cst_731 = arith.constant 9.99999997E-7 : f32
    %1535 = vector.broadcast %cst_731 : f32 to vector<1x1xf32>
    %1536 = arith.addf %1532, %1535 : vector<1x1xf32>
    %1537 = math.rsqrt %1536 : vector<1x1xf32>
    %1538 = vector.broadcast %1537 : vector<1x1xf32> to vector<1x38xf32>
    %1539 = arith.mulf %1534, %1538 : vector<1x38xf32>
    %1540 = arith.mulf %1539, %1520 : vector<1x38xf32>
    %1541 = arith.addf %1540, %1521 : vector<1x38xf32>
    %cst_732 = arith.constant dense<0.000000e+00> : vector<1x38xf32>
    %1542 = tpu.matmul %1541, %246, %cst_732 {dimension_numbers = #tpu.dot_dimension_numbers<[1], [0], [0], [1], [0, 0, 1, 1], [], []>} : vector<1x38xf32>, vector<38x38xf32>, vector<1x38xf32> -> vector<1x38xf32>
    %1543 = arith.addf %1542, %1419 : vector<1x38xf32>
    %cst_733 = arith.constant -1.000000e+30 : f32
    %1544 = vector.broadcast %cst_733 : f32 to vector<1x38xf32>
    %1545 = arith.select %13, %1543, %1544 : vector<1x38xi1>, vector<1x38xf32>
    %cst_734 = arith.constant dense<0xFF800000> : vector<1xf32>
    %1546 = vector.multi_reduction <maximumf>, %1545, %cst_734 [1] : vector<1x38xf32> to vector<1xf32>
    %1547 = vector.shape_cast %1546 : vector<1xf32> to vector<1x1xf32>
    %1548 = vector.broadcast %1547 : vector<1x1xf32> to vector<1x38xf32>
    %1549 = arith.subf %1545, %1548 : vector<1x38xf32>
    %1550 = math.exp %1549 : vector<1x38xf32>
    %cst_735 = arith.constant dense<0.000000e+00> : vector<1xf32>
    %1551 = vector.multi_reduction <add>, %1550, %cst_735 [1] : vector<1x38xf32> to vector<1xf32>
    %1552 = vector.shape_cast %1551 : vector<1xf32> to vector<1x1xf32>
    %1553 = vector.broadcast %1552 : vector<1x1xf32> to vector<1x38xf32>
    %1554 = arith.divf %1550, %1553 : vector<1x38xf32>
    %cst_736 = arith.constant 0.000000e+00 : f32
    %1555 = vector.broadcast %cst_736 : f32 to vector<1x38xf32>
    %1556 = arith.select %13, %1554, %1555 : vector<1x38xi1>, vector<1x38xf32>
    %cst_737 = arith.constant -1.000000e+30 : f32
    %1557 = vector.broadcast %cst_737 : f32 to vector<1x38xf32>
    %1558 = arith.select %18, %1543, %1557 : vector<1x38xi1>, vector<1x38xf32>
    %cst_738 = arith.constant dense<0xFF800000> : vector<1xf32>
    %1559 = vector.multi_reduction <maximumf>, %1558, %cst_738 [1] : vector<1x38xf32> to vector<1xf32>
    %1560 = vector.shape_cast %1559 : vector<1xf32> to vector<1x1xf32>
    %1561 = vector.broadcast %1560 : vector<1x1xf32> to vector<1x38xf32>
    %1562 = arith.subf %1558, %1561 : vector<1x38xf32>
    %1563 = math.exp %1562 : vector<1x38xf32>
    %cst_739 = arith.constant dense<0.000000e+00> : vector<1xf32>
    %1564 = vector.multi_reduction <add>, %1563, %cst_739 [1] : vector<1x38xf32> to vector<1xf32>
    %1565 = vector.shape_cast %1564 : vector<1xf32> to vector<1x1xf32>
    %1566 = vector.broadcast %1565 : vector<1x1xf32> to vector<1x38xf32>
    %1567 = arith.divf %1563, %1566 : vector<1x38xf32>
    %cst_740 = arith.constant 0.000000e+00 : f32
    %1568 = vector.broadcast %cst_740 : f32 to vector<1x38xf32>
    %1569 = arith.select %18, %1567, %1568 : vector<1x38xi1>, vector<1x38xf32>
    %1570 = arith.addf %1556, %1569 : vector<1x38xf32>
    %cst_741 = arith.constant 0.000000e+00 : f32
    %1571 = vector.broadcast %cst_741 : f32 to vector<1x38xf32>
    %1572 = arith.subf %1571, %1543 : vector<1x38xf32>
    %1573 = math.exp %1572 : vector<1x38xf32>
    %cst_742 = arith.constant 1.000000e+00 : f32
    %1574 = vector.broadcast %cst_742 : f32 to vector<1x38xf32>
    %1575 = arith.addf %1574, %1573 : vector<1x38xf32>
    %cst_743 = arith.constant 1.000000e+00 : f32
    %1576 = vector.broadcast %cst_743 : f32 to vector<1x38xf32>
    %1577 = arith.divf %1576, %1575 : vector<1x38xf32>
    %cst_744 = arith.constant 0.000000e+00 : f32
    %1578 = vector.broadcast %cst_744 : f32 to vector<1x38xf32>
    %1579 = arith.select %23, %1577, %1578 : vector<1x38xi1>, vector<1x38xf32>
    %1580 = arith.addf %1570, %1579 : vector<1x38xf32>
    %1581 = vector.extract_strided_slice %1580 {offsets = [0, 0], sizes = [1, 19], strides = [1, 1]} : vector<1x38xf32> to vector<1x19xf32>
    %c1_745 = arith.constant 1 : index
    %c4_746 = arith.constant 4 : index
    %c0_747 = arith.constant 0 : index
    %1582 = vector.load %arg33[%c1_745, %c4_746, %c0_747] : memref<2x5x19xf32, #tpu.memory_space<vmem>>, vector<1x1x19xf32>
    %1583 = vector.shape_cast %1582 : vector<1x1x19xf32> to vector<1x19xf32>
    %1584 = vector.shape_cast %1581 : vector<1x19xf32> to vector<1x1x19xf32>
    tpu.vector_store %arg33[%c1_745, %c4_746, %c0_747], %1584 {strides = array<i32>} : memref<2x5x19xf32, #tpu.memory_space<vmem>>, vector<1x1x19xf32>,
    return
  }
  func.func @transform_0(%arg0: i32) -> (i32, i32) {
    %c0_i32 = arith.constant 0 : i32
    %c0_i32_0 = arith.constant 0 : i32
    %c0_i32_1 = arith.constant 0 : i32
    return %c0_i32, %c0_i32_0 : i32, i32
  }
  func.func @transform_1(%arg0: i32) -> (i32, i32) {
    %c0_i32 = arith.constant 0 : i32
    %c0_i32_0 = arith.constant 0 : i32
    %c0_i32_1 = arith.constant 0 : i32
    return %c0_i32, %c0_i32_0 : i32, i32
  }
  func.func @transform_2(%arg0: i32) -> (i32, i32, i32) {
    %c0_i32 = arith.constant 0 : i32
    %c0_i32_0 = arith.constant 0 : i32
    %c0_i32_1 = arith.constant 0 : i32
    %c0_i32_2 = arith.constant 0 : i32
    return %c0_i32, %c0_i32_0, %c0_i32_1 : i32, i32, i32
  }
  func.func @transform_3(%arg0: i32) -> (i32, i32) {
    %c0_i32 = arith.constant 0 : i32
    %c0_i32_0 = arith.constant 0 : i32
    %c0_i32_1 = arith.constant 0 : i32
    return %c0_i32, %c0_i32_0 : i32, i32
  }
  func.func @transform_4(%arg0: i32) -> (i32, i32) {
    %c0_i32 = arith.constant 0 : i32
    %c0_i32_0 = arith.constant 0 : i32
    %c0_i32_1 = arith.constant 0 : i32
    return %c0_i32, %c0_i32_0 : i32, i32
  }
  func.func @transform_5(%arg0: i32) -> (i32, i32) {
    %c0_i32 = arith.constant 0 : i32
    %c0_i32_0 = arith.constant 0 : i32
    %c0_i32_1 = arith.constant 0 : i32
    return %c0_i32, %c0_i32_0 : i32, i32
  }
  func.func @transform_6(%arg0: i32) -> (i32, i32) {
    %c0_i32 = arith.constant 0 : i32
    %c0_i32_0 = arith.constant 0 : i32
    %c0_i32_1 = arith.constant 0 : i32
    return %c0_i32, %c0_i32_0 : i32, i32
  }
  func.func @transform_7(%arg0: i32) -> (i32, i32) {
    %c0_i32 = arith.constant 0 : i32
    %c0_i32_0 = arith.constant 0 : i32
    %c0_i32_1 = arith.constant 0 : i32
    return %c0_i32, %c0_i32_0 : i32, i32
  }
  func.func @transform_8(%arg0: i32) -> (i32, i32) {
    %c0_i32 = arith.constant 0 : i32
    %c0_i32_0 = arith.constant 0 : i32
    %c0_i32_1 = arith.constant 0 : i32
    return %c0_i32, %c0_i32_0 : i32, i32
  }
  func.func @transform_9(%arg0: i32) -> (i32, i32) {
    %c0_i32 = arith.constant 0 : i32
    %c0_i32_0 = arith.constant 0 : i32
    %c0_i32_1 = arith.constant 0 : i32
    return %c0_i32, %c0_i32_0 : i32, i32
  }
  func.func @transform_10(%arg0: i32) -> (i32, i32) {
    %c0_i32 = arith.constant 0 : i32
    %c0_i32_0 = arith.constant 0 : i32
    %c0_i32_1 = arith.constant 0 : i32
    return %c0_i32, %c0_i32_0 : i32, i32
  }
  func.func @transform_11(%arg0: i32) -> (i32, i32) {
    %c0_i32 = arith.constant 0 : i32
    %c0_i32_0 = arith.constant 0 : i32
    %c0_i32_1 = arith.constant 0 : i32
    return %c0_i32, %c0_i32_0 : i32, i32
  }
  func.func @transform_12(%arg0: i32) -> (i32, i32) {
    %c0_i32 = arith.constant 0 : i32
    %c0_i32_0 = arith.constant 0 : i32
    %c0_i32_1 = arith.constant 0 : i32
    return %c0_i32, %c0_i32_0 : i32, i32
  }
  func.func @transform_13(%arg0: i32) -> (i32, i32) {
    %c0_i32 = arith.constant 0 : i32
    %c0_i32_0 = arith.constant 0 : i32
    %c0_i32_1 = arith.constant 0 : i32
    return %c0_i32, %c0_i32_0 : i32, i32
  }
  func.func @transform_14(%arg0: i32) -> (i32, i32) {
    %c0_i32 = arith.constant 0 : i32
    %c0_i32_0 = arith.constant 0 : i32
    %c0_i32_1 = arith.constant 0 : i32
    return %c0_i32, %c0_i32_0 : i32, i32
  }
  func.func @transform_15(%arg0: i32) -> (i32, i32) {
    %c0_i32 = arith.constant 0 : i32
    %c0_i32_0 = arith.constant 0 : i32
    %c0_i32_1 = arith.constant 0 : i32
    return %c0_i32, %c0_i32_0 : i32, i32
  }
  func.func @transform_16(%arg0: i32) -> (i32, i32, i32) {
    %c0_i32 = arith.constant 0 : i32
    %c0_i32_0 = arith.constant 0 : i32
    %c0_i32_1 = arith.constant 0 : i32
    %c0_i32_2 = arith.constant 0 : i32
    return %c0_i32, %c0_i32_0, %c0_i32_1 : i32, i32, i32
  }
  func.func @transform_17(%arg0: i32) -> (i32, i32) {
    %c0_i32 = arith.constant 0 : i32
    %c0_i32_0 = arith.constant 0 : i32
    %c0_i32_1 = arith.constant 0 : i32
    return %c0_i32, %c0_i32_0 : i32, i32
  }
  func.func @transform_18(%arg0: i32) -> (i32, i32) {
    %c0_i32 = arith.constant 0 : i32
    %c0_i32_0 = arith.constant 0 : i32
    %c0_i32_1 = arith.constant 0 : i32
    return %c0_i32, %c0_i32_0 : i32, i32
  }
  func.func @transform_19(%arg0: i32) -> (i32, i32) {
    %c0_i32 = arith.constant 0 : i32
    %c0_i32_0 = arith.constant 0 : i32
    %c0_i32_1 = arith.constant 0 : i32
    return %c0_i32, %c0_i32_0 : i32, i32
  }
  func.func @transform_20(%arg0: i32) -> (i32, i32) {
    %c0_i32 = arith.constant 0 : i32
    %c0_i32_0 = arith.constant 0 : i32
    %c0_i32_1 = arith.constant 0 : i32
    return %c0_i32, %c0_i32_0 : i32, i32
  }
  func.func @transform_21(%arg0: i32) -> (i32, i32) {
    %c0_i32 = arith.constant 0 : i32
    %c0_i32_0 = arith.constant 0 : i32
    %c0_i32_1 = arith.constant 0 : i32
    return %c0_i32, %c0_i32_0 : i32, i32
  }
  func.func @transform_22(%arg0: i32) -> (i32, i32, i32) {
    %c0_i32 = arith.constant 0 : i32
    %c0_i32_0 = arith.constant 0 : i32
    %c0_i32_1 = arith.constant 0 : i32
    %c0_i32_2 = arith.constant 0 : i32
    return %c0_i32, %c0_i32_0, %c0_i32_1 : i32, i32, i32
  }
  func.func @transform_23(%arg0: i32) -> (i32, i32) {
    %c0_i32 = arith.constant 0 : i32
    %c0_i32_0 = arith.constant 0 : i32
    %c0_i32_1 = arith.constant 0 : i32
    return %c0_i32, %c0_i32_0 : i32, i32
  }
  func.func @transform_24(%arg0: i32) -> (i32, i32) {
    %c0_i32 = arith.constant 0 : i32
    %c0_i32_0 = arith.constant 0 : i32
    %c0_i32_1 = arith.constant 0 : i32
    return %c0_i32, %c0_i32_0 : i32, i32
  }
  func.func @transform_25(%arg0: i32) -> (i32, i32) {
    %c0_i32 = arith.constant 0 : i32
    %c0_i32_0 = arith.constant 0 : i32
    %c0_i32_1 = arith.constant 0 : i32
    return %c0_i32, %c0_i32_0 : i32, i32
  }
  func.func @transform_26(%arg0: i32) -> (i32, i32) {
    %c0_i32 = arith.constant 0 : i32
    %c0_i32_0 = arith.constant 0 : i32
    %c0_i32_1 = arith.constant 0 : i32
    return %c0_i32, %c0_i32_0 : i32, i32
  }
  func.func @transform_27(%arg0: i32) -> (i32, i32) {
    %c0_i32 = arith.constant 0 : i32
    %c0_i32_0 = arith.constant 0 : i32
    %c0_i32_1 = arith.constant 0 : i32
    return %c0_i32, %c0_i32_0 : i32, i32
  }
  func.func @transform_28(%arg0: i32) -> (i32, i32) {
    %c0_i32 = arith.constant 0 : i32
    %c0_i32_0 = arith.constant 0 : i32
    %c0_i32_1 = arith.constant 0 : i32
    return %c0_i32, %c0_i32_0 : i32, i32
  }
  func.func @transform_29(%arg0: i32) -> (i32, i32) {
    %c0_i32 = arith.constant 0 : i32
    %c0_i32_0 = arith.constant 0 : i32
    %c0_i32_1 = arith.constant 0 : i32
    return %c0_i32, %c0_i32_0 : i32, i32
  }
  func.func @transform_30(%arg0: i32) -> (i32, i32) {
    %c0_i32 = arith.constant 0 : i32
    %c0_i32_0 = arith.constant 0 : i32
    %c0_i32_1 = arith.constant 0 : i32
    return %c0_i32, %c0_i32_0 : i32, i32
  }
  func.func @transform_31(%arg0: i32) -> (i32, i32) {
    %c0_i32 = arith.constant 0 : i32
    %c0_i32_0 = arith.constant 0 : i32
    %c0_i32_1 = arith.constant 0 : i32
    return %c0_i32, %c0_i32_0 : i32, i32
  }
  func.func @transform_32(%arg0: i32) -> (i32, i32, i32) {
    %c0_i32 = arith.constant 0 : i32
    %c0_i32_0 = arith.constant 0 : i32
    %c0_i32_1 = arith.constant 0 : i32
    %c0_i32_2 = arith.constant 0 : i32
    return %c0_i32, %c0_i32_0, %c0_i32_1 : i32, i32, i32
  }
  func.func @transform_33(%arg0: i32) -> (i32, i32, i32, i32) {
    %c0_i32 = arith.constant 0 : i32
    %c0_i32_0 = arith.constant 0 : i32
    %c0_i32_1 = arith.constant 0 : i32
    %c0_i32_2 = arith.constant 0 : i32
    %c0_i32_3 = arith.constant 0 : i32
    return %c0_i32, %c0_i32_0, %c0_i32_1, %c0_i32_2 : i32, i32, i32, i32
  }
  func.func @transform_34(%arg0: i32) -> (i32, i32, i32, i32) {
    %c0_i32 = arith.constant 0 : i32
    %c0_i32_0 = arith.constant 0 : i32
    %c0_i32_1 = arith.constant 0 : i32
    %c0_i32_2 = arith.constant 0 : i32
    %c0_i32_3 = arith.constant 0 : i32
    return %c0_i32, %c0_i32_0, %c0_i32_1, %c0_i32_2 : i32, i32, i32, i32
  }
}

</mosaic_0001>

<llo_original>
// kernel: transformer_forward.1
$region0: #{transformer_forward.1}
  #allocation0 [shape = 'u32[]', space=smem, size = 0x4, offset = 0x4, fixed_abs, tag = 'smem constant byte address 0x4 - core index']
  #allocation1 [shape = 'u32[72,128]{1,0:T(1,128)}', space=vmem, size = 0x9000, scoped, tag = 'internal scratch']
  %s0 = inlined_call_operand.smem [shape: u32[35], index: -1, kind: input, shape index: {}]
  %s1 = sld [smem:[%s0]]
  %s2 = scalar_lea.smem %s0, 1
  %s3 = sld [smem:[%s2]]
  %s4 = scalar_lea.smem %s0, 2
  %s5 = sld [smem:[%s4]]
  %s6 = scalar_lea.smem %s0, 3
  %s7 = sld [smem:[%s6]]
  %s8 = scalar_lea.smem %s0, 4
  %s9 = sld [smem:[%s8]]
  %s10 = scalar_lea.smem %s0, 5
  %s11 = sld [smem:[%s10]]
  %s12 = scalar_lea.smem %s0, 6
  %s13 = sld [smem:[%s12]]
  %s14 = scalar_lea.smem %s0, 7
  %s15 = sld [smem:[%s14]]
  %s16 = scalar_lea.smem %s0, 8
  %s17 = sld [smem:[%s16]]
  %s18 = scalar_lea.smem %s0, 9
  %s19 = sld [smem:[%s18]]
  %s20 = scalar_lea.smem %s0, 10
  %s21 = sld [smem:[%s20]]
  %s22 = scalar_lea.smem %s0, 11
  %s23 = sld [smem:[%s22]]
  %s24 = scalar_lea.smem %s0, 12
  %s25 = sld [smem:[%s24]]
  %s26 = scalar_lea.smem %s0, 13
  %s27 = sld [smem:[%s26]]
  %s28 = scalar_lea.smem %s0, 14
  %s29 = sld [smem:[%s28]]
  %s30 = scalar_lea.smem %s0, 15
  %s31 = sld [smem:[%s30]]
  %s32 = scalar_lea.smem %s0, 16
  %s33 = sld [smem:[%s32]]
  %s34 = scalar_lea.smem %s0, 17
  %s35 = sld [smem:[%s34]]
  %s36 = scalar_lea.smem %s0, 18
  %s37 = sld [smem:[%s36]]
  %s38 = scalar_lea.smem %s0, 19
  %s39 = sld [smem:[%s38]]
  %s40 = scalar_lea.smem %s0, 20
  %s41 = sld [smem:[%s40]]
  %s42 = scalar_lea.smem %s0, 21
  %s43 = sld [smem:[%s42]]
  %s44 = scalar_lea.smem %s0, 22
  %s45 = sld [smem:[%s44]]
  %s46 = scalar_lea.smem %s0, 23
  %s47 = sld [smem:[%s46]]
  %s48 = scalar_lea.smem %s0, 24
  %s49 = sld [smem:[%s48]]
  %s50 = scalar_lea.smem %s0, 25
  %s51 = sld [smem:[%s50]]
  %s52 = scalar_lea.smem %s0, 26
  %s53 = sld [smem:[%s52]]
  %s54 = scalar_lea.smem %s0, 27
  %s55 = sld [smem:[%s54]]
  %s56 = scalar_lea.smem %s0, 28
  %s57 = sld [smem:[%s56]]
  %s58 = scalar_lea.smem %s0, 29
  %s59 = sld [smem:[%s58]]
  %s60 = scalar_lea.smem %s0, 30
  %s61 = sld [smem:[%s60]]
  %s62 = scalar_lea.smem %s0, 31
  %s63 = sld [smem:[%s62]]
  %s64 = scalar_lea.smem %s0, 32
  %s65 = sld [smem:[%s64]]
  %s66 = scalar_lea.smem %s0, 33
  %s67 = sld [smem:[%s66]]
  %s68 = scalar_lea.smem %s0, 34
  %s69 = sld [smem:[%s68]]
  %70 = xla_tuple %s65, %s67, %s69
  %s71 = sld [smem:[#allocation0]]
  $region154: #{transformer_forward.1} parent=0
    _
  %s73 = ssub.s32 1, %s71
  %s74 = scalar_select 0, %s73, %s71
  $region1: #{transformer_forward.1} parent=0
    #allocation2 [shape = 'u8[8192]{0}', space=vmem, size = 0x2000, scoped, tag = 'output window, operand 1, single buffered']
    #allocation3 [shape = 's32[1]{0}', space=sflag, size = 0x4, scoped, tag = 'scoped memory for transformer_forward.1']
    #allocation4 [shape = 'u8[16384]{0}', space=vmem, size = 0x4000, scoped, tag = 'output window, operand 2, single buffered']
    #allocation5 [shape = 's32[1]{0}', space=sflag, size = 0x4, scoped, tag = 'scoped memory for transformer_forward.1']
    %75 = vsyncpa [#allocation3], 0
    %76 = vsyncpa [#allocation5], 0
    // Predicated region
    $region2: #{transformer_forward.1} parent=1 // pred_check
      _
    $region3: #{transformer_forward.1} parent=1 // pred_check_branch
      %78 = sbr.rel (0) target = $region5
    $region4: #{transformer_forward.1} parent=1 // pred_region
      _
    $region5: #{transformer_forward.1} parent=1 // pred_fallthru
      _
    // Predicated region
    $region6: #{transformer_forward.1} parent=1 // pred_check
      _
    $region7: #{transformer_forward.1} parent=1 // pred_check_branch
      %80 = sbr.rel (0) target = $region9
    $region8: #{transformer_forward.1} parent=1 // pred_region
      _
    $region9: #{transformer_forward.1} parent=1 // pred_fallthru
      _
    // Predicated region
    $region10: #{transformer_forward.1} parent=1 // pred_check
      _
    $region11: #{transformer_forward.1} parent=1 // pred_check_branch
      %82 = sbr.rel (0) target = $region13
    $region12: #{transformer_forward.1} parent=1 // pred_region
      _
    $region13: #{transformer_forward.1} parent=1 // pred_fallthru
      _
    // Predicated region
    $region14: #{transformer_forward.1} parent=1 // pred_check
      _
    $region15: #{transformer_forward.1} parent=1 // pred_check_branch
      %84 = sbr.rel (0) target = $region17
    $region16: #{transformer_forward.1} parent=1 // pred_region
      _
    $region17: #{transformer_forward.1} parent=1 // pred_fallthru
      _
    // Predicated region
    $region18: #{transformer_forward.1} parent=1 // pred_check
      _
    $region19: #{transformer_forward.1} parent=1 // pred_check_branch
      %86 = sbr.rel (0) target = $region21
    $region20: #{transformer_forward.1} parent=1 // pred_region
      _
    $region21: #{transformer_forward.1} parent=1 // pred_fallthru
      _
    // Predicated region
    $region22: #{transformer_forward.1} parent=1 // pred_check
      _
    $region23: #{transformer_forward.1} parent=1 // pred_check_branch
      %88 = sbr.rel (0) target = $region25
    $region24: #{transformer_forward.1} parent=1 // pred_region
      _
    $region25: #{transformer_forward.1} parent=1 // pred_fallthru
      _
    // Predicated region
    $region26: #{transformer_forward.1} parent=1 // pred_check
      _
    $region27: #{transformer_forward.1} parent=1 // pred_check_branch
      %90 = sbr.rel (0) target = $region29
    $region28: #{transformer_forward.1} parent=1 // pred_region
      _
    $region29: #{transformer_forward.1} parent=1 // pred_fallthru
      _
    // Predicated region
    $region30: #{transformer_forward.1} parent=1 // pred_check
      _
    $region31: #{transformer_forward.1} parent=1 // pred_check_branch
      %92 = sbr.rel (0) target = $region33
    $region32: #{transformer_forward.1} parent=1 // pred_region
      _
    $region33: #{transformer_forward.1} parent=1 // pred_fallthru
      _
    // Predicated region
    $region34: #{transformer_forward.1} parent=1 // pred_check
      _
    $region35: #{transformer_forward.1} parent=1 // pred_check_branch
      %94 = sbr.rel (0) target = $region37
    $region36: #{transformer_forward.1} parent=1 // pred_region
      _
    $region37: #{transformer_forward.1} parent=1 // pred_fallthru
      _
    // Predicated region
    $region38: #{transformer_forward.1} parent=1 // pred_check
      _
    $region39: #{transformer_forward.1} parent=1 // pred_check_branch
      %96 = sbr.rel (0) target = $region41
    $region40: #{transformer_forward.1} parent=1 // pred_region
      _
    $region41: #{transformer_forward.1} parent=1 // pred_fallthru
      _
    // Predicated region
    $region42: #{transformer_forward.1} parent=1 // pred_check
      _
    $region43: #{transformer_forward.1} parent=1 // pred_check_branch
      %98 = sbr.rel (0) target = $region45
    $region44: #{transformer_forward.1} parent=1 // pred_region
      _
    $region45: #{transformer_forward.1} parent=1 // pred_fallthru
      _
    // Predicated region
    $region46: #{transformer_forward.1} parent=1 // pred_check
      _
    $region47: #{transformer_forward.1} parent=1 // pred_check_branch
      %100 = sbr.rel (0) target = $region49
    $region48: #{transformer_forward.1} parent=1 // pred_region
      _
    $region49: #{transformer_forward.1} parent=1 // pred_fallthru
      _
    // Predicated region
    $region50: #{transformer_forward.1} parent=1 // pred_check
      _
    $region51: #{transformer_forward.1} parent=1 // pred_check_branch
      %102 = sbr.rel (0) target = $region53
    $region52: #{transformer_forward.1} parent=1 // pred_region
      _
    $region53: #{transformer_forward.1} parent=1 // pred_fallthru
      _
    // Predicated region
    $region54: #{transformer_forward.1} parent=1 // pred_check
      _
    $region55: #{transformer_forward.1} parent=1 // pred_check_branch
      %104 = sbr.rel (0) target = $region57
    $region56: #{transformer_forward.1} parent=1 // pred_region
      _
    $region57: #{transformer_forward.1} parent=1 // pred_fallthru
      _
    // Predicated region
    $region58: #{transformer_forward.1} parent=1 // pred_check
      _
    $region59: #{transformer_forward.1} parent=1 // pred_check_branch
      %106 = sbr.rel (0) target = $region61
    $region60: #{transformer_forward.1} parent=1 // pred_region
      _
    $region61: #{transformer_forward.1} parent=1 // pred_fallthru
      _
    // Predicated region
    $region62: #{transformer_forward.1} parent=1 // pred_check
      _
    $region63: #{transformer_forward.1} parent=1 // pred_check_branch
      %108 = sbr.rel (0) target = $region65
    $region64: #{transformer_forward.1} parent=1 // pred_region
      _
    $region65: #{transformer_forward.1} parent=1 // pred_fallthru
      _
    // Predicated region
    $region66: #{transformer_forward.1} parent=1 // pred_check
      _
    $region67: #{transformer_forward.1} parent=1 // pred_check_branch
      %110 = sbr.rel (0) target = $region69
    $region68: #{transformer_forward.1} parent=1 // pred_region
      _
    $region69: #{transformer_forward.1} parent=1 // pred_fallthru
      _
    // Predicated region
    $region70: #{transformer_forward.1} parent=1 // pred_check
      _
    $region71: #{transformer_forward.1} parent=1 // pred_check_branch
      %112 = sbr.rel (0) target = $region73
    $region72: #{transformer_forward.1} parent=1 // pred_region
      _
    $region73: #{transformer_forward.1} parent=1 // pred_fallthru
      _
    // Predicated region
    $region74: #{transformer_forward.1} parent=1 // pred_check
      _
    $region75: #{transformer_forward.1} parent=1 // pred_check_branch
      %114 = sbr.rel (0) target = $region77
    $region76: #{transformer_forward.1} parent=1 // pred_region
      _
    $region77: #{transformer_forward.1} parent=1 // pred_fallthru
      _
    // Predicated region
    $region78: #{transformer_forward.1} parent=1 // pred_check
      _
    $region79: #{transformer_forward.1} parent=1 // pred_check_branch
      %116 = sbr.rel (0) target = $region81
    $region80: #{transformer_forward.1} parent=1 // pred_region
      _
    $region81: #{transformer_forward.1} parent=1 // pred_fallthru
      _
    // Predicated region
    $region82: #{transformer_forward.1} parent=1 // pred_check
      _
    $region83: #{transformer_forward.1} parent=1 // pred_check_branch
      %118 = sbr.rel (0) target = $region85
    $region84: #{transformer_forward.1} parent=1 // pred_region
      _
    $region85: #{transformer_forward.1} parent=1 // pred_fallthru
      _
    // Predicated region
    $region86: #{transformer_forward.1} parent=1 // pred_check
      _
    $region87: #{transformer_forward.1} parent=1 // pred_check_branch
      %120 = sbr.rel (0) target = $region89
    $region88: #{transformer_forward.1} parent=1 // pred_region
      _
    $region89: #{transformer_forward.1} parent=1 // pred_fallthru
      _
    // Predicated region
    $region90: #{transformer_forward.1} parent=1 // pred_check
      _
    $region91: #{transformer_forward.1} parent=1 // pred_check_branch
      %122 = sbr.rel (0) target = $region93
    $region92: #{transformer_forward.1} parent=1 // pred_region
      _
    $region93: #{transformer_forward.1} parent=1 // pred_fallthru
      _
    // Predicated region
    $region94: #{transformer_forward.1} parent=1 // pred_check
      _
    $region95: #{transformer_forward.1} parent=1 // pred_check_branch
      %124 = sbr.rel (0) target = $region97
    $region96: #{transformer_forward.1} parent=1 // pred_region
      _
    $region97: #{transformer_forward.1} parent=1 // pred_fallthru
      _
    // Predicated region
    $region98: #{transformer_forward.1} parent=1 // pred_check
      _
    $region99: #{transformer_forward.1} parent=1 // pred_check_branch
      %126 = sbr.rel (0) target = $region101
    $region100: #{transformer_forward.1} parent=1 // pred_region
      _
    $region101: #{transformer_forward.1} parent=1 // pred_fallthru
      _
    // Predicated region
    $region102: #{transformer_forward.1} parent=1 // pred_check
      _
    $region103: #{transformer_forward.1} parent=1 // pred_check_branch
      %128 = sbr.rel (0) target = $region105
    $region104: #{transformer_forward.1} parent=1 // pred_region
      _
    $region105: #{transformer_forward.1} parent=1 // pred_fallthru
      _
    // Predicated region
    $region106: #{transformer_forward.1} parent=1 // pred_check
      _
    $region107: #{transformer_forward.1} parent=1 // pred_check_branch
      %130 = sbr.rel (0) target = $region109
    $region108: #{transformer_forward.1} parent=1 // pred_region
      _
    $region109: #{transformer_forward.1} parent=1 // pred_fallthru
      _
    // Predicated region
    $region110: #{transformer_forward.1} parent=1 // pred_check
      _
    $region111: #{transformer_forward.1} parent=1 // pred_check_branch
      %132 = sbr.rel (0) target = $region113
    $region112: #{transformer_forward.1} parent=1 // pred_region
      _
    $region113: #{transformer_forward.1} parent=1 // pred_fallthru
      _
    // Predicated region
    $region114: #{transformer_forward.1} parent=1 // pred_check
      _
    $region115: #{transformer_forward.1} parent=1 // pred_check_branch
      %134 = sbr.rel (0) target = $region117
    $region116: #{transformer_forward.1} parent=1 // pred_region
      _
    $region117: #{transformer_forward.1} parent=1 // pred_fallthru
      _
    // Predicated region
    $region118: #{transformer_forward.1} parent=1 // pred_check
      _
    $region119: #{transformer_forward.1} parent=1 // pred_check_branch
      %136 = sbr.rel (0) target = $region121
    $region120: #{transformer_forward.1} parent=1 // pred_region
      _
    $region121: #{transformer_forward.1} parent=1 // pred_fallthru
      _
    // Predicated region
    $region122: #{transformer_forward.1} parent=1 // pred_check
      _
    $region123: #{transformer_forward.1} parent=1 // pred_check_branch
      %138 = sbr.rel (0) target = $region125
    $region124: #{transformer_forward.1} parent=1 // pred_region
      _
    $region125: #{transformer_forward.1} parent=1 // pred_fallthru
      _
    // Predicated region
    $region126: #{transformer_forward.1} parent=1 // pred_check
      _
    $region127: #{transformer_forward.1} parent=1 // pred_check_branch
      %140 = sbr.rel (0) target = $region129
    $region128: #{transformer_forward.1} parent=1 // pred_region
      _
    $region129: #{transformer_forward.1} parent=1 // pred_fallthru
      _
    %v141 = vlaneseq
    %v142 = vand.u32 %v141, 127
    %vm143 = vcmp.ge.s32.totalorder %v142, 0
    %vm144 = vcmp.lt.s32.totalorder %v142, 8
    %vm145 = vmand %vm143, %vm144
    %vm146 = vcmp.ge.s32.totalorder %v142, 8
    %vm147 = vcmp.lt.s32.totalorder %v142, 16
    %vm148 = vmand %vm146, %vm147
    %vm149 = vcmp.lt.s32.totalorder %v142, 9
    %vm150 = vcmp.ge.s32.totalorder %v142, 9
    %vm151 = vcmp.lt.s32.totalorder %v142, 18
    %vm152 = vmand %vm150, %vm151
    %vm153 = vcmp.ge.s32.totalorder %v142, 18
    %vm154 = vcmp.lt.s32.totalorder %v142, 19
    %vm155 = vmand %vm153, %vm154
    %v156 = vld [vmem:[%s1] sm:$0xff]
    %v157 = vld [vmem:[%s1 + $0x8] sm:$0xff]
    %v158 = vld [vmem:[%s7] sm:$0xff]
    %v159 = vld [vmem:[%s7 + $0x8] sm:$0xff]
    %v160 = vld [vmem:[%s7 + $0x10] sm:$0xff]
    %v161 = vld [vmem:[%s7 + $0x18] sm:$0xff]
    %v162 = vld [vmem:[%s7 + $0x20] sm:$0xff]
    %v163 = vld [vmem:[%s7 + $0x28] sm:$0xff]
    %v164 = vld [vmem:[%s7 + $0x30] sm:$0xff]
    %v165 = vld [vmem:[%s7 + $0x38] sm:$0xff]
    %v166 = vld [vmem:[%s7 + $0x40] sm:$0xff]
    %v167 = vld [vmem:[%s7 + $0x48] sm:$0xff]
    %v168 = vld [vmem:[%s7 + $0x50] sm:$0xff]
    %v169 = vld [vmem:[%s7 + $0x58] sm:$0xff]
    %v170 = vld [vmem:[%s7 + $0x60] sm:$0x3f]
    %vm171 = vcmask 834560
    %v173 = vsel %vm171, %v156, 0
    %v176 = vsel %vm171, %v157, 0
    %vm178 = vcmask 1045504
    %v180 = vsel %vm178, %v170, 0
    %182 = vmatpush.msra.mxu0 0.0
    %183 = vmatpush.msra.mxu0 0.0
    %184 = vmatpush.msra.mxu0 0.0
    %185 = vmatpush.msra.mxu0 %v180
    %186 = vmatpush.msra.mxu0 %v169
    %187 = vmatpush.msra.mxu0 %v168
    %188 = vmatpush.msra.mxu0 %v167
    %189 = vmatpush.msra.mxu0 %v166
    %190 = vmatpush.msra.mxu0 %v165
    %191 = vmatpush.msra.mxu0 %v164
    %192 = vmatpush.msra.mxu0 %v163
    %193 = vmatpush.msra.mxu0 %v162
    %194 = vmatpush.msra.mxu0 %v161
    %195 = vmatpush.msra.mxu0 %v160
    %196 = vmatpush.msra.mxu0 %v159
    %197 = vmatpush.msra.mxu0 %v158
    %198 = vmatmul.f32.gmra.mxu0 %v173
    %v199 = vpop.f32.mrf.mxu0
    %v200 = vadd.f32 0.0, %v199
    %201 = vmatmul.f32.gmra.mxu0 %v176
    %v202 = vpop.f32.mrf.mxu0
    %v203 = vadd.f32 0.0, %v202
    %204 = vdwg.mxu0
    %v205 = vld [vmem:[%s9] sm:$0xff]
    %v206 = vld [vmem:[%s9 + $0x8] sm:$0xff]
    %v207 = vld [vmem:[%s9 + $0x10] sm:$0xff]
    %v208 = vld [vmem:[%s9 + $0x18] sm:$0xff]
    %v209 = vld [vmem:[%s9 + $0x20] sm:$0xff]
    %v210 = vld [vmem:[%s9 + $0x28] sm:$0xff]
    %v211 = vld [vmem:[%s9 + $0x30] sm:$0xff]
    %v212 = vld [vmem:[%s9 + $0x38] sm:$0xff]
    %v213 = vld [vmem:[%s9 + $0x40] sm:$0xff]
    %v214 = vld [vmem:[%s9 + $0x48] sm:$0xff]
    %v215 = vld [vmem:[%s9 + $0x50] sm:$0xff]
    %v216 = vld [vmem:[%s9 + $0x58] sm:$0xff]
    %v217 = vld [vmem:[%s9 + $0x60] sm:$0x3f]
    %v219 = vsel %vm178, %v217, 0
    %221 = vmatpush.msra.mxu0 0.0
    %222 = vmatpush.msra.mxu0 0.0
    %223 = vmatpush.msra.mxu0 0.0
    %224 = vmatpush.msra.mxu0 %v219
    %225 = vmatpush.msra.mxu0 %v216
    %226 = vmatpush.msra.mxu0 %v215
    %227 = vmatpush.msra.mxu0 %v214
    %228 = vmatpush.msra.mxu0 %v213
    %229 = vmatpush.msra.mxu0 %v212
    %230 = vmatpush.msra.mxu0 %v211
    %231 = vmatpush.msra.mxu0 %v210
    %232 = vmatpush.msra.mxu0 %v209
    %233 = vmatpush.msra.mxu0 %v208
    %234 = vmatpush.msra.mxu0 %v207
    %235 = vmatpush.msra.mxu0 %v206
    %236 = vmatpush.msra.mxu0 %v205
    %237 = vmatmul.f32.gmra.mxu0 %v173
    %v238 = vpop.f32.mrf.mxu0
    %v239 = vadd.f32 0.0, %v238
    %240 = vmatmul.f32.gmra.mxu0 %v176
    %v241 = vpop.f32.mrf.mxu0
    %v242 = vadd.f32 0.0, %v241
    %243 = vdwg.mxu0
    %v244 = vld [vmem:[%s11] sm:$0xff]
    %v245 = vld [vmem:[%s11 + $0x8] sm:$0xff]
    %v246 = vld [vmem:[%s11 + $0x10] sm:$0xff]
    %v247 = vld [vmem:[%s11 + $0x18] sm:$0xff]
    %v248 = vld [vmem:[%s11 + $0x20] sm:$0xff]
    %v249 = vld [vmem:[%s11 + $0x28] sm:$0xff]
    %v250 = vld [vmem:[%s11 + $0x30] sm:$0xff]
    %v251 = vld [vmem:[%s11 + $0x38] sm:$0xff]
    %v252 = vld [vmem:[%s11 + $0x40] sm:$0xff]
    %v253 = vld [vmem:[%s11 + $0x48] sm:$0xff]
    %v254 = vld [vmem:[%s11 + $0x50] sm:$0xff]
    %v255 = vld [vmem:[%s11 + $0x58] sm:$0xff]
    %v256 = vld [vmem:[%s11 + $0x60] sm:$0x3f]
    %v258 = vsel %vm178, %v256, 0
    %260 = vmatpush.msra.mxu0 0.0
    %261 = vmatpush.msra.mxu0 0.0
    %262 = vmatpush.msra.mxu0 0.0
    %263 = vmatpush.msra.mxu0 %v258
    %264 = vmatpush.msra.mxu0 %v255
    %265 = vmatpush.msra.mxu0 %v254
    %266 = vmatpush.msra.mxu0 %v253
    %267 = vmatpush.msra.mxu0 %v252
    %268 = vmatpush.msra.mxu0 %v251
    %269 = vmatpush.msra.mxu0 %v250
    %270 = vmatpush.msra.mxu0 %v249
    %271 = vmatpush.msra.mxu0 %v248
    %272 = vmatpush.msra.mxu0 %v247
    %273 = vmatpush.msra.mxu0 %v246
    %274 = vmatpush.msra.mxu0 %v245
    %275 = vmatpush.msra.mxu0 %v244
    %276 = vmatmul.f32.gmra.mxu0 %v173
    %v277 = vpop.f32.mrf.mxu0
    %v278 = vadd.f32 0.0, %v277
    %279 = vmatmul.f32.gmra.mxu0 %v176
    %v280 = vpop.f32.mrf.mxu0
    %v281 = vadd.f32 0.0, %v280
    %282 = vdwg.mxu0
    %v283 = vld [vmem:[%s5] sm:$0x1]
    %v284 = vsel %vm145, 1, 0
    %vm285 = vcmp.eq.s32.totalorder %v284, 1
    %v286 = vsel %vm285, %v200, 0.0
    %vm287 = vcmask 130048
    %v289 = vsel %vm287, %v286, 0
    %v292 = vsel %vm287, %v239, 0
    %294 = vmatpush.xpose.msra.mxu0 0.0
    %295 = vmatpush.xpose.msra.mxu0 0.0
    %296 = vmatpush.xpose.msra.mxu0 0.0
    %297 = vmatpush.xpose.msra.mxu0 0.0
    %298 = vmatpush.xpose.msra.mxu0 0.0
    %299 = vmatpush.xpose.msra.mxu0 0.0
    %300 = vmatpush.xpose.msra.mxu0 0.0
    %301 = vmatpush.xpose.msra.mxu0 0.0
    %302 = vmatpush.xpose.msra.mxu0 0.0
    %303 = vmatpush.xpose.msra.mxu0 0.0
    %304 = vmatpush.xpose.msra.mxu0 0.0
    %305 = vmatpush.xpose.msra.mxu0 0.0
    %306 = vmatpush.xpose.msra.mxu0 0.0
    %307 = vmatpush.xpose.msra.mxu0 0.0
    %308 = vmatpush.xpose.msra.mxu0 0.0
    %309 = vmatpush.xpose.msra.mxu0 %v292
    %310 = vmatmul.f32.gmra.mxu0 %v289
    %v311 = vpop.f32.mrf.mxu0
    %v312 = vadd.f32 0.0, %v311
    %313 = vdwg.mxu0
    %v314 = vmul.f32 %v312, 0.35355338
    %v316 = vperm.slane %v283, 0
    %v318 = vadd.f32 %v314, %v316
    %vm319 = vcmask 64512
    %v320 = vsel %vm319, %v318, -inf
    %321 = vmax.xlane.f32.xlu0 %v320
    %v322 = vpop.xlane.xlu0 %321
    %v323 = vsub.f32 %v318, %v322
    %v324 = vmul.f32 %v323, 1.442695
    %v325 = vpow.pop %v324
    %v326 = vsel %vm319, %v325, 0.0
    %327 = vadd.xlane.f32.xlu0 %v326
    %v328 = vpop.xlane.xlu0 %327
    %v329 = vrcp.pop %v328
    %v330 = vmul.f32 %v328, %v329
    %v331 = vsub.f32 1.0, %v330
    %v332 = vmul.f32 %v329, %v331
    %v333 = vadd.f32 %v329, %v332
    %vm334 = vweird.f32 %v328
    %vm335 = vweird.f32 %v329
    %vm336 = vmor %vm334, %vm335
    %v337 = vsel %vm336, %v329, %v333
    %v338 = vand.u32 2147483647, %v328
    %vm339 = vcmp.eq.f32.partialorder %v338, 8.507059e+37
    %v340 = vand.u32 %v328, 2147483648
    %v341 = vor.u32 1.1754944e-38, %v340
    %v342 = vsel %vm339, %v341, %v337
    %v343 = vmul.f32 %v325, %v342
    %344 = vst.msk [vmem:[#allocation4] sm:$0xff] %vm319, %v343
    %v345 = vsel %vm285, %v278, 0.0
    %v346 = vsel %vm148, 1, 0
    %vm347 = vcmp.eq.s32.totalorder %v346, 1
    %v348 = vsel %vm347, %v200, 0.0
    %v350 = vsel %vm287, %v348, 0
    %352 = vmatpush.xpose.msra.mxu0 0.0
    %353 = vmatpush.xpose.msra.mxu0 0.0
    %354 = vmatpush.xpose.msra.mxu0 0.0
    %355 = vmatpush.xpose.msra.mxu0 0.0
    %356 = vmatpush.xpose.msra.mxu0 0.0
    %357 = vmatpush.xpose.msra.mxu0 0.0
    %358 = vmatpush.xpose.msra.mxu0 0.0
    %359 = vmatpush.xpose.msra.mxu0 0.0
    %360 = vmatpush.xpose.msra.mxu0 0.0
    %361 = vmatpush.xpose.msra.mxu0 0.0
    %362 = vmatpush.xpose.msra.mxu0 0.0
    %363 = vmatpush.xpose.msra.mxu0 0.0
    %364 = vmatpush.xpose.msra.mxu0 0.0
    %365 = vmatpush.xpose.msra.mxu0 0.0
    %366 = vmatpush.xpose.msra.mxu0 0.0
    %367 = vmatpush.xpose.msra.mxu0 %v292
    %368 = vmatmul.f32.gmra.mxu0 %v350
    %v369 = vpop.f32.mrf.mxu0
    %v370 = vadd.f32 0.0, %v369
    %371 = vdwg.mxu0
    %v372 = vmul.f32 %v370, 0.35355338
    %v373 = vadd.f32 %v372, %v316
    %v374 = vsel %vm319, %v373, -inf
    %375 = vmax.xlane.f32.xlu0 %v374
    %v376 = vpop.xlane.xlu0 %375
    %v377 = vsub.f32 %v373, %v376
    %v378 = vmul.f32 %v377, 1.442695
    %v379 = vpow.pop %v378
    %v380 = vsel %vm319, %v379, 0.0
    %381 = vadd.xlane.f32.xlu0 %v380
    %v382 = vpop.xlane.xlu0 %381
    %v383 = vrcp.pop %v382
    %v384 = vmul.f32 %v382, %v383
    %v385 = vsub.f32 1.0, %v384
    %v386 = vmul.f32 %v383, %v385
    %v387 = vadd.f32 %v383, %v386
    %vm388 = vweird.f32 %v382
    %vm389 = vweird.f32 %v383
    %vm390 = vmor %vm388, %vm389
    %v391 = vsel %vm390, %v383, %v387
    %v392 = vand.u32 2147483647, %v382
    %vm393 = vcmp.eq.f32.partialorder %v392, 8.507059e+37
    %v394 = vand.u32 %v382, 2147483648
    %v395 = vor.u32 1.1754944e-38, %v394
    %v396 = vsel %vm393, %v395, %v391
    %v397 = vmul.f32 %v379, %v396
    %s398 = scalar_lea.vmem [#allocation4], 8
    %399 = vst.msk [vmem:[%s398] sm:$0xff] %vm319, %v397
    %v400 = vsel %vm347, %v278, 0.0
    %v402 = vsel %vm319, %v397, 0
    %404 = vmatpush.msra.mxu0 0.0
    %405 = vmatpush.msra.mxu0 0.0
    %406 = vmatpush.msra.mxu0 0.0
    %407 = vmatpush.msra.mxu0 0.0
    %408 = vmatpush.msra.mxu0 0.0
    %409 = vmatpush.msra.mxu0 0.0
    %410 = vmatpush.msra.mxu0 0.0
    %411 = vmatpush.msra.mxu0 0.0
    %412 = vmatpush.msra.mxu0 0.0
    %413 = vmatpush.msra.mxu0 0.0
    %414 = vmatpush.msra.mxu0 0.0
    %415 = vmatpush.msra.mxu0 0.0
    %416 = vmatpush.msra.mxu0 0.0
    %417 = vmatpush.msra.mxu0 0.0
    %418 = vmatpush.msra.mxu0 0.0
    %419 = vmatpush.msra.mxu0 %v400
    %420 = vmatmul.f32.gmra.mxu0 %v402
    %v421 = vpop.f32.mrf.mxu0
    %v422 = vadd.f32 0.0, %v421
    %423 = vdwg.mxu0
    %v425 = vsel %vm319, %v343, 0
    %427 = vmatpush.msra.mxu0 0.0
    %428 = vmatpush.msra.mxu0 0.0
    %429 = vmatpush.msra.mxu0 0.0
    %430 = vmatpush.msra.mxu0 0.0
    %431 = vmatpush.msra.mxu0 0.0
    %432 = vmatpush.msra.mxu0 0.0
    %433 = vmatpush.msra.mxu0 0.0
    %434 = vmatpush.msra.mxu0 0.0
    %435 = vmatpush.msra.mxu0 0.0
    %436 = vmatpush.msra.mxu0 0.0
    %437 = vmatpush.msra.mxu0 0.0
    %438 = vmatpush.msra.mxu0 0.0
    %439 = vmatpush.msra.mxu0 0.0
    %440 = vmatpush.msra.mxu0 0.0
    %441 = vmatpush.msra.mxu0 0.0
    %442 = vmatpush.msra.mxu0 %v345
    %443 = vmatmul.f32.gmra.mxu0 %v425
    %v444 = vpop.f32.mrf.mxu0
    %v445 = vadd.f32 %v422, %v444
    %446 = vdwg.mxu0
    %v447 = vld [vmem:[%s13] sm:$0xff]
    %v448 = vld [vmem:[%s13 + $0x8] sm:$0xff]
    %v450 = vsel %vm287, %v445, 0
    %452 = vmatpush.msra.mxu0 0.0
    %453 = vmatpush.msra.mxu0 0.0
    %454 = vmatpush.msra.mxu0 0.0
    %455 = vmatpush.msra.mxu0 0.0
    %456 = vmatpush.msra.mxu0 0.0
    %457 = vmatpush.msra.mxu0 0.0
    %458 = vmatpush.msra.mxu0 0.0
    %459 = vmatpush.msra.mxu0 0.0
    %460 = vmatpush.msra.mxu0 0.0
    %461 = vmatpush.msra.mxu0 0.0
    %462 = vmatpush.msra.mxu0 0.0
    %463 = vmatpush.msra.mxu0 0.0
    %464 = vmatpush.msra.mxu0 0.0
    %465 = vmatpush.msra.mxu0 0.0
    %466 = vmatpush.msra.mxu0 %v448
    %467 = vmatpush.msra.mxu0 %v447
    %468 = vmatmul.f32.gmra.mxu0 %v450
    %v469 = vpop.f32.mrf.mxu0
    %v470 = vadd.f32 %v156, %v469
    %471 = vdwg.mxu0
    %v472 = vld [vmem:[%s15] sm:$0x1]
    %v473 = vld [vmem:[%s17] sm:$0x1]
    %v474 = vsel %vm171, %v470, 0.0
    %475 = vadd.xlane.f32.xlu0 %v474
    %v476 = vpop.xlane.xlu0 %475
    %v477 = vrcp.pop 102.0
    %v478 = vmul.f32 102.0, %v477
    %v479 = vsub.f32 1.0, %v478
    %v480 = vmul.f32 %v477, %v479
    %v481 = vadd.f32 %v477, %v480
    %vm482 = vweird.f32 %v477
    %v483 = vsel %vm482, %v477, %v481
    %v484 = vmul.f32 %v476, %v483
    %v485 = vsub.f32 %v470, %v484
    %v486 = vmul.f32 %v485, %v485
    %v487 = vsel %vm171, %v486, 0.0
    %488 = vadd.xlane.f32.xlu0 %v487
    %v489 = vpop.xlane.xlu0 %488
    %v490 = vmul.f32 %v489, %v483
    %v491 = vadd.f32 %v490, 1e-06
    %v492 = vrsqrt.pop %v491
    %v493 = vmul.f32 %v492, %v491
    %v494 = vmul.f32 %v493, %v492
    %v495 = vmul.f32 0.5, %v494
    %v496 = vsub.f32 1.5, %v495
    %v497 = vmul.f32 %v492, %v496
    %vm498 = vweird.f32 %v491
    %vm499 = vweird.f32 %v492
    %vm500 = vmor %vm498, %vm499
    %v501 = vsel %vm500, %v492, %v497
    %v502 = vmul.f32 %v485, %v501
    %v504 = vperm.slane %v472, 0
    %v506 = vmul.f32 %v502, %v504
    %v508 = vperm.slane %v473, 0
    %v510 = vadd.f32 %v506, %v508
    %s511 = scalar_lea.vmem %s5, 1
    %v512 = vld [vmem:[%s511] sm:$0x1]
    %v513 = vsel %vm285, %v203, 0.0
    %v515 = vsel %vm287, %v513, 0
    %v518 = vsel %vm287, %v242, 0
    %520 = vmatpush.xpose.msra.mxu0 0.0
    %521 = vmatpush.xpose.msra.mxu0 0.0
    %522 = vmatpush.xpose.msra.mxu0 0.0
    %523 = vmatpush.xpose.msra.mxu0 0.0
    %524 = vmatpush.xpose.msra.mxu0 0.0
    %525 = vmatpush.xpose.msra.mxu0 0.0
    %526 = vmatpush.xpose.msra.mxu0 0.0
    %527 = vmatpush.xpose.msra.mxu0 0.0
    %528 = vmatpush.xpose.msra.mxu0 0.0
    %529 = vmatpush.xpose.msra.mxu0 0.0
    %530 = vmatpush.xpose.msra.mxu0 0.0
    %531 = vmatpush.xpose.msra.mxu0 0.0
    %532 = vmatpush.xpose.msra.mxu0 0.0
    %533 = vmatpush.xpose.msra.mxu0 0.0
    %534 = vmatpush.xpose.msra.mxu0 0.0
    %535 = vmatpush.xpose.msra.mxu0 %v518
    %536 = vmatmul.f32.gmra.mxu0 %v515
    %v537 = vpop.f32.mrf.mxu0
    %v538 = vadd.f32 0.0, %v537
    %539 = vdwg.mxu0
    %v540 = vmul.f32 %v538, 0.35355338
    %v542 = vperm.slane %v512, 0
    %v544 = vadd.f32 %v540, %v542
    %v545 = vsel %vm319, %v544, -inf
    %546 = vmax.xlane.f32.xlu0 %v545
    %v547 = vpop.xlane.xlu0 %546
    %v548 = vsub.f32 %v544, %v547
    %v549 = vmul.f32 %v548, 1.442695
    %v550 = vpow.pop %v549
    %v551 = vsel %vm319, %v550, 0.0
    %552 = vadd.xlane.f32.xlu0 %v551
    %v553 = vpop.xlane.xlu0 %552
    %v554 = vrcp.pop %v553
    %v555 = vmul.f32 %v553, %v554
    %v556 = vsub.f32 1.0, %v555
    %v557 = vmul.f32 %v554, %v556
    %v558 = vadd.f32 %v554, %v557
    %vm559 = vweird.f32 %v553
    %vm560 = vweird.f32 %v554
    %vm561 = vmor %vm559, %vm560
    %v562 = vsel %vm561, %v554, %v558
    %v563 = vand.u32 2147483647, %v553
    %vm564 = vcmp.eq.f32.partialorder %v563, 8.507059e+37
    %v565 = vand.u32 %v553, 2147483648
    %v566 = vor.u32 1.1754944e-38, %v565
    %v567 = vsel %vm564, %v566, %v562
    %v568 = vmul.f32 %v550, %v567
    %s569 = scalar_lea.vmem [#allocation4], 16
    %570 = vst.msk [vmem:[%s569] sm:$0xff] %vm319, %v568
    %v571 = vsel %vm285, %v281, 0.0
    %v572 = vsel %vm347, %v203, 0.0
    %v574 = vsel %vm287, %v572, 0
    %576 = vmatpush.xpose.msra.mxu0 0.0
    %577 = vmatpush.xpose.msra.mxu0 0.0
    %578 = vmatpush.xpose.msra.mxu0 0.0
    %579 = vmatpush.xpose.msra.mxu0 0.0
    %580 = vmatpush.xpose.msra.mxu0 0.0
    %581 = vmatpush.xpose.msra.mxu0 0.0
    %582 = vmatpush.xpose.msra.mxu0 0.0
    %583 = vmatpush.xpose.msra.mxu0 0.0
    %584 = vmatpush.xpose.msra.mxu0 0.0
    %585 = vmatpush.xpose.msra.mxu0 0.0
    %586 = vmatpush.xpose.msra.mxu0 0.0
    %587 = vmatpush.xpose.msra.mxu0 0.0
    %588 = vmatpush.xpose.msra.mxu0 0.0
    %589 = vmatpush.xpose.msra.mxu0 0.0
    %590 = vmatpush.xpose.msra.mxu0 0.0
    %591 = vmatpush.xpose.msra.mxu0 %v518
    %592 = vmatmul.f32.gmra.mxu0 %v574
    %v593 = vpop.f32.mrf.mxu0
    %v594 = vadd.f32 0.0, %v593
    %595 = vdwg.mxu0
    %v596 = vmul.f32 %v594, 0.35355338
    %v597 = vadd.f32 %v596, %v542
    %v598 = vsel %vm319, %v597, -inf
    %599 = vmax.xlane.f32.xlu0 %v598
    %v600 = vpop.xlane.xlu0 %599
    %v601 = vsub.f32 %v597, %v600
    %v602 = vmul.f32 %v601, 1.442695
    %v603 = vpow.pop %v602
    %v604 = vsel %vm319, %v603, 0.0
    %605 = vadd.xlane.f32.xlu0 %v604
    %v606 = vpop.xlane.xlu0 %605
    %v607 = vrcp.pop %v606
    %v608 = vmul.f32 %v606, %v607
    %v609 = vsub.f32 1.0, %v608
    %v610 = vmul.f32 %v607, %v609
    %v611 = vadd.f32 %v607, %v610
    %vm612 = vweird.f32 %v606
    %vm613 = vweird.f32 %v607
    %vm614 = vmor %vm612, %vm613
    %v615 = vsel %vm614, %v607, %v611
    %v616 = vand.u32 2147483647, %v606
    %vm617 = vcmp.eq.f32.partialorder %v616, 8.507059e+37
    %v618 = vand.u32 %v606, 2147483648
    %v619 = vor.u32 1.1754944e-38, %v618
    %v620 = vsel %vm617, %v619, %v615
    %v621 = vmul.f32 %v603, %v620
    %s622 = scalar_lea.vmem [#allocation4], 24
    %623 = vst.msk [vmem:[%s622] sm:$0xff] %vm319, %v621
    %v624 = vsel %vm347, %v281, 0.0
    %v626 = vsel %vm319, %v621, 0
    %628 = vmatpush.msra.mxu0 0.0
    %629 = vmatpush.msra.mxu0 0.0
    %630 = vmatpush.msra.mxu0 0.0
    %631 = vmatpush.msra.mxu0 0.0
    %632 = vmatpush.msra.mxu0 0.0
    %633 = vmatpush.msra.mxu0 0.0
    %634 = vmatpush.msra.mxu0 0.0
    %635 = vmatpush.msra.mxu0 0.0
    %636 = vmatpush.msra.mxu0 0.0
    %637 = vmatpush.msra.mxu0 0.0
    %638 = vmatpush.msra.mxu0 0.0
    %639 = vmatpush.msra.mxu0 0.0
    %640 = vmatpush.msra.mxu0 0.0
    %641 = vmatpush.msra.mxu0 0.0
    %642 = vmatpush.msra.mxu0 0.0
    %643 = vmatpush.msra.mxu0 %v624
    %644 = vmatmul.f32.gmra.mxu0 %v626
    %v645 = vpop.f32.mrf.mxu0
    %v646 = vadd.f32 0.0, %v645
    %647 = vdwg.mxu0
    %v649 = vsel %vm319, %v568, 0
    %651 = vmatpush.msra.mxu0 0.0
    %652 = vmatpush.msra.mxu0 0.0
    %653 = vmatpush.msra.mxu0 0.0
    %654 = vmatpush.msra.mxu0 0.0
    %655 = vmatpush.msra.mxu0 0.0
    %656 = vmatpush.msra.mxu0 0.0
    %657 = vmatpush.msra.mxu0 0.0
    %658 = vmatpush.msra.mxu0 0.0
    %659 = vmatpush.msra.mxu0 0.0
    %660 = vmatpush.msra.mxu0 0.0
    %661 = vmatpush.msra.mxu0 0.0
    %662 = vmatpush.msra.mxu0 0.0
    %663 = vmatpush.msra.mxu0 0.0
    %664 = vmatpush.msra.mxu0 0.0
    %665 = vmatpush.msra.mxu0 0.0
    %666 = vmatpush.msra.mxu0 %v571
    %667 = vmatmul.f32.gmra.mxu0 %v649
    %v668 = vpop.f32.mrf.mxu0
    %v669 = vadd.f32 %v646, %v668
    %670 = vdwg.mxu0
    %v671 = vld [vmem:[%s13] sm:$0xff]
    %v672 = vld [vmem:[%s13 + $0x8] sm:$0xff]
    %v674 = vsel %vm287, %v669, 0
    %676 = vmatpush.msra.mxu0 0.0
    %677 = vmatpush.msra.mxu0 0.0
    %678 = vmatpush.msra.mxu0 0.0
    %679 = vmatpush.msra.mxu0 0.0
    %680 = vmatpush.msra.mxu0 0.0
    %681 = vmatpush.msra.mxu0 0.0
    %682 = vmatpush.msra.mxu0 0.0
    %683 = vmatpush.msra.mxu0 0.0
    %684 = vmatpush.msra.mxu0 0.0
    %685 = vmatpush.msra.mxu0 0.0
    %686 = vmatpush.msra.mxu0 0.0
    %687 = vmatpush.msra.mxu0 0.0
    %688 = vmatpush.msra.mxu0 0.0
    %689 = vmatpush.msra.mxu0 0.0
    %690 = vmatpush.msra.mxu0 %v672
    %691 = vmatpush.msra.mxu0 %v671
    %692 = vmatmul.f32.gmra.mxu0 %v674
    %v693 = vpop.f32.mrf.mxu0
    %v694 = vadd.f32 %v157, %v693
    %695 = vdwg.mxu0
    %v696 = vld [vmem:[%s15] sm:$0x1]
    %v697 = vld [vmem:[%s17] sm:$0x1]
    %v698 = vsel %vm171, %v694, 0.0
    %699 = vadd.xlane.f32.xlu0 %v698
    %v700 = vpop.xlane.xlu0 %699
    %v701 = vmul.f32 %v700, %v483
    %v702 = vsub.f32 %v694, %v701
    %v703 = vmul.f32 %v702, %v702
    %v704 = vsel %vm171, %v703, 0.0
    %705 = vadd.xlane.f32.xlu0 %v704
    %v706 = vpop.xlane.xlu0 %705
    %v707 = vmul.f32 %v706, %v483
    %v708 = vadd.f32 %v707, 1e-06
    %v709 = vrsqrt.pop %v708
    %v710 = vmul.f32 %v709, %v708
    %v711 = vmul.f32 %v710, %v709
    %v712 = vmul.f32 0.5, %v711
    %v713 = vsub.f32 1.5, %v712
    %v714 = vmul.f32 %v709, %v713
    %vm715 = vweird.f32 %v708
    %vm716 = vweird.f32 %v709
    %vm717 = vmor %vm715, %vm716
    %v718 = vsel %vm717, %v709, %v714
    %v719 = vmul.f32 %v702, %v718
    %v721 = vperm.slane %v696, 0
    %v723 = vmul.f32 %v719, %v721
    %v725 = vperm.slane %v697, 0
    %v727 = vadd.f32 %v723, %v725
    %v728 = vld [vmem:[%s19] sm:$0xff]
    %v729 = vld [vmem:[%s19 + $0x8] sm:$0xff]
    %v730 = vld [vmem:[%s19 + $0x10] sm:$0xff]
    %v731 = vld [vmem:[%s19 + $0x18] sm:$0xff]
    %v732 = vld [vmem:[%s19 + $0x20] sm:$0xff]
    %v733 = vld [vmem:[%s19 + $0x28] sm:$0xff]
    %v734 = vld [vmem:[%s19 + $0x30] sm:$0xff]
    %v735 = vld [vmem:[%s19 + $0x38] sm:$0xff]
    %v736 = vld [vmem:[%s19 + $0x40] sm:$0xff]
    %v737 = vld [vmem:[%s19 + $0x48] sm:$0xff]
    %v738 = vld [vmem:[%s19 + $0x50] sm:$0xff]
    %v739 = vld [vmem:[%s19 + $0x58] sm:$0xff]
    %v740 = vld [vmem:[%s19 + $0x60] sm:$0x3f]
    %v741 = vld [vmem:[%s21] sm:$0x1]
    %v743 = vperm.slane %v741, 0
    %v746 = vsel %vm171, %v510, 0
    %v749 = vsel %vm171, %v727, 0
    %v752 = vsel %vm178, %v740, 0
    %754 = vmatpush.msra.mxu0 0.0
    %755 = vmatpush.msra.mxu0 0.0
    %756 = vmatpush.msra.mxu0 0.0
    %757 = vmatpush.msra.mxu0 %v752
    %758 = vmatpush.msra.mxu0 %v739
    %759 = vmatpush.msra.mxu0 %v738
    %760 = vmatpush.msra.mxu0 %v737
    %761 = vmatpush.msra.mxu0 %v736
    %762 = vmatpush.msra.mxu0 %v735
    %763 = vmatpush.msra.mxu0 %v734
    %764 = vmatpush.msra.mxu0 %v733
    %765 = vmatpush.msra.mxu0 %v732
    %766 = vmatpush.msra.mxu0 %v731
    %767 = vmatpush.msra.mxu0 %v730
    %768 = vmatpush.msra.mxu0 %v729
    %769 = vmatpush.msra.mxu0 %v728
    %770 = vmatmul.f32.gmra.mxu0 %v746
    %v771 = vpop.f32.mrf.mxu0
    %v772 = vadd.f32 %v743, %v771
    %773 = vmatmul.f32.gmra.mxu0 %v749
    %v774 = vpop.f32.mrf.mxu0
    %v775 = vadd.f32 %v743, %v774
    %776 = vdwg.mxu0
    %v777 = vmax.f32 %v772, 0.0
    %v778 = vmax.f32 %v775, 0.0
    %v779 = vld [vmem:[%s23] sm:$0xff]
    %v780 = vld [vmem:[%s23 + $0x8] sm:$0xff]
    %v781 = vld [vmem:[%s23 + $0x10] sm:$0xff]
    %v782 = vld [vmem:[%s23 + $0x18] sm:$0xff]
    %v783 = vld [vmem:[%s23 + $0x20] sm:$0xff]
    %v784 = vld [vmem:[%s23 + $0x28] sm:$0xff]
    %v785 = vld [vmem:[%s23 + $0x30] sm:$0xff]
    %v786 = vld [vmem:[%s23 + $0x38] sm:$0xff]
    %v787 = vld [vmem:[%s25] sm:$0x1]
    %v789 = vperm.slane %v787, 0
    %vm791 = vcmask 523264
    %v793 = vsel %vm791, %v777, 0
    %v796 = vsel %vm791, %v778, 0
    %798 = vmatpush.msra.mxu0 0.0
    %799 = vmatpush.msra.mxu0 0.0
    %800 = vmatpush.msra.mxu0 0.0
    %801 = vmatpush.msra.mxu0 0.0
    %802 = vmatpush.msra.mxu0 0.0
    %803 = vmatpush.msra.mxu0 0.0
    %804 = vmatpush.msra.mxu0 0.0
    %805 = vmatpush.msra.mxu0 0.0
    %806 = vmatpush.msra.mxu0 %v786
    %807 = vmatpush.msra.mxu0 %v785
    %808 = vmatpush.msra.mxu0 %v784
    %809 = vmatpush.msra.mxu0 %v783
    %810 = vmatpush.msra.mxu0 %v782
    %811 = vmatpush.msra.mxu0 %v781
    %812 = vmatpush.msra.mxu0 %v780
    %813 = vmatpush.msra.mxu0 %v779
    %814 = vmatmul.f32.gmra.mxu0 %v793
    %v815 = vpop.f32.mrf.mxu0
    %v816 = vadd.f32 %v789, %v815
    %817 = vmatmul.f32.gmra.mxu0 %v796
    %v818 = vpop.f32.mrf.mxu0
    %v819 = vadd.f32 %v789, %v818
    %820 = vdwg.mxu0
    %v821 = vadd.f32 %v816, %v510
    %v822 = vadd.f32 %v819, %v727
    %v823 = vld [vmem:[%s27] sm:$0x1]
    %v824 = vld [vmem:[%s29] sm:$0x1]
    %v825 = vsel %vm171, %v821, 0.0
    %826 = vadd.xlane.f32.xlu0 %v825
    %v827 = vpop.xlane.xlu0 %826
    %v828 = vsel %vm171, %v822, 0.0
    %829 = vadd.xlane.f32.xlu0 %v828
    %v830 = vpop.xlane.xlu0 %829
    %v831 = vmul.f32 %v827, %v483
    %v832 = vmul.f32 %v830, %v483
    %v833 = vsub.f32 %v821, %v831
    %v834 = vsub.f32 %v822, %v832
    %v835 = vmul.f32 %v833, %v833
    %v836 = vmul.f32 %v834, %v834
    %v837 = vsel %vm171, %v835, 0.0
    %838 = vadd.xlane.f32.xlu0 %v837
    %v839 = vpop.xlane.xlu0 %838
    %v840 = vsel %vm171, %v836, 0.0
    %841 = vadd.xlane.f32.xlu0 %v840
    %v842 = vpop.xlane.xlu0 %841
    %v843 = vmul.f32 %v839, %v483
    %v844 = vmul.f32 %v842, %v483
    %v845 = vadd.f32 %v843, 1e-06
    %v846 = vadd.f32 %v844, 1e-06
    %v847 = vrsqrt.pop %v845
    %v848 = vmul.f32 %v847, %v845
    %v849 = vmul.f32 %v848, %v847
    %v850 = vmul.f32 0.5, %v849
    %v851 = vsub.f32 1.5, %v850
    %v852 = vmul.f32 %v847, %v851
    %vm853 = vweird.f32 %v845
    %vm854 = vweird.f32 %v847
    %vm855 = vmor %vm853, %vm854
    %v856 = vsel %vm855, %v847, %v852
    %v857 = vrsqrt.pop %v846
    %v858 = vmul.f32 %v857, %v846
    %v859 = vmul.f32 %v858, %v857
    %v860 = vmul.f32 0.5, %v859
    %v861 = vsub.f32 1.5, %v860
    %v862 = vmul.f32 %v857, %v861
    %vm863 = vweird.f32 %v846
    %vm864 = vweird.f32 %v857
    %vm865 = vmor %vm863, %vm864
    %v866 = vsel %vm865, %v857, %v862
    %v867 = vmul.f32 %v833, %v856
    %v868 = vmul.f32 %v834, %v866
    %v870 = vperm.slane %v823, 0
    %v872 = vmul.f32 %v867, %v870
    %v873 = vmul.f32 %v868, %v870
    %v875 = vperm.slane %v824, 0
    %v877 = vadd.f32 %v872, %v875
    %v878 = vadd.f32 %v873, %v875
    %v879 = vld [vmem:[%s3] sm:$0xff]
    %v880 = vld [vmem:[%s3 + $0x8] sm:$0xff]
    %v881 = vadd.f32 %v877, %v879
    %v882 = vadd.f32 %v878, %v880
    %v883 = vld [vmem:[%s31] sm:$0xf]
    %v884 = vld [vmem:[%s35] sm:$0xff]
    %v885 = vld [vmem:[%s35 + $0x8] sm:$0xff]
    %v886 = vld [vmem:[%s35 + $0x10] sm:$0xff]
    %v887 = vld [vmem:[%s35 + $0x18] sm:$0xff]
    %v888 = vld [vmem:[%s35 + $0x20] sm:$0x3f]
    %v889 = vld [vmem:[%s41] sm:$0xff]
    %v890 = vld [vmem:[%s41 + $0x8] sm:$0xff]
    %v891 = vld [vmem:[%s41 + $0x10] sm:$0xff]
    %v892 = vld [vmem:[%s41 + $0x18] sm:$0xff]
    %v893 = vld [vmem:[%s41 + $0x20] sm:$0x3f]
    %v894 = vld [vmem:[%s63] sm:$0xff]
    %v895 = vld [vmem:[%s63 + $0x8] sm:$0xff]
    %v896 = vld [vmem:[%s63 + $0x10] sm:$0xff]
    %v897 = vld [vmem:[%s63 + $0x18] sm:$0xff]
    %v898 = vld [vmem:[%s63 + $0x20] sm:$0x3f]
    %v899 = vld [vmem:[%s5] sm:$0x1]
    %v900 = vld [vmem:[%s43] sm:$0xff]
    %v901 = vld [vmem:[%s43 + $0x8] sm:$0xff]
    %v902 = vld [vmem:[%s43 + $0x10] sm:$0xff]
    %v903 = vld [vmem:[%s43 + $0x18] sm:$0xff]
    %v904 = vld [vmem:[%s43 + $0x20] sm:$0xff]
    %v905 = vld [vmem:[%s43 + $0x28] sm:$0xff]
    %v906 = vld [vmem:[%s43 + $0x30] sm:$0xff]
    %v907 = vld [vmem:[%s43 + $0x38] sm:$0xff]
    %v908 = vld [vmem:[%s43 + $0x40] sm:$0xff]
    %v909 = vld [vmem:[%s43 + $0x48] sm:$0xff]
    %v910 = vld [vmem:[%s43 + $0x50] sm:$0xff]
    %v911 = vld [vmem:[%s43 + $0x58] sm:$0xff]
    %v912 = vld [vmem:[%s43 + $0x60] sm:$0x3f]
    %v914 = vsel %vm171, %v881, 0
    %v917 = vsel %vm178, %v912, 0
    %919 = vmatpush.msra.mxu0 0.0
    %920 = vmatpush.msra.mxu0 0.0
    %921 = vmatpush.msra.mxu0 0.0
    %922 = vmatpush.msra.mxu0 %v917
    %923 = vmatpush.msra.mxu0 %v911
    %924 = vmatpush.msra.mxu0 %v910
    %925 = vmatpush.msra.mxu0 %v909
    %926 = vmatpush.msra.mxu0 %v908
    %927 = vmatpush.msra.mxu0 %v907
    %928 = vmatpush.msra.mxu0 %v906
    %929 = vmatpush.msra.mxu0 %v905
    %930 = vmatpush.msra.mxu0 %v904
    %931 = vmatpush.msra.mxu0 %v903
    %932 = vmatpush.msra.mxu0 %v902
    %933 = vmatpush.msra.mxu0 %v901
    %934 = vmatpush.msra.mxu0 %v900
    %935 = vmatmul.f32.gmra.mxu0 %v914
    %v936 = vpop.f32.mrf.mxu0
    %v937 = vadd.f32 0.0, %v936
    %938 = vdwg.mxu0
    %v939 = vsel %vm285, %v937, 0.0
    %v940 = vsel %vm347, %v937, 0.0
    %v941 = vld [vmem:[%s45] sm:$0xff]
    %v942 = vld [vmem:[%s45 + $0x8] sm:$0xff]
    %v943 = vld [vmem:[%s45 + $0x10] sm:$0xff]
    %v944 = vld [vmem:[%s45 + $0x18] sm:$0xff]
    %v945 = vld [vmem:[%s45 + $0x20] sm:$0xff]
    %v946 = vld [vmem:[%s45 + $0x28] sm:$0xff]
    %v947 = vld [vmem:[%s45 + $0x30] sm:$0xff]
    %v948 = vld [vmem:[%s45 + $0x38] sm:$0xff]
    %v949 = vld [vmem:[%s45 + $0x40] sm:$0xff]
    %v950 = vld [vmem:[%s45 + $0x48] sm:$0xff]
    %v951 = vld [vmem:[%s45 + $0x50] sm:$0xff]
    %v952 = vld [vmem:[%s45 + $0x58] sm:$0xff]
    %v953 = vld [vmem:[%s45 + $0x60] sm:$0x3f]
    %v955 = vsel %vm178, %v953, 0
    %957 = vmatpush.msra.mxu0 0.0
    %958 = vmatpush.msra.mxu0 0.0
    %959 = vmatpush.msra.mxu0 0.0
    %960 = vmatpush.msra.mxu0 %v955
    %961 = vmatpush.msra.mxu0 %v952
    %962 = vmatpush.msra.mxu0 %v951
    %963 = vmatpush.msra.mxu0 %v950
    %964 = vmatpush.msra.mxu0 %v949
    %965 = vmatpush.msra.mxu0 %v948
    %966 = vmatpush.msra.mxu0 %v947
    %967 = vmatpush.msra.mxu0 %v946
    %968 = vmatpush.msra.mxu0 %v945
    %969 = vmatpush.msra.mxu0 %v944
    %970 = vmatpush.msra.mxu0 %v943
    %971 = vmatpush.msra.mxu0 %v942
    %972 = vmatpush.msra.mxu0 %v941
    %973 = vmatmul.f32.gmra.mxu0 %v914
    %v974 = vpop.f32.mrf.mxu0
    %v975 = vadd.f32 0.0, %v974
    %976 = vdwg.mxu0
    %s977 = scalar_lea.vmem %s45, 104
    %v978 = vld [vmem:[%s977] sm:$0xff]
    %v979 = vld [vmem:[%s977 + $0x8] sm:$0xff]
    %v980 = vld [vmem:[%s977 + $0x10] sm:$0xff]
    %v981 = vld [vmem:[%s977 + $0x18] sm:$0xff]
    %v982 = vld [vmem:[%s977 + $0x20] sm:$0xff]
    %v983 = vld [vmem:[%s977 + $0x28] sm:$0xff]
    %v984 = vld [vmem:[%s977 + $0x30] sm:$0xff]
    %v985 = vld [vmem:[%s977 + $0x38] sm:$0xff]
    %v986 = vld [vmem:[%s977 + $0x40] sm:$0xff]
    %v987 = vld [vmem:[%s977 + $0x48] sm:$0xff]
    %v988 = vld [vmem:[%s977 + $0x50] sm:$0xff]
    %v989 = vld [vmem:[%s977 + $0x58] sm:$0xff]
    %v990 = vld [vmem:[%s977 + $0x60] sm:$0x3f]
    %v992 = vsel %vm178, %v990, 0
    %994 = vmatpush.msra.mxu0 0.0
    %995 = vmatpush.msra.mxu0 0.0
    %996 = vmatpush.msra.mxu0 0.0
    %997 = vmatpush.msra.mxu0 %v992
    %998 = vmatpush.msra.mxu0 %v989
    %999 = vmatpush.msra.mxu0 %v988
    %1000 = vmatpush.msra.mxu0 %v987
    %1001 = vmatpush.msra.mxu0 %v986
    %1002 = vmatpush.msra.mxu0 %v985
    %1003 = vmatpush.msra.mxu0 %v984
    %1004 = vmatpush.msra.mxu0 %v983
    %1005 = vmatpush.msra.mxu0 %v982
    %1006 = vmatpush.msra.mxu0 %v981
    %1007 = vmatpush.msra.mxu0 %v980
    %1008 = vmatpush.msra.mxu0 %v979
    %1009 = vmatpush.msra.mxu0 %v978
    %1010 = vmatmul.f32.gmra.mxu0 %v914
    %v1011 = vpop.f32.mrf.mxu0
    %v1012 = vadd.f32 0.0, %v1011
    %1013 = vdwg.mxu0
    %v1014 = vld [vmem:[%s33] sm:$0x1]
    %vm1015 = vcmask 147456
    %1016 = vst.msk [vmem:[%s65] sm:$0x1] %vm1015, %v1014
    %v1017 = vadd.f32 %v1014, %v883
    %vm1018 = vcmask 310272
    %v1020 = vsel %vm1018, %v1017, 0
    %v1023 = vsel %vm178, %v888, 0
    %1025 = vmatpush.msra.mxu0 0.0
    %1026 = vmatpush.msra.mxu0 0.0
    %1027 = vmatpush.msra.mxu0 0.0
    %1028 = vmatpush.msra.mxu0 0.0
    %1029 = vmatpush.msra.mxu0 0.0
    %1030 = vmatpush.msra.mxu0 0.0
    %1031 = vmatpush.msra.mxu0 0.0
    %1032 = vmatpush.msra.mxu0 0.0
    %1033 = vmatpush.msra.mxu0 0.0
    %1034 = vmatpush.msra.mxu0 0.0
    %1035 = vmatpush.msra.mxu0 0.0
    %1036 = vmatpush.msra.mxu0 %v1023
    %1037 = vmatpush.msra.mxu0 %v887
    %1038 = vmatpush.msra.mxu0 %v886
    %1039 = vmatpush.msra.mxu0 %v885
    %1040 = vmatpush.msra.mxu0 %v884
    %1041 = vmatmul.f32.gmra.mxu0 %v1020
    %v1042 = vpop.f32.mrf.mxu0
    %v1043 = vadd.f32 %v1017, %v1042
    %1044 = vdwg.mxu0
    %v1045 = vld [vmem:[%s37] sm:$0x1]
    %v1046 = vld [vmem:[%s39] sm:$0x1]
    %vm1047 = vcmask 303104
    %v1048 = vsel %vm1047, %v1043, 0.0
    %1049 = vadd.xlane.f32.xlu0 %v1048
    %v1050 = vpop.xlane.xlu0 %1049
    %v1051 = vrcp.pop 38.0
    %v1052 = vmul.f32 38.0, %v1051
    %v1053 = vsub.f32 1.0, %v1052
    %v1054 = vmul.f32 %v1051, %v1053
    %v1055 = vadd.f32 %v1051, %v1054
    %vm1056 = vweird.f32 %v1051
    %v1057 = vsel %vm1056, %v1051, %v1055
    %v1058 = vmul.f32 %v1050, %v1057
    %v1059 = vsub.f32 %v1043, %v1058
    %v1060 = vmul.f32 %v1059, %v1059
    %v1061 = vsel %vm1047, %v1060, 0.0
    %1062 = vadd.xlane.f32.xlu0 %v1061
    %v1063 = vpop.xlane.xlu0 %1062
    %v1064 = vmul.f32 %v1063, %v1057
    %v1065 = vadd.f32 %v1064, 1e-06
    %v1066 = vrsqrt.pop %v1065
    %v1067 = vmul.f32 %v1066, %v1065
    %v1068 = vmul.f32 %v1067, %v1066
    %v1069 = vmul.f32 0.5, %v1068
    %v1070 = vsub.f32 1.5, %v1069
    %v1071 = vmul.f32 %v1066, %v1070
    %vm1072 = vweird.f32 %v1065
    %vm1073 = vweird.f32 %v1066
    %vm1074 = vmor %vm1072, %vm1073
    %v1075 = vsel %vm1074, %v1066, %v1071
    %v1076 = vmul.f32 %v1059, %v1075
    %v1077 = vmul.f32 %v1076, %v1045
    %v1078 = vadd.f32 %v1077, %v1046
    %v1080 = vsel %vm1018, %v1078, 0
    %v1083 = vsel %vm178, %v893, 0
    %1085 = vmatpush.msra.mxu0 0.0
    %1086 = vmatpush.msra.mxu0 0.0
    %1087 = vmatpush.msra.mxu0 0.0
    %1088 = vmatpush.msra.mxu0 0.0
    %1089 = vmatpush.msra.mxu0 0.0
    %1090 = vmatpush.msra.mxu0 0.0
    %1091 = vmatpush.msra.mxu0 0.0
    %1092 = vmatpush.msra.mxu0 0.0
    %1093 = vmatpush.msra.mxu0 0.0
    %1094 = vmatpush.msra.mxu0 0.0
    %1095 = vmatpush.msra.mxu0 0.0
    %1096 = vmatpush.msra.mxu0 %v1083
    %1097 = vmatpush.msra.mxu0 %v892
    %1098 = vmatpush.msra.mxu0 %v891
    %1099 = vmatpush.msra.mxu0 %v890
    %1100 = vmatpush.msra.mxu0 %v889
    %1101 = vmatmul.f32.gmra.mxu0 %v1080
    %v1102 = vpop.f32.mrf.mxu0
    %v1103 = vadd.f32 0.0, %v1102
    %1104 = vdwg.mxu0
    %v1106 = vsel %vm287, %v1103, 0
    %v1109 = vsel %vm287, %v939, 0
    %1111 = vmatpush.xpose.msra.mxu0 0.0
    %1112 = vmatpush.xpose.msra.mxu0 0.0
    %1113 = vmatpush.xpose.msra.mxu0 0.0
    %1114 = vmatpush.xpose.msra.mxu0 0.0
    %1115 = vmatpush.xpose.msra.mxu0 0.0
    %1116 = vmatpush.xpose.msra.mxu0 0.0
    %1117 = vmatpush.xpose.msra.mxu0 0.0
    %1118 = vmatpush.xpose.msra.mxu0 0.0
    %1119 = vmatpush.xpose.msra.mxu0 0.0
    %1120 = vmatpush.xpose.msra.mxu0 0.0
    %1121 = vmatpush.xpose.msra.mxu0 0.0
    %1122 = vmatpush.xpose.msra.mxu0 0.0
    %1123 = vmatpush.xpose.msra.mxu0 0.0
    %1124 = vmatpush.xpose.msra.mxu0 0.0
    %1125 = vmatpush.xpose.msra.mxu0 0.0
    %1126 = vmatpush.xpose.msra.mxu0 %v1109
    %1127 = vmatmul.f32.gmra.mxu0 %v1106
    %v1128 = vpop.f32.mrf.mxu0
    %v1129 = vadd.f32 0.0, %v1128
    %1130 = vdwg.mxu0
    %v1131 = vmul.f32 %v1129, 0.35355338
    %v1132 = vadd.f32 %v1131, %v899
    %vm1133 = vcmask 57344
    %v1134 = vsel %vm1133, %v1132, -inf
    %1135 = vmax.xlane.f32.xlu0 %v1134
    %v1136 = vpop.xlane.xlu0 %1135
    %v1137 = vsub.f32 %v1132, %v1136
    %v1138 = vmul.f32 %v1137, 1.442695
    %v1139 = vpow.pop %v1138
    %v1140 = vsel %vm1133, %v1139, 0.0
    %1141 = vadd.xlane.f32.xlu0 %v1140
    %v1142 = vpop.xlane.xlu0 %1141
    %v1143 = vrcp.pop %v1142
    %v1144 = vmul.f32 %v1142, %v1143
    %v1145 = vsub.f32 1.0, %v1144
    %v1146 = vmul.f32 %v1143, %v1145
    %v1147 = vadd.f32 %v1143, %v1146
    %vm1148 = vweird.f32 %v1142
    %vm1149 = vweird.f32 %v1143
    %vm1150 = vmor %vm1148, %vm1149
    %v1151 = vsel %vm1150, %v1143, %v1147
    %v1152 = vand.u32 2147483647, %v1142
    %vm1153 = vcmp.eq.f32.partialorder %v1152, 8.507059e+37
    %v1154 = vand.u32 %v1142, 2147483648
    %v1155 = vor.u32 1.1754944e-38, %v1154
    %v1156 = vsel %vm1153, %v1155, %v1151
    %v1157 = vmul.f32 %v1139, %v1156
    %1158 = vst.msk [vmem:[#allocation2] sm:$0x1] %vm1133, %v1157
    %v1160 = vsel %vm287, %v940, 0
    %1162 = vmatpush.xpose.msra.mxu0 0.0
    %1163 = vmatpush.xpose.msra.mxu0 0.0
    %1164 = vmatpush.xpose.msra.mxu0 0.0
    %1165 = vmatpush.xpose.msra.mxu0 0.0
    %1166 = vmatpush.xpose.msra.mxu0 0.0
    %1167 = vmatpush.xpose.msra.mxu0 0.0
    %1168 = vmatpush.xpose.msra.mxu0 0.0
    %1169 = vmatpush.xpose.msra.mxu0 0.0
    %1170 = vmatpush.xpose.msra.mxu0 0.0
    %1171 = vmatpush.xpose.msra.mxu0 0.0
    %1172 = vmatpush.xpose.msra.mxu0 0.0
    %1173 = vmatpush.xpose.msra.mxu0 0.0
    %1174 = vmatpush.xpose.msra.mxu0 0.0
    %1175 = vmatpush.xpose.msra.mxu0 0.0
    %1176 = vmatpush.xpose.msra.mxu0 0.0
    %1177 = vmatpush.xpose.msra.mxu0 %v1160
    %1178 = vmatmul.f32.gmra.mxu0 %v1106
    %v1179 = vpop.f32.mrf.mxu0
    %v1180 = vadd.f32 0.0, %v1179
    %1181 = vdwg.mxu0
    %v1182 = vmul.f32 %v1180, 0.35355338
    %v1183 = vadd.f32 %v1182, %v899
    %v1184 = vsel %vm1133, %v1183, -inf
    %1185 = vmax.xlane.f32.xlu0 %v1184
    %v1186 = vpop.xlane.xlu0 %1185
    %v1187 = vsub.f32 %v1183, %v1186
    %v1188 = vmul.f32 %v1187, 1.442695
    %v1189 = vpow.pop %v1188
    %v1190 = vsel %vm1133, %v1189, 0.0
    %1191 = vadd.xlane.f32.xlu0 %v1190
    %v1192 = vpop.xlane.xlu0 %1191
    %v1193 = vrcp.pop %v1192
    %v1194 = vmul.f32 %v1192, %v1193
    %v1195 = vsub.f32 1.0, %v1194
    %v1196 = vmul.f32 %v1193, %v1195
    %v1197 = vadd.f32 %v1193, %v1196
    %vm1198 = vweird.f32 %v1192
    %vm1199 = vweird.f32 %v1193
    %vm1200 = vmor %vm1198, %vm1199
    %v1201 = vsel %vm1200, %v1193, %v1197
    %v1202 = vand.u32 2147483647, %v1192
    %vm1203 = vcmp.eq.f32.partialorder %v1202, 8.507059e+37
    %v1204 = vand.u32 %v1192, 2147483648
    %v1205 = vor.u32 1.1754944e-38, %v1204
    %v1206 = vsel %vm1203, %v1205, %v1201
    %v1207 = vmul.f32 %v1189, %v1206
    %s1208 = scalar_lea.vmem [#allocation2], 4
    %1209 = vst.msk [vmem:[%s1208] sm:$0x1] %vm1133, %v1207
    %v1211 = vsel %vm319, %v1207, 0
    %1213 = vmatpush.msra.mxu0 0.0
    %1214 = vmatpush.msra.mxu0 0.0
    %1215 = vmatpush.msra.mxu0 0.0
    %1216 = vmatpush.msra.mxu0 0.0
    %1217 = vmatpush.msra.mxu0 0.0
    %1218 = vmatpush.msra.mxu0 0.0
    %1219 = vmatpush.msra.mxu0 0.0
    %1220 = vmatpush.msra.mxu0 0.0
    %1221 = vmatpush.msra.mxu0 0.0
    %1222 = vmatpush.msra.mxu0 0.0
    %1223 = vmatpush.msra.mxu0 0.0
    %1224 = vmatpush.msra.mxu0 0.0
    %1225 = vmatpush.msra.mxu0 0.0
    %1226 = vmatpush.msra.mxu0 0.0
    %1227 = vmatpush.msra.mxu0 0.0
    %1228 = vmatpush.msra.mxu0 %v1012
    %1229 = vmatmul.f32.gmra.mxu0 %v1211
    %v1230 = vpop.f32.mrf.mxu0
    %v1231 = vadd.f32 0.0, %v1230
    %1232 = vdwg.mxu0
    %v1234 = vsel %vm319, %v1157, 0
    %1236 = vmatpush.msra.mxu0 0.0
    %1237 = vmatpush.msra.mxu0 0.0
    %1238 = vmatpush.msra.mxu0 0.0
    %1239 = vmatpush.msra.mxu0 0.0
    %1240 = vmatpush.msra.mxu0 0.0
    %1241 = vmatpush.msra.mxu0 0.0
    %1242 = vmatpush.msra.mxu0 0.0
    %1243 = vmatpush.msra.mxu0 0.0
    %1244 = vmatpush.msra.mxu0 0.0
    %1245 = vmatpush.msra.mxu0 0.0
    %1246 = vmatpush.msra.mxu0 0.0
    %1247 = vmatpush.msra.mxu0 0.0
    %1248 = vmatpush.msra.mxu0 0.0
    %1249 = vmatpush.msra.mxu0 0.0
    %1250 = vmatpush.msra.mxu0 0.0
    %1251 = vmatpush.msra.mxu0 %v975
    %1252 = vmatmul.f32.gmra.mxu0 %v1234
    %v1253 = vpop.f32.mrf.mxu0
    %v1254 = vadd.f32 %v1231, %v1253
    %1255 = vdwg.mxu0
    %v1256 = vadd.f32 %v1254, %v1078
    %v1257 = vld [vmem:[%s47] sm:$0x1]
    %v1258 = vld [vmem:[%s49] sm:$0x1]
    %v1259 = vsel %vm1047, %v1256, 0.0
    %1260 = vadd.xlane.f32.xlu0 %v1259
    %v1261 = vpop.xlane.xlu0 %1260
    %v1262 = vmul.f32 %v1261, %v1057
    %v1263 = vsub.f32 %v1256, %v1262
    %v1264 = vmul.f32 %v1263, %v1263
    %v1265 = vsel %vm1047, %v1264, 0.0
    %1266 = vadd.xlane.f32.xlu0 %v1265
    %v1267 = vpop.xlane.xlu0 %1266
    %v1268 = vmul.f32 %v1267, %v1057
    %v1269 = vadd.f32 %v1268, 1e-06
    %v1270 = vrsqrt.pop %v1269
    %v1271 = vmul.f32 %v1270, %v1269
    %v1272 = vmul.f32 %v1271, %v1270
    %v1273 = vmul.f32 0.5, %v1272
    %v1274 = vsub.f32 1.5, %v1273
    %v1275 = vmul.f32 %v1270, %v1274
    %vm1276 = vweird.f32 %v1269
    %vm1277 = vweird.f32 %v1270
    %vm1278 = vmor %vm1276, %vm1277
    %v1279 = vsel %vm1278, %v1270, %v1275
    %v1280 = vmul.f32 %v1263, %v1279
    %v1281 = vmul.f32 %v1280, %v1257
    %v1282 = vadd.f32 %v1281, %v1258
    %v1283 = vld [vmem:[%s51] sm:$0xff]
    %v1284 = vld [vmem:[%s51 + $0x8] sm:$0xff]
    %v1285 = vld [vmem:[%s51 + $0x10] sm:$0xff]
    %v1286 = vld [vmem:[%s51 + $0x18] sm:$0xff]
    %v1287 = vld [vmem:[%s51 + $0x20] sm:$0x3f]
    %v1288 = vld [vmem:[%s53] sm:$0x1]
    %v1290 = vsel %vm1018, %v1282, 0
    %v1293 = vsel %vm178, %v1287, 0
    %1295 = vmatpush.msra.mxu0 0.0
    %1296 = vmatpush.msra.mxu0 0.0
    %1297 = vmatpush.msra.mxu0 0.0
    %1298 = vmatpush.msra.mxu0 0.0
    %1299 = vmatpush.msra.mxu0 0.0
    %1300 = vmatpush.msra.mxu0 0.0
    %1301 = vmatpush.msra.mxu0 0.0
    %1302 = vmatpush.msra.mxu0 0.0
    %1303 = vmatpush.msra.mxu0 0.0
    %1304 = vmatpush.msra.mxu0 0.0
    %1305 = vmatpush.msra.mxu0 0.0
    %1306 = vmatpush.msra.mxu0 %v1293
    %1307 = vmatpush.msra.mxu0 %v1286
    %1308 = vmatpush.msra.mxu0 %v1285
    %1309 = vmatpush.msra.mxu0 %v1284
    %1310 = vmatpush.msra.mxu0 %v1283
    %1311 = vmatmul.f32.gmra.mxu0 %v1290
    %v1312 = vpop.f32.mrf.mxu0
    %v1313 = vadd.f32 %v1288, %v1312
    %1314 = vdwg.mxu0
    %v1315 = vmax.f32 %v1313, 0.0
    %v1316 = vld [vmem:[%s55] sm:$0xff]
    %v1317 = vld [vmem:[%s55 + $0x8] sm:$0xff]
    %v1318 = vld [vmem:[%s55 + $0x10] sm:$0xff]
    %v1319 = vld [vmem:[%s55 + $0x18] sm:$0xff]
    %v1320 = vld [vmem:[%s55 + $0x20] sm:$0xff]
    %v1321 = vld [vmem:[%s55 + $0x28] sm:$0xff]
    %v1322 = vld [vmem:[%s55 + $0x30] sm:$0xff]
    %v1323 = vld [vmem:[%s55 + $0x38] sm:$0xff]
    %v1324 = vld [vmem:[%s57] sm:$0x1]
    %v1326 = vsel %vm791, %v1315, 0
    %1328 = vmatpush.msra.mxu0 0.0
    %1329 = vmatpush.msra.mxu0 0.0
    %1330 = vmatpush.msra.mxu0 0.0
    %1331 = vmatpush.msra.mxu0 0.0
    %1332 = vmatpush.msra.mxu0 0.0
    %1333 = vmatpush.msra.mxu0 0.0
    %1334 = vmatpush.msra.mxu0 0.0
    %1335 = vmatpush.msra.mxu0 0.0
    %1336 = vmatpush.msra.mxu0 %v1323
    %1337 = vmatpush.msra.mxu0 %v1322
    %1338 = vmatpush.msra.mxu0 %v1321
    %1339 = vmatpush.msra.mxu0 %v1320
    %1340 = vmatpush.msra.mxu0 %v1319
    %1341 = vmatpush.msra.mxu0 %v1318
    %1342 = vmatpush.msra.mxu0 %v1317
    %1343 = vmatpush.msra.mxu0 %v1316
    %1344 = vmatmul.f32.gmra.mxu0 %v1326
    %v1345 = vpop.f32.mrf.mxu0
    %v1346 = vadd.f32 %v1324, %v1345
    %1347 = vdwg.mxu0
    %v1348 = vadd.f32 %v1346, %v1282
    %v1349 = vld [vmem:[%s59] sm:$0x1]
    %v1350 = vld [vmem:[%s61] sm:$0x1]
    %v1351 = vsel %vm1047, %v1348, 0.0
    %1352 = vadd.xlane.f32.xlu0 %v1351
    %v1353 = vpop.xlane.xlu0 %1352
    %v1354 = vmul.f32 %v1353, %v1057
    %v1355 = vsub.f32 %v1348, %v1354
    %v1356 = vmul.f32 %v1355, %v1355
    %v1357 = vsel %vm1047, %v1356, 0.0
    %1358 = vadd.xlane.f32.xlu0 %v1357
    %v1359 = vpop.xlane.xlu0 %1358
    %v1360 = vmul.f32 %v1359, %v1057
    %v1361 = vadd.f32 %v1360, 1e-06
    %v1362 = vrsqrt.pop %v1361
    %v1363 = vmul.f32 %v1362, %v1361
    %v1364 = vmul.f32 %v1363, %v1362
    %v1365 = vmul.f32 0.5, %v1364
    %v1366 = vsub.f32 1.5, %v1365
    %v1367 = vmul.f32 %v1362, %v1366
    %vm1368 = vweird.f32 %v1361
    %vm1369 = vweird.f32 %v1362
    %vm1370 = vmor %vm1368, %vm1369
    %v1371 = vsel %vm1370, %v1362, %v1367
    %v1372 = vmul.f32 %v1355, %v1371
    %v1373 = vmul.f32 %v1372, %v1349
    %v1374 = vadd.f32 %v1373, %v1350
    %v1376 = vsel %vm1018, %v1374, 0
    %v1379 = vsel %vm178, %v898, 0
    %1381 = vmatpush.msra.mxu0 0.0
    %1382 = vmatpush.msra.mxu0 0.0
    %1383 = vmatpush.msra.mxu0 0.0
    %1384 = vmatpush.msra.mxu0 0.0
    %1385 = vmatpush.msra.mxu0 0.0
    %1386 = vmatpush.msra.mxu0 0.0
    %1387 = vmatpush.msra.mxu0 0.0
    %1388 = vmatpush.msra.mxu0 0.0
    %1389 = vmatpush.msra.mxu0 0.0
    %1390 = vmatpush.msra.mxu0 0.0
    %1391 = vmatpush.msra.mxu0 0.0
    %1392 = vmatpush.msra.mxu0 %v1379
    %1393 = vmatpush.msra.mxu0 %v897
    %1394 = vmatpush.msra.mxu0 %v896
    %1395 = vmatpush.msra.mxu0 %v895
    %1396 = vmatpush.msra.mxu0 %v894
    %1397 = vmatmul.f32.gmra.mxu0 %v1376
    %v1398 = vpop.f32.mrf.mxu0
    %v1399 = vadd.f32 %v1014, %v1398
    %1400 = vdwg.mxu0
    %v1401 = vsel %vm149, %v1399, -1e+30
    %v1402 = vsel %vm1047, %v1401, -inf
    %1403 = vmax.xlane.f32.xlu0 %v1402
    %v1404 = vpop.xlane.xlu0 %1403
    %v1405 = vsub.f32 %v1401, %v1404
    %v1406 = vmul.f32 %v1405, 1.442695
    %v1407 = vpow.pop %v1406
    %v1408 = vsel %vm1047, %v1407, 0.0
    %1409 = vadd.xlane.f32.xlu0 %v1408
    %v1410 = vpop.xlane.xlu0 %1409
    %v1411 = vrcp.pop %v1410
    %v1412 = vmul.f32 %v1410, %v1411
    %v1413 = vsub.f32 1.0, %v1412
    %v1414 = vmul.f32 %v1411, %v1413
    %v1415 = vadd.f32 %v1411, %v1414
    %vm1416 = vweird.f32 %v1410
    %vm1417 = vweird.f32 %v1411
    %vm1418 = vmor %vm1416, %vm1417
    %v1419 = vsel %vm1418, %v1411, %v1415
    %v1420 = vand.u32 2147483647, %v1410
    %vm1421 = vcmp.eq.f32.partialorder %v1420, 8.507059e+37
    %v1422 = vand.u32 %v1410, 2147483648
    %v1423 = vor.u32 1.1754944e-38, %v1422
    %v1424 = vsel %vm1421, %v1423, %v1419
    %v1425 = vmul.f32 %v1407, %v1424
    %v1426 = vsel %vm149, %v1425, 0.0
    %v1427 = vsel %vm152, %v1399, -1e+30
    %v1428 = vsel %vm1047, %v1427, -inf
    %1429 = vmax.xlane.f32.xlu0 %v1428
    %v1430 = vpop.xlane.xlu0 %1429
    %v1431 = vsub.f32 %v1427, %v1430
    %v1432 = vmul.f32 %v1431, 1.442695
    %v1433 = vpow.pop %v1432
    %v1434 = vsel %vm1047, %v1433, 0.0
    %1435 = vadd.xlane.f32.xlu0 %v1434
    %v1436 = vpop.xlane.xlu0 %1435
    %v1437 = vrcp.pop %v1436
    %v1438 = vmul.f32 %v1436, %v1437
    %v1439 = vsub.f32 1.0, %v1438
    %v1440 = vmul.f32 %v1437, %v1439
    %v1441 = vadd.f32 %v1437, %v1440
    %vm1442 = vweird.f32 %v1436
    %vm1443 = vweird.f32 %v1437
    %vm1444 = vmor %vm1442, %vm1443
    %v1445 = vsel %vm1444, %v1437, %v1441
    %v1446 = vand.u32 2147483647, %v1436
    %vm1447 = vcmp.eq.f32.partialorder %v1446, 8.507059e+37
    %v1448 = vand.u32 %v1436, 2147483648
    %v1449 = vor.u32 1.1754944e-38, %v1448
    %v1450 = vsel %vm1447, %v1449, %v1445
    %v1451 = vmul.f32 %v1433, %v1450
    %v1452 = vsel %vm152, %v1451, 0.0
    %v1453 = vadd.f32 %v1426, %v1452
    %v1454 = vsub.f32 0.0, %v1399
    %v1455 = vmul.f32 %v1454, 1.442695
    %v1456 = vpow.pop %v1455
    %v1457 = vadd.f32 %v1456, 1.0
    %v1458 = vrcp.pop %v1457
    %v1459 = vmul.f32 %v1457, %v1458
    %v1460 = vsub.f32 1.0, %v1459
    %v1461 = vmul.f32 %v1458, %v1460
    %v1462 = vadd.f32 %v1458, %v1461
    %vm1463 = vweird.f32 %v1457
    %vm1464 = vweird.f32 %v1458
    %vm1465 = vmor %vm1463, %vm1464
    %v1466 = vsel %vm1465, %v1458, %v1462
    %v1467 = vand.u32 2147483647, %v1457
    %vm1468 = vcmp.eq.f32.partialorder %v1467, 8.507059e+37
    %v1469 = vand.u32 %v1457, 2147483648
    %v1470 = vor.u32 1.1754944e-38, %v1469
    %v1471 = vsel %vm1468, %v1470, %v1466
    %v1472 = vmul.f32 1.0, %v1471
    %v1473 = vsel %vm155, %v1472, 0.0
    %v1474 = vadd.f32 %v1453, %v1473
    %1475 = vst.msk [vmem:[%s65 + $0x1] sm:$0x1] %vm1015, %v1474
    %v1477 = vrot.slane %v883, 1
    %v1479 = vadd.f32 %v1474, %v1477
    %v1481 = vsel %vm1018, %v1479, 0
    %1483 = vmatpush.msra.mxu0 0.0
    %1484 = vmatpush.msra.mxu0 0.0
    %1485 = vmatpush.msra.mxu0 0.0
    %1486 = vmatpush.msra.mxu0 0.0
    %1487 = vmatpush.msra.mxu0 0.0
    %1488 = vmatpush.msra.mxu0 0.0
    %1489 = vmatpush.msra.mxu0 0.0
    %1490 = vmatpush.msra.mxu0 0.0
    %1491 = vmatpush.msra.mxu0 0.0
    %1492 = vmatpush.msra.mxu0 0.0
    %1493 = vmatpush.msra.mxu0 0.0
    %1494 = vmatpush.msra.mxu0 %v1023
    %1495 = vmatpush.msra.mxu0 %v887
    %1496 = vmatpush.msra.mxu0 %v886
    %1497 = vmatpush.msra.mxu0 %v885
    %1498 = vmatpush.msra.mxu0 %v884
    %1499 = vmatmul.f32.gmra.mxu0 %v1481
    %v1500 = vpop.f32.mrf.mxu0
    %v1501 = vadd.f32 %v1479, %v1500
    %1502 = vdwg.mxu0
    %v1503 = vld [vmem:[%s37] sm:$0x1]
    %v1504 = vld [vmem:[%s39] sm:$0x1]
    %v1505 = vsel %vm1047, %v1501, 0.0
    %1506 = vadd.xlane.f32.xlu0 %v1505
    %v1507 = vpop.xlane.xlu0 %1506
    %v1508 = vmul.f32 %v1507, %v1057
    %v1509 = vsub.f32 %v1501, %v1508
    %v1510 = vmul.f32 %v1509, %v1509
    %v1511 = vsel %vm1047, %v1510, 0.0
    %1512 = vadd.xlane.f32.xlu0 %v1511
    %v1513 = vpop.xlane.xlu0 %1512
    %v1514 = vmul.f32 %v1513, %v1057
    %v1515 = vadd.f32 %v1514, 1e-06
    %v1516 = vrsqrt.pop %v1515
    %v1517 = vmul.f32 %v1516, %v1515
    %v1518 = vmul.f32 %v1517, %v1516
    %v1519 = vmul.f32 0.5, %v1518
    %v1520 = vsub.f32 1.5, %v1519
    %v1521 = vmul.f32 %v1516, %v1520
    %vm1522 = vweird.f32 %v1515
    %vm1523 = vweird.f32 %v1516
    %vm1524 = vmor %vm1522, %vm1523
    %v1525 = vsel %vm1524, %v1516, %v1521
    %v1526 = vmul.f32 %v1509, %v1525
    %v1527 = vmul.f32 %v1526, %v1503
    %v1528 = vadd.f32 %v1527, %v1504
    %v1530 = vsel %vm1018, %v1528, 0
    %1532 = vmatpush.msra.mxu0 0.0
    %1533 = vmatpush.msra.mxu0 0.0
    %1534 = vmatpush.msra.mxu0 0.0
    %1535 = vmatpush.msra.mxu0 0.0
    %1536 = vmatpush.msra.mxu0 0.0
    %1537 = vmatpush.msra.mxu0 0.0
    %1538 = vmatpush.msra.mxu0 0.0
    %1539 = vmatpush.msra.mxu0 0.0
    %1540 = vmatpush.msra.mxu0 0.0
    %1541 = vmatpush.msra.mxu0 0.0
    %1542 = vmatpush.msra.mxu0 0.0
    %1543 = vmatpush.msra.mxu0 %v1083
    %1544 = vmatpush.msra.mxu0 %v892
    %1545 = vmatpush.msra.mxu0 %v891
    %1546 = vmatpush.msra.mxu0 %v890
    %1547 = vmatpush.msra.mxu0 %v889
    %1548 = vmatmul.f32.gmra.mxu0 %v1530
    %v1549 = vpop.f32.mrf.mxu0
    %v1550 = vadd.f32 0.0, %v1549
    %1551 = vdwg.mxu0
    %v1553 = vsel %vm287, %v1550, 0
    %1555 = vmatpush.xpose.msra.mxu0 0.0
    %1556 = vmatpush.xpose.msra.mxu0 0.0
    %1557 = vmatpush.xpose.msra.mxu0 0.0
    %1558 = vmatpush.xpose.msra.mxu0 0.0
    %1559 = vmatpush.xpose.msra.mxu0 0.0
    %1560 = vmatpush.xpose.msra.mxu0 0.0
    %1561 = vmatpush.xpose.msra.mxu0 0.0
    %1562 = vmatpush.xpose.msra.mxu0 0.0
    %1563 = vmatpush.xpose.msra.mxu0 0.0
    %1564 = vmatpush.xpose.msra.mxu0 0.0
    %1565 = vmatpush.xpose.msra.mxu0 0.0
    %1566 = vmatpush.xpose.msra.mxu0 0.0
    %1567 = vmatpush.xpose.msra.mxu0 0.0
    %1568 = vmatpush.xpose.msra.mxu0 0.0
    %1569 = vmatpush.xpose.msra.mxu0 0.0
    %1570 = vmatpush.xpose.msra.mxu0 %v1109
    %1571 = vmatmul.f32.gmra.mxu0 %v1553
    %v1572 = vpop.f32.mrf.mxu0
    %v1573 = vadd.f32 0.0, %v1572
    %1574 = vdwg.mxu0
    %v1575 = vmul.f32 %v1573, 0.35355338
    %v1576 = vadd.f32 %v1575, %v899
    %v1577 = vsel %vm1133, %v1576, -inf
    %1578 = vmax.xlane.f32.xlu0 %v1577
    %v1579 = vpop.xlane.xlu0 %1578
    %v1580 = vsub.f32 %v1576, %v1579
    %v1581 = vmul.f32 %v1580, 1.442695
    %v1582 = vpow.pop %v1581
    %v1583 = vsel %vm1133, %v1582, 0.0
    %1584 = vadd.xlane.f32.xlu0 %v1583
    %v1585 = vpop.xlane.xlu0 %1584
    %v1586 = vrcp.pop %v1585
    %v1587 = vmul.f32 %v1585, %v1586
    %v1588 = vsub.f32 1.0, %v1587
    %v1589 = vmul.f32 %v1586, %v1588
    %v1590 = vadd.f32 %v1586, %v1589
    %vm1591 = vweird.f32 %v1585
    %vm1592 = vweird.f32 %v1586
    %vm1593 = vmor %vm1591, %vm1592
    %v1594 = vsel %vm1593, %v1586, %v1590
    %v1595 = vand.u32 2147483647, %v1585
    %vm1596 = vcmp.eq.f32.partialorder %v1595, 8.507059e+37
    %v1597 = vand.u32 %v1585, 2147483648
    %v1598 = vor.u32 1.1754944e-38, %v1597
    %v1599 = vsel %vm1596, %v1598, %v1594
    %v1600 = vmul.f32 %v1582, %v1599
    %1601 = vst.msk [vmem:[#allocation2 + $0x1] sm:$0x1] %vm1133, %v1600
    %1602 = vmatpush.xpose.msra.mxu0 0.0
    %1603 = vmatpush.xpose.msra.mxu0 0.0
    %1604 = vmatpush.xpose.msra.mxu0 0.0
    %1605 = vmatpush.xpose.msra.mxu0 0.0
    %1606 = vmatpush.xpose.msra.mxu0 0.0
    %1607 = vmatpush.xpose.msra.mxu0 0.0
    %1608 = vmatpush.xpose.msra.mxu0 0.0
    %1609 = vmatpush.xpose.msra.mxu0 0.0
    %1610 = vmatpush.xpose.msra.mxu0 0.0
    %1611 = vmatpush.xpose.msra.mxu0 0.0
    %1612 = vmatpush.xpose.msra.mxu0 0.0
    %1613 = vmatpush.xpose.msra.mxu0 0.0
    %1614 = vmatpush.xpose.msra.mxu0 0.0
    %1615 = vmatpush.xpose.msra.mxu0 0.0
    %1616 = vmatpush.xpose.msra.mxu0 0.0
    %1617 = vmatpush.xpose.msra.mxu0 %v1160
    %1618 = vmatmul.f32.gmra.mxu0 %v1553
    %v1619 = vpop.f32.mrf.mxu0
    %v1620 = vadd.f32 0.0, %v1619
    %1621 = vdwg.mxu0
    %v1622 = vmul.f32 %v1620, 0.35355338
    %v1623 = vadd.f32 %v1622, %v899
    %v1624 = vsel %vm1133, %v1623, -inf
    %1625 = vmax.xlane.f32.xlu0 %v1624
    %v1626 = vpop.xlane.xlu0 %1625
    %v1627 = vsub.f32 %v1623, %v1626
    %v1628 = vmul.f32 %v1627, 1.442695
    %v1629 = vpow.pop %v1628
    %v1630 = vsel %vm1133, %v1629, 0.0
    %1631 = vadd.xlane.f32.xlu0 %v1630
    %v1632 = vpop.xlane.xlu0 %1631
    %v1633 = vrcp.pop %v1632
    %v1634 = vmul.f32 %v1632, %v1633
    %v1635 = vsub.f32 1.0, %v1634
    %v1636 = vmul.f32 %v1633, %v1635
    %v1637 = vadd.f32 %v1633, %v1636
    %vm1638 = vweird.f32 %v1632
    %vm1639 = vweird.f32 %v1633
    %vm1640 = vmor %vm1638, %vm1639
    %v1641 = vsel %vm1640, %v1633, %v1637
    %v1642 = vand.u32 2147483647, %v1632
    %vm1643 = vcmp.eq.f32.partialorder %v1642, 8.507059e+37
    %v1644 = vand.u32 %v1632, 2147483648
    %v1645 = vor.u32 1.1754944e-38, %v1644
    %v1646 = vsel %vm1643, %v1645, %v1641
    %v1647 = vmul.f32 %v1629, %v1646
    %1648 = vst.msk [vmem:[%s1208 + $0x1] sm:$0x1] %vm1133, %v1647
    %v1650 = vsel %vm319, %v1647, 0
    %1652 = vmatpush.msra.mxu0 0.0
    %1653 = vmatpush.msra.mxu0 0.0
    %1654 = vmatpush.msra.mxu0 0.0
    %1655 = vmatpush.msra.mxu0 0.0
    %1656 = vmatpush.msra.mxu0 0.0
    %1657 = vmatpush.msra.mxu0 0.0
    %1658 = vmatpush.msra.mxu0 0.0
    %1659 = vmatpush.msra.mxu0 0.0
    %1660 = vmatpush.msra.mxu0 0.0
    %1661 = vmatpush.msra.mxu0 0.0
    %1662 = vmatpush.msra.mxu0 0.0
    %1663 = vmatpush.msra.mxu0 0.0
    %1664 = vmatpush.msra.mxu0 0.0
    %1665 = vmatpush.msra.mxu0 0.0
    %1666 = vmatpush.msra.mxu0 0.0
    %1667 = vmatpush.msra.mxu0 %v1012
    %1668 = vmatmul.f32.gmra.mxu0 %v1650
    %v1669 = vpop.f32.mrf.mxu0
    %v1670 = vadd.f32 0.0, %v1669
    %1671 = vdwg.mxu0
    %v1673 = vsel %vm319, %v1600, 0
    %1675 = vmatpush.msra.mxu0 0.0
    %1676 = vmatpush.msra.mxu0 0.0
    %1677 = vmatpush.msra.mxu0 0.0
    %1678 = vmatpush.msra.mxu0 0.0
    %1679 = vmatpush.msra.mxu0 0.0
    %1680 = vmatpush.msra.mxu0 0.0
    %1681 = vmatpush.msra.mxu0 0.0
    %1682 = vmatpush.msra.mxu0 0.0
    %1683 = vmatpush.msra.mxu0 0.0
    %1684 = vmatpush.msra.mxu0 0.0
    %1685 = vmatpush.msra.mxu0 0.0
    %1686 = vmatpush.msra.mxu0 0.0
    %1687 = vmatpush.msra.mxu0 0.0
    %1688 = vmatpush.msra.mxu0 0.0
    %1689 = vmatpush.msra.mxu0 0.0
    %1690 = vmatpush.msra.mxu0 %v975
    %1691 = vmatmul.f32.gmra.mxu0 %v1673
    %v1692 = vpop.f32.mrf.mxu0
    %v1693 = vadd.f32 %v1670, %v1692
    %1694 = vdwg.mxu0
    %v1695 = vadd.f32 %v1693, %v1528
    %v1696 = vld [vmem:[%s47] sm:$0x1]
    %v1697 = vld [vmem:[%s49] sm:$0x1]
    %v1698 = vsel %vm1047, %v1695, 0.0
    %1699 = vadd.xlane.f32.xlu0 %v1698
    %v1700 = vpop.xlane.xlu0 %1699
    %v1701 = vmul.f32 %v1700, %v1057
    %v1702 = vsub.f32 %v1695, %v1701
    %v1703 = vmul.f32 %v1702, %v1702
    %v1704 = vsel %vm1047, %v1703, 0.0
    %1705 = vadd.xlane.f32.xlu0 %v1704
    %v1706 = vpop.xlane.xlu0 %1705
    %v1707 = vmul.f32 %v1706, %v1057
    %v1708 = vadd.f32 %v1707, 1e-06
    %v1709 = vrsqrt.pop %v1708
    %v1710 = vmul.f32 %v1709, %v1708
    %v1711 = vmul.f32 %v1710, %v1709
    %v1712 = vmul.f32 0.5, %v1711
    %v1713 = vsub.f32 1.5, %v1712
    %v1714 = vmul.f32 %v1709, %v1713
    %vm1715 = vweird.f32 %v1708
    %vm1716 = vweird.f32 %v1709
    %vm1717 = vmor %vm1715, %vm1716
    %v1718 = vsel %vm1717, %v1709, %v1714
    %v1719 = vmul.f32 %v1702, %v1718
    %v1720 = vmul.f32 %v1719, %v1696
    %v1721 = vadd.f32 %v1720, %v1697
    %v1722 = vld [vmem:[%s51] sm:$0xff]
    %v1723 = vld [vmem:[%s51 + $0x8] sm:$0xff]
    %v1724 = vld [vmem:[%s51 + $0x10] sm:$0xff]
    %v1725 = vld [vmem:[%s51 + $0x18] sm:$0xff]
    %v1726 = vld [vmem:[%s51 + $0x20] sm:$0x3f]
    %v1727 = vld [vmem:[%s53] sm:$0x1]
    %v1729 = vsel %vm1018, %v1721, 0
    %v1732 = vsel %vm178, %v1726, 0
    %1734 = vmatpush.msra.mxu0 0.0
    %1735 = vmatpush.msra.mxu0 0.0
    %1736 = vmatpush.msra.mxu0 0.0
    %1737 = vmatpush.msra.mxu0 0.0
    %1738 = vmatpush.msra.mxu0 0.0
    %1739 = vmatpush.msra.mxu0 0.0
    %1740 = vmatpush.msra.mxu0 0.0
    %1741 = vmatpush.msra.mxu0 0.0
    %1742 = vmatpush.msra.mxu0 0.0
    %1743 = vmatpush.msra.mxu0 0.0
    %1744 = vmatpush.msra.mxu0 0.0
    %1745 = vmatpush.msra.mxu0 %v1732
    %1746 = vmatpush.msra.mxu0 %v1725
    %1747 = vmatpush.msra.mxu0 %v1724
    %1748 = vmatpush.msra.mxu0 %v1723
    %1749 = vmatpush.msra.mxu0 %v1722
    %1750 = vmatmul.f32.gmra.mxu0 %v1729
    %v1751 = vpop.f32.mrf.mxu0
    %v1752 = vadd.f32 %v1727, %v1751
    %1753 = vdwg.mxu0
    %v1754 = vmax.f32 %v1752, 0.0
    %v1755 = vld [vmem:[%s55] sm:$0xff]
    %v1756 = vld [vmem:[%s55 + $0x8] sm:$0xff]
    %v1757 = vld [vmem:[%s55 + $0x10] sm:$0xff]
    %v1758 = vld [vmem:[%s55 + $0x18] sm:$0xff]
    %v1759 = vld [vmem:[%s55 + $0x20] sm:$0xff]
    %v1760 = vld [vmem:[%s55 + $0x28] sm:$0xff]
    %v1761 = vld [vmem:[%s55 + $0x30] sm:$0xff]
    %v1762 = vld [vmem:[%s55 + $0x38] sm:$0xff]
    %v1763 = vld [vmem:[%s57] sm:$0x1]
    %v1765 = vsel %vm791, %v1754, 0
    %1767 = vmatpush.msra.mxu0 0.0
    %1768 = vmatpush.msra.mxu0 0.0
    %1769 = vmatpush.msra.mxu0 0.0
    %1770 = vmatpush.msra.mxu0 0.0
    %1771 = vmatpush.msra.mxu0 0.0
    %1772 = vmatpush.msra.mxu0 0.0
    %1773 = vmatpush.msra.mxu0 0.0
    %1774 = vmatpush.msra.mxu0 0.0
    %1775 = vmatpush.msra.mxu0 %v1762
    %1776 = vmatpush.msra.mxu0 %v1761
    %1777 = vmatpush.msra.mxu0 %v1760
    %1778 = vmatpush.msra.mxu0 %v1759
    %1779 = vmatpush.msra.mxu0 %v1758
    %1780 = vmatpush.msra.mxu0 %v1757
    %1781 = vmatpush.msra.mxu0 %v1756
    %1782 = vmatpush.msra.mxu0 %v1755
    %1783 = vmatmul.f32.gmra.mxu0 %v1765
    %v1784 = vpop.f32.mrf.mxu0
    %v1785 = vadd.f32 %v1763, %v1784
    %1786 = vdwg.mxu0
    %v1787 = vadd.f32 %v1785, %v1721
    %v1788 = vld [vmem:[%s59] sm:$0x1]
    %v1789 = vld [vmem:[%s61] sm:$0x1]
    %v1790 = vsel %vm1047, %v1787, 0.0
    %1791 = vadd.xlane.f32.xlu0 %v1790
    %v1792 = vpop.xlane.xlu0 %1791
    %v1793 = vmul.f32 %v1792, %v1057
    %v1794 = vsub.f32 %v1787, %v1793
    %v1795 = vmul.f32 %v1794, %v1794
    %v1796 = vsel %vm1047, %v1795, 0.0
    %1797 = vadd.xlane.f32.xlu0 %v1796
    %v1798 = vpop.xlane.xlu0 %1797
    %v1799 = vmul.f32 %v1798, %v1057
    %v1800 = vadd.f32 %v1799, 1e-06
    %v1801 = vrsqrt.pop %v1800
    %v1802 = vmul.f32 %v1801, %v1800
    %v1803 = vmul.f32 %v1802, %v1801
    %v1804 = vmul.f32 0.5, %v1803
    %v1805 = vsub.f32 1.5, %v1804
    %v1806 = vmul.f32 %v1801, %v1805
    %vm1807 = vweird.f32 %v1800
    %vm1808 = vweird.f32 %v1801
    %vm1809 = vmor %vm1807, %vm1808
    %v1810 = vsel %vm1809, %v1801, %v1806
    %v1811 = vmul.f32 %v1794, %v1810
    %v1812 = vmul.f32 %v1811, %v1788
    %v1813 = vadd.f32 %v1812, %v1789
    %v1815 = vsel %vm1018, %v1813, 0
    %1817 = vmatpush.msra.mxu0 0.0
    %1818 = vmatpush.msra.mxu0 0.0
    %1819 = vmatpush.msra.mxu0 0.0
    %1820 = vmatpush.msra.mxu0 0.0
    %1821 = vmatpush.msra.mxu0 0.0
    %1822 = vmatpush.msra.mxu0 0.0
    %1823 = vmatpush.msra.mxu0 0.0
    %1824 = vmatpush.msra.mxu0 0.0
    %1825 = vmatpush.msra.mxu0 0.0
    %1826 = vmatpush.msra.mxu0 0.0
    %1827 = vmatpush.msra.mxu0 0.0
    %1828 = vmatpush.msra.mxu0 %v1379
    %1829 = vmatpush.msra.mxu0 %v897
    %1830 = vmatpush.msra.mxu0 %v896
    %1831 = vmatpush.msra.mxu0 %v895
    %1832 = vmatpush.msra.mxu0 %v894
    %1833 = vmatmul.f32.gmra.mxu0 %v1815
    %v1834 = vpop.f32.mrf.mxu0
    %v1835 = vadd.f32 %v1474, %v1834
    %1836 = vdwg.mxu0
    %v1837 = vsel %vm149, %v1835, -1e+30
    %v1838 = vsel %vm1047, %v1837, -inf
    %1839 = vmax.xlane.f32.xlu0 %v1838
    %v1840 = vpop.xlane.xlu0 %1839
    %v1841 = vsub.f32 %v1837, %v1840
    %v1842 = vmul.f32 %v1841, 1.442695
    %v1843 = vpow.pop %v1842
    %v1844 = vsel %vm1047, %v1843, 0.0
    %1845 = vadd.xlane.f32.xlu0 %v1844
    %v1846 = vpop.xlane.xlu0 %1845
    %v1847 = vrcp.pop %v1846
    %v1848 = vmul.f32 %v1846, %v1847
    %v1849 = vsub.f32 1.0, %v1848
    %v1850 = vmul.f32 %v1847, %v1849
    %v1851 = vadd.f32 %v1847, %v1850
    %vm1852 = vweird.f32 %v1846
    %vm1853 = vweird.f32 %v1847
    %vm1854 = vmor %vm1852, %vm1853
    %v1855 = vsel %vm1854, %v1847, %v1851
    %v1856 = vand.u32 2147483647, %v1846
    %vm1857 = vcmp.eq.f32.partialorder %v1856, 8.507059e+37
    %v1858 = vand.u32 %v1846, 2147483648
    %v1859 = vor.u32 1.1754944e-38, %v1858
    %v1860 = vsel %vm1857, %v1859, %v1855
    %v1861 = vmul.f32 %v1843, %v1860
    %v1862 = vsel %vm149, %v1861, 0.0
    %v1863 = vsel %vm152, %v1835, -1e+30
    %v1864 = vsel %vm1047, %v1863, -inf
    %1865 = vmax.xlane.f32.xlu0 %v1864
    %v1866 = vpop.xlane.xlu0 %1865
    %v1867 = vsub.f32 %v1863, %v1866
    %v1868 = vmul.f32 %v1867, 1.442695
    %v1869 = vpow.pop %v1868
    %v1870 = vsel %vm1047, %v1869, 0.0
    %1871 = vadd.xlane.f32.xlu0 %v1870
    %v1872 = vpop.xlane.xlu0 %1871
    %v1873 = vrcp.pop %v1872
    %v1874 = vmul.f32 %v1872, %v1873
    %v1875 = vsub.f32 1.0, %v1874
    %v1876 = vmul.f32 %v1873, %v1875
    %v1877 = vadd.f32 %v1873, %v1876
    %vm1878 = vweird.f32 %v1872
    %vm1879 = vweird.f32 %v1873
    %vm1880 = vmor %vm1878, %vm1879
    %v1881 = vsel %vm1880, %v1873, %v1877
    %v1882 = vand.u32 2147483647, %v1872
    %vm1883 = vcmp.eq.f32.partialorder %v1882, 8.507059e+37
    %v1884 = vand.u32 %v1872, 2147483648
    %v1885 = vor.u32 1.1754944e-38, %v1884
    %v1886 = vsel %vm1883, %v1885, %v1881
    %v1887 = vmul.f32 %v1869, %v1886
    %v1888 = vsel %vm152, %v1887, 0.0
    %v1889 = vadd.f32 %v1862, %v1888
    %v1890 = vsub.f32 0.0, %v1835
    %v1891 = vmul.f32 %v1890, 1.442695
    %v1892 = vpow.pop %v1891
    %v1893 = vadd.f32 %v1892, 1.0
    %v1894 = vrcp.pop %v1893
    %v1895 = vmul.f32 %v1893, %v1894
    %v1896 = vsub.f32 1.0, %v1895
    %v1897 = vmul.f32 %v1894, %v1896
    %v1898 = vadd.f32 %v1894, %v1897
    %vm1899 = vweird.f32 %v1893
    %vm1900 = vweird.f32 %v1894
    %vm1901 = vmor %vm1899, %vm1900
    %v1902 = vsel %vm1901, %v1894, %v1898
    %v1903 = vand.u32 2147483647, %v1893
    %vm1904 = vcmp.eq.f32.partialorder %v1903, 8.507059e+37
    %v1905 = vand.u32 %v1893, 2147483648
    %v1906 = vor.u32 1.1754944e-38, %v1905
    %v1907 = vsel %vm1904, %v1906, %v1902
    %v1908 = vmul.f32 1.0, %v1907
    %v1909 = vsel %vm155, %v1908, 0.0
    %v1910 = vadd.f32 %v1889, %v1909
    %1911 = vst.msk [vmem:[%s65 + $0x2] sm:$0x1] %vm1015, %v1910
    %v1912 = vrot.slane %v883, 2
    %v1914 = vadd.f32 %v1910, %v1912
    %v1916 = vsel %vm1018, %v1914, 0
    %1918 = vmatpush.msra.mxu0 0.0
    %1919 = vmatpush.msra.mxu0 0.0
    %1920 = vmatpush.msra.mxu0 0.0
    %1921 = vmatpush.msra.mxu0 0.0
    %1922 = vmatpush.msra.mxu0 0.0
    %1923 = vmatpush.msra.mxu0 0.0
    %1924 = vmatpush.msra.mxu0 0.0
    %1925 = vmatpush.msra.mxu0 0.0
    %1926 = vmatpush.msra.mxu0 0.0
    %1927 = vmatpush.msra.mxu0 0.0
    %1928 = vmatpush.msra.mxu0 0.0
    %1929 = vmatpush.msra.mxu0 %v1023
    %1930 = vmatpush.msra.mxu0 %v887
    %1931 = vmatpush.msra.mxu0 %v886
    %1932 = vmatpush.msra.mxu0 %v885
    %1933 = vmatpush.msra.mxu0 %v884
    %1934 = vmatmul.f32.gmra.mxu0 %v1916
    %v1935 = vpop.f32.mrf.mxu0
    %v1936 = vadd.f32 %v1914, %v1935
    %1937 = vdwg.mxu0
    %v1938 = vld [vmem:[%s37] sm:$0x1]
    %v1939 = vld [vmem:[%s39] sm:$0x1]
    %v1940 = vsel %vm1047, %v1936, 0.0
    %1941 = vadd.xlane.f32.xlu0 %v1940
    %v1942 = vpop.xlane.xlu0 %1941
    %v1943 = vmul.f32 %v1942, %v1057
    %v1944 = vsub.f32 %v1936, %v1943
    %v1945 = vmul.f32 %v1944, %v1944
    %v1946 = vsel %vm1047, %v1945, 0.0
    %1947 = vadd.xlane.f32.xlu0 %v1946
    %v1948 = vpop.xlane.xlu0 %1947
    %v1949 = vmul.f32 %v1948, %v1057
    %v1950 = vadd.f32 %v1949, 1e-06
    %v1951 = vrsqrt.pop %v1950
    %v1952 = vmul.f32 %v1951, %v1950
    %v1953 = vmul.f32 %v1952, %v1951
    %v1954 = vmul.f32 0.5, %v1953
    %v1955 = vsub.f32 1.5, %v1954
    %v1956 = vmul.f32 %v1951, %v1955
    %vm1957 = vweird.f32 %v1950
    %vm1958 = vweird.f32 %v1951
    %vm1959 = vmor %vm1957, %vm1958
    %v1960 = vsel %vm1959, %v1951, %v1956
    %v1961 = vmul.f32 %v1944, %v1960
    %v1962 = vmul.f32 %v1961, %v1938
    %v1963 = vadd.f32 %v1962, %v1939
    %v1965 = vsel %vm1018, %v1963, 0
    %1967 = vmatpush.msra.mxu0 0.0
    %1968 = vmatpush.msra.mxu0 0.0
    %1969 = vmatpush.msra.mxu0 0.0
    %1970 = vmatpush.msra.mxu0 0.0
    %1971 = vmatpush.msra.mxu0 0.0
    %1972 = vmatpush.msra.mxu0 0.0
    %1973 = vmatpush.msra.mxu0 0.0
    %1974 = vmatpush.msra.mxu0 0.0
    %1975 = vmatpush.msra.mxu0 0.0
    %1976 = vmatpush.msra.mxu0 0.0
    %1977 = vmatpush.msra.mxu0 0.0
    %1978 = vmatpush.msra.mxu0 %v1083
    %1979 = vmatpush.msra.mxu0 %v892
    %1980 = vmatpush.msra.mxu0 %v891
    %1981 = vmatpush.msra.mxu0 %v890
    %1982 = vmatpush.msra.mxu0 %v889
    %1983 = vmatmul.f32.gmra.mxu0 %v1965
    %v1984 = vpop.f32.mrf.mxu0
    %v1985 = vadd.f32 0.0, %v1984
    %1986 = vdwg.mxu0
    %v1988 = vsel %vm287, %v1985, 0
    %1990 = vmatpush.xpose.msra.mxu0 0.0
    %1991 = vmatpush.xpose.msra.mxu0 0.0
    %1992 = vmatpush.xpose.msra.mxu0 0.0
    %1993 = vmatpush.xpose.msra.mxu0 0.0
    %1994 = vmatpush.xpose.msra.mxu0 0.0
    %1995 = vmatpush.xpose.msra.mxu0 0.0
    %1996 = vmatpush.xpose.msra.mxu0 0.0
    %1997 = vmatpush.xpose.msra.mxu0 0.0
    %1998 = vmatpush.xpose.msra.mxu0 0.0
    %1999 = vmatpush.xpose.msra.mxu0 0.0
    %2000 = vmatpush.xpose.msra.mxu0 0.0
    %2001 = vmatpush.xpose.msra.mxu0 0.0
    %2002 = vmatpush.xpose.msra.mxu0 0.0
    %2003 = vmatpush.xpose.msra.mxu0 0.0
    %2004 = vmatpush.xpose.msra.mxu0 0.0
    %2005 = vmatpush.xpose.msra.mxu0 %v1109
    %2006 = vmatmul.f32.gmra.mxu0 %v1988
    %v2007 = vpop.f32.mrf.mxu0
    %v2008 = vadd.f32 0.0, %v2007
    %2009 = vdwg.mxu0
    %v2010 = vmul.f32 %v2008, 0.35355338
    %v2011 = vadd.f32 %v2010, %v899
    %v2012 = vsel %vm1133, %v2011, -inf
    %2013 = vmax.xlane.f32.xlu0 %v2012
    %v2014 = vpop.xlane.xlu0 %2013
    %v2015 = vsub.f32 %v2011, %v2014
    %v2016 = vmul.f32 %v2015, 1.442695
    %v2017 = vpow.pop %v2016
    %v2018 = vsel %vm1133, %v2017, 0.0
    %2019 = vadd.xlane.f32.xlu0 %v2018
    %v2020 = vpop.xlane.xlu0 %2019
    %v2021 = vrcp.pop %v2020
    %v2022 = vmul.f32 %v2020, %v2021
    %v2023 = vsub.f32 1.0, %v2022
    %v2024 = vmul.f32 %v2021, %v2023
    %v2025 = vadd.f32 %v2021, %v2024
    %vm2026 = vweird.f32 %v2020
    %vm2027 = vweird.f32 %v2021
    %vm2028 = vmor %vm2026, %vm2027
    %v2029 = vsel %vm2028, %v2021, %v2025
    %v2030 = vand.u32 2147483647, %v2020
    %vm2031 = vcmp.eq.f32.partialorder %v2030, 8.507059e+37
    %v2032 = vand.u32 %v2020, 2147483648
    %v2033 = vor.u32 1.1754944e-38, %v2032
    %v2034 = vsel %vm2031, %v2033, %v2029
    %v2035 = vmul.f32 %v2017, %v2034
    %2036 = vst.msk [vmem:[#allocation2 + $0x2] sm:$0x1] %vm1133, %v2035
    %2037 = vmatpush.xpose.msra.mxu0 0.0
    %2038 = vmatpush.xpose.msra.mxu0 0.0
    %2039 = vmatpush.xpose.msra.mxu0 0.0
    %2040 = vmatpush.xpose.msra.mxu0 0.0
    %2041 = vmatpush.xpose.msra.mxu0 0.0
    %2042 = vmatpush.xpose.msra.mxu0 0.0
    %2043 = vmatpush.xpose.msra.mxu0 0.0
    %2044 = vmatpush.xpose.msra.mxu0 0.0
    %2045 = vmatpush.xpose.msra.mxu0 0.0
    %2046 = vmatpush.xpose.msra.mxu0 0.0
    %2047 = vmatpush.xpose.msra.mxu0 0.0
    %2048 = vmatpush.xpose.msra.mxu0 0.0
    %2049 = vmatpush.xpose.msra.mxu0 0.0
    %2050 = vmatpush.xpose.msra.mxu0 0.0
    %2051 = vmatpush.xpose.msra.mxu0 0.0
    %2052 = vmatpush.xpose.msra.mxu0 %v1160
    %2053 = vmatmul.f32.gmra.mxu0 %v1988
    %v2054 = vpop.f32.mrf.mxu0
    %v2055 = vadd.f32 0.0, %v2054
    %2056 = vdwg.mxu0
    %v2057 = vmul.f32 %v2055, 0.35355338
    %v2058 = vadd.f32 %v2057, %v899
    %v2059 = vsel %vm1133, %v2058, -inf
    %2060 = vmax.xlane.f32.xlu0 %v2059
    %v2061 = vpop.xlane.xlu0 %2060
    %v2062 = vsub.f32 %v2058, %v2061
    %v2063 = vmul.f32 %v2062, 1.442695
    %v2064 = vpow.pop %v2063
    %v2065 = vsel %vm1133, %v2064, 0.0
    %2066 = vadd.xlane.f32.xlu0 %v2065
    %v2067 = vpop.xlane.xlu0 %2066
    %v2068 = vrcp.pop %v2067
    %v2069 = vmul.f32 %v2067, %v2068
    %v2070 = vsub.f32 1.0, %v2069
    %v2071 = vmul.f32 %v2068, %v2070
    %v2072 = vadd.f32 %v2068, %v2071
    %vm2073 = vweird.f32 %v2067
    %vm2074 = vweird.f32 %v2068
    %vm2075 = vmor %vm2073, %vm2074
    %v2076 = vsel %vm2075, %v2068, %v2072
    %v2077 = vand.u32 2147483647, %v2067
    %vm2078 = vcmp.eq.f32.partialorder %v2077, 8.507059e+37
    %v2079 = vand.u32 %v2067, 2147483648
    %v2080 = vor.u32 1.1754944e-38, %v2079
    %v2081 = vsel %vm2078, %v2080, %v2076
    %v2082 = vmul.f32 %v2064, %v2081
    %2083 = vst.msk [vmem:[%s1208 + $0x2] sm:$0x1] %vm1133, %v2082
    %v2085 = vsel %vm319, %v2082, 0
    %2087 = vmatpush.msra.mxu0 0.0
    %2088 = vmatpush.msra.mxu0 0.0
    %2089 = vmatpush.msra.mxu0 0.0
    %2090 = vmatpush.msra.mxu0 0.0
    %2091 = vmatpush.msra.mxu0 0.0
    %2092 = vmatpush.msra.mxu0 0.0
    %2093 = vmatpush.msra.mxu0 0.0
    %2094 = vmatpush.msra.mxu0 0.0
    %2095 = vmatpush.msra.mxu0 0.0
    %2096 = vmatpush.msra.mxu0 0.0
    %2097 = vmatpush.msra.mxu0 0.0
    %2098 = vmatpush.msra.mxu0 0.0
    %2099 = vmatpush.msra.mxu0 0.0
    %2100 = vmatpush.msra.mxu0 0.0
    %2101 = vmatpush.msra.mxu0 0.0
    %2102 = vmatpush.msra.mxu0 %v1012
    %2103 = vmatmul.f32.gmra.mxu0 %v2085
    %v2104 = vpop.f32.mrf.mxu0
    %v2105 = vadd.f32 0.0, %v2104
    %2106 = vdwg.mxu0
    %v2108 = vsel %vm319, %v2035, 0
    %2110 = vmatpush.msra.mxu0 0.0
    %2111 = vmatpush.msra.mxu0 0.0
    %2112 = vmatpush.msra.mxu0 0.0
    %2113 = vmatpush.msra.mxu0 0.0
    %2114 = vmatpush.msra.mxu0 0.0
    %2115 = vmatpush.msra.mxu0 0.0
    %2116 = vmatpush.msra.mxu0 0.0
    %2117 = vmatpush.msra.mxu0 0.0
    %2118 = vmatpush.msra.mxu0 0.0
    %2119 = vmatpush.msra.mxu0 0.0
    %2120 = vmatpush.msra.mxu0 0.0
    %2121 = vmatpush.msra.mxu0 0.0
    %2122 = vmatpush.msra.mxu0 0.0
    %2123 = vmatpush.msra.mxu0 0.0
    %2124 = vmatpush.msra.mxu0 0.0
    %2125 = vmatpush.msra.mxu0 %v975
    %2126 = vmatmul.f32.gmra.mxu0 %v2108
    %v2127 = vpop.f32.mrf.mxu0
    %v2128 = vadd.f32 %v2105, %v2127
    %2129 = vdwg.mxu0
    %v2130 = vadd.f32 %v2128, %v1963
    %v2131 = vld [vmem:[%s47] sm:$0x1]
    %v2132 = vld [vmem:[%s49] sm:$0x1]
    %v2133 = vsel %vm1047, %v2130, 0.0
    %2134 = vadd.xlane.f32.xlu0 %v2133
    %v2135 = vpop.xlane.xlu0 %2134
    %v2136 = vmul.f32 %v2135, %v1057
    %v2137 = vsub.f32 %v2130, %v2136
    %v2138 = vmul.f32 %v2137, %v2137
    %v2139 = vsel %vm1047, %v2138, 0.0
    %2140 = vadd.xlane.f32.xlu0 %v2139
    %v2141 = vpop.xlane.xlu0 %2140
    %v2142 = vmul.f32 %v2141, %v1057
    %v2143 = vadd.f32 %v2142, 1e-06
    %v2144 = vrsqrt.pop %v2143
    %v2145 = vmul.f32 %v2144, %v2143
    %v2146 = vmul.f32 %v2145, %v2144
    %v2147 = vmul.f32 0.5, %v2146
    %v2148 = vsub.f32 1.5, %v2147
    %v2149 = vmul.f32 %v2144, %v2148
    %vm2150 = vweird.f32 %v2143
    %vm2151 = vweird.f32 %v2144
    %vm2152 = vmor %vm2150, %vm2151
    %v2153 = vsel %vm2152, %v2144, %v2149
    %v2154 = vmul.f32 %v2137, %v2153
    %v2155 = vmul.f32 %v2154, %v2131
    %v2156 = vadd.f32 %v2155, %v2132
    %v2157 = vld [vmem:[%s51] sm:$0xff]
    %v2158 = vld [vmem:[%s51 + $0x8] sm:$0xff]
    %v2159 = vld [vmem:[%s51 + $0x10] sm:$0xff]
    %v2160 = vld [vmem:[%s51 + $0x18] sm:$0xff]
    %v2161 = vld [vmem:[%s51 + $0x20] sm:$0x3f]
    %v2162 = vld [vmem:[%s53] sm:$0x1]
    %v2164 = vsel %vm1018, %v2156, 0
    %v2167 = vsel %vm178, %v2161, 0
    %2169 = vmatpush.msra.mxu0 0.0
    %2170 = vmatpush.msra.mxu0 0.0
    %2171 = vmatpush.msra.mxu0 0.0
    %2172 = vmatpush.msra.mxu0 0.0
    %2173 = vmatpush.msra.mxu0 0.0
    %2174 = vmatpush.msra.mxu0 0.0
    %2175 = vmatpush.msra.mxu0 0.0
    %2176 = vmatpush.msra.mxu0 0.0
    %2177 = vmatpush.msra.mxu0 0.0
    %2178 = vmatpush.msra.mxu0 0.0
    %2179 = vmatpush.msra.mxu0 0.0
    %2180 = vmatpush.msra.mxu0 %v2167
    %2181 = vmatpush.msra.mxu0 %v2160
    %2182 = vmatpush.msra.mxu0 %v2159
    %2183 = vmatpush.msra.mxu0 %v2158
    %2184 = vmatpush.msra.mxu0 %v2157
    %2185 = vmatmul.f32.gmra.mxu0 %v2164
    %v2186 = vpop.f32.mrf.mxu0
    %v2187 = vadd.f32 %v2162, %v2186
    %2188 = vdwg.mxu0
    %v2189 = vmax.f32 %v2187, 0.0
    %v2190 = vld [vmem:[%s55] sm:$0xff]
    %v2191 = vld [vmem:[%s55 + $0x8] sm:$0xff]
    %v2192 = vld [vmem:[%s55 + $0x10] sm:$0xff]
    %v2193 = vld [vmem:[%s55 + $0x18] sm:$0xff]
    %v2194 = vld [vmem:[%s55 + $0x20] sm:$0xff]
    %v2195 = vld [vmem:[%s55 + $0x28] sm:$0xff]
    %v2196 = vld [vmem:[%s55 + $0x30] sm:$0xff]
    %v2197 = vld [vmem:[%s55 + $0x38] sm:$0xff]
    %v2198 = vld [vmem:[%s57] sm:$0x1]
    %v2200 = vsel %vm791, %v2189, 0
    %2202 = vmatpush.msra.mxu0 0.0
    %2203 = vmatpush.msra.mxu0 0.0
    %2204 = vmatpush.msra.mxu0 0.0
    %2205 = vmatpush.msra.mxu0 0.0
    %2206 = vmatpush.msra.mxu0 0.0
    %2207 = vmatpush.msra.mxu0 0.0
    %2208 = vmatpush.msra.mxu0 0.0
    %2209 = vmatpush.msra.mxu0 0.0
    %2210 = vmatpush.msra.mxu0 %v2197
    %2211 = vmatpush.msra.mxu0 %v2196
    %2212 = vmatpush.msra.mxu0 %v2195
    %2213 = vmatpush.msra.mxu0 %v2194
    %2214 = vmatpush.msra.mxu0 %v2193
    %2215 = vmatpush.msra.mxu0 %v2192
    %2216 = vmatpush.msra.mxu0 %v2191
    %2217 = vmatpush.msra.mxu0 %v2190
    %2218 = vmatmul.f32.gmra.mxu0 %v2200
    %v2219 = vpop.f32.mrf.mxu0
    %v2220 = vadd.f32 %v2198, %v2219
    %2221 = vdwg.mxu0
    %v2222 = vadd.f32 %v2220, %v2156
    %v2223 = vld [vmem:[%s59] sm:$0x1]
    %v2224 = vld [vmem:[%s61] sm:$0x1]
    %v2225 = vsel %vm1047, %v2222, 0.0
    %2226 = vadd.xlane.f32.xlu0 %v2225
    %v2227 = vpop.xlane.xlu0 %2226
    %v2228 = vmul.f32 %v2227, %v1057
    %v2229 = vsub.f32 %v2222, %v2228
    %v2230 = vmul.f32 %v2229, %v2229
    %v2231 = vsel %vm1047, %v2230, 0.0
    %2232 = vadd.xlane.f32.xlu0 %v2231
    %v2233 = vpop.xlane.xlu0 %2232
    %v2234 = vmul.f32 %v2233, %v1057
    %v2235 = vadd.f32 %v2234, 1e-06
    %v2236 = vrsqrt.pop %v2235
    %v2237 = vmul.f32 %v2236, %v2235
    %v2238 = vmul.f32 %v2237, %v2236
    %v2239 = vmul.f32 0.5, %v2238
    %v2240 = vsub.f32 1.5, %v2239
    %v2241 = vmul.f32 %v2236, %v2240
    %vm2242 = vweird.f32 %v2235
    %vm2243 = vweird.f32 %v2236
    %vm2244 = vmor %vm2242, %vm2243
    %v2245 = vsel %vm2244, %v2236, %v2241
    %v2246 = vmul.f32 %v2229, %v2245
    %v2247 = vmul.f32 %v2246, %v2223
    %v2248 = vadd.f32 %v2247, %v2224
    %v2250 = vsel %vm1018, %v2248, 0
    %2252 = vmatpush.msra.mxu0 0.0
    %2253 = vmatpush.msra.mxu0 0.0
    %2254 = vmatpush.msra.mxu0 0.0
    %2255 = vmatpush.msra.mxu0 0.0
    %2256 = vmatpush.msra.mxu0 0.0
    %2257 = vmatpush.msra.mxu0 0.0
    %2258 = vmatpush.msra.mxu0 0.0
    %2259 = vmatpush.msra.mxu0 0.0
    %2260 = vmatpush.msra.mxu0 0.0
    %2261 = vmatpush.msra.mxu0 0.0
    %2262 = vmatpush.msra.mxu0 0.0
    %2263 = vmatpush.msra.mxu0 %v1379
    %2264 = vmatpush.msra.mxu0 %v897
    %2265 = vmatpush.msra.mxu0 %v896
    %2266 = vmatpush.msra.mxu0 %v895
    %2267 = vmatpush.msra.mxu0 %v894
    %2268 = vmatmul.f32.gmra.mxu0 %v2250
    %v2269 = vpop.f32.mrf.mxu0
    %v2270 = vadd.f32 %v1910, %v2269
    %2271 = vdwg.mxu0
    %v2272 = vsel %vm149, %v2270, -1e+30
    %v2273 = vsel %vm1047, %v2272, -inf
    %2274 = vmax.xlane.f32.xlu0 %v2273
    %v2275 = vpop.xlane.xlu0 %2274
    %v2276 = vsub.f32 %v2272, %v2275
    %v2277 = vmul.f32 %v2276, 1.442695
    %v2278 = vpow.pop %v2277
    %v2279 = vsel %vm1047, %v2278, 0.0
    %2280 = vadd.xlane.f32.xlu0 %v2279
    %v2281 = vpop.xlane.xlu0 %2280
    %v2282 = vrcp.pop %v2281
    %v2283 = vmul.f32 %v2281, %v2282
    %v2284 = vsub.f32 1.0, %v2283
    %v2285 = vmul.f32 %v2282, %v2284
    %v2286 = vadd.f32 %v2282, %v2285
    %vm2287 = vweird.f32 %v2281
    %vm2288 = vweird.f32 %v2282
    %vm2289 = vmor %vm2287, %vm2288
    %v2290 = vsel %vm2289, %v2282, %v2286
    %v2291 = vand.u32 2147483647, %v2281
    %vm2292 = vcmp.eq.f32.partialorder %v2291, 8.507059e+37
    %v2293 = vand.u32 %v2281, 2147483648
    %v2294 = vor.u32 1.1754944e-38, %v2293
    %v2295 = vsel %vm2292, %v2294, %v2290
    %v2296 = vmul.f32 %v2278, %v2295
    %v2297 = vsel %vm149, %v2296, 0.0
    %v2298 = vsel %vm152, %v2270, -1e+30
    %v2299 = vsel %vm1047, %v2298, -inf
    %2300 = vmax.xlane.f32.xlu0 %v2299
    %v2301 = vpop.xlane.xlu0 %2300
    %v2302 = vsub.f32 %v2298, %v2301
    %v2303 = vmul.f32 %v2302, 1.442695
    %v2304 = vpow.pop %v2303
    %v2305 = vsel %vm1047, %v2304, 0.0
    %2306 = vadd.xlane.f32.xlu0 %v2305
    %v2307 = vpop.xlane.xlu0 %2306
    %v2308 = vrcp.pop %v2307
    %v2309 = vmul.f32 %v2307, %v2308
    %v2310 = vsub.f32 1.0, %v2309
    %v2311 = vmul.f32 %v2308, %v2310
    %v2312 = vadd.f32 %v2308, %v2311
    %vm2313 = vweird.f32 %v2307
    %vm2314 = vweird.f32 %v2308
    %vm2315 = vmor %vm2313, %vm2314
    %v2316 = vsel %vm2315, %v2308, %v2312
    %v2317 = vand.u32 2147483647, %v2307
    %vm2318 = vcmp.eq.f32.partialorder %v2317, 8.507059e+37
    %v2319 = vand.u32 %v2307, 2147483648
    %v2320 = vor.u32 1.1754944e-38, %v2319
    %v2321 = vsel %vm2318, %v2320, %v2316
    %v2322 = vmul.f32 %v2304, %v2321
    %v2323 = vsel %vm152, %v2322, 0.0
    %v2324 = vadd.f32 %v2297, %v2323
    %v2325 = vsub.f32 0.0, %v2270
    %v2326 = vmul.f32 %v2325, 1.442695
    %v2327 = vpow.pop %v2326
    %v2328 = vadd.f32 %v2327, 1.0
    %v2329 = vrcp.pop %v2328
    %v2330 = vmul.f32 %v2328, %v2329
    %v2331 = vsub.f32 1.0, %v2330
    %v2332 = vmul.f32 %v2329, %v2331
    %v2333 = vadd.f32 %v2329, %v2332
    %vm2334 = vweird.f32 %v2328
    %vm2335 = vweird.f32 %v2329
    %vm2336 = vmor %vm2334, %vm2335
    %v2337 = vsel %vm2336, %v2329, %v2333
    %v2338 = vand.u32 2147483647, %v2328
    %vm2339 = vcmp.eq.f32.partialorder %v2338, 8.507059e+37
    %v2340 = vand.u32 %v2328, 2147483648
    %v2341 = vor.u32 1.1754944e-38, %v2340
    %v2342 = vsel %vm2339, %v2341, %v2337
    %v2343 = vmul.f32 1.0, %v2342
    %v2344 = vsel %vm155, %v2343, 0.0
    %v2345 = vadd.f32 %v2324, %v2344
    %2346 = vst.msk [vmem:[%s65 + $0x3] sm:$0x1] %vm1015, %v2345
    %v2347 = vrot.slane %v883, 3
    %v2349 = vadd.f32 %v2345, %v2347
    %v2351 = vsel %vm1018, %v2349, 0
    %2353 = vmatpush.msra.mxu0 0.0
    %2354 = vmatpush.msra.mxu0 0.0
    %2355 = vmatpush.msra.mxu0 0.0
    %2356 = vmatpush.msra.mxu0 0.0
    %2357 = vmatpush.msra.mxu0 0.0
    %2358 = vmatpush.msra.mxu0 0.0
    %2359 = vmatpush.msra.mxu0 0.0
    %2360 = vmatpush.msra.mxu0 0.0
    %2361 = vmatpush.msra.mxu0 0.0
    %2362 = vmatpush.msra.mxu0 0.0
    %2363 = vmatpush.msra.mxu0 0.0
    %2364 = vmatpush.msra.mxu0 %v1023
    %2365 = vmatpush.msra.mxu0 %v887
    %2366 = vmatpush.msra.mxu0 %v886
    %2367 = vmatpush.msra.mxu0 %v885
    %2368 = vmatpush.msra.mxu0 %v884
    %2369 = vmatmul.f32.gmra.mxu0 %v2351
    %v2370 = vpop.f32.mrf.mxu0
    %v2371 = vadd.f32 %v2349, %v2370
    %2372 = vdwg.mxu0
    %v2373 = vld [vmem:[%s37] sm:$0x1]
    %v2374 = vld [vmem:[%s39] sm:$0x1]
    %v2375 = vsel %vm1047, %v2371, 0.0
    %2376 = vadd.xlane.f32.xlu0 %v2375
    %v2377 = vpop.xlane.xlu0 %2376
    %v2378 = vmul.f32 %v2377, %v1057
    %v2379 = vsub.f32 %v2371, %v2378
    %v2380 = vmul.f32 %v2379, %v2379
    %v2381 = vsel %vm1047, %v2380, 0.0
    %2382 = vadd.xlane.f32.xlu0 %v2381
    %v2383 = vpop.xlane.xlu0 %2382
    %v2384 = vmul.f32 %v2383, %v1057
    %v2385 = vadd.f32 %v2384, 1e-06
    %v2386 = vrsqrt.pop %v2385
    %v2387 = vmul.f32 %v2386, %v2385
    %v2388 = vmul.f32 %v2387, %v2386
    %v2389 = vmul.f32 0.5, %v2388
    %v2390 = vsub.f32 1.5, %v2389
    %v2391 = vmul.f32 %v2386, %v2390
    %vm2392 = vweird.f32 %v2385
    %vm2393 = vweird.f32 %v2386
    %vm2394 = vmor %vm2392, %vm2393
    %v2395 = vsel %vm2394, %v2386, %v2391
    %v2396 = vmul.f32 %v2379, %v2395
    %v2397 = vmul.f32 %v2396, %v2373
    %v2398 = vadd.f32 %v2397, %v2374
    %v2400 = vsel %vm1018, %v2398, 0
    %2402 = vmatpush.msra.mxu0 0.0
    %2403 = vmatpush.msra.mxu0 0.0
    %2404 = vmatpush.msra.mxu0 0.0
    %2405 = vmatpush.msra.mxu0 0.0
    %2406 = vmatpush.msra.mxu0 0.0
    %2407 = vmatpush.msra.mxu0 0.0
    %2408 = vmatpush.msra.mxu0 0.0
    %2409 = vmatpush.msra.mxu0 0.0
    %2410 = vmatpush.msra.mxu0 0.0
    %2411 = vmatpush.msra.mxu0 0.0
    %2412 = vmatpush.msra.mxu0 0.0
    %2413 = vmatpush.msra.mxu0 %v1083
    %2414 = vmatpush.msra.mxu0 %v892
    %2415 = vmatpush.msra.mxu0 %v891
    %2416 = vmatpush.msra.mxu0 %v890
    %2417 = vmatpush.msra.mxu0 %v889
    %2418 = vmatmul.f32.gmra.mxu0 %v2400
    %v2419 = vpop.f32.mrf.mxu0
    %v2420 = vadd.f32 0.0, %v2419
    %2421 = vdwg.mxu0
    %v2423 = vsel %vm287, %v2420, 0
    %2425 = vmatpush.xpose.msra.mxu0 0.0
    %2426 = vmatpush.xpose.msra.mxu0 0.0
    %2427 = vmatpush.xpose.msra.mxu0 0.0
    %2428 = vmatpush.xpose.msra.mxu0 0.0
    %2429 = vmatpush.xpose.msra.mxu0 0.0
    %2430 = vmatpush.xpose.msra.mxu0 0.0
    %2431 = vmatpush.xpose.msra.mxu0 0.0
    %2432 = vmatpush.xpose.msra.mxu0 0.0
    %2433 = vmatpush.xpose.msra.mxu0 0.0
    %2434 = vmatpush.xpose.msra.mxu0 0.0
    %2435 = vmatpush.xpose.msra.mxu0 0.0
    %2436 = vmatpush.xpose.msra.mxu0 0.0
    %2437 = vmatpush.xpose.msra.mxu0 0.0
    %2438 = vmatpush.xpose.msra.mxu0 0.0
    %2439 = vmatpush.xpose.msra.mxu0 0.0
    %2440 = vmatpush.xpose.msra.mxu0 %v1109
    %2441 = vmatmul.f32.gmra.mxu0 %v2423
    %v2442 = vpop.f32.mrf.mxu0
    %v2443 = vadd.f32 0.0, %v2442
    %2444 = vdwg.mxu0
    %v2445 = vmul.f32 %v2443, 0.35355338
    %v2446 = vadd.f32 %v2445, %v899
    %v2447 = vsel %vm1133, %v2446, -inf
    %2448 = vmax.xlane.f32.xlu0 %v2447
    %v2449 = vpop.xlane.xlu0 %2448
    %v2450 = vsub.f32 %v2446, %v2449
    %v2451 = vmul.f32 %v2450, 1.442695
    %v2452 = vpow.pop %v2451
    %v2453 = vsel %vm1133, %v2452, 0.0
    %2454 = vadd.xlane.f32.xlu0 %v2453
    %v2455 = vpop.xlane.xlu0 %2454
    %v2456 = vrcp.pop %v2455
    %v2457 = vmul.f32 %v2455, %v2456
    %v2458 = vsub.f32 1.0, %v2457
    %v2459 = vmul.f32 %v2456, %v2458
    %v2460 = vadd.f32 %v2456, %v2459
    %vm2461 = vweird.f32 %v2455
    %vm2462 = vweird.f32 %v2456
    %vm2463 = vmor %vm2461, %vm2462
    %v2464 = vsel %vm2463, %v2456, %v2460
    %v2465 = vand.u32 2147483647, %v2455
    %vm2466 = vcmp.eq.f32.partialorder %v2465, 8.507059e+37
    %v2467 = vand.u32 %v2455, 2147483648
    %v2468 = vor.u32 1.1754944e-38, %v2467
    %v2469 = vsel %vm2466, %v2468, %v2464
    %v2470 = vmul.f32 %v2452, %v2469
    %2471 = vst.msk [vmem:[#allocation2 + $0x3] sm:$0x1] %vm1133, %v2470
    %2472 = vmatpush.xpose.msra.mxu0 0.0
    %2473 = vmatpush.xpose.msra.mxu0 0.0
    %2474 = vmatpush.xpose.msra.mxu0 0.0
    %2475 = vmatpush.xpose.msra.mxu0 0.0
    %2476 = vmatpush.xpose.msra.mxu0 0.0
    %2477 = vmatpush.xpose.msra.mxu0 0.0
    %2478 = vmatpush.xpose.msra.mxu0 0.0
    %2479 = vmatpush.xpose.msra.mxu0 0.0
    %2480 = vmatpush.xpose.msra.mxu0 0.0
    %2481 = vmatpush.xpose.msra.mxu0 0.0
    %2482 = vmatpush.xpose.msra.mxu0 0.0
    %2483 = vmatpush.xpose.msra.mxu0 0.0
    %2484 = vmatpush.xpose.msra.mxu0 0.0
    %2485 = vmatpush.xpose.msra.mxu0 0.0
    %2486 = vmatpush.xpose.msra.mxu0 0.0
    %2487 = vmatpush.xpose.msra.mxu0 %v1160
    %2488 = vmatmul.f32.gmra.mxu0 %v2423
    %v2489 = vpop.f32.mrf.mxu0
    %v2490 = vadd.f32 0.0, %v2489
    %2491 = vdwg.mxu0
    %v2492 = vmul.f32 %v2490, 0.35355338
    %v2493 = vadd.f32 %v2492, %v899
    %v2494 = vsel %vm1133, %v2493, -inf
    %2495 = vmax.xlane.f32.xlu0 %v2494
    %v2496 = vpop.xlane.xlu0 %2495
    %v2497 = vsub.f32 %v2493, %v2496
    %v2498 = vmul.f32 %v2497, 1.442695
    %v2499 = vpow.pop %v2498
    %v2500 = vsel %vm1133, %v2499, 0.0
    %2501 = vadd.xlane.f32.xlu0 %v2500
    %v2502 = vpop.xlane.xlu0 %2501
    %v2503 = vrcp.pop %v2502
    %v2504 = vmul.f32 %v2502, %v2503
    %v2505 = vsub.f32 1.0, %v2504
    %v2506 = vmul.f32 %v2503, %v2505
    %v2507 = vadd.f32 %v2503, %v2506
    %vm2508 = vweird.f32 %v2502
    %vm2509 = vweird.f32 %v2503
    %vm2510 = vmor %vm2508, %vm2509
    %v2511 = vsel %vm2510, %v2503, %v2507
    %v2512 = vand.u32 2147483647, %v2502
    %vm2513 = vcmp.eq.f32.partialorder %v2512, 8.507059e+37
    %v2514 = vand.u32 %v2502, 2147483648
    %v2515 = vor.u32 1.1754944e-38, %v2514
    %v2516 = vsel %vm2513, %v2515, %v2511
    %v2517 = vmul.f32 %v2499, %v2516
    %2518 = vst.msk [vmem:[%s1208 + $0x3] sm:$0x1] %vm1133, %v2517
    %v2520 = vsel %vm319, %v2517, 0
    %2522 = vmatpush.msra.mxu0 0.0
    %2523 = vmatpush.msra.mxu0 0.0
    %2524 = vmatpush.msra.mxu0 0.0
    %2525 = vmatpush.msra.mxu0 0.0
    %2526 = vmatpush.msra.mxu0 0.0
    %2527 = vmatpush.msra.mxu0 0.0
    %2528 = vmatpush.msra.mxu0 0.0
    %2529 = vmatpush.msra.mxu0 0.0
    %2530 = vmatpush.msra.mxu0 0.0
    %2531 = vmatpush.msra.mxu0 0.0
    %2532 = vmatpush.msra.mxu0 0.0
    %2533 = vmatpush.msra.mxu0 0.0
    %2534 = vmatpush.msra.mxu0 0.0
    %2535 = vmatpush.msra.mxu0 0.0
    %2536 = vmatpush.msra.mxu0 0.0
    %2537 = vmatpush.msra.mxu0 %v1012
    %2538 = vmatmul.f32.gmra.mxu0 %v2520
    %v2539 = vpop.f32.mrf.mxu0
    %v2540 = vadd.f32 0.0, %v2539
    %2541 = vdwg.mxu0
    %v2543 = vsel %vm319, %v2470, 0
    %2545 = vmatpush.msra.mxu0 0.0
    %2546 = vmatpush.msra.mxu0 0.0
    %2547 = vmatpush.msra.mxu0 0.0
    %2548 = vmatpush.msra.mxu0 0.0
    %2549 = vmatpush.msra.mxu0 0.0
    %2550 = vmatpush.msra.mxu0 0.0
    %2551 = vmatpush.msra.mxu0 0.0
    %2552 = vmatpush.msra.mxu0 0.0
    %2553 = vmatpush.msra.mxu0 0.0
    %2554 = vmatpush.msra.mxu0 0.0
    %2555 = vmatpush.msra.mxu0 0.0
    %2556 = vmatpush.msra.mxu0 0.0
    %2557 = vmatpush.msra.mxu0 0.0
    %2558 = vmatpush.msra.mxu0 0.0
    %2559 = vmatpush.msra.mxu0 0.0
    %2560 = vmatpush.msra.mxu0 %v975
    %2561 = vmatmul.f32.gmra.mxu0 %v2543
    %v2562 = vpop.f32.mrf.mxu0
    %v2563 = vadd.f32 %v2540, %v2562
    %2564 = vdwg.mxu0
    %v2565 = vadd.f32 %v2563, %v2398
    %v2566 = vld [vmem:[%s47] sm:$0x1]
    %v2567 = vld [vmem:[%s49] sm:$0x1]
    %v2568 = vsel %vm1047, %v2565, 0.0
    %2569 = vadd.xlane.f32.xlu0 %v2568
    %v2570 = vpop.xlane.xlu0 %2569
    %v2571 = vmul.f32 %v2570, %v1057
    %v2572 = vsub.f32 %v2565, %v2571
    %v2573 = vmul.f32 %v2572, %v2572
    %v2574 = vsel %vm1047, %v2573, 0.0
    %2575 = vadd.xlane.f32.xlu0 %v2574
    %v2576 = vpop.xlane.xlu0 %2575
    %v2577 = vmul.f32 %v2576, %v1057
    %v2578 = vadd.f32 %v2577, 1e-06
    %v2579 = vrsqrt.pop %v2578
    %v2580 = vmul.f32 %v2579, %v2578
    %v2581 = vmul.f32 %v2580, %v2579
    %v2582 = vmul.f32 0.5, %v2581
    %v2583 = vsub.f32 1.5, %v2582
    %v2584 = vmul.f32 %v2579, %v2583
    %vm2585 = vweird.f32 %v2578
    %vm2586 = vweird.f32 %v2579
    %vm2587 = vmor %vm2585, %vm2586
    %v2588 = vsel %vm2587, %v2579, %v2584
    %v2589 = vmul.f32 %v2572, %v2588
    %v2590 = vmul.f32 %v2589, %v2566
    %v2591 = vadd.f32 %v2590, %v2567
    %v2592 = vld [vmem:[%s51] sm:$0xff]
    %v2593 = vld [vmem:[%s51 + $0x8] sm:$0xff]
    %v2594 = vld [vmem:[%s51 + $0x10] sm:$0xff]
    %v2595 = vld [vmem:[%s51 + $0x18] sm:$0xff]
    %v2596 = vld [vmem:[%s51 + $0x20] sm:$0x3f]
    %v2597 = vld [vmem:[%s53] sm:$0x1]
    %v2599 = vsel %vm1018, %v2591, 0
    %v2602 = vsel %vm178, %v2596, 0
    %2604 = vmatpush.msra.mxu0 0.0
    %2605 = vmatpush.msra.mxu0 0.0
    %2606 = vmatpush.msra.mxu0 0.0
    %2607 = vmatpush.msra.mxu0 0.0
    %2608 = vmatpush.msra.mxu0 0.0
    %2609 = vmatpush.msra.mxu0 0.0
    %2610 = vmatpush.msra.mxu0 0.0
    %2611 = vmatpush.msra.mxu0 0.0
    %2612 = vmatpush.msra.mxu0 0.0
    %2613 = vmatpush.msra.mxu0 0.0
    %2614 = vmatpush.msra.mxu0 0.0
    %2615 = vmatpush.msra.mxu0 %v2602
    %2616 = vmatpush.msra.mxu0 %v2595
    %2617 = vmatpush.msra.mxu0 %v2594
    %2618 = vmatpush.msra.mxu0 %v2593
    %2619 = vmatpush.msra.mxu0 %v2592
    %2620 = vmatmul.f32.gmra.mxu0 %v2599
    %v2621 = vpop.f32.mrf.mxu0
    %v2622 = vadd.f32 %v2597, %v2621
    %2623 = vdwg.mxu0
    %v2624 = vmax.f32 %v2622, 0.0
    %v2625 = vld [vmem:[%s55] sm:$0xff]
    %v2626 = vld [vmem:[%s55 + $0x8] sm:$0xff]
    %v2627 = vld [vmem:[%s55 + $0x10] sm:$0xff]
    %v2628 = vld [vmem:[%s55 + $0x18] sm:$0xff]
    %v2629 = vld [vmem:[%s55 + $0x20] sm:$0xff]
    %v2630 = vld [vmem:[%s55 + $0x28] sm:$0xff]
    %v2631 = vld [vmem:[%s55 + $0x30] sm:$0xff]
    %v2632 = vld [vmem:[%s55 + $0x38] sm:$0xff]
    %v2633 = vld [vmem:[%s57] sm:$0x1]
    %v2635 = vsel %vm791, %v2624, 0
    %2637 = vmatpush.msra.mxu0 0.0
    %2638 = vmatpush.msra.mxu0 0.0
    %2639 = vmatpush.msra.mxu0 0.0
    %2640 = vmatpush.msra.mxu0 0.0
    %2641 = vmatpush.msra.mxu0 0.0
    %2642 = vmatpush.msra.mxu0 0.0
    %2643 = vmatpush.msra.mxu0 0.0
    %2644 = vmatpush.msra.mxu0 0.0
    %2645 = vmatpush.msra.mxu0 %v2632
    %2646 = vmatpush.msra.mxu0 %v2631
    %2647 = vmatpush.msra.mxu0 %v2630
    %2648 = vmatpush.msra.mxu0 %v2629
    %2649 = vmatpush.msra.mxu0 %v2628
    %2650 = vmatpush.msra.mxu0 %v2627
    %2651 = vmatpush.msra.mxu0 %v2626
    %2652 = vmatpush.msra.mxu0 %v2625
    %2653 = vmatmul.f32.gmra.mxu0 %v2635
    %v2654 = vpop.f32.mrf.mxu0
    %v2655 = vadd.f32 %v2633, %v2654
    %2656 = vdwg.mxu0
    %v2657 = vadd.f32 %v2655, %v2591
    %v2658 = vld [vmem:[%s59] sm:$0x1]
    %v2659 = vld [vmem:[%s61] sm:$0x1]
    %v2660 = vsel %vm1047, %v2657, 0.0
    %2661 = vadd.xlane.f32.xlu0 %v2660
    %v2662 = vpop.xlane.xlu0 %2661
    %v2663 = vmul.f32 %v2662, %v1057
    %v2664 = vsub.f32 %v2657, %v2663
    %v2665 = vmul.f32 %v2664, %v2664
    %v2666 = vsel %vm1047, %v2665, 0.0
    %2667 = vadd.xlane.f32.xlu0 %v2666
    %v2668 = vpop.xlane.xlu0 %2667
    %v2669 = vmul.f32 %v2668, %v1057
    %v2670 = vadd.f32 %v2669, 1e-06
    %v2671 = vrsqrt.pop %v2670
    %v2672 = vmul.f32 %v2671, %v2670
    %v2673 = vmul.f32 %v2672, %v2671
    %v2674 = vmul.f32 0.5, %v2673
    %v2675 = vsub.f32 1.5, %v2674
    %v2676 = vmul.f32 %v2671, %v2675
    %vm2677 = vweird.f32 %v2670
    %vm2678 = vweird.f32 %v2671
    %vm2679 = vmor %vm2677, %vm2678
    %v2680 = vsel %vm2679, %v2671, %v2676
    %v2681 = vmul.f32 %v2664, %v2680
    %v2682 = vmul.f32 %v2681, %v2658
    %v2683 = vadd.f32 %v2682, %v2659
    %v2685 = vsel %vm1018, %v2683, 0
    %2687 = vmatpush.msra.mxu0 0.0
    %2688 = vmatpush.msra.mxu0 0.0
    %2689 = vmatpush.msra.mxu0 0.0
    %2690 = vmatpush.msra.mxu0 0.0
    %2691 = vmatpush.msra.mxu0 0.0
    %2692 = vmatpush.msra.mxu0 0.0
    %2693 = vmatpush.msra.mxu0 0.0
    %2694 = vmatpush.msra.mxu0 0.0
    %2695 = vmatpush.msra.mxu0 0.0
    %2696 = vmatpush.msra.mxu0 0.0
    %2697 = vmatpush.msra.mxu0 0.0
    %2698 = vmatpush.msra.mxu0 %v1379
    %2699 = vmatpush.msra.mxu0 %v897
    %2700 = vmatpush.msra.mxu0 %v896
    %2701 = vmatpush.msra.mxu0 %v895
    %2702 = vmatpush.msra.mxu0 %v894
    %2703 = vmatmul.f32.gmra.mxu0 %v2685
    %v2704 = vpop.f32.mrf.mxu0
    %v2705 = vadd.f32 %v2345, %v2704
    %2706 = vdwg.mxu0
    %v2707 = vsel %vm149, %v2705, -1e+30
    %v2708 = vsel %vm1047, %v2707, -inf
    %2709 = vmax.xlane.f32.xlu0 %v2708
    %v2710 = vpop.xlane.xlu0 %2709
    %v2711 = vsub.f32 %v2707, %v2710
    %v2712 = vmul.f32 %v2711, 1.442695
    %v2713 = vpow.pop %v2712
    %v2714 = vsel %vm1047, %v2713, 0.0
    %2715 = vadd.xlane.f32.xlu0 %v2714
    %v2716 = vpop.xlane.xlu0 %2715
    %v2717 = vrcp.pop %v2716
    %v2718 = vmul.f32 %v2716, %v2717
    %v2719 = vsub.f32 1.0, %v2718
    %v2720 = vmul.f32 %v2717, %v2719
    %v2721 = vadd.f32 %v2717, %v2720
    %vm2722 = vweird.f32 %v2716
    %vm2723 = vweird.f32 %v2717
    %vm2724 = vmor %vm2722, %vm2723
    %v2725 = vsel %vm2724, %v2717, %v2721
    %v2726 = vand.u32 2147483647, %v2716
    %vm2727 = vcmp.eq.f32.partialorder %v2726, 8.507059e+37
    %v2728 = vand.u32 %v2716, 2147483648
    %v2729 = vor.u32 1.1754944e-38, %v2728
    %v2730 = vsel %vm2727, %v2729, %v2725
    %v2731 = vmul.f32 %v2713, %v2730
    %v2732 = vsel %vm149, %v2731, 0.0
    %v2733 = vsel %vm152, %v2705, -1e+30
    %v2734 = vsel %vm1047, %v2733, -inf
    %2735 = vmax.xlane.f32.xlu0 %v2734
    %v2736 = vpop.xlane.xlu0 %2735
    %v2737 = vsub.f32 %v2733, %v2736
    %v2738 = vmul.f32 %v2737, 1.442695
    %v2739 = vpow.pop %v2738
    %v2740 = vsel %vm1047, %v2739, 0.0
    %2741 = vadd.xlane.f32.xlu0 %v2740
    %v2742 = vpop.xlane.xlu0 %2741
    %v2743 = vrcp.pop %v2742
    %v2744 = vmul.f32 %v2742, %v2743
    %v2745 = vsub.f32 1.0, %v2744
    %v2746 = vmul.f32 %v2743, %v2745
    %v2747 = vadd.f32 %v2743, %v2746
    %vm2748 = vweird.f32 %v2742
    %vm2749 = vweird.f32 %v2743
    %vm2750 = vmor %vm2748, %vm2749
    %v2751 = vsel %vm2750, %v2743, %v2747
    %v2752 = vand.u32 2147483647, %v2742
    %vm2753 = vcmp.eq.f32.partialorder %v2752, 8.507059e+37
    %v2754 = vand.u32 %v2742, 2147483648
    %v2755 = vor.u32 1.1754944e-38, %v2754
    %v2756 = vsel %vm2753, %v2755, %v2751
    %v2757 = vmul.f32 %v2739, %v2756
    %v2758 = vsel %vm152, %v2757, 0.0
    %v2759 = vadd.f32 %v2732, %v2758
    %v2760 = vsub.f32 0.0, %v2705
    %v2761 = vmul.f32 %v2760, 1.442695
    %v2762 = vpow.pop %v2761
    %v2763 = vadd.f32 %v2762, 1.0
    %v2764 = vrcp.pop %v2763
    %v2765 = vmul.f32 %v2763, %v2764
    %v2766 = vsub.f32 1.0, %v2765
    %v2767 = vmul.f32 %v2764, %v2766
    %v2768 = vadd.f32 %v2764, %v2767
    %vm2769 = vweird.f32 %v2763
    %vm2770 = vweird.f32 %v2764
    %vm2771 = vmor %vm2769, %vm2770
    %v2772 = vsel %vm2771, %v2764, %v2768
    %v2773 = vand.u32 2147483647, %v2763
    %vm2774 = vcmp.eq.f32.partialorder %v2773, 8.507059e+37
    %v2775 = vand.u32 %v2763, 2147483648
    %v2776 = vor.u32 1.1754944e-38, %v2775
    %v2777 = vsel %vm2774, %v2776, %v2772
    %v2778 = vmul.f32 1.0, %v2777
    %v2779 = vsel %vm155, %v2778, 0.0
    %v2780 = vadd.f32 %v2759, %v2779
    %2781 = vst.msk [vmem:[%s65 + $0x4] sm:$0x1] %vm1015, %v2780
    %v2782 = vld [vmem:[%s511] sm:$0x1]
    %v2783 = vld [vmem:[%s43] sm:$0xff]
    %v2784 = vld [vmem:[%s43 + $0x8] sm:$0xff]
    %v2785 = vld [vmem:[%s43 + $0x10] sm:$0xff]
    %v2786 = vld [vmem:[%s43 + $0x18] sm:$0xff]
    %v2787 = vld [vmem:[%s43 + $0x20] sm:$0xff]
    %v2788 = vld [vmem:[%s43 + $0x28] sm:$0xff]
    %v2789 = vld [vmem:[%s43 + $0x30] sm:$0xff]
    %v2790 = vld [vmem:[%s43 + $0x38] sm:$0xff]
    %v2791 = vld [vmem:[%s43 + $0x40] sm:$0xff]
    %v2792 = vld [vmem:[%s43 + $0x48] sm:$0xff]
    %v2793 = vld [vmem:[%s43 + $0x50] sm:$0xff]
    %v2794 = vld [vmem:[%s43 + $0x58] sm:$0xff]
    %v2795 = vld [vmem:[%s43 + $0x60] sm:$0x3f]
    %v2797 = vsel %vm171, %v882, 0
    %v2800 = vsel %vm178, %v2795, 0
    %2802 = vmatpush.msra.mxu0 0.0
    %2803 = vmatpush.msra.mxu0 0.0
    %2804 = vmatpush.msra.mxu0 0.0
    %2805 = vmatpush.msra.mxu0 %v2800
    %2806 = vmatpush.msra.mxu0 %v2794
    %2807 = vmatpush.msra.mxu0 %v2793
    %2808 = vmatpush.msra.mxu0 %v2792
    %2809 = vmatpush.msra.mxu0 %v2791
    %2810 = vmatpush.msra.mxu0 %v2790
    %2811 = vmatpush.msra.mxu0 %v2789
    %2812 = vmatpush.msra.mxu0 %v2788
    %2813 = vmatpush.msra.mxu0 %v2787
    %2814 = vmatpush.msra.mxu0 %v2786
    %2815 = vmatpush.msra.mxu0 %v2785
    %2816 = vmatpush.msra.mxu0 %v2784
    %2817 = vmatpush.msra.mxu0 %v2783
    %2818 = vmatmul.f32.gmra.mxu0 %v2797
    %v2819 = vpop.f32.mrf.mxu0
    %v2820 = vadd.f32 0.0, %v2819
    %2821 = vdwg.mxu0
    %v2822 = vsel %vm285, %v2820, 0.0
    %v2823 = vsel %vm347, %v2820, 0.0
    %v2824 = vld [vmem:[%s45] sm:$0xff]
    %v2825 = vld [vmem:[%s45 + $0x8] sm:$0xff]
    %v2826 = vld [vmem:[%s45 + $0x10] sm:$0xff]
    %v2827 = vld [vmem:[%s45 + $0x18] sm:$0xff]
    %v2828 = vld [vmem:[%s45 + $0x20] sm:$0xff]
    %v2829 = vld [vmem:[%s45 + $0x28] sm:$0xff]
    %v2830 = vld [vmem:[%s45 + $0x30] sm:$0xff]
    %v2831 = vld [vmem:[%s45 + $0x38] sm:$0xff]
    %v2832 = vld [vmem:[%s45 + $0x40] sm:$0xff]
    %v2833 = vld [vmem:[%s45 + $0x48] sm:$0xff]
    %v2834 = vld [vmem:[%s45 + $0x50] sm:$0xff]
    %v2835 = vld [vmem:[%s45 + $0x58] sm:$0xff]
    %v2836 = vld [vmem:[%s45 + $0x60] sm:$0x3f]
    %v2838 = vsel %vm178, %v2836, 0
    %2840 = vmatpush.msra.mxu0 0.0
    %2841 = vmatpush.msra.mxu0 0.0
    %2842 = vmatpush.msra.mxu0 0.0
    %2843 = vmatpush.msra.mxu0 %v2838
    %2844 = vmatpush.msra.mxu0 %v2835
    %2845 = vmatpush.msra.mxu0 %v2834
    %2846 = vmatpush.msra.mxu0 %v2833
    %2847 = vmatpush.msra.mxu0 %v2832
    %2848 = vmatpush.msra.mxu0 %v2831
    %2849 = vmatpush.msra.mxu0 %v2830
    %2850 = vmatpush.msra.mxu0 %v2829
    %2851 = vmatpush.msra.mxu0 %v2828
    %2852 = vmatpush.msra.mxu0 %v2827
    %2853 = vmatpush.msra.mxu0 %v2826
    %2854 = vmatpush.msra.mxu0 %v2825
    %2855 = vmatpush.msra.mxu0 %v2824
    %2856 = vmatmul.f32.gmra.mxu0 %v2797
    %v2857 = vpop.f32.mrf.mxu0
    %v2858 = vadd.f32 0.0, %v2857
    %2859 = vdwg.mxu0
    %v2860 = vld [vmem:[%s977] sm:$0xff]
    %v2861 = vld [vmem:[%s977 + $0x8] sm:$0xff]
    %v2862 = vld [vmem:[%s977 + $0x10] sm:$0xff]
    %v2863 = vld [vmem:[%s977 + $0x18] sm:$0xff]
    %v2864 = vld [vmem:[%s977 + $0x20] sm:$0xff]
    %v2865 = vld [vmem:[%s977 + $0x28] sm:$0xff]
    %v2866 = vld [vmem:[%s977 + $0x30] sm:$0xff]
    %v2867 = vld [vmem:[%s977 + $0x38] sm:$0xff]
    %v2868 = vld [vmem:[%s977 + $0x40] sm:$0xff]
    %v2869 = vld [vmem:[%s977 + $0x48] sm:$0xff]
    %v2870 = vld [vmem:[%s977 + $0x50] sm:$0xff]
    %v2871 = vld [vmem:[%s977 + $0x58] sm:$0xff]
    %v2872 = vld [vmem:[%s977 + $0x60] sm:$0x3f]
    %v2874 = vsel %vm178, %v2872, 0
    %2876 = vmatpush.msra.mxu0 0.0
    %2877 = vmatpush.msra.mxu0 0.0
    %2878 = vmatpush.msra.mxu0 0.0
    %2879 = vmatpush.msra.mxu0 %v2874
    %2880 = vmatpush.msra.mxu0 %v2871
    %2881 = vmatpush.msra.mxu0 %v2870
    %2882 = vmatpush.msra.mxu0 %v2869
    %2883 = vmatpush.msra.mxu0 %v2868
    %2884 = vmatpush.msra.mxu0 %v2867
    %2885 = vmatpush.msra.mxu0 %v2866
    %2886 = vmatpush.msra.mxu0 %v2865
    %2887 = vmatpush.msra.mxu0 %v2864
    %2888 = vmatpush.msra.mxu0 %v2863
    %2889 = vmatpush.msra.mxu0 %v2862
    %2890 = vmatpush.msra.mxu0 %v2861
    %2891 = vmatpush.msra.mxu0 %v2860
    %2892 = vmatmul.f32.gmra.mxu0 %v2797
    %v2893 = vpop.f32.mrf.mxu0
    %v2894 = vadd.f32 0.0, %v2893
    %2895 = vdwg.mxu0
    %s2896 = scalar_lea.vmem %s33, 1
    %v2897 = vld [vmem:[%s2896] sm:$0x1]
    %s2898 = scalar_lea.vmem %s65, 8
    %2899 = vst.msk [vmem:[%s2898] sm:$0x1] %vm1015, %v2897
    %v2900 = vadd.f32 %v2897, %v883
    %v2902 = vsel %vm1018, %v2900, 0
    %2904 = vmatpush.msra.mxu0 0.0
    %2905 = vmatpush.msra.mxu0 0.0
    %2906 = vmatpush.msra.mxu0 0.0
    %2907 = vmatpush.msra.mxu0 0.0
    %2908 = vmatpush.msra.mxu0 0.0
    %2909 = vmatpush.msra.mxu0 0.0
    %2910 = vmatpush.msra.mxu0 0.0
    %2911 = vmatpush.msra.mxu0 0.0
    %2912 = vmatpush.msra.mxu0 0.0
    %2913 = vmatpush.msra.mxu0 0.0
    %2914 = vmatpush.msra.mxu0 0.0
    %2915 = vmatpush.msra.mxu0 %v1023
    %2916 = vmatpush.msra.mxu0 %v887
    %2917 = vmatpush.msra.mxu0 %v886
    %2918 = vmatpush.msra.mxu0 %v885
    %2919 = vmatpush.msra.mxu0 %v884
    %2920 = vmatmul.f32.gmra.mxu0 %v2902
    %v2921 = vpop.f32.mrf.mxu0
    %v2922 = vadd.f32 %v2900, %v2921
    %2923 = vdwg.mxu0
    %v2924 = vld [vmem:[%s37] sm:$0x1]
    %v2925 = vld [vmem:[%s39] sm:$0x1]
    %v2926 = vsel %vm1047, %v2922, 0.0
    %2927 = vadd.xlane.f32.xlu0 %v2926
    %v2928 = vpop.xlane.xlu0 %2927
    %v2929 = vmul.f32 %v2928, %v1057
    %v2930 = vsub.f32 %v2922, %v2929
    %v2931 = vmul.f32 %v2930, %v2930
    %v2932 = vsel %vm1047, %v2931, 0.0
    %2933 = vadd.xlane.f32.xlu0 %v2932
    %v2934 = vpop.xlane.xlu0 %2933
    %v2935 = vmul.f32 %v2934, %v1057
    %v2936 = vadd.f32 %v2935, 1e-06
    %v2937 = vrsqrt.pop %v2936
    %v2938 = vmul.f32 %v2937, %v2936
    %v2939 = vmul.f32 %v2938, %v2937
    %v2940 = vmul.f32 0.5, %v2939
    %v2941 = vsub.f32 1.5, %v2940
    %v2942 = vmul.f32 %v2937, %v2941
    %vm2943 = vweird.f32 %v2936
    %vm2944 = vweird.f32 %v2937
    %vm2945 = vmor %vm2943, %vm2944
    %v2946 = vsel %vm2945, %v2937, %v2942
    %v2947 = vmul.f32 %v2930, %v2946
    %v2948 = vmul.f32 %v2947, %v2924
    %v2949 = vadd.f32 %v2948, %v2925
    %v2951 = vsel %vm1018, %v2949, 0
    %2953 = vmatpush.msra.mxu0 0.0
    %2954 = vmatpush.msra.mxu0 0.0
    %2955 = vmatpush.msra.mxu0 0.0
    %2956 = vmatpush.msra.mxu0 0.0
    %2957 = vmatpush.msra.mxu0 0.0
    %2958 = vmatpush.msra.mxu0 0.0
    %2959 = vmatpush.msra.mxu0 0.0
    %2960 = vmatpush.msra.mxu0 0.0
    %2961 = vmatpush.msra.mxu0 0.0
    %2962 = vmatpush.msra.mxu0 0.0
    %2963 = vmatpush.msra.mxu0 0.0
    %2964 = vmatpush.msra.mxu0 %v1083
    %2965 = vmatpush.msra.mxu0 %v892
    %2966 = vmatpush.msra.mxu0 %v891
    %2967 = vmatpush.msra.mxu0 %v890
    %2968 = vmatpush.msra.mxu0 %v889
    %2969 = vmatmul.f32.gmra.mxu0 %v2951
    %v2970 = vpop.f32.mrf.mxu0
    %v2971 = vadd.f32 0.0, %v2970
    %2972 = vdwg.mxu0
    %v2974 = vsel %vm287, %v2971, 0
    %v2977 = vsel %vm287, %v2822, 0
    %2979 = vmatpush.xpose.msra.mxu0 0.0
    %2980 = vmatpush.xpose.msra.mxu0 0.0
    %2981 = vmatpush.xpose.msra.mxu0 0.0
    %2982 = vmatpush.xpose.msra.mxu0 0.0
    %2983 = vmatpush.xpose.msra.mxu0 0.0
    %2984 = vmatpush.xpose.msra.mxu0 0.0
    %2985 = vmatpush.xpose.msra.mxu0 0.0
    %2986 = vmatpush.xpose.msra.mxu0 0.0
    %2987 = vmatpush.xpose.msra.mxu0 0.0
    %2988 = vmatpush.xpose.msra.mxu0 0.0
    %2989 = vmatpush.xpose.msra.mxu0 0.0
    %2990 = vmatpush.xpose.msra.mxu0 0.0
    %2991 = vmatpush.xpose.msra.mxu0 0.0
    %2992 = vmatpush.xpose.msra.mxu0 0.0
    %2993 = vmatpush.xpose.msra.mxu0 0.0
    %2994 = vmatpush.xpose.msra.mxu0 %v2977
    %2995 = vmatmul.f32.gmra.mxu0 %v2974
    %v2996 = vpop.f32.mrf.mxu0
    %v2997 = vadd.f32 0.0, %v2996
    %2998 = vdwg.mxu0
    %v2999 = vmul.f32 %v2997, 0.35355338
    %v3000 = vadd.f32 %v2999, %v2782
    %v3001 = vsel %vm1133, %v3000, -inf
    %3002 = vmax.xlane.f32.xlu0 %v3001
    %v3003 = vpop.xlane.xlu0 %3002
    %v3004 = vsub.f32 %v3000, %v3003
    %v3005 = vmul.f32 %v3004, 1.442695
    %v3006 = vpow.pop %v3005
    %v3007 = vsel %vm1133, %v3006, 0.0
    %3008 = vadd.xlane.f32.xlu0 %v3007
    %v3009 = vpop.xlane.xlu0 %3008
    %v3010 = vrcp.pop %v3009
    %v3011 = vmul.f32 %v3009, %v3010
    %v3012 = vsub.f32 1.0, %v3011
    %v3013 = vmul.f32 %v3010, %v3012
    %v3014 = vadd.f32 %v3010, %v3013
    %vm3015 = vweird.f32 %v3009
    %vm3016 = vweird.f32 %v3010
    %vm3017 = vmor %vm3015, %vm3016
    %v3018 = vsel %vm3017, %v3010, %v3014
    %v3019 = vand.u32 2147483647, %v3009
    %vm3020 = vcmp.eq.f32.partialorder %v3019, 8.507059e+37
    %v3021 = vand.u32 %v3009, 2147483648
    %v3022 = vor.u32 1.1754944e-38, %v3021
    %v3023 = vsel %vm3020, %v3022, %v3018
    %v3024 = vmul.f32 %v3006, %v3023
    %s3025 = scalar_lea.vmem [#allocation2], 8
    %3026 = vst.msk [vmem:[%s3025] sm:$0x1] %vm1133, %v3024
    %v3028 = vsel %vm287, %v2823, 0
    %3030 = vmatpush.xpose.msra.mxu0 0.0
    %3031 = vmatpush.xpose.msra.mxu0 0.0
    %3032 = vmatpush.xpose.msra.mxu0 0.0
    %3033 = vmatpush.xpose.msra.mxu0 0.0
    %3034 = vmatpush.xpose.msra.mxu0 0.0
    %3035 = vmatpush.xpose.msra.mxu0 0.0
    %3036 = vmatpush.xpose.msra.mxu0 0.0
    %3037 = vmatpush.xpose.msra.mxu0 0.0
    %3038 = vmatpush.xpose.msra.mxu0 0.0
    %3039 = vmatpush.xpose.msra.mxu0 0.0
    %3040 = vmatpush.xpose.msra.mxu0 0.0
    %3041 = vmatpush.xpose.msra.mxu0 0.0
    %3042 = vmatpush.xpose.msra.mxu0 0.0
    %3043 = vmatpush.xpose.msra.mxu0 0.0
    %3044 = vmatpush.xpose.msra.mxu0 0.0
    %3045 = vmatpush.xpose.msra.mxu0 %v3028
    %3046 = vmatmul.f32.gmra.mxu0 %v2974
    %v3047 = vpop.f32.mrf.mxu0
    %v3048 = vadd.f32 0.0, %v3047
    %3049 = vdwg.mxu0
    %v3050 = vmul.f32 %v3048, 0.35355338
    %v3051 = vadd.f32 %v3050, %v2782
    %v3052 = vsel %vm1133, %v3051, -inf
    %3053 = vmax.xlane.f32.xlu0 %v3052
    %v3054 = vpop.xlane.xlu0 %3053
    %v3055 = vsub.f32 %v3051, %v3054
    %v3056 = vmul.f32 %v3055, 1.442695
    %v3057 = vpow.pop %v3056
    %v3058 = vsel %vm1133, %v3057, 0.0
    %3059 = vadd.xlane.f32.xlu0 %v3058
    %v3060 = vpop.xlane.xlu0 %3059
    %v3061 = vrcp.pop %v3060
    %v3062 = vmul.f32 %v3060, %v3061
    %v3063 = vsub.f32 1.0, %v3062
    %v3064 = vmul.f32 %v3061, %v3063
    %v3065 = vadd.f32 %v3061, %v3064
    %vm3066 = vweird.f32 %v3060
    %vm3067 = vweird.f32 %v3061
    %vm3068 = vmor %vm3066, %vm3067
    %v3069 = vsel %vm3068, %v3061, %v3065
    %v3070 = vand.u32 2147483647, %v3060
    %vm3071 = vcmp.eq.f32.partialorder %v3070, 8.507059e+37
    %v3072 = vand.u32 %v3060, 2147483648
    %v3073 = vor.u32 1.1754944e-38, %v3072
    %v3074 = vsel %vm3071, %v3073, %v3069
    %v3075 = vmul.f32 %v3057, %v3074
    %s3076 = scalar_lea.vmem [#allocation2], 12
    %3077 = vst.msk [vmem:[%s3076] sm:$0x1] %vm1133, %v3075
    %v3079 = vsel %vm319, %v3075, 0
    %3081 = vmatpush.msra.mxu0 0.0
    %3082 = vmatpush.msra.mxu0 0.0
    %3083 = vmatpush.msra.mxu0 0.0
    %3084 = vmatpush.msra.mxu0 0.0
    %3085 = vmatpush.msra.mxu0 0.0
    %3086 = vmatpush.msra.mxu0 0.0
    %3087 = vmatpush.msra.mxu0 0.0
    %3088 = vmatpush.msra.mxu0 0.0
    %3089 = vmatpush.msra.mxu0 0.0
    %3090 = vmatpush.msra.mxu0 0.0
    %3091 = vmatpush.msra.mxu0 0.0
    %3092 = vmatpush.msra.mxu0 0.0
    %3093 = vmatpush.msra.mxu0 0.0
    %3094 = vmatpush.msra.mxu0 0.0
    %3095 = vmatpush.msra.mxu0 0.0
    %3096 = vmatpush.msra.mxu0 %v2894
    %3097 = vmatmul.f32.gmra.mxu0 %v3079
    %v3098 = vpop.f32.mrf.mxu0
    %v3099 = vadd.f32 0.0, %v3098
    %3100 = vdwg.mxu0
    %v3102 = vsel %vm319, %v3024, 0
    %3104 = vmatpush.msra.mxu0 0.0
    %3105 = vmatpush.msra.mxu0 0.0
    %3106 = vmatpush.msra.mxu0 0.0
    %3107 = vmatpush.msra.mxu0 0.0
    %3108 = vmatpush.msra.mxu0 0.0
    %3109 = vmatpush.msra.mxu0 0.0
    %3110 = vmatpush.msra.mxu0 0.0
    %3111 = vmatpush.msra.mxu0 0.0
    %3112 = vmatpush.msra.mxu0 0.0
    %3113 = vmatpush.msra.mxu0 0.0
    %3114 = vmatpush.msra.mxu0 0.0
    %3115 = vmatpush.msra.mxu0 0.0
    %3116 = vmatpush.msra.mxu0 0.0
    %3117 = vmatpush.msra.mxu0 0.0
    %3118 = vmatpush.msra.mxu0 0.0
    %3119 = vmatpush.msra.mxu0 %v2858
    %3120 = vmatmul.f32.gmra.mxu0 %v3102
    %v3121 = vpop.f32.mrf.mxu0
    %v3122 = vadd.f32 %v3099, %v3121
    %3123 = vdwg.mxu0
    %v3124 = vadd.f32 %v3122, %v2949
    %v3125 = vld [vmem:[%s47] sm:$0x1]
    %v3126 = vld [vmem:[%s49] sm:$0x1]
    %v3127 = vsel %vm1047, %v3124, 0.0
    %3128 = vadd.xlane.f32.xlu0 %v3127
    %v3129 = vpop.xlane.xlu0 %3128
    %v3130 = vmul.f32 %v3129, %v1057
    %v3131 = vsub.f32 %v3124, %v3130
    %v3132 = vmul.f32 %v3131, %v3131
    %v3133 = vsel %vm1047, %v3132, 0.0
    %3134 = vadd.xlane.f32.xlu0 %v3133
    %v3135 = vpop.xlane.xlu0 %3134
    %v3136 = vmul.f32 %v3135, %v1057
    %v3137 = vadd.f32 %v3136, 1e-06
    %v3138 = vrsqrt.pop %v3137
    %v3139 = vmul.f32 %v3138, %v3137
    %v3140 = vmul.f32 %v3139, %v3138
    %v3141 = vmul.f32 0.5, %v3140
    %v3142 = vsub.f32 1.5, %v3141
    %v3143 = vmul.f32 %v3138, %v3142
    %vm3144 = vweird.f32 %v3137
    %vm3145 = vweird.f32 %v3138
    %vm3146 = vmor %vm3144, %vm3145
    %v3147 = vsel %vm3146, %v3138, %v3143
    %v3148 = vmul.f32 %v3131, %v3147
    %v3149 = vmul.f32 %v3148, %v3125
    %v3150 = vadd.f32 %v3149, %v3126
    %v3151 = vld [vmem:[%s51] sm:$0xff]
    %v3152 = vld [vmem:[%s51 + $0x8] sm:$0xff]
    %v3153 = vld [vmem:[%s51 + $0x10] sm:$0xff]
    %v3154 = vld [vmem:[%s51 + $0x18] sm:$0xff]
    %v3155 = vld [vmem:[%s51 + $0x20] sm:$0x3f]
    %v3156 = vld [vmem:[%s53] sm:$0x1]
    %v3158 = vsel %vm1018, %v3150, 0
    %v3161 = vsel %vm178, %v3155, 0
    %3163 = vmatpush.msra.mxu0 0.0
    %3164 = vmatpush.msra.mxu0 0.0
    %3165 = vmatpush.msra.mxu0 0.0
    %3166 = vmatpush.msra.mxu0 0.0
    %3167 = vmatpush.msra.mxu0 0.0
    %3168 = vmatpush.msra.mxu0 0.0
    %3169 = vmatpush.msra.mxu0 0.0
    %3170 = vmatpush.msra.mxu0 0.0
    %3171 = vmatpush.msra.mxu0 0.0
    %3172 = vmatpush.msra.mxu0 0.0
    %3173 = vmatpush.msra.mxu0 0.0
    %3174 = vmatpush.msra.mxu0 %v3161
    %3175 = vmatpush.msra.mxu0 %v3154
    %3176 = vmatpush.msra.mxu0 %v3153
    %3177 = vmatpush.msra.mxu0 %v3152
    %3178 = vmatpush.msra.mxu0 %v3151
    %3179 = vmatmul.f32.gmra.mxu0 %v3158
    %v3180 = vpop.f32.mrf.mxu0
    %v3181 = vadd.f32 %v3156, %v3180
    %3182 = vdwg.mxu0
    %v3183 = vmax.f32 %v3181, 0.0
    %v3184 = vld [vmem:[%s55] sm:$0xff]
    %v3185 = vld [vmem:[%s55 + $0x8] sm:$0xff]
    %v3186 = vld [vmem:[%s55 + $0x10] sm:$0xff]
    %v3187 = vld [vmem:[%s55 + $0x18] sm:$0xff]
    %v3188 = vld [vmem:[%s55 + $0x20] sm:$0xff]
    %v3189 = vld [vmem:[%s55 + $0x28] sm:$0xff]
    %v3190 = vld [vmem:[%s55 + $0x30] sm:$0xff]
    %v3191 = vld [vmem:[%s55 + $0x38] sm:$0xff]
    %v3192 = vld [vmem:[%s57] sm:$0x1]
    %v3194 = vsel %vm791, %v3183, 0
    %3196 = vmatpush.msra.mxu0 0.0
    %3197 = vmatpush.msra.mxu0 0.0
    %3198 = vmatpush.msra.mxu0 0.0
    %3199 = vmatpush.msra.mxu0 0.0
    %3200 = vmatpush.msra.mxu0 0.0
    %3201 = vmatpush.msra.mxu0 0.0
    %3202 = vmatpush.msra.mxu0 0.0
    %3203 = vmatpush.msra.mxu0 0.0
    %3204 = vmatpush.msra.mxu0 %v3191
    %3205 = vmatpush.msra.mxu0 %v3190
    %3206 = vmatpush.msra.mxu0 %v3189
    %3207 = vmatpush.msra.mxu0 %v3188
    %3208 = vmatpush.msra.mxu0 %v3187
    %3209 = vmatpush.msra.mxu0 %v3186
    %3210 = vmatpush.msra.mxu0 %v3185
    %3211 = vmatpush.msra.mxu0 %v3184
    %3212 = vmatmul.f32.gmra.mxu0 %v3194
    %v3213 = vpop.f32.mrf.mxu0
    %v3214 = vadd.f32 %v3192, %v3213
    %3215 = vdwg.mxu0
    %v3216 = vadd.f32 %v3214, %v3150
    %v3217 = vld [vmem:[%s59] sm:$0x1]
    %v3218 = vld [vmem:[%s61] sm:$0x1]
    %v3219 = vsel %vm1047, %v3216, 0.0
    %3220 = vadd.xlane.f32.xlu0 %v3219
    %v3221 = vpop.xlane.xlu0 %3220
    %v3222 = vmul.f32 %v3221, %v1057
    %v3223 = vsub.f32 %v3216, %v3222
    %v3224 = vmul.f32 %v3223, %v3223
    %v3225 = vsel %vm1047, %v3224, 0.0
    %3226 = vadd.xlane.f32.xlu0 %v3225
    %v3227 = vpop.xlane.xlu0 %3226
    %v3228 = vmul.f32 %v3227, %v1057
    %v3229 = vadd.f32 %v3228, 1e-06
    %v3230 = vrsqrt.pop %v3229
    %v3231 = vmul.f32 %v3230, %v3229
    %v3232 = vmul.f32 %v3231, %v3230
    %v3233 = vmul.f32 0.5, %v3232
    %v3234 = vsub.f32 1.5, %v3233
    %v3235 = vmul.f32 %v3230, %v3234
    %vm3236 = vweird.f32 %v3229
    %vm3237 = vweird.f32 %v3230
    %vm3238 = vmor %vm3236, %vm3237
    %v3239 = vsel %vm3238, %v3230, %v3235
    %v3240 = vmul.f32 %v3223, %v3239
    %v3241 = vmul.f32 %v3240, %v3217
    %v3242 = vadd.f32 %v3241, %v3218
    %v3244 = vsel %vm1018, %v3242, 0
    %3246 = vmatpush.msra.mxu0 0.0
    %3247 = vmatpush.msra.mxu0 0.0
    %3248 = vmatpush.msra.mxu0 0.0
    %3249 = vmatpush.msra.mxu0 0.0
    %3250 = vmatpush.msra.mxu0 0.0
    %3251 = vmatpush.msra.mxu0 0.0
    %3252 = vmatpush.msra.mxu0 0.0
    %3253 = vmatpush.msra.mxu0 0.0
    %3254 = vmatpush.msra.mxu0 0.0
    %3255 = vmatpush.msra.mxu0 0.0
    %3256 = vmatpush.msra.mxu0 0.0
    %3257 = vmatpush.msra.mxu0 %v1379
    %3258 = vmatpush.msra.mxu0 %v897
    %3259 = vmatpush.msra.mxu0 %v896
    %3260 = vmatpush.msra.mxu0 %v895
    %3261 = vmatpush.msra.mxu0 %v894
    %3262 = vmatmul.f32.gmra.mxu0 %v3244
    %v3263 = vpop.f32.mrf.mxu0
    %v3264 = vadd.f32 %v2897, %v3263
    %3265 = vdwg.mxu0
    %v3266 = vsel %vm149, %v3264, -1e+30
    %v3267 = vsel %vm1047, %v3266, -inf
    %3268 = vmax.xlane.f32.xlu0 %v3267
    %v3269 = vpop.xlane.xlu0 %3268
    %v3270 = vsub.f32 %v3266, %v3269
    %v3271 = vmul.f32 %v3270, 1.442695
    %v3272 = vpow.pop %v3271
    %v3273 = vsel %vm1047, %v3272, 0.0
    %3274 = vadd.xlane.f32.xlu0 %v3273
    %v3275 = vpop.xlane.xlu0 %3274
    %v3276 = vrcp.pop %v3275
    %v3277 = vmul.f32 %v3275, %v3276
    %v3278 = vsub.f32 1.0, %v3277
    %v3279 = vmul.f32 %v3276, %v3278
    %v3280 = vadd.f32 %v3276, %v3279
    %vm3281 = vweird.f32 %v3275
    %vm3282 = vweird.f32 %v3276
    %vm3283 = vmor %vm3281, %vm3282
    %v3284 = vsel %vm3283, %v3276, %v3280
    %v3285 = vand.u32 2147483647, %v3275
    %vm3286 = vcmp.eq.f32.partialorder %v3285, 8.507059e+37
    %v3287 = vand.u32 %v3275, 2147483648
    %v3288 = vor.u32 1.1754944e-38, %v3287
    %v3289 = vsel %vm3286, %v3288, %v3284
    %v3290 = vmul.f32 %v3272, %v3289
    %v3291 = vsel %vm149, %v3290, 0.0
    %v3292 = vsel %vm152, %v3264, -1e+30
    %v3293 = vsel %vm1047, %v3292, -inf
    %3294 = vmax.xlane.f32.xlu0 %v3293
    %v3295 = vpop.xlane.xlu0 %3294
    %v3296 = vsub.f32 %v3292, %v3295
    %v3297 = vmul.f32 %v3296, 1.442695
    %v3298 = vpow.pop %v3297
    %v3299 = vsel %vm1047, %v3298, 0.0
    %3300 = vadd.xlane.f32.xlu0 %v3299
    %v3301 = vpop.xlane.xlu0 %3300
    %v3302 = vrcp.pop %v3301
    %v3303 = vmul.f32 %v3301, %v3302
    %v3304 = vsub.f32 1.0, %v3303
    %v3305 = vmul.f32 %v3302, %v3304
    %v3306 = vadd.f32 %v3302, %v3305
    %vm3307 = vweird.f32 %v3301
    %vm3308 = vweird.f32 %v3302
    %vm3309 = vmor %vm3307, %vm3308
    %v3310 = vsel %vm3309, %v3302, %v3306
    %v3311 = vand.u32 2147483647, %v3301
    %vm3312 = vcmp.eq.f32.partialorder %v3311, 8.507059e+37
    %v3313 = vand.u32 %v3301, 2147483648
    %v3314 = vor.u32 1.1754944e-38, %v3313
    %v3315 = vsel %vm3312, %v3314, %v3310
    %v3316 = vmul.f32 %v3298, %v3315
    %v3317 = vsel %vm152, %v3316, 0.0
    %v3318 = vadd.f32 %v3291, %v3317
    %v3319 = vsub.f32 0.0, %v3264
    %v3320 = vmul.f32 %v3319, 1.442695
    %v3321 = vpow.pop %v3320
    %v3322 = vadd.f32 %v3321, 1.0
    %v3323 = vrcp.pop %v3322
    %v3324 = vmul.f32 %v3322, %v3323
    %v3325 = vsub.f32 1.0, %v3324
    %v3326 = vmul.f32 %v3323, %v3325
    %v3327 = vadd.f32 %v3323, %v3326
    %vm3328 = vweird.f32 %v3322
    %vm3329 = vweird.f32 %v3323
    %vm3330 = vmor %vm3328, %vm3329
    %v3331 = vsel %vm3330, %v3323, %v3327
    %v3332 = vand.u32 2147483647, %v3322
    %vm3333 = vcmp.eq.f32.partialorder %v3332, 8.507059e+37
    %v3334 = vand.u32 %v3322, 2147483648
    %v3335 = vor.u32 1.1754944e-38, %v3334
    %v3336 = vsel %vm3333, %v3335, %v3331
    %v3337 = vmul.f32 1.0, %v3336
    %v3338 = vsel %vm155, %v3337, 0.0
    %v3339 = vadd.f32 %v3318, %v3338
    %3340 = vst.msk [vmem:[%s2898 + $0x1] sm:$0x1] %vm1015, %v3339
    %v3341 = vadd.f32 %v3339, %v1477
    %v3343 = vsel %vm1018, %v3341, 0
    %3345 = vmatpush.msra.mxu0 0.0
    %3346 = vmatpush.msra.mxu0 0.0
    %3347 = vmatpush.msra.mxu0 0.0
    %3348 = vmatpush.msra.mxu0 0.0
    %3349 = vmatpush.msra.mxu0 0.0
    %3350 = vmatpush.msra.mxu0 0.0
    %3351 = vmatpush.msra.mxu0 0.0
    %3352 = vmatpush.msra.mxu0 0.0
    %3353 = vmatpush.msra.mxu0 0.0
    %3354 = vmatpush.msra.mxu0 0.0
    %3355 = vmatpush.msra.mxu0 0.0
    %3356 = vmatpush.msra.mxu0 %v1023
    %3357 = vmatpush.msra.mxu0 %v887
    %3358 = vmatpush.msra.mxu0 %v886
    %3359 = vmatpush.msra.mxu0 %v885
    %3360 = vmatpush.msra.mxu0 %v884
    %3361 = vmatmul.f32.gmra.mxu0 %v3343
    %v3362 = vpop.f32.mrf.mxu0
    %v3363 = vadd.f32 %v3341, %v3362
    %3364 = vdwg.mxu0
    %v3365 = vld [vmem:[%s37] sm:$0x1]
    %v3366 = vld [vmem:[%s39] sm:$0x1]
    %v3367 = vsel %vm1047, %v3363, 0.0
    %3368 = vadd.xlane.f32.xlu0 %v3367
    %v3369 = vpop.xlane.xlu0 %3368
    %v3370 = vmul.f32 %v3369, %v1057
    %v3371 = vsub.f32 %v3363, %v3370
    %v3372 = vmul.f32 %v3371, %v3371
    %v3373 = vsel %vm1047, %v3372, 0.0
    %3374 = vadd.xlane.f32.xlu0 %v3373
    %v3375 = vpop.xlane.xlu0 %3374
    %v3376 = vmul.f32 %v3375, %v1057
    %v3377 = vadd.f32 %v3376, 1e-06
    %v3378 = vrsqrt.pop %v3377
    %v3379 = vmul.f32 %v3378, %v3377
    %v3380 = vmul.f32 %v3379, %v3378
    %v3381 = vmul.f32 0.5, %v3380
    %v3382 = vsub.f32 1.5, %v3381
    %v3383 = vmul.f32 %v3378, %v3382
    %vm3384 = vweird.f32 %v3377
    %vm3385 = vweird.f32 %v3378
    %vm3386 = vmor %vm3384, %vm3385
    %v3387 = vsel %vm3386, %v3378, %v3383
    %v3388 = vmul.f32 %v3371, %v3387
    %v3389 = vmul.f32 %v3388, %v3365
    %v3390 = vadd.f32 %v3389, %v3366
    %v3392 = vsel %vm1018, %v3390, 0
    %3394 = vmatpush.msra.mxu0 0.0
    %3395 = vmatpush.msra.mxu0 0.0
    %3396 = vmatpush.msra.mxu0 0.0
    %3397 = vmatpush.msra.mxu0 0.0
    %3398 = vmatpush.msra.mxu0 0.0
    %3399 = vmatpush.msra.mxu0 0.0
    %3400 = vmatpush.msra.mxu0 0.0
    %3401 = vmatpush.msra.mxu0 0.0
    %3402 = vmatpush.msra.mxu0 0.0
    %3403 = vmatpush.msra.mxu0 0.0
    %3404 = vmatpush.msra.mxu0 0.0
    %3405 = vmatpush.msra.mxu0 %v1083
    %3406 = vmatpush.msra.mxu0 %v892
    %3407 = vmatpush.msra.mxu0 %v891
    %3408 = vmatpush.msra.mxu0 %v890
    %3409 = vmatpush.msra.mxu0 %v889
    %3410 = vmatmul.f32.gmra.mxu0 %v3392
    %v3411 = vpop.f32.mrf.mxu0
    %v3412 = vadd.f32 0.0, %v3411
    %3413 = vdwg.mxu0
    %v3415 = vsel %vm287, %v3412, 0
    %3417 = vmatpush.xpose.msra.mxu0 0.0
    %3418 = vmatpush.xpose.msra.mxu0 0.0
    %3419 = vmatpush.xpose.msra.mxu0 0.0
    %3420 = vmatpush.xpose.msra.mxu0 0.0
    %3421 = vmatpush.xpose.msra.mxu0 0.0
    %3422 = vmatpush.xpose.msra.mxu0 0.0
    %3423 = vmatpush.xpose.msra.mxu0 0.0
    %3424 = vmatpush.xpose.msra.mxu0 0.0
    %3425 = vmatpush.xpose.msra.mxu0 0.0
    %3426 = vmatpush.xpose.msra.mxu0 0.0
    %3427 = vmatpush.xpose.msra.mxu0 0.0
    %3428 = vmatpush.xpose.msra.mxu0 0.0
    %3429 = vmatpush.xpose.msra.mxu0 0.0
    %3430 = vmatpush.xpose.msra.mxu0 0.0
    %3431 = vmatpush.xpose.msra.mxu0 0.0
    %3432 = vmatpush.xpose.msra.mxu0 %v2977
    %3433 = vmatmul.f32.gmra.mxu0 %v3415
    %v3434 = vpop.f32.mrf.mxu0
    %v3435 = vadd.f32 0.0, %v3434
    %3436 = vdwg.mxu0
    %v3437 = vmul.f32 %v3435, 0.35355338
    %v3438 = vadd.f32 %v3437, %v2782
    %v3439 = vsel %vm1133, %v3438, -inf
    %3440 = vmax.xlane.f32.xlu0 %v3439
    %v3441 = vpop.xlane.xlu0 %3440
    %v3442 = vsub.f32 %v3438, %v3441
    %v3443 = vmul.f32 %v3442, 1.442695
    %v3444 = vpow.pop %v3443
    %v3445 = vsel %vm1133, %v3444, 0.0
    %3446 = vadd.xlane.f32.xlu0 %v3445
    %v3447 = vpop.xlane.xlu0 %3446
    %v3448 = vrcp.pop %v3447
    %v3449 = vmul.f32 %v3447, %v3448
    %v3450 = vsub.f32 1.0, %v3449
    %v3451 = vmul.f32 %v3448, %v3450
    %v3452 = vadd.f32 %v3448, %v3451
    %vm3453 = vweird.f32 %v3447
    %vm3454 = vweird.f32 %v3448
    %vm3455 = vmor %vm3453, %vm3454
    %v3456 = vsel %vm3455, %v3448, %v3452
    %v3457 = vand.u32 2147483647, %v3447
    %vm3458 = vcmp.eq.f32.partialorder %v3457, 8.507059e+37
    %v3459 = vand.u32 %v3447, 2147483648
    %v3460 = vor.u32 1.1754944e-38, %v3459
    %v3461 = vsel %vm3458, %v3460, %v3456
    %v3462 = vmul.f32 %v3444, %v3461
    %3463 = vst.msk [vmem:[%s3025 + $0x1] sm:$0x1] %vm1133, %v3462
    %3464 = vmatpush.xpose.msra.mxu0 0.0
    %3465 = vmatpush.xpose.msra.mxu0 0.0
    %3466 = vmatpush.xpose.msra.mxu0 0.0
    %3467 = vmatpush.xpose.msra.mxu0 0.0
    %3468 = vmatpush.xpose.msra.mxu0 0.0
    %3469 = vmatpush.xpose.msra.mxu0 0.0
    %3470 = vmatpush.xpose.msra.mxu0 0.0
    %3471 = vmatpush.xpose.msra.mxu0 0.0
    %3472 = vmatpush.xpose.msra.mxu0 0.0
    %3473 = vmatpush.xpose.msra.mxu0 0.0
    %3474 = vmatpush.xpose.msra.mxu0 0.0
    %3475 = vmatpush.xpose.msra.mxu0 0.0
    %3476 = vmatpush.xpose.msra.mxu0 0.0
    %3477 = vmatpush.xpose.msra.mxu0 0.0
    %3478 = vmatpush.xpose.msra.mxu0 0.0
    %3479 = vmatpush.xpose.msra.mxu0 %v3028
    %3480 = vmatmul.f32.gmra.mxu0 %v3415
    %v3481 = vpop.f32.mrf.mxu0
    %v3482 = vadd.f32 0.0, %v3481
    %3483 = vdwg.mxu0
    %v3484 = vmul.f32 %v3482, 0.35355338
    %v3485 = vadd.f32 %v3484, %v2782
    %v3486 = vsel %vm1133, %v3485, -inf
    %3487 = vmax.xlane.f32.xlu0 %v3486
    %v3488 = vpop.xlane.xlu0 %3487
    %v3489 = vsub.f32 %v3485, %v3488
    %v3490 = vmul.f32 %v3489, 1.442695
    %v3491 = vpow.pop %v3490
    %v3492 = vsel %vm1133, %v3491, 0.0
    %3493 = vadd.xlane.f32.xlu0 %v3492
    %v3494 = vpop.xlane.xlu0 %3493
    %v3495 = vrcp.pop %v3494
    %v3496 = vmul.f32 %v3494, %v3495
    %v3497 = vsub.f32 1.0, %v3496
    %v3498 = vmul.f32 %v3495, %v3497
    %v3499 = vadd.f32 %v3495, %v3498
    %vm3500 = vweird.f32 %v3494
    %vm3501 = vweird.f32 %v3495
    %vm3502 = vmor %vm3500, %vm3501
    %v3503 = vsel %vm3502, %v3495, %v3499
    %v3504 = vand.u32 2147483647, %v3494
    %vm3505 = vcmp.eq.f32.partialorder %v3504, 8.507059e+37
    %v3506 = vand.u32 %v3494, 2147483648
    %v3507 = vor.u32 1.1754944e-38, %v3506
    %v3508 = vsel %vm3505, %v3507, %v3503
    %v3509 = vmul.f32 %v3491, %v3508
    %3510 = vst.msk [vmem:[%s3076 + $0x1] sm:$0x1] %vm1133, %v3509
    %v3512 = vsel %vm319, %v3509, 0
    %3514 = vmatpush.msra.mxu0 0.0
    %3515 = vmatpush.msra.mxu0 0.0
    %3516 = vmatpush.msra.mxu0 0.0
    %3517 = vmatpush.msra.mxu0 0.0
    %3518 = vmatpush.msra.mxu0 0.0
    %3519 = vmatpush.msra.mxu0 0.0
    %3520 = vmatpush.msra.mxu0 0.0
    %3521 = vmatpush.msra.mxu0 0.0
    %3522 = vmatpush.msra.mxu0 0.0
    %3523 = vmatpush.msra.mxu0 0.0
    %3524 = vmatpush.msra.mxu0 0.0
    %3525 = vmatpush.msra.mxu0 0.0
    %3526 = vmatpush.msra.mxu0 0.0
    %3527 = vmatpush.msra.mxu0 0.0
    %3528 = vmatpush.msra.mxu0 0.0
    %3529 = vmatpush.msra.mxu0 %v2894
    %3530 = vmatmul.f32.gmra.mxu0 %v3512
    %v3531 = vpop.f32.mrf.mxu0
    %v3532 = vadd.f32 0.0, %v3531
    %3533 = vdwg.mxu0
    %v3535 = vsel %vm319, %v3462, 0
    %3537 = vmatpush.msra.mxu0 0.0
    %3538 = vmatpush.msra.mxu0 0.0
    %3539 = vmatpush.msra.mxu0 0.0
    %3540 = vmatpush.msra.mxu0 0.0
    %3541 = vmatpush.msra.mxu0 0.0
    %3542 = vmatpush.msra.mxu0 0.0
    %3543 = vmatpush.msra.mxu0 0.0
    %3544 = vmatpush.msra.mxu0 0.0
    %3545 = vmatpush.msra.mxu0 0.0
    %3546 = vmatpush.msra.mxu0 0.0
    %3547 = vmatpush.msra.mxu0 0.0
    %3548 = vmatpush.msra.mxu0 0.0
    %3549 = vmatpush.msra.mxu0 0.0
    %3550 = vmatpush.msra.mxu0 0.0
    %3551 = vmatpush.msra.mxu0 0.0
    %3552 = vmatpush.msra.mxu0 %v2858
    %3553 = vmatmul.f32.gmra.mxu0 %v3535
    %v3554 = vpop.f32.mrf.mxu0
    %v3555 = vadd.f32 %v3532, %v3554
    %3556 = vdwg.mxu0
    %v3557 = vadd.f32 %v3555, %v3390
    %v3558 = vld [vmem:[%s47] sm:$0x1]
    %v3559 = vld [vmem:[%s49] sm:$0x1]
    %v3560 = vsel %vm1047, %v3557, 0.0
    %3561 = vadd.xlane.f32.xlu0 %v3560
    %v3562 = vpop.xlane.xlu0 %3561
    %v3563 = vmul.f32 %v3562, %v1057
    %v3564 = vsub.f32 %v3557, %v3563
    %v3565 = vmul.f32 %v3564, %v3564
    %v3566 = vsel %vm1047, %v3565, 0.0
    %3567 = vadd.xlane.f32.xlu0 %v3566
    %v3568 = vpop.xlane.xlu0 %3567
    %v3569 = vmul.f32 %v3568, %v1057
    %v3570 = vadd.f32 %v3569, 1e-06
    %v3571 = vrsqrt.pop %v3570
    %v3572 = vmul.f32 %v3571, %v3570
    %v3573 = vmul.f32 %v3572, %v3571
    %v3574 = vmul.f32 0.5, %v3573
    %v3575 = vsub.f32 1.5, %v3574
    %v3576 = vmul.f32 %v3571, %v3575
    %vm3577 = vweird.f32 %v3570
    %vm3578 = vweird.f32 %v3571
    %vm3579 = vmor %vm3577, %vm3578
    %v3580 = vsel %vm3579, %v3571, %v3576
    %v3581 = vmul.f32 %v3564, %v3580
    %v3582 = vmul.f32 %v3581, %v3558
    %v3583 = vadd.f32 %v3582, %v3559
    %v3584 = vld [vmem:[%s51] sm:$0xff]
    %v3585 = vld [vmem:[%s51 + $0x8] sm:$0xff]
    %v3586 = vld [vmem:[%s51 + $0x10] sm:$0xff]
    %v3587 = vld [vmem:[%s51 + $0x18] sm:$0xff]
    %v3588 = vld [vmem:[%s51 + $0x20] sm:$0x3f]
    %v3589 = vld [vmem:[%s53] sm:$0x1]
    %v3591 = vsel %vm1018, %v3583, 0
    %v3594 = vsel %vm178, %v3588, 0
    %3596 = vmatpush.msra.mxu0 0.0
    %3597 = vmatpush.msra.mxu0 0.0
    %3598 = vmatpush.msra.mxu0 0.0
    %3599 = vmatpush.msra.mxu0 0.0
    %3600 = vmatpush.msra.mxu0 0.0
    %3601 = vmatpush.msra.mxu0 0.0
    %3602 = vmatpush.msra.mxu0 0.0
    %3603 = vmatpush.msra.mxu0 0.0
    %3604 = vmatpush.msra.mxu0 0.0
    %3605 = vmatpush.msra.mxu0 0.0
    %3606 = vmatpush.msra.mxu0 0.0
    %3607 = vmatpush.msra.mxu0 %v3594
    %3608 = vmatpush.msra.mxu0 %v3587
    %3609 = vmatpush.msra.mxu0 %v3586
    %3610 = vmatpush.msra.mxu0 %v3585
    %3611 = vmatpush.msra.mxu0 %v3584
    %3612 = vmatmul.f32.gmra.mxu0 %v3591
    %v3613 = vpop.f32.mrf.mxu0
    %v3614 = vadd.f32 %v3589, %v3613
    %3615 = vdwg.mxu0
    %v3616 = vmax.f32 %v3614, 0.0
    %v3617 = vld [vmem:[%s55] sm:$0xff]
    %v3618 = vld [vmem:[%s55 + $0x8] sm:$0xff]
    %v3619 = vld [vmem:[%s55 + $0x10] sm:$0xff]
    %v3620 = vld [vmem:[%s55 + $0x18] sm:$0xff]
    %v3621 = vld [vmem:[%s55 + $0x20] sm:$0xff]
    %v3622 = vld [vmem:[%s55 + $0x28] sm:$0xff]
    %v3623 = vld [vmem:[%s55 + $0x30] sm:$0xff]
    %v3624 = vld [vmem:[%s55 + $0x38] sm:$0xff]
    %v3625 = vld [vmem:[%s57] sm:$0x1]
    %v3627 = vsel %vm791, %v3616, 0
    %3629 = vmatpush.msra.mxu0 0.0
    %3630 = vmatpush.msra.mxu0 0.0
    %3631 = vmatpush.msra.mxu0 0.0
    %3632 = vmatpush.msra.mxu0 0.0
    %3633 = vmatpush.msra.mxu0 0.0
    %3634 = vmatpush.msra.mxu0 0.0
    %3635 = vmatpush.msra.mxu0 0.0
    %3636 = vmatpush.msra.mxu0 0.0
    %3637 = vmatpush.msra.mxu0 %v3624
    %3638 = vmatpush.msra.mxu0 %v3623
    %3639 = vmatpush.msra.mxu0 %v3622
    %3640 = vmatpush.msra.mxu0 %v3621
    %3641 = vmatpush.msra.mxu0 %v3620
    %3642 = vmatpush.msra.mxu0 %v3619
    %3643 = vmatpush.msra.mxu0 %v3618
    %3644 = vmatpush.msra.mxu0 %v3617
    %3645 = vmatmul.f32.gmra.mxu0 %v3627
    %v3646 = vpop.f32.mrf.mxu0
    %v3647 = vadd.f32 %v3625, %v3646
    %3648 = vdwg.mxu0
    %v3649 = vadd.f32 %v3647, %v3583
    %v3650 = vld [vmem:[%s59] sm:$0x1]
    %v3651 = vld [vmem:[%s61] sm:$0x1]
    %v3652 = vsel %vm1047, %v3649, 0.0
    %3653 = vadd.xlane.f32.xlu0 %v3652
    %v3654 = vpop.xlane.xlu0 %3653
    %v3655 = vmul.f32 %v3654, %v1057
    %v3656 = vsub.f32 %v3649, %v3655
    %v3657 = vmul.f32 %v3656, %v3656
    %v3658 = vsel %vm1047, %v3657, 0.0
    %3659 = vadd.xlane.f32.xlu0 %v3658
    %v3660 = vpop.xlane.xlu0 %3659
    %v3661 = vmul.f32 %v3660, %v1057
    %v3662 = vadd.f32 %v3661, 1e-06
    %v3663 = vrsqrt.pop %v3662
    %v3664 = vmul.f32 %v3663, %v3662
    %v3665 = vmul.f32 %v3664, %v3663
    %v3666 = vmul.f32 0.5, %v3665
    %v3667 = vsub.f32 1.5, %v3666
    %v3668 = vmul.f32 %v3663, %v3667
    %vm3669 = vweird.f32 %v3662
    %vm3670 = vweird.f32 %v3663
    %vm3671 = vmor %vm3669, %vm3670
    %v3672 = vsel %vm3671, %v3663, %v3668
    %v3673 = vmul.f32 %v3656, %v3672
    %v3674 = vmul.f32 %v3673, %v3650
    %v3675 = vadd.f32 %v3674, %v3651
    %v3677 = vsel %vm1018, %v3675, 0
    %3679 = vmatpush.msra.mxu0 0.0
    %3680 = vmatpush.msra.mxu0 0.0
    %3681 = vmatpush.msra.mxu0 0.0
    %3682 = vmatpush.msra.mxu0 0.0
    %3683 = vmatpush.msra.mxu0 0.0
    %3684 = vmatpush.msra.mxu0 0.0
    %3685 = vmatpush.msra.mxu0 0.0
    %3686 = vmatpush.msra.mxu0 0.0
    %3687 = vmatpush.msra.mxu0 0.0
    %3688 = vmatpush.msra.mxu0 0.0
    %3689 = vmatpush.msra.mxu0 0.0
    %3690 = vmatpush.msra.mxu0 %v1379
    %3691 = vmatpush.msra.mxu0 %v897
    %3692 = vmatpush.msra.mxu0 %v896
    %3693 = vmatpush.msra.mxu0 %v895
    %3694 = vmatpush.msra.mxu0 %v894
    %3695 = vmatmul.f32.gmra.mxu0 %v3677
    %v3696 = vpop.f32.mrf.mxu0
    %v3697 = vadd.f32 %v3339, %v3696
    %3698 = vdwg.mxu0
    %v3699 = vsel %vm149, %v3697, -1e+30
    %v3700 = vsel %vm1047, %v3699, -inf
    %3701 = vmax.xlane.f32.xlu0 %v3700
    %v3702 = vpop.xlane.xlu0 %3701
    %v3703 = vsub.f32 %v3699, %v3702
    %v3704 = vmul.f32 %v3703, 1.442695
    %v3705 = vpow.pop %v3704
    %v3706 = vsel %vm1047, %v3705, 0.0
    %3707 = vadd.xlane.f32.xlu0 %v3706
    %v3708 = vpop.xlane.xlu0 %3707
    %v3709 = vrcp.pop %v3708
    %v3710 = vmul.f32 %v3708, %v3709
    %v3711 = vsub.f32 1.0, %v3710
    %v3712 = vmul.f32 %v3709, %v3711
    %v3713 = vadd.f32 %v3709, %v3712
    %vm3714 = vweird.f32 %v3708
    %vm3715 = vweird.f32 %v3709
    %vm3716 = vmor %vm3714, %vm3715
    %v3717 = vsel %vm3716, %v3709, %v3713
    %v3718 = vand.u32 2147483647, %v3708
    %vm3719 = vcmp.eq.f32.partialorder %v3718, 8.507059e+37
    %v3720 = vand.u32 %v3708, 2147483648
    %v3721 = vor.u32 1.1754944e-38, %v3720
    %v3722 = vsel %vm3719, %v3721, %v3717
    %v3723 = vmul.f32 %v3705, %v3722
    %v3724 = vsel %vm149, %v3723, 0.0
    %v3725 = vsel %vm152, %v3697, -1e+30
    %v3726 = vsel %vm1047, %v3725, -inf
    %3727 = vmax.xlane.f32.xlu0 %v3726
    %v3728 = vpop.xlane.xlu0 %3727
    %v3729 = vsub.f32 %v3725, %v3728
    %v3730 = vmul.f32 %v3729, 1.442695
    %v3731 = vpow.pop %v3730
    %v3732 = vsel %vm1047, %v3731, 0.0
    %3733 = vadd.xlane.f32.xlu0 %v3732
    %v3734 = vpop.xlane.xlu0 %3733
    %v3735 = vrcp.pop %v3734
    %v3736 = vmul.f32 %v3734, %v3735
    %v3737 = vsub.f32 1.0, %v3736
    %v3738 = vmul.f32 %v3735, %v3737
    %v3739 = vadd.f32 %v3735, %v3738
    %vm3740 = vweird.f32 %v3734
    %vm3741 = vweird.f32 %v3735
    %vm3742 = vmor %vm3740, %vm3741
    %v3743 = vsel %vm3742, %v3735, %v3739
    %v3744 = vand.u32 2147483647, %v3734
    %vm3745 = vcmp.eq.f32.partialorder %v3744, 8.507059e+37
    %v3746 = vand.u32 %v3734, 2147483648
    %v3747 = vor.u32 1.1754944e-38, %v3746
    %v3748 = vsel %vm3745, %v3747, %v3743
    %v3749 = vmul.f32 %v3731, %v3748
    %v3750 = vsel %vm152, %v3749, 0.0
    %v3751 = vadd.f32 %v3724, %v3750
    %v3752 = vsub.f32 0.0, %v3697
    %v3753 = vmul.f32 %v3752, 1.442695
    %v3754 = vpow.pop %v3753
    %v3755 = vadd.f32 %v3754, 1.0
    %v3756 = vrcp.pop %v3755
    %v3757 = vmul.f32 %v3755, %v3756
    %v3758 = vsub.f32 1.0, %v3757
    %v3759 = vmul.f32 %v3756, %v3758
    %v3760 = vadd.f32 %v3756, %v3759
    %vm3761 = vweird.f32 %v3755
    %vm3762 = vweird.f32 %v3756
    %vm3763 = vmor %vm3761, %vm3762
    %v3764 = vsel %vm3763, %v3756, %v3760
    %v3765 = vand.u32 2147483647, %v3755
    %vm3766 = vcmp.eq.f32.partialorder %v3765, 8.507059e+37
    %v3767 = vand.u32 %v3755, 2147483648
    %v3768 = vor.u32 1.1754944e-38, %v3767
    %v3769 = vsel %vm3766, %v3768, %v3764
    %v3770 = vmul.f32 1.0, %v3769
    %v3771 = vsel %vm155, %v3770, 0.0
    %v3772 = vadd.f32 %v3751, %v3771
    %3773 = vst.msk [vmem:[%s2898 + $0x2] sm:$0x1] %vm1015, %v3772
    %v3774 = vadd.f32 %v3772, %v1912
    %v3776 = vsel %vm1018, %v3774, 0
    %3778 = vmatpush.msra.mxu0 0.0
    %3779 = vmatpush.msra.mxu0 0.0
    %3780 = vmatpush.msra.mxu0 0.0
    %3781 = vmatpush.msra.mxu0 0.0
    %3782 = vmatpush.msra.mxu0 0.0
    %3783 = vmatpush.msra.mxu0 0.0
    %3784 = vmatpush.msra.mxu0 0.0
    %3785 = vmatpush.msra.mxu0 0.0
    %3786 = vmatpush.msra.mxu0 0.0
    %3787 = vmatpush.msra.mxu0 0.0
    %3788 = vmatpush.msra.mxu0 0.0
    %3789 = vmatpush.msra.mxu0 %v1023
    %3790 = vmatpush.msra.mxu0 %v887
    %3791 = vmatpush.msra.mxu0 %v886
    %3792 = vmatpush.msra.mxu0 %v885
    %3793 = vmatpush.msra.mxu0 %v884
    %3794 = vmatmul.f32.gmra.mxu0 %v3776
    %v3795 = vpop.f32.mrf.mxu0
    %v3796 = vadd.f32 %v3774, %v3795
    %3797 = vdwg.mxu0
    %v3798 = vld [vmem:[%s37] sm:$0x1]
    %v3799 = vld [vmem:[%s39] sm:$0x1]
    %v3800 = vsel %vm1047, %v3796, 0.0
    %3801 = vadd.xlane.f32.xlu0 %v3800
    %v3802 = vpop.xlane.xlu0 %3801
    %v3803 = vmul.f32 %v3802, %v1057
    %v3804 = vsub.f32 %v3796, %v3803
    %v3805 = vmul.f32 %v3804, %v3804
    %v3806 = vsel %vm1047, %v3805, 0.0
    %3807 = vadd.xlane.f32.xlu0 %v3806
    %v3808 = vpop.xlane.xlu0 %3807
    %v3809 = vmul.f32 %v3808, %v1057
    %v3810 = vadd.f32 %v3809, 1e-06
    %v3811 = vrsqrt.pop %v3810
    %v3812 = vmul.f32 %v3811, %v3810
    %v3813 = vmul.f32 %v3812, %v3811
    %v3814 = vmul.f32 0.5, %v3813
    %v3815 = vsub.f32 1.5, %v3814
    %v3816 = vmul.f32 %v3811, %v3815
    %vm3817 = vweird.f32 %v3810
    %vm3818 = vweird.f32 %v3811
    %vm3819 = vmor %vm3817, %vm3818
    %v3820 = vsel %vm3819, %v3811, %v3816
    %v3821 = vmul.f32 %v3804, %v3820
    %v3822 = vmul.f32 %v3821, %v3798
    %v3823 = vadd.f32 %v3822, %v3799
    %v3825 = vsel %vm1018, %v3823, 0
    %3827 = vmatpush.msra.mxu0 0.0
    %3828 = vmatpush.msra.mxu0 0.0
    %3829 = vmatpush.msra.mxu0 0.0
    %3830 = vmatpush.msra.mxu0 0.0
    %3831 = vmatpush.msra.mxu0 0.0
    %3832 = vmatpush.msra.mxu0 0.0
    %3833 = vmatpush.msra.mxu0 0.0
    %3834 = vmatpush.msra.mxu0 0.0
    %3835 = vmatpush.msra.mxu0 0.0
    %3836 = vmatpush.msra.mxu0 0.0
    %3837 = vmatpush.msra.mxu0 0.0
    %3838 = vmatpush.msra.mxu0 %v1083
    %3839 = vmatpush.msra.mxu0 %v892
    %3840 = vmatpush.msra.mxu0 %v891
    %3841 = vmatpush.msra.mxu0 %v890
    %3842 = vmatpush.msra.mxu0 %v889
    %3843 = vmatmul.f32.gmra.mxu0 %v3825
    %v3844 = vpop.f32.mrf.mxu0
    %v3845 = vadd.f32 0.0, %v3844
    %3846 = vdwg.mxu0
    %v3848 = vsel %vm287, %v3845, 0
    %3850 = vmatpush.xpose.msra.mxu0 0.0
    %3851 = vmatpush.xpose.msra.mxu0 0.0
    %3852 = vmatpush.xpose.msra.mxu0 0.0
    %3853 = vmatpush.xpose.msra.mxu0 0.0
    %3854 = vmatpush.xpose.msra.mxu0 0.0
    %3855 = vmatpush.xpose.msra.mxu0 0.0
    %3856 = vmatpush.xpose.msra.mxu0 0.0
    %3857 = vmatpush.xpose.msra.mxu0 0.0
    %3858 = vmatpush.xpose.msra.mxu0 0.0
    %3859 = vmatpush.xpose.msra.mxu0 0.0
    %3860 = vmatpush.xpose.msra.mxu0 0.0
    %3861 = vmatpush.xpose.msra.mxu0 0.0
    %3862 = vmatpush.xpose.msra.mxu0 0.0
    %3863 = vmatpush.xpose.msra.mxu0 0.0
    %3864 = vmatpush.xpose.msra.mxu0 0.0
    %3865 = vmatpush.xpose.msra.mxu0 %v2977
    %3866 = vmatmul.f32.gmra.mxu0 %v3848
    %v3867 = vpop.f32.mrf.mxu0
    %v3868 = vadd.f32 0.0, %v3867
    %3869 = vdwg.mxu0
    %v3870 = vmul.f32 %v3868, 0.35355338
    %v3871 = vadd.f32 %v3870, %v2782
    %v3872 = vsel %vm1133, %v3871, -inf
    %3873 = vmax.xlane.f32.xlu0 %v3872
    %v3874 = vpop.xlane.xlu0 %3873
    %v3875 = vsub.f32 %v3871, %v3874
    %v3876 = vmul.f32 %v3875, 1.442695
    %v3877 = vpow.pop %v3876
    %v3878 = vsel %vm1133, %v3877, 0.0
    %3879 = vadd.xlane.f32.xlu0 %v3878
    %v3880 = vpop.xlane.xlu0 %3879
    %v3881 = vrcp.pop %v3880
    %v3882 = vmul.f32 %v3880, %v3881
    %v3883 = vsub.f32 1.0, %v3882
    %v3884 = vmul.f32 %v3881, %v3883
    %v3885 = vadd.f32 %v3881, %v3884
    %vm3886 = vweird.f32 %v3880
    %vm3887 = vweird.f32 %v3881
    %vm3888 = vmor %vm3886, %vm3887
    %v3889 = vsel %vm3888, %v3881, %v3885
    %v3890 = vand.u32 2147483647, %v3880
    %vm3891 = vcmp.eq.f32.partialorder %v3890, 8.507059e+37
    %v3892 = vand.u32 %v3880, 2147483648
    %v3893 = vor.u32 1.1754944e-38, %v3892
    %v3894 = vsel %vm3891, %v3893, %v3889
    %v3895 = vmul.f32 %v3877, %v3894
    %3896 = vst.msk [vmem:[%s3025 + $0x2] sm:$0x1] %vm1133, %v3895
    %3897 = vmatpush.xpose.msra.mxu0 0.0
    %3898 = vmatpush.xpose.msra.mxu0 0.0
    %3899 = vmatpush.xpose.msra.mxu0 0.0
    %3900 = vmatpush.xpose.msra.mxu0 0.0
    %3901 = vmatpush.xpose.msra.mxu0 0.0
    %3902 = vmatpush.xpose.msra.mxu0 0.0
    %3903 = vmatpush.xpose.msra.mxu0 0.0
    %3904 = vmatpush.xpose.msra.mxu0 0.0
    %3905 = vmatpush.xpose.msra.mxu0 0.0
    %3906 = vmatpush.xpose.msra.mxu0 0.0
    %3907 = vmatpush.xpose.msra.mxu0 0.0
    %3908 = vmatpush.xpose.msra.mxu0 0.0
    %3909 = vmatpush.xpose.msra.mxu0 0.0
    %3910 = vmatpush.xpose.msra.mxu0 0.0
    %3911 = vmatpush.xpose.msra.mxu0 0.0
    %3912 = vmatpush.xpose.msra.mxu0 %v3028
    %3913 = vmatmul.f32.gmra.mxu0 %v3848
    %v3914 = vpop.f32.mrf.mxu0
    %v3915 = vadd.f32 0.0, %v3914
    %3916 = vdwg.mxu0
    %v3917 = vmul.f32 %v3915, 0.35355338
    %v3918 = vadd.f32 %v3917, %v2782
    %v3919 = vsel %vm1133, %v3918, -inf
    %3920 = vmax.xlane.f32.xlu0 %v3919
    %v3921 = vpop.xlane.xlu0 %3920
    %v3922 = vsub.f32 %v3918, %v3921
    %v3923 = vmul.f32 %v3922, 1.442695
    %v3924 = vpow.pop %v3923
    %v3925 = vsel %vm1133, %v3924, 0.0
    %3926 = vadd.xlane.f32.xlu0 %v3925
    %v3927 = vpop.xlane.xlu0 %3926
    %v3928 = vrcp.pop %v3927
    %v3929 = vmul.f32 %v3927, %v3928
    %v3930 = vsub.f32 1.0, %v3929
    %v3931 = vmul.f32 %v3928, %v3930
    %v3932 = vadd.f32 %v3928, %v3931
    %vm3933 = vweird.f32 %v3927
    %vm3934 = vweird.f32 %v3928
    %vm3935 = vmor %vm3933, %vm3934
    %v3936 = vsel %vm3935, %v3928, %v3932
    %v3937 = vand.u32 2147483647, %v3927
    %vm3938 = vcmp.eq.f32.partialorder %v3937, 8.507059e+37
    %v3939 = vand.u32 %v3927, 2147483648
    %v3940 = vor.u32 1.1754944e-38, %v3939
    %v3941 = vsel %vm3938, %v3940, %v3936
    %v3942 = vmul.f32 %v3924, %v3941
    %3943 = vst.msk [vmem:[%s3076 + $0x2] sm:$0x1] %vm1133, %v3942
    %v3945 = vsel %vm319, %v3942, 0
    %3947 = vmatpush.msra.mxu0 0.0
    %3948 = vmatpush.msra.mxu0 0.0
    %3949 = vmatpush.msra.mxu0 0.0
    %3950 = vmatpush.msra.mxu0 0.0
    %3951 = vmatpush.msra.mxu0 0.0
    %3952 = vmatpush.msra.mxu0 0.0
    %3953 = vmatpush.msra.mxu0 0.0
    %3954 = vmatpush.msra.mxu0 0.0
    %3955 = vmatpush.msra.mxu0 0.0
    %3956 = vmatpush.msra.mxu0 0.0
    %3957 = vmatpush.msra.mxu0 0.0
    %3958 = vmatpush.msra.mxu0 0.0
    %3959 = vmatpush.msra.mxu0 0.0
    %3960 = vmatpush.msra.mxu0 0.0
    %3961 = vmatpush.msra.mxu0 0.0
    %3962 = vmatpush.msra.mxu0 %v2894
    %3963 = vmatmul.f32.gmra.mxu0 %v3945
    %v3964 = vpop.f32.mrf.mxu0
    %v3965 = vadd.f32 0.0, %v3964
    %3966 = vdwg.mxu0
    %v3968 = vsel %vm319, %v3895, 0
    %3970 = vmatpush.msra.mxu0 0.0
    %3971 = vmatpush.msra.mxu0 0.0
    %3972 = vmatpush.msra.mxu0 0.0
    %3973 = vmatpush.msra.mxu0 0.0
    %3974 = vmatpush.msra.mxu0 0.0
    %3975 = vmatpush.msra.mxu0 0.0
    %3976 = vmatpush.msra.mxu0 0.0
    %3977 = vmatpush.msra.mxu0 0.0
    %3978 = vmatpush.msra.mxu0 0.0
    %3979 = vmatpush.msra.mxu0 0.0
    %3980 = vmatpush.msra.mxu0 0.0
    %3981 = vmatpush.msra.mxu0 0.0
    %3982 = vmatpush.msra.mxu0 0.0
    %3983 = vmatpush.msra.mxu0 0.0
    %3984 = vmatpush.msra.mxu0 0.0
    %3985 = vmatpush.msra.mxu0 %v2858
    %3986 = vmatmul.f32.gmra.mxu0 %v3968
    %v3987 = vpop.f32.mrf.mxu0
    %v3988 = vadd.f32 %v3965, %v3987
    %3989 = vdwg.mxu0
    %v3990 = vadd.f32 %v3988, %v3823
    %v3991 = vld [vmem:[%s47] sm:$0x1]
    %v3992 = vld [vmem:[%s49] sm:$0x1]
    %v3993 = vsel %vm1047, %v3990, 0.0
    %3994 = vadd.xlane.f32.xlu0 %v3993
    %v3995 = vpop.xlane.xlu0 %3994
    %v3996 = vmul.f32 %v3995, %v1057
    %v3997 = vsub.f32 %v3990, %v3996
    %v3998 = vmul.f32 %v3997, %v3997
    %v3999 = vsel %vm1047, %v3998, 0.0
    %4000 = vadd.xlane.f32.xlu0 %v3999
    %v4001 = vpop.xlane.xlu0 %4000
    %v4002 = vmul.f32 %v4001, %v1057
    %v4003 = vadd.f32 %v4002, 1e-06
    %v4004 = vrsqrt.pop %v4003
    %v4005 = vmul.f32 %v4004, %v4003
    %v4006 = vmul.f32 %v4005, %v4004
    %v4007 = vmul.f32 0.5, %v4006
    %v4008 = vsub.f32 1.5, %v4007
    %v4009 = vmul.f32 %v4004, %v4008
    %vm4010 = vweird.f32 %v4003
    %vm4011 = vweird.f32 %v4004
    %vm4012 = vmor %vm4010, %vm4011
    %v4013 = vsel %vm4012, %v4004, %v4009
    %v4014 = vmul.f32 %v3997, %v4013
    %v4015 = vmul.f32 %v4014, %v3991
    %v4016 = vadd.f32 %v4015, %v3992
    %v4017 = vld [vmem:[%s51] sm:$0xff]
    %v4018 = vld [vmem:[%s51 + $0x8] sm:$0xff]
    %v4019 = vld [vmem:[%s51 + $0x10] sm:$0xff]
    %v4020 = vld [vmem:[%s51 + $0x18] sm:$0xff]
    %v4021 = vld [vmem:[%s51 + $0x20] sm:$0x3f]
    %v4022 = vld [vmem:[%s53] sm:$0x1]
    %v4024 = vsel %vm1018, %v4016, 0
    %v4027 = vsel %vm178, %v4021, 0
    %4029 = vmatpush.msra.mxu0 0.0
    %4030 = vmatpush.msra.mxu0 0.0
    %4031 = vmatpush.msra.mxu0 0.0
    %4032 = vmatpush.msra.mxu0 0.0
    %4033 = vmatpush.msra.mxu0 0.0
    %4034 = vmatpush.msra.mxu0 0.0
    %4035 = vmatpush.msra.mxu0 0.0
    %4036 = vmatpush.msra.mxu0 0.0
    %4037 = vmatpush.msra.mxu0 0.0
    %4038 = vmatpush.msra.mxu0 0.0
    %4039 = vmatpush.msra.mxu0 0.0
    %4040 = vmatpush.msra.mxu0 %v4027
    %4041 = vmatpush.msra.mxu0 %v4020
    %4042 = vmatpush.msra.mxu0 %v4019
    %4043 = vmatpush.msra.mxu0 %v4018
    %4044 = vmatpush.msra.mxu0 %v4017
    %4045 = vmatmul.f32.gmra.mxu0 %v4024
    %v4046 = vpop.f32.mrf.mxu0
    %v4047 = vadd.f32 %v4022, %v4046
    %4048 = vdwg.mxu0
    %v4049 = vmax.f32 %v4047, 0.0
    %v4050 = vld [vmem:[%s55] sm:$0xff]
    %v4051 = vld [vmem:[%s55 + $0x8] sm:$0xff]
    %v4052 = vld [vmem:[%s55 + $0x10] sm:$0xff]
    %v4053 = vld [vmem:[%s55 + $0x18] sm:$0xff]
    %v4054 = vld [vmem:[%s55 + $0x20] sm:$0xff]
    %v4055 = vld [vmem:[%s55 + $0x28] sm:$0xff]
    %v4056 = vld [vmem:[%s55 + $0x30] sm:$0xff]
    %v4057 = vld [vmem:[%s55 + $0x38] sm:$0xff]
    %v4058 = vld [vmem:[%s57] sm:$0x1]
    %v4060 = vsel %vm791, %v4049, 0
    %4062 = vmatpush.msra.mxu0 0.0
    %4063 = vmatpush.msra.mxu0 0.0
    %4064 = vmatpush.msra.mxu0 0.0
    %4065 = vmatpush.msra.mxu0 0.0
    %4066 = vmatpush.msra.mxu0 0.0
    %4067 = vmatpush.msra.mxu0 0.0
    %4068 = vmatpush.msra.mxu0 0.0
    %4069 = vmatpush.msra.mxu0 0.0
    %4070 = vmatpush.msra.mxu0 %v4057
    %4071 = vmatpush.msra.mxu0 %v4056
    %4072 = vmatpush.msra.mxu0 %v4055
    %4073 = vmatpush.msra.mxu0 %v4054
    %4074 = vmatpush.msra.mxu0 %v4053
    %4075 = vmatpush.msra.mxu0 %v4052
    %4076 = vmatpush.msra.mxu0 %v4051
    %4077 = vmatpush.msra.mxu0 %v4050
    %4078 = vmatmul.f32.gmra.mxu0 %v4060
    %v4079 = vpop.f32.mrf.mxu0
    %v4080 = vadd.f32 %v4058, %v4079
    %4081 = vdwg.mxu0
    %v4082 = vadd.f32 %v4080, %v4016
    %v4083 = vld [vmem:[%s59] sm:$0x1]
    %v4084 = vld [vmem:[%s61] sm:$0x1]
    %v4085 = vsel %vm1047, %v4082, 0.0
    %4086 = vadd.xlane.f32.xlu0 %v4085
    %v4087 = vpop.xlane.xlu0 %4086
    %v4088 = vmul.f32 %v4087, %v1057
    %v4089 = vsub.f32 %v4082, %v4088
    %v4090 = vmul.f32 %v4089, %v4089
    %v4091 = vsel %vm1047, %v4090, 0.0
    %4092 = vadd.xlane.f32.xlu0 %v4091
    %v4093 = vpop.xlane.xlu0 %4092
    %v4094 = vmul.f32 %v4093, %v1057
    %v4095 = vadd.f32 %v4094, 1e-06
    %v4096 = vrsqrt.pop %v4095
    %v4097 = vmul.f32 %v4096, %v4095
    %v4098 = vmul.f32 %v4097, %v4096
    %v4099 = vmul.f32 0.5, %v4098
    %v4100 = vsub.f32 1.5, %v4099
    %v4101 = vmul.f32 %v4096, %v4100
    %vm4102 = vweird.f32 %v4095
    %vm4103 = vweird.f32 %v4096
    %vm4104 = vmor %vm4102, %vm4103
    %v4105 = vsel %vm4104, %v4096, %v4101
    %v4106 = vmul.f32 %v4089, %v4105
    %v4107 = vmul.f32 %v4106, %v4083
    %v4108 = vadd.f32 %v4107, %v4084
    %v4110 = vsel %vm1018, %v4108, 0
    %4112 = vmatpush.msra.mxu0 0.0
    %4113 = vmatpush.msra.mxu0 0.0
    %4114 = vmatpush.msra.mxu0 0.0
    %4115 = vmatpush.msra.mxu0 0.0
    %4116 = vmatpush.msra.mxu0 0.0
    %4117 = vmatpush.msra.mxu0 0.0
    %4118 = vmatpush.msra.mxu0 0.0
    %4119 = vmatpush.msra.mxu0 0.0
    %4120 = vmatpush.msra.mxu0 0.0
    %4121 = vmatpush.msra.mxu0 0.0
    %4122 = vmatpush.msra.mxu0 0.0
    %4123 = vmatpush.msra.mxu0 %v1379
    %4124 = vmatpush.msra.mxu0 %v897
    %4125 = vmatpush.msra.mxu0 %v896
    %4126 = vmatpush.msra.mxu0 %v895
    %4127 = vmatpush.msra.mxu0 %v894
    %4128 = vmatmul.f32.gmra.mxu0 %v4110
    %v4129 = vpop.f32.mrf.mxu0
    %v4130 = vadd.f32 %v3772, %v4129
    %4131 = vdwg.mxu0
    %v4132 = vsel %vm149, %v4130, -1e+30
    %v4133 = vsel %vm1047, %v4132, -inf
    %4134 = vmax.xlane.f32.xlu0 %v4133
    %v4135 = vpop.xlane.xlu0 %4134
    %v4136 = vsub.f32 %v4132, %v4135
    %v4137 = vmul.f32 %v4136, 1.442695
    %v4138 = vpow.pop %v4137
    %v4139 = vsel %vm1047, %v4138, 0.0
    %4140 = vadd.xlane.f32.xlu0 %v4139
    %v4141 = vpop.xlane.xlu0 %4140
    %v4142 = vrcp.pop %v4141
    %v4143 = vmul.f32 %v4141, %v4142
    %v4144 = vsub.f32 1.0, %v4143
    %v4145 = vmul.f32 %v4142, %v4144
    %v4146 = vadd.f32 %v4142, %v4145
    %vm4147 = vweird.f32 %v4141
    %vm4148 = vweird.f32 %v4142
    %vm4149 = vmor %vm4147, %vm4148
    %v4150 = vsel %vm4149, %v4142, %v4146
    %v4151 = vand.u32 2147483647, %v4141
    %vm4152 = vcmp.eq.f32.partialorder %v4151, 8.507059e+37
    %v4153 = vand.u32 %v4141, 2147483648
    %v4154 = vor.u32 1.1754944e-38, %v4153
    %v4155 = vsel %vm4152, %v4154, %v4150
    %v4156 = vmul.f32 %v4138, %v4155
    %v4157 = vsel %vm149, %v4156, 0.0
    %v4158 = vsel %vm152, %v4130, -1e+30
    %v4159 = vsel %vm1047, %v4158, -inf
    %4160 = vmax.xlane.f32.xlu0 %v4159
    %v4161 = vpop.xlane.xlu0 %4160
    %v4162 = vsub.f32 %v4158, %v4161
    %v4163 = vmul.f32 %v4162, 1.442695
    %v4164 = vpow.pop %v4163
    %v4165 = vsel %vm1047, %v4164, 0.0
    %4166 = vadd.xlane.f32.xlu0 %v4165
    %v4167 = vpop.xlane.xlu0 %4166
    %v4168 = vrcp.pop %v4167
    %v4169 = vmul.f32 %v4167, %v4168
    %v4170 = vsub.f32 1.0, %v4169
    %v4171 = vmul.f32 %v4168, %v4170
    %v4172 = vadd.f32 %v4168, %v4171
    %vm4173 = vweird.f32 %v4167
    %vm4174 = vweird.f32 %v4168
    %vm4175 = vmor %vm4173, %vm4174
    %v4176 = vsel %vm4175, %v4168, %v4172
    %v4177 = vand.u32 2147483647, %v4167
    %vm4178 = vcmp.eq.f32.partialorder %v4177, 8.507059e+37
    %v4179 = vand.u32 %v4167, 2147483648
    %v4180 = vor.u32 1.1754944e-38, %v4179
    %v4181 = vsel %vm4178, %v4180, %v4176
    %v4182 = vmul.f32 %v4164, %v4181
    %v4183 = vsel %vm152, %v4182, 0.0
    %v4184 = vadd.f32 %v4157, %v4183
    %v4185 = vsub.f32 0.0, %v4130
    %v4186 = vmul.f32 %v4185, 1.442695
    %v4187 = vpow.pop %v4186
    %v4188 = vadd.f32 %v4187, 1.0
    %v4189 = vrcp.pop %v4188
    %v4190 = vmul.f32 %v4188, %v4189
    %v4191 = vsub.f32 1.0, %v4190
    %v4192 = vmul.f32 %v4189, %v4191
    %v4193 = vadd.f32 %v4189, %v4192
    %vm4194 = vweird.f32 %v4188
    %vm4195 = vweird.f32 %v4189
    %vm4196 = vmor %vm4194, %vm4195
    %v4197 = vsel %vm4196, %v4189, %v4193
    %v4198 = vand.u32 2147483647, %v4188
    %vm4199 = vcmp.eq.f32.partialorder %v4198, 8.507059e+37
    %v4200 = vand.u32 %v4188, 2147483648
    %v4201 = vor.u32 1.1754944e-38, %v4200
    %v4202 = vsel %vm4199, %v4201, %v4197
    %v4203 = vmul.f32 1.0, %v4202
    %v4204 = vsel %vm155, %v4203, 0.0
    %v4205 = vadd.f32 %v4184, %v4204
    %4206 = vst.msk [vmem:[%s2898 + $0x3] sm:$0x1] %vm1015, %v4205
    %v4207 = vadd.f32 %v4205, %v2347
    %v4209 = vsel %vm1018, %v4207, 0
    %4211 = vmatpush.msra.mxu0 0.0
    %4212 = vmatpush.msra.mxu0 0.0
    %4213 = vmatpush.msra.mxu0 0.0
    %4214 = vmatpush.msra.mxu0 0.0
    %4215 = vmatpush.msra.mxu0 0.0
    %4216 = vmatpush.msra.mxu0 0.0
    %4217 = vmatpush.msra.mxu0 0.0
    %4218 = vmatpush.msra.mxu0 0.0
    %4219 = vmatpush.msra.mxu0 0.0
    %4220 = vmatpush.msra.mxu0 0.0
    %4221 = vmatpush.msra.mxu0 0.0
    %4222 = vmatpush.msra.mxu0 %v1023
    %4223 = vmatpush.msra.mxu0 %v887
    %4224 = vmatpush.msra.mxu0 %v886
    %4225 = vmatpush.msra.mxu0 %v885
    %4226 = vmatpush.msra.mxu0 %v884
    %4227 = vmatmul.f32.gmra.mxu0 %v4209
    %v4228 = vpop.f32.mrf.mxu0
    %v4229 = vadd.f32 %v4207, %v4228
    %4230 = vdwg.mxu0
    %v4231 = vld [vmem:[%s37] sm:$0x1]
    %v4232 = vld [vmem:[%s39] sm:$0x1]
    %v4233 = vsel %vm1047, %v4229, 0.0
    %4234 = vadd.xlane.f32.xlu0 %v4233
    %v4235 = vpop.xlane.xlu0 %4234
    %v4236 = vmul.f32 %v4235, %v1057
    %v4237 = vsub.f32 %v4229, %v4236
    %v4238 = vmul.f32 %v4237, %v4237
    %v4239 = vsel %vm1047, %v4238, 0.0
    %4240 = vadd.xlane.f32.xlu0 %v4239
    %v4241 = vpop.xlane.xlu0 %4240
    %v4242 = vmul.f32 %v4241, %v1057
    %v4243 = vadd.f32 %v4242, 1e-06
    %v4244 = vrsqrt.pop %v4243
    %v4245 = vmul.f32 %v4244, %v4243
    %v4246 = vmul.f32 %v4245, %v4244
    %v4247 = vmul.f32 0.5, %v4246
    %v4248 = vsub.f32 1.5, %v4247
    %v4249 = vmul.f32 %v4244, %v4248
    %vm4250 = vweird.f32 %v4243
    %vm4251 = vweird.f32 %v4244
    %vm4252 = vmor %vm4250, %vm4251
    %v4253 = vsel %vm4252, %v4244, %v4249
    %v4254 = vmul.f32 %v4237, %v4253
    %v4255 = vmul.f32 %v4254, %v4231
    %v4256 = vadd.f32 %v4255, %v4232
    %v4258 = vsel %vm1018, %v4256, 0
    %4260 = vmatpush.msra.mxu0 0.0
    %4261 = vmatpush.msra.mxu0 0.0
    %4262 = vmatpush.msra.mxu0 0.0
    %4263 = vmatpush.msra.mxu0 0.0
    %4264 = vmatpush.msra.mxu0 0.0
    %4265 = vmatpush.msra.mxu0 0.0
    %4266 = vmatpush.msra.mxu0 0.0
    %4267 = vmatpush.msra.mxu0 0.0
    %4268 = vmatpush.msra.mxu0 0.0
    %4269 = vmatpush.msra.mxu0 0.0
    %4270 = vmatpush.msra.mxu0 0.0
    %4271 = vmatpush.msra.mxu0 %v1083
    %4272 = vmatpush.msra.mxu0 %v892
    %4273 = vmatpush.msra.mxu0 %v891
    %4274 = vmatpush.msra.mxu0 %v890
    %4275 = vmatpush.msra.mxu0 %v889
    %4276 = vmatmul.f32.gmra.mxu0 %v4258
    %v4277 = vpop.f32.mrf.mxu0
    %v4278 = vadd.f32 0.0, %v4277
    %4279 = vdwg.mxu0
    %v4281 = vsel %vm287, %v4278, 0
    %4283 = vmatpush.xpose.msra.mxu0 0.0
    %4284 = vmatpush.xpose.msra.mxu0 0.0
    %4285 = vmatpush.xpose.msra.mxu0 0.0
    %4286 = vmatpush.xpose.msra.mxu0 0.0
    %4287 = vmatpush.xpose.msra.mxu0 0.0
    %4288 = vmatpush.xpose.msra.mxu0 0.0
    %4289 = vmatpush.xpose.msra.mxu0 0.0
    %4290 = vmatpush.xpose.msra.mxu0 0.0
    %4291 = vmatpush.xpose.msra.mxu0 0.0
    %4292 = vmatpush.xpose.msra.mxu0 0.0
    %4293 = vmatpush.xpose.msra.mxu0 0.0
    %4294 = vmatpush.xpose.msra.mxu0 0.0
    %4295 = vmatpush.xpose.msra.mxu0 0.0
    %4296 = vmatpush.xpose.msra.mxu0 0.0
    %4297 = vmatpush.xpose.msra.mxu0 0.0
    %4298 = vmatpush.xpose.msra.mxu0 %v2977
    %4299 = vmatmul.f32.gmra.mxu0 %v4281
    %v4300 = vpop.f32.mrf.mxu0
    %v4301 = vadd.f32 0.0, %v4300
    %4302 = vdwg.mxu0
    %v4303 = vmul.f32 %v4301, 0.35355338
    %v4304 = vadd.f32 %v4303, %v2782
    %v4305 = vsel %vm1133, %v4304, -inf
    %4306 = vmax.xlane.f32.xlu0 %v4305
    %v4307 = vpop.xlane.xlu0 %4306
    %v4308 = vsub.f32 %v4304, %v4307
    %v4309 = vmul.f32 %v4308, 1.442695
    %v4310 = vpow.pop %v4309
    %v4311 = vsel %vm1133, %v4310, 0.0
    %4312 = vadd.xlane.f32.xlu0 %v4311
    %v4313 = vpop.xlane.xlu0 %4312
    %v4314 = vrcp.pop %v4313
    %v4315 = vmul.f32 %v4313, %v4314
    %v4316 = vsub.f32 1.0, %v4315
    %v4317 = vmul.f32 %v4314, %v4316
    %v4318 = vadd.f32 %v4314, %v4317
    %vm4319 = vweird.f32 %v4313
    %vm4320 = vweird.f32 %v4314
    %vm4321 = vmor %vm4319, %vm4320
    %v4322 = vsel %vm4321, %v4314, %v4318
    %v4323 = vand.u32 2147483647, %v4313
    %vm4324 = vcmp.eq.f32.partialorder %v4323, 8.507059e+37
    %v4325 = vand.u32 %v4313, 2147483648
    %v4326 = vor.u32 1.1754944e-38, %v4325
    %v4327 = vsel %vm4324, %v4326, %v4322
    %v4328 = vmul.f32 %v4310, %v4327
    %4329 = vst.msk [vmem:[%s3025 + $0x3] sm:$0x1] %vm1133, %v4328
    %4330 = vmatpush.xpose.msra.mxu0 0.0
    %4331 = vmatpush.xpose.msra.mxu0 0.0
    %4332 = vmatpush.xpose.msra.mxu0 0.0
    %4333 = vmatpush.xpose.msra.mxu0 0.0
    %4334 = vmatpush.xpose.msra.mxu0 0.0
    %4335 = vmatpush.xpose.msra.mxu0 0.0
    %4336 = vmatpush.xpose.msra.mxu0 0.0
    %4337 = vmatpush.xpose.msra.mxu0 0.0
    %4338 = vmatpush.xpose.msra.mxu0 0.0
    %4339 = vmatpush.xpose.msra.mxu0 0.0
    %4340 = vmatpush.xpose.msra.mxu0 0.0
    %4341 = vmatpush.xpose.msra.mxu0 0.0
    %4342 = vmatpush.xpose.msra.mxu0 0.0
    %4343 = vmatpush.xpose.msra.mxu0 0.0
    %4344 = vmatpush.xpose.msra.mxu0 0.0
    %4345 = vmatpush.xpose.msra.mxu0 %v3028
    %4346 = vmatmul.f32.gmra.mxu0 %v4281
    %v4347 = vpop.f32.mrf.mxu0
    %v4348 = vadd.f32 0.0, %v4347
    %4349 = vdwg.mxu0
    %v4350 = vmul.f32 %v4348, 0.35355338
    %v4351 = vadd.f32 %v4350, %v2782
    %v4352 = vsel %vm1133, %v4351, -inf
    %4353 = vmax.xlane.f32.xlu0 %v4352
    %v4354 = vpop.xlane.xlu0 %4353
    %v4355 = vsub.f32 %v4351, %v4354
    %v4356 = vmul.f32 %v4355, 1.442695
    %v4357 = vpow.pop %v4356
    %v4358 = vsel %vm1133, %v4357, 0.0
    %4359 = vadd.xlane.f32.xlu0 %v4358
    %v4360 = vpop.xlane.xlu0 %4359
    %v4361 = vrcp.pop %v4360
    %v4362 = vmul.f32 %v4360, %v4361
    %v4363 = vsub.f32 1.0, %v4362
    %v4364 = vmul.f32 %v4361, %v4363
    %v4365 = vadd.f32 %v4361, %v4364
    %vm4366 = vweird.f32 %v4360
    %vm4367 = vweird.f32 %v4361
    %vm4368 = vmor %vm4366, %vm4367
    %v4369 = vsel %vm4368, %v4361, %v4365
    %v4370 = vand.u32 2147483647, %v4360
    %vm4371 = vcmp.eq.f32.partialorder %v4370, 8.507059e+37
    %v4372 = vand.u32 %v4360, 2147483648
    %v4373 = vor.u32 1.1754944e-38, %v4372
    %v4374 = vsel %vm4371, %v4373, %v4369
    %v4375 = vmul.f32 %v4357, %v4374
    %4376 = vst.msk [vmem:[%s3076 + $0x3] sm:$0x1] %vm1133, %v4375
    %v4378 = vsel %vm319, %v4375, 0
    %4380 = vmatpush.msra.mxu0 0.0
    %4381 = vmatpush.msra.mxu0 0.0
    %4382 = vmatpush.msra.mxu0 0.0
    %4383 = vmatpush.msra.mxu0 0.0
    %4384 = vmatpush.msra.mxu0 0.0
    %4385 = vmatpush.msra.mxu0 0.0
    %4386 = vmatpush.msra.mxu0 0.0
    %4387 = vmatpush.msra.mxu0 0.0
    %4388 = vmatpush.msra.mxu0 0.0
    %4389 = vmatpush.msra.mxu0 0.0
    %4390 = vmatpush.msra.mxu0 0.0
    %4391 = vmatpush.msra.mxu0 0.0
    %4392 = vmatpush.msra.mxu0 0.0
    %4393 = vmatpush.msra.mxu0 0.0
    %4394 = vmatpush.msra.mxu0 0.0
    %4395 = vmatpush.msra.mxu0 %v2894
    %4396 = vmatmul.f32.gmra.mxu0 %v4378
    %v4397 = vpop.f32.mrf.mxu0
    %v4398 = vadd.f32 0.0, %v4397
    %4399 = vdwg.mxu0
    %v4401 = vsel %vm319, %v4328, 0
    %4403 = vmatpush.msra.mxu0 0.0
    %4404 = vmatpush.msra.mxu0 0.0
    %4405 = vmatpush.msra.mxu0 0.0
    %4406 = vmatpush.msra.mxu0 0.0
    %4407 = vmatpush.msra.mxu0 0.0
    %4408 = vmatpush.msra.mxu0 0.0
    %4409 = vmatpush.msra.mxu0 0.0
    %4410 = vmatpush.msra.mxu0 0.0
    %4411 = vmatpush.msra.mxu0 0.0
    %4412 = vmatpush.msra.mxu0 0.0
    %4413 = vmatpush.msra.mxu0 0.0
    %4414 = vmatpush.msra.mxu0 0.0
    %4415 = vmatpush.msra.mxu0 0.0
    %4416 = vmatpush.msra.mxu0 0.0
    %4417 = vmatpush.msra.mxu0 0.0
    %4418 = vmatpush.msra.mxu0 %v2858
    %4419 = vmatmul.f32.gmra.mxu0 %v4401
    %v4420 = vpop.f32.mrf.mxu0
    %v4421 = vadd.f32 %v4398, %v4420
    %4422 = vdwg.mxu0
    %v4423 = vadd.f32 %v4421, %v4256
    %v4424 = vld [vmem:[%s47] sm:$0x1]
    %v4425 = vld [vmem:[%s49] sm:$0x1]
    %v4426 = vsel %vm1047, %v4423, 0.0
    %4427 = vadd.xlane.f32.xlu0 %v4426
    %v4428 = vpop.xlane.xlu0 %4427
    %v4429 = vmul.f32 %v4428, %v1057
    %v4430 = vsub.f32 %v4423, %v4429
    %v4431 = vmul.f32 %v4430, %v4430
    %v4432 = vsel %vm1047, %v4431, 0.0
    %4433 = vadd.xlane.f32.xlu0 %v4432
    %v4434 = vpop.xlane.xlu0 %4433
    %v4435 = vmul.f32 %v4434, %v1057
    %v4436 = vadd.f32 %v4435, 1e-06
    %v4437 = vrsqrt.pop %v4436
    %v4438 = vmul.f32 %v4437, %v4436
    %v4439 = vmul.f32 %v4438, %v4437
    %v4440 = vmul.f32 0.5, %v4439
    %v4441 = vsub.f32 1.5, %v4440
    %v4442 = vmul.f32 %v4437, %v4441
    %vm4443 = vweird.f32 %v4436
    %vm4444 = vweird.f32 %v4437
    %vm4445 = vmor %vm4443, %vm4444
    %v4446 = vsel %vm4445, %v4437, %v4442
    %v4447 = vmul.f32 %v4430, %v4446
    %v4448 = vmul.f32 %v4447, %v4424
    %v4449 = vadd.f32 %v4448, %v4425
    %v4450 = vld [vmem:[%s51] sm:$0xff]
    %v4451 = vld [vmem:[%s51 + $0x8] sm:$0xff]
    %v4452 = vld [vmem:[%s51 + $0x10] sm:$0xff]
    %v4453 = vld [vmem:[%s51 + $0x18] sm:$0xff]
    %v4454 = vld [vmem:[%s51 + $0x20] sm:$0x3f]
    %v4455 = vld [vmem:[%s53] sm:$0x1]
    %v4457 = vsel %vm1018, %v4449, 0
    %v4460 = vsel %vm178, %v4454, 0
    %4462 = vmatpush.msra.mxu0 0.0
    %4463 = vmatpush.msra.mxu0 0.0
    %4464 = vmatpush.msra.mxu0 0.0
    %4465 = vmatpush.msra.mxu0 0.0
    %4466 = vmatpush.msra.mxu0 0.0
    %4467 = vmatpush.msra.mxu0 0.0
    %4468 = vmatpush.msra.mxu0 0.0
    %4469 = vmatpush.msra.mxu0 0.0
    %4470 = vmatpush.msra.mxu0 0.0
    %4471 = vmatpush.msra.mxu0 0.0
    %4472 = vmatpush.msra.mxu0 0.0
    %4473 = vmatpush.msra.mxu0 %v4460
    %4474 = vmatpush.msra.mxu0 %v4453
    %4475 = vmatpush.msra.mxu0 %v4452
    %4476 = vmatpush.msra.mxu0 %v4451
    %4477 = vmatpush.msra.mxu0 %v4450
    %4478 = vmatmul.f32.gmra.mxu0 %v4457
    %v4479 = vpop.f32.mrf.mxu0
    %v4480 = vadd.f32 %v4455, %v4479
    %4481 = vdwg.mxu0
    %v4482 = vmax.f32 %v4480, 0.0
    %v4483 = vld [vmem:[%s55] sm:$0xff]
    %v4484 = vld [vmem:[%s55 + $0x8] sm:$0xff]
    %v4485 = vld [vmem:[%s55 + $0x10] sm:$0xff]
    %v4486 = vld [vmem:[%s55 + $0x18] sm:$0xff]
    %v4487 = vld [vmem:[%s55 + $0x20] sm:$0xff]
    %v4488 = vld [vmem:[%s55 + $0x28] sm:$0xff]
    %v4489 = vld [vmem:[%s55 + $0x30] sm:$0xff]
    %v4490 = vld [vmem:[%s55 + $0x38] sm:$0xff]
    %v4491 = vld [vmem:[%s57] sm:$0x1]
    %v4493 = vsel %vm791, %v4482, 0
    %4495 = vmatpush.msra.mxu0 0.0
    %4496 = vmatpush.msra.mxu0 0.0
    %4497 = vmatpush.msra.mxu0 0.0
    %4498 = vmatpush.msra.mxu0 0.0
    %4499 = vmatpush.msra.mxu0 0.0
    %4500 = vmatpush.msra.mxu0 0.0
    %4501 = vmatpush.msra.mxu0 0.0
    %4502 = vmatpush.msra.mxu0 0.0
    %4503 = vmatpush.msra.mxu0 %v4490
    %4504 = vmatpush.msra.mxu0 %v4489
    %4505 = vmatpush.msra.mxu0 %v4488
    %4506 = vmatpush.msra.mxu0 %v4487
    %4507 = vmatpush.msra.mxu0 %v4486
    %4508 = vmatpush.msra.mxu0 %v4485
    %4509 = vmatpush.msra.mxu0 %v4484
    %4510 = vmatpush.msra.mxu0 %v4483
    %4511 = vmatmul.f32.gmra.mxu0 %v4493
    %v4512 = vpop.f32.mrf.mxu0
    %v4513 = vadd.f32 %v4491, %v4512
    %4514 = vdwg.mxu0
    %v4515 = vadd.f32 %v4513, %v4449
    %v4516 = vld [vmem:[%s59] sm:$0x1]
    %v4517 = vld [vmem:[%s61] sm:$0x1]
    %v4518 = vsel %vm1047, %v4515, 0.0
    %4519 = vadd.xlane.f32.xlu0 %v4518
    %v4520 = vpop.xlane.xlu0 %4519
    %v4521 = vmul.f32 %v4520, %v1057
    %v4522 = vsub.f32 %v4515, %v4521
    %v4523 = vmul.f32 %v4522, %v4522
    %v4524 = vsel %vm1047, %v4523, 0.0
    %4525 = vadd.xlane.f32.xlu0 %v4524
    %v4526 = vpop.xlane.xlu0 %4525
    %v4527 = vmul.f32 %v4526, %v1057
    %v4528 = vadd.f32 %v4527, 1e-06
    %v4529 = vrsqrt.pop %v4528
    %v4530 = vmul.f32 %v4529, %v4528
    %v4531 = vmul.f32 %v4530, %v4529
    %v4532 = vmul.f32 0.5, %v4531
    %v4533 = vsub.f32 1.5, %v4532
    %v4534 = vmul.f32 %v4529, %v4533
    %vm4535 = vweird.f32 %v4528
    %vm4536 = vweird.f32 %v4529
    %vm4537 = vmor %vm4535, %vm4536
    %v4538 = vsel %vm4537, %v4529, %v4534
    %v4539 = vmul.f32 %v4522, %v4538
    %v4540 = vmul.f32 %v4539, %v4516
    %v4541 = vadd.f32 %v4540, %v4517
    %v4543 = vsel %vm1018, %v4541, 0
    %4545 = vmatpush.msra.mxu0 0.0
    %4546 = vmatpush.msra.mxu0 0.0
    %4547 = vmatpush.msra.mxu0 0.0
    %4548 = vmatpush.msra.mxu0 0.0
    %4549 = vmatpush.msra.mxu0 0.0
    %4550 = vmatpush.msra.mxu0 0.0
    %4551 = vmatpush.msra.mxu0 0.0
    %4552 = vmatpush.msra.mxu0 0.0
    %4553 = vmatpush.msra.mxu0 0.0
    %4554 = vmatpush.msra.mxu0 0.0
    %4555 = vmatpush.msra.mxu0 0.0
    %4556 = vmatpush.msra.mxu0 %v1379
    %4557 = vmatpush.msra.mxu0 %v897
    %4558 = vmatpush.msra.mxu0 %v896
    %4559 = vmatpush.msra.mxu0 %v895
    %4560 = vmatpush.msra.mxu0 %v894
    %4561 = vmatmul.f32.gmra.mxu0 %v4543
    %v4562 = vpop.f32.mrf.mxu0
    %v4563 = vadd.f32 %v4205, %v4562
    %4564 = vdwg.mxu0
    %v4565 = vsel %vm149, %v4563, -1e+30
    %v4566 = vsel %vm1047, %v4565, -inf
    %4567 = vmax.xlane.f32.xlu0 %v4566
    %v4568 = vpop.xlane.xlu0 %4567
    %v4569 = vsub.f32 %v4565, %v4568
    %v4570 = vmul.f32 %v4569, 1.442695
    %v4571 = vpow.pop %v4570
    %v4572 = vsel %vm1047, %v4571, 0.0
    %4573 = vadd.xlane.f32.xlu0 %v4572
    %v4574 = vpop.xlane.xlu0 %4573
    %v4575 = vrcp.pop %v4574
    %v4576 = vmul.f32 %v4574, %v4575
    %v4577 = vsub.f32 1.0, %v4576
    %v4578 = vmul.f32 %v4575, %v4577
    %v4579 = vadd.f32 %v4575, %v4578
    %vm4580 = vweird.f32 %v4574
    %vm4581 = vweird.f32 %v4575
    %vm4582 = vmor %vm4580, %vm4581
    %v4583 = vsel %vm4582, %v4575, %v4579
    %v4584 = vand.u32 2147483647, %v4574
    %vm4585 = vcmp.eq.f32.partialorder %v4584, 8.507059e+37
    %v4586 = vand.u32 %v4574, 2147483648
    %v4587 = vor.u32 1.1754944e-38, %v4586
    %v4588 = vsel %vm4585, %v4587, %v4583
    %v4589 = vmul.f32 %v4571, %v4588
    %v4590 = vsel %vm149, %v4589, 0.0
    %v4591 = vsel %vm152, %v4563, -1e+30
    %v4592 = vsel %vm1047, %v4591, -inf
    %4593 = vmax.xlane.f32.xlu0 %v4592
    %v4594 = vpop.xlane.xlu0 %4593
    %v4595 = vsub.f32 %v4591, %v4594
    %v4596 = vmul.f32 %v4595, 1.442695
    %v4597 = vpow.pop %v4596
    %v4598 = vsel %vm1047, %v4597, 0.0
    %4599 = vadd.xlane.f32.xlu0 %v4598
    %v4600 = vpop.xlane.xlu0 %4599
    %v4601 = vrcp.pop %v4600
    %v4602 = vmul.f32 %v4600, %v4601
    %v4603 = vsub.f32 1.0, %v4602
    %v4604 = vmul.f32 %v4601, %v4603
    %v4605 = vadd.f32 %v4601, %v4604
    %vm4606 = vweird.f32 %v4600
    %vm4607 = vweird.f32 %v4601
    %vm4608 = vmor %vm4606, %vm4607
    %v4609 = vsel %vm4608, %v4601, %v4605
    %v4610 = vand.u32 2147483647, %v4600
    %vm4611 = vcmp.eq.f32.partialorder %v4610, 8.507059e+37
    %v4612 = vand.u32 %v4600, 2147483648
    %v4613 = vor.u32 1.1754944e-38, %v4612
    %v4614 = vsel %vm4611, %v4613, %v4609
    %v4615 = vmul.f32 %v4597, %v4614
    %v4616 = vsel %vm152, %v4615, 0.0
    %v4617 = vadd.f32 %v4590, %v4616
    %v4618 = vsub.f32 0.0, %v4563
    %v4619 = vmul.f32 %v4618, 1.442695
    %v4620 = vpow.pop %v4619
    %v4621 = vadd.f32 %v4620, 1.0
    %v4622 = vrcp.pop %v4621
    %v4623 = vmul.f32 %v4621, %v4622
    %v4624 = vsub.f32 1.0, %v4623
    %v4625 = vmul.f32 %v4622, %v4624
    %v4626 = vadd.f32 %v4622, %v4625
    %vm4627 = vweird.f32 %v4621
    %vm4628 = vweird.f32 %v4622
    %vm4629 = vmor %vm4627, %vm4628
    %v4630 = vsel %vm4629, %v4622, %v4626
    %v4631 = vand.u32 2147483647, %v4621
    %vm4632 = vcmp.eq.f32.partialorder %v4631, 8.507059e+37
    %v4633 = vand.u32 %v4621, 2147483648
    %v4634 = vor.u32 1.1754944e-38, %v4633
    %v4635 = vsel %vm4632, %v4634, %v4630
    %v4636 = vmul.f32 1.0, %v4635
    %v4637 = vsel %vm155, %v4636, 0.0
    %v4638 = vadd.f32 %v4617, %v4637
    %4639 = vst.msk [vmem:[%s2898 + $0x4] sm:$0x1] %vm1015, %v4638
    // Predicated region
    $region130: #{transformer_forward.1} parent=1 // pred_check
      _
    $region131: #{transformer_forward.1} parent=1 // pred_check_branch
      %4641 = sbr.rel (0) target = $region133
    $region132: #{transformer_forward.1} parent=1 // pred_region
      _
    $region133: #{transformer_forward.1} parent=1 // pred_fallthru
      _
    // Predicated region
    $region134: #{transformer_forward.1} parent=1 // pred_check
      _
    $region135: #{transformer_forward.1} parent=1 // pred_check_branch
      %4643 = sbr.rel (0) target = $region137
    $region136: #{transformer_forward.1} parent=1 // pred_region
      %4645 = vsyncadd [#allocation3], 0
      %s4646 = sshll.u32 [#allocation2], 4
      %s4647 = int_to_ptr.vmem [resolvable:$true] %s4646
      %s4648 = sshll.u32 %s67, 4
      %s4649 = int_to_ptr.hbm [resolvable:$true] %s4648
      %4654 = dma.vmem_to_hbm [thread:$0]  %s4647, 256, %s4649, [#allocation3], 64, 64, 4
    $region137: #{transformer_forward.1} parent=1 // pred_fallthru
      _
    // Predicated region
    $region138: #{transformer_forward.1} parent=1 // pred_check
      _
    $region139: #{transformer_forward.1} parent=1 // pred_check_branch
      %4656 = sbr.rel (0) target = $region141
    $region140: #{transformer_forward.1} parent=1 // pred_region
      %4658 = vsyncadd [#allocation5], 0
      %s4659 = sshll.u32 [#allocation4], 4
      %s4660 = int_to_ptr.vmem [resolvable:$true] %s4659
      %s4661 = sshll.u32 %s69, 4
      %s4662 = int_to_ptr.hbm [resolvable:$true] %s4661
      %4667 = dma.vmem_to_hbm [thread:$0]  %s4660, 512, %s4662, [#allocation5], 128, 128, 8
    $region141: #{transformer_forward.1} parent=1 // pred_fallthru
      _
    // Predicated region
    $region142: #{transformer_forward.1} parent=1 // pred_check
      _
    $region143: #{transformer_forward.1} parent=1 // pred_check_branch
      %4669 = sbr.rel (0) target = $region145
    $region144: #{transformer_forward.1} parent=1 // pred_region
      _
    $region145: #{transformer_forward.1} parent=1 // pred_fallthru
      _
    // Predicated region
    $region146: #{transformer_forward.1} parent=1 // pred_check
      _
    $region147: #{transformer_forward.1} parent=1 // pred_check_branch
      %4671 = sbr.rel (0) target = $region149
    $region148: #{transformer_forward.1} parent=1 // pred_region
      %4673 = dma.done [#allocation3], 256
    $region149: #{transformer_forward.1} parent=1 // pred_fallthru
      _
    // Predicated region
    $region150: #{transformer_forward.1} parent=1 // pred_check
      _
    $region151: #{transformer_forward.1} parent=1 // pred_check_branch
      %4675 = sbr.rel (0) target = $region153
    $region152: #{transformer_forward.1} parent=1 // pred_region
      %4677 = dma.done [#allocation5], 512
    $region153: #{transformer_forward.1} parent=1 // pred_fallthru
      _
    %4678 = vsyncpa [#allocation3], 1
    %4679 = vsyncpa [#allocation5], 1

</llo_original>
